<compile_context>
chip_gen: v7x
topology: tpu7x:2x2x1
jax: 0.10.0
libtpu: 0.0.40
codegen_flags: <defaults>
</compile_context>

<pallas_src>
import functools

import jax
import jax.numpy as jnp
from jax.experimental import pallas as pl
from jax.experimental.pallas import tpu as pltpu


def _ceil_to(x, m):
    return ((x + m - 1) // m) * m


# -----------------------------------------------------------------------------
# Fused kernel: conv0+bias+ReLU, then L x [conv + BN(train stats) + ReLU]
# -----------------------------------------------------------------------------
def _cnnblock0_kernel(*refs, N, H, W, CP, C_out, L, eps):
    if L > 0:
        x_ref, w0_ref, b0_ref, mw_ref, mg_ref, mb_ref, o_ref, apad_ref = refs
    else:
        x_ref, w0_ref, b0_ref, o_ref = refs
        mw_ref = mg_ref = mb_ref = apad_ref = None

    M = N * H * W

    # ---- stage 0: Conv(bias=True) + ReLU (input pre-im2col'd outside) -------
    # x_ref: (M, K0P) bf16, w0_ref: (K0P, CP) bf16 -> one MXU matmul, f32 acc.
    y = jnp.dot(x_ref[...], w0_ref[...], preferred_element_type=jnp.float32)
    y = jnp.maximum(y + b0_ref[...], 0.0)                      # (M, CP) f32

    # ---- stages 1..L: Conv(bias=False) + BatchNorm(train) + ReLU ------------
    if L > 0:
        apad_ref[...] = jnp.zeros_like(apad_ref)               # zero halo once
    inv_m = 1.0 / float(M)
    for l in range(L):                                         # static unroll
        # previous activation into the padded VMEM scratch (interior only)
        apad_ref[:, 1:H + 1, 1:W + 1, :] = y.reshape(N, H, W, CP)

        # 3x3 conv = 9 shifted (M,CP)x(CP,CP) MXU matmuls accumulated in f32
        # (no (M, 9*CP) im2col materialization in VMEM).
        acc = None
        for dy in range(3):                                    # static unroll
            for dx in range(3):
                tap = apad_ref[:, dy:dy + H, dx:dx + W, :]
                tap = tap.reshape(M, CP).astype(jnp.bfloat16)
                d = jnp.dot(tap, mw_ref[l * 9 + dy * 3 + dx],
                            preferred_element_type=jnp.float32)
                acc = d if acc is None else acc + d
        y = acc                                                # (M, CP) f32

        # BatchNorm2d training mode: biased batch stats over N*H*W, one pass,
        # computed on the matmul result while resident; eps = 1e-4.
        mean = jnp.sum(y, axis=0, keepdims=True) * inv_m       # (1, CP)
        ex2 = jnp.sum(y * y, axis=0, keepdims=True) * inv_m    # E[x^2]
        var = jnp.maximum(ex2 - mean * mean, 0.0)              # biased variance
        scale = jax.lax.rsqrt(var + eps) * mg_ref[l]           # (1, CP)
        y = jnp.maximum((y - mean) * scale + mb_ref[l], 0.0)

    # ---- output: channel-major, lane-dense (N, C_out, H*W) stores -----------
    yr = y.reshape(N, H * W, CP)
    for n in range(N):                                         # static unroll
        o_ref[n] = yr[n].T[:C_out, :].astype(o_ref.dtype)


# -----------------------------------------------------------------------------
# Parameters (deterministic) and one-time kernel-layout packing
# -----------------------------------------------------------------------------
def init_cnnblock0_params(key, image_channels, n_channels, level):
    params = {}
    key, k_w0, k_b0 = jax.random.split(key, 3)
    params["w0"] = 0.1 * jax.random.normal(
        k_w0, (3, 3, image_channels, n_channels), jnp.float32)
    params["b0"] = 0.1 * jax.random.normal(k_b0, (1, n_channels), jnp.float32)

    mids = []
    for _ in range(level - 2):
        key, k_w, k_g, k_b = jax.random.split(key, 4)
        w = 0.1 * jax.random.normal(k_w, (3, 3, n_channels, n_channels),
                                    jnp.float32)
        gamma = 1.0 + 0.05 * jax.random.normal(k_g, (1, n_channels), jnp.float32)
        beta = 0.05 * jax.random.normal(k_b, (1, n_channels), jnp.float32)
        mids.append((w, gamma, beta))
    params["mid"] = mids
    return params


def pack_params(params):
    """Kernel layout: stage-0 weight flattened to (9*Cin -> pad 128, CP) bf16,
    mid weights per-tap (L*9, CP, CP) bf16, channel vectors padded to CP."""
    w0 = params["w0"]
    cin, c = int(w0.shape[2]), int(w0.shape[3])
    cp = _ceil_to(c, 128)
    k0 = 9 * cin
    k0p = _ceil_to(k0, 128)

    w0_flat = jnp.zeros((k0p, cp), jnp.float32).at[:k0, :c].set(
        w0.reshape(k0, c))
    packed = {
        "w0": w0_flat.astype(jnp.bfloat16),
        "b0": jnp.zeros((1, cp), jnp.float32).at[:, :c].set(params["b0"]),
    }
    if params["mid"]:
        mw = []
        for (w, _, _) in params["mid"]:
            wp = jnp.zeros((3, 3, cp, cp), jnp.float32).at[:, :, :c, :c].set(w)
            mw.append(wp.reshape(9, cp, cp).astype(jnp.bfloat16))
        packed["midw"] = jnp.concatenate(mw, axis=0)            # (L*9, CP, CP)
        packed["midg"] = jnp.stack(
            [jnp.ones((1, cp), jnp.float32).at[:, :c].set(g)
             for (_, g, _) in params["mid"]])
        packed["midb"] = jnp.stack(
            [jnp.zeros((1, cp), jnp.float32).at[:, :c].set(b)
             for (_, _, b) in params["mid"]])
    else:
        packed["midw"] = packed["midg"] = packed["midb"] = None
    return packed


# -----------------------------------------------------------------------------
# Forward: NCHW in / NCHW out
# -----------------------------------------------------------------------------
def cnnblock0_forward(x_nchw, packed, *, n_channels):
    N, Cin, H, W = x_nchw.shape
    C = n_channels
    CP = int(packed["w0"].shape[1])
    K0P = int(packed["w0"].shape[0])
    L = 0 if packed["midw"] is None else int(packed["midw"].shape[0]) // 9
    M = N * H * W

    # One-time stage-0 im2col on the raw (~9 KB) input; XLA fuses this into a
    # single tiny prep op: NCHW -> NHWC, zero-pad spatially, gather the 9 taps
    # (dy,dx outer / channel inner), pad K to a 128-lane multiple, cast bf16.
    x_nhwc = jnp.transpose(x_nchw, (0, 2, 3, 1)).astype(jnp.float32)
    xpad = jnp.pad(x_nhwc, ((0, 0), (1, 1), (1, 1), (0, 0)))
    taps = [xpad[:, dy:dy + H, dx:dx + W, :]
            for dy in range(3) for dx in range(3)]
    cols = jnp.concatenate(taps, axis=-1).reshape(M, 9 * Cin)
    cols = jnp.pad(cols, ((0, 0), (0, K0P - 9 * Cin))).astype(jnp.bfloat16)

    kernel = functools.partial(_cnnblock0_kernel, N=N, H=H, W=W, CP=CP,
                               C_out=C, L=L, eps=1e-4)

    args = [cols, packed["w0"], packed["b0"]]
    scratch = []
    if L > 0:
        args += [packed["midw"], packed["midg"], packed["midb"]]
        scratch = [pltpu.VMEM((N, H + 2, W + 2, CP), jnp.float32)]

    # Single fused invocation: whole batch, all stages, activation VMEM-resident.
    # TODO(synk): single invocation uses one TensorCore (fine at these sizes);
    # BN batch stats need the full batch, so a dual-TC split would require a
    # cross-core stats exchange if scaled up.
    out = pl.pallas_call(
        kernel,
        out_shape=jax.ShapeDtypeStruct((N, C, H * W), jnp.float32),
        scratch_shapes=scratch,
    )(*args)

    return out.reshape(N, C, H, W)                             # free reshape


if __name__ == "__main__":
    # Small shapes consistent with the module: batch=2, image_channels=4,
    # spatial=16x16, n_channels=32, level=3 (conv+relu, then conv+bn+relu).
    batch, image_channels, n_channels, level = 2, 4, 32, 3
    H = W = 16

    key = jax.random.PRNGKey(0)
    key, k_x = jax.random.split(key)
    x = jax.random.normal(k_x, (batch, image_channels, H, W), jnp.float32)

    params = init_cnnblock0_params(key, image_channels, n_channels, level)
    packed = pack_params(params)

    fwd = jax.jit(functools.partial(cnnblock0_forward, n_channels=n_channels))
    out = jax.block_until_ready(fwd(x, packed))

    assert out.shape == (batch, n_channels, H, W), out.shape
    assert bool(jnp.all(jnp.isfinite(out)))
    assert float(jnp.min(out)) >= 0.0  # final ReLU
    print("KERNEL_OK")
</pallas_src>

<mosaic_0001>
module attributes {stable_mosaic.version = 11 : i64} {
  func.func @_cnnblock0_kernel(%arg0: memref<512x128xbf16, #tpu.memory_space<vmem>>, %arg1: memref<128x128xbf16, #tpu.memory_space<vmem>>, %arg2: memref<1x128xf32, #tpu.memory_space<vmem>>, %arg3: memref<9x128x128xbf16, #tpu.memory_space<vmem>>, %arg4: memref<1x1x128xf32, #tpu.memory_space<vmem>>, %arg5: memref<1x1x128xf32, #tpu.memory_space<vmem>>, %arg6: memref<2x32x256xf32, #tpu.memory_space<vmem>>, %arg7: memref<2x18x18x128xf32, #tpu.memory_space<vmem>>) attributes {dimension_semantics = [], scalar_prefetch = 0 : i64, scratch_operands = 1 : i64, tpu.core_type = #tpu.core_type<tc>} {
    %c0 = arith.constant 0 : index
    %c0_0 = arith.constant 0 : index
    %0 = vector.load %arg0[%c0, %c0_0] : memref<512x128xbf16, #tpu.memory_space<vmem>>, vector<512x128xbf16>
    %c0_1 = arith.constant 0 : index
    %c0_2 = arith.constant 0 : index
    %1 = vector.load %arg1[%c0_1, %c0_2] : memref<128x128xbf16, #tpu.memory_space<vmem>>, vector<128x128xbf16>
    %cst = arith.constant dense<0.000000e+00> : vector<512x128xf32>
    %2 = tpu.matmul %0, %1, %cst {dimension_numbers = #tpu.dot_dimension_numbers<[1], [0], [0], [1], [0, 0, 1, 1], [], []>} : vector<512x128xbf16>, vector<128x128xbf16>, vector<512x128xf32> -> vector<512x128xf32>
    %c0_3 = arith.constant 0 : index
    %c0_4 = arith.constant 0 : index
    %3 = vector.load %arg2[%c0_3, %c0_4] : memref<1x128xf32, #tpu.memory_space<vmem>>, vector<1x128xf32>
    %4 = vector.broadcast %3 : vector<1x128xf32> to vector<512x128xf32>
    %5 = arith.addf %2, %4 : vector<512x128xf32>
    %cst_5 = arith.constant 0.000000e+00 : f32
    %6 = vector.broadcast %cst_5 : f32 to vector<512x128xf32>
    %7 = arith.maximumf %5, %6 : vector<512x128xf32>
    %cst_6 = arith.constant 0.000000e+00 : f32
    %8 = vector.broadcast %cst_6 : f32 to vector<2x18x18x128xf32>
    %c0_7 = arith.constant 0 : index
    %c0_8 = arith.constant 0 : index
    %c0_9 = arith.constant 0 : index
    %c0_10 = arith.constant 0 : index
    %9 = vector.load %arg7[%c0_7, %c0_8, %c0_9, %c0_10] : memref<2x18x18x128xf32, #tpu.memory_space<vmem>>, vector<2x18x18x128xf32>
    tpu.vector_store %arg7[%c0_7, %c0_8, %c0_9, %c0_10], %8 {strides = array<i32>} : memref<2x18x18x128xf32, #tpu.memory_space<vmem>>, vector<2x18x18x128xf32>,
    %10 = vector.shape_cast %7 : vector<512x128xf32> to vector<2x16x16x128xf32>
    %c0_11 = arith.constant 0 : index
    %c1 = arith.constant 1 : index
    %c1_12 = arith.constant 1 : index
    %c0_13 = arith.constant 0 : index
    %11 = vector.load %arg7[%c0_11, %c1, %c1_12, %c0_13] : memref<2x18x18x128xf32, #tpu.memory_space<vmem>>, vector<2x16x16x128xf32>
    tpu.vector_store %arg7[%c0_11, %c1, %c1_12, %c0_13], %10 {strides = array<i32>} : memref<2x18x18x128xf32, #tpu.memory_space<vmem>>, vector<2x16x16x128xf32>,
    %c0_14 = arith.constant 0 : index
    %c0_15 = arith.constant 0 : index
    %c0_16 = arith.constant 0 : index
    %c0_17 = arith.constant 0 : index
    %12 = vector.load %arg7[%c0_14, %c0_15, %c0_16, %c0_17] : memref<2x18x18x128xf32, #tpu.memory_space<vmem>>, vector<2x16x16x128xf32>
    %13 = vector.shape_cast %12 : vector<2x16x16x128xf32> to vector<512x128xf32>
    %14 = arith.truncf %13 : vector<512x128xf32> to vector<512x128xbf16>
    %c0_18 = arith.constant 0 : index
    %c0_19 = arith.constant 0 : index
    %c0_20 = arith.constant 0 : index
    %15 = vector.load %arg3[%c0_18, %c0_19, %c0_20] : memref<9x128x128xbf16, #tpu.memory_space<vmem>>, vector<1x128x128xbf16>
    %16 = vector.shape_cast %15 : vector<1x128x128xbf16> to vector<128x128xbf16>
    %cst_21 = arith.constant dense<0.000000e+00> : vector<512x128xf32>
    %17 = tpu.matmul %14, %16, %cst_21 {dimension_numbers = #tpu.dot_dimension_numbers<[1], [0], [0], [1], [0, 0, 1, 1], [], []>} : vector<512x128xbf16>, vector<128x128xbf16>, vector<512x128xf32> -> vector<512x128xf32>
    %c0_22 = arith.constant 0 : index
    %c0_23 = arith.constant 0 : index
    %c1_24 = arith.constant 1 : index
    %c0_25 = arith.constant 0 : index
    %18 = vector.load %arg7[%c0_22, %c0_23, %c1_24, %c0_25] : memref<2x18x18x128xf32, #tpu.memory_space<vmem>>, vector<2x16x16x128xf32>
    %19 = vector.shape_cast %18 : vector<2x16x16x128xf32> to vector<512x128xf32>
    %20 = arith.truncf %19 : vector<512x128xf32> to vector<512x128xbf16>
    %c1_26 = arith.constant 1 : index
    %c0_27 = arith.constant 0 : index
    %c0_28 = arith.constant 0 : index
    %21 = vector.load %arg3[%c1_26, %c0_27, %c0_28] : memref<9x128x128xbf16, #tpu.memory_space<vmem>>, vector<1x128x128xbf16>
    %22 = vector.shape_cast %21 : vector<1x128x128xbf16> to vector<128x128xbf16>
    %cst_29 = arith.constant dense<0.000000e+00> : vector<512x128xf32>
    %23 = tpu.matmul %20, %22, %cst_29 {dimension_numbers = #tpu.dot_dimension_numbers<[1], [0], [0], [1], [0, 0, 1, 1], [], []>} : vector<512x128xbf16>, vector<128x128xbf16>, vector<512x128xf32> -> vector<512x128xf32>
    %24 = arith.addf %17, %23 : vector<512x128xf32>
    %c0_30 = arith.constant 0 : index
    %c0_31 = arith.constant 0 : index
    %c2 = arith.constant 2 : index
    %c0_32 = arith.constant 0 : index
    %25 = vector.load %arg7[%c0_30, %c0_31, %c2, %c0_32] : memref<2x18x18x128xf32, #tpu.memory_space<vmem>>, vector<2x16x16x128xf32>
    %26 = vector.shape_cast %25 : vector<2x16x16x128xf32> to vector<512x128xf32>
    %27 = arith.truncf %26 : vector<512x128xf32> to vector<512x128xbf16>
    %c2_33 = arith.constant 2 : index
    %c0_34 = arith.constant 0 : index
    %c0_35 = arith.constant 0 : index
    %28 = vector.load %arg3[%c2_33, %c0_34, %c0_35] : memref<9x128x128xbf16, #tpu.memory_space<vmem>>, vector<1x128x128xbf16>
    %29 = vector.shape_cast %28 : vector<1x128x128xbf16> to vector<128x128xbf16>
    %cst_36 = arith.constant dense<0.000000e+00> : vector<512x128xf32>
    %30 = tpu.matmul %27, %29, %cst_36 {dimension_numbers = #tpu.dot_dimension_numbers<[1], [0], [0], [1], [0, 0, 1, 1], [], []>} : vector<512x128xbf16>, vector<128x128xbf16>, vector<512x128xf32> -> vector<512x128xf32>
    %31 = arith.addf %24, %30 : vector<512x128xf32>
    %c0_37 = arith.constant 0 : index
    %c1_38 = arith.constant 1 : index
    %c0_39 = arith.constant 0 : index
    %c0_40 = arith.constant 0 : index
    %32 = vector.load %arg7[%c0_37, %c1_38, %c0_39, %c0_40] : memref<2x18x18x128xf32, #tpu.memory_space<vmem>>, vector<2x16x16x128xf32>
    %33 = vector.shape_cast %32 : vector<2x16x16x128xf32> to vector<512x128xf32>
    %34 = arith.truncf %33 : vector<512x128xf32> to vector<512x128xbf16>
    %c3 = arith.constant 3 : index
    %c0_41 = arith.constant 0 : index
    %c0_42 = arith.constant 0 : index
    %35 = vector.load %arg3[%c3, %c0_41, %c0_42] : memref<9x128x128xbf16, #tpu.memory_space<vmem>>, vector<1x128x128xbf16>
    %36 = vector.shape_cast %35 : vector<1x128x128xbf16> to vector<128x128xbf16>
    %cst_43 = arith.constant dense<0.000000e+00> : vector<512x128xf32>
    %37 = tpu.matmul %34, %36, %cst_43 {dimension_numbers = #tpu.dot_dimension_numbers<[1], [0], [0], [1], [0, 0, 1, 1], [], []>} : vector<512x128xbf16>, vector<128x128xbf16>, vector<512x128xf32> -> vector<512x128xf32>
    %38 = arith.addf %31, %37 : vector<512x128xf32>
    %c0_44 = arith.constant 0 : index
    %c1_45 = arith.constant 1 : index
    %c1_46 = arith.constant 1 : index
    %c0_47 = arith.constant 0 : index
    %39 = vector.load %arg7[%c0_44, %c1_45, %c1_46, %c0_47] : memref<2x18x18x128xf32, #tpu.memory_space<vmem>>, vector<2x16x16x128xf32>
    %40 = vector.shape_cast %39 : vector<2x16x16x128xf32> to vector<512x128xf32>
    %41 = arith.truncf %40 : vector<512x128xf32> to vector<512x128xbf16>
    %c4 = arith.constant 4 : index
    %c0_48 = arith.constant 0 : index
    %c0_49 = arith.constant 0 : index
    %42 = vector.load %arg3[%c4, %c0_48, %c0_49] : memref<9x128x128xbf16, #tpu.memory_space<vmem>>, vector<1x128x128xbf16>
    %43 = vector.shape_cast %42 : vector<1x128x128xbf16> to vector<128x128xbf16>
    %cst_50 = arith.constant dense<0.000000e+00> : vector<512x128xf32>
    %44 = tpu.matmul %41, %43, %cst_50 {dimension_numbers = #tpu.dot_dimension_numbers<[1], [0], [0], [1], [0, 0, 1, 1], [], []>} : vector<512x128xbf16>, vector<128x128xbf16>, vector<512x128xf32> -> vector<512x128xf32>
    %45 = arith.addf %38, %44 : vector<512x128xf32>
    %c0_51 = arith.constant 0 : index
    %c1_52 = arith.constant 1 : index
    %c2_53 = arith.constant 2 : index
    %c0_54 = arith.constant 0 : index
    %46 = vector.load %arg7[%c0_51, %c1_52, %c2_53, %c0_54] : memref<2x18x18x128xf32, #tpu.memory_space<vmem>>, vector<2x16x16x128xf32>
    %47 = vector.shape_cast %46 : vector<2x16x16x128xf32> to vector<512x128xf32>
    %48 = arith.truncf %47 : vector<512x128xf32> to vector<512x128xbf16>
    %c5 = arith.constant 5 : index
    %c0_55 = arith.constant 0 : index
    %c0_56 = arith.constant 0 : index
    %49 = vector.load %arg3[%c5, %c0_55, %c0_56] : memref<9x128x128xbf16, #tpu.memory_space<vmem>>, vector<1x128x128xbf16>
    %50 = vector.shape_cast %49 : vector<1x128x128xbf16> to vector<128x128xbf16>
    %cst_57 = arith.constant dense<0.000000e+00> : vector<512x128xf32>
    %51 = tpu.matmul %48, %50, %cst_57 {dimension_numbers = #tpu.dot_dimension_numbers<[1], [0], [0], [1], [0, 0, 1, 1], [], []>} : vector<512x128xbf16>, vector<128x128xbf16>, vector<512x128xf32> -> vector<512x128xf32>
    %52 = arith.addf %45, %51 : vector<512x128xf32>
    %c0_58 = arith.constant 0 : index
    %c2_59 = arith.constant 2 : index
    %c0_60 = arith.constant 0 : index
    %c0_61 = arith.constant 0 : index
    %53 = vector.load %arg7[%c0_58, %c2_59, %c0_60, %c0_61] : memref<2x18x18x128xf32, #tpu.memory_space<vmem>>, vector<2x16x16x128xf32>
    %54 = vector.shape_cast %53 : vector<2x16x16x128xf32> to vector<512x128xf32>
    %55 = arith.truncf %54 : vector<512x128xf32> to vector<512x128xbf16>
    %c6 = arith.constant 6 : index
    %c0_62 = arith.constant 0 : index
    %c0_63 = arith.constant 0 : index
    %56 = vector.load %arg3[%c6, %c0_62, %c0_63] : memref<9x128x128xbf16, #tpu.memory_space<vmem>>, vector<1x128x128xbf16>
    %57 = vector.shape_cast %56 : vector<1x128x128xbf16> to vector<128x128xbf16>
    %cst_64 = arith.constant dense<0.000000e+00> : vector<512x128xf32>
    %58 = tpu.matmul %55, %57, %cst_64 {dimension_numbers = #tpu.dot_dimension_numbers<[1], [0], [0], [1], [0, 0, 1, 1], [], []>} : vector<512x128xbf16>, vector<128x128xbf16>, vector<512x128xf32> -> vector<512x128xf32>
    %59 = arith.addf %52, %58 : vector<512x128xf32>
    %c0_65 = arith.constant 0 : index
    %c2_66 = arith.constant 2 : index
    %c1_67 = arith.constant 1 : index
    %c0_68 = arith.constant 0 : index
    %60 = vector.load %arg7[%c0_65, %c2_66, %c1_67, %c0_68] : memref<2x18x18x128xf32, #tpu.memory_space<vmem>>, vector<2x16x16x128xf32>
    %61 = vector.shape_cast %60 : vector<2x16x16x128xf32> to vector<512x128xf32>
    %62 = arith.truncf %61 : vector<512x128xf32> to vector<512x128xbf16>
    %c7 = arith.constant 7 : index
    %c0_69 = arith.constant 0 : index
    %c0_70 = arith.constant 0 : index
    %63 = vector.load %arg3[%c7, %c0_69, %c0_70] : memref<9x128x128xbf16, #tpu.memory_space<vmem>>, vector<1x128x128xbf16>
    %64 = vector.shape_cast %63 : vector<1x128x128xbf16> to vector<128x128xbf16>
    %cst_71 = arith.constant dense<0.000000e+00> : vector<512x128xf32>
    %65 = tpu.matmul %62, %64, %cst_71 {dimension_numbers = #tpu.dot_dimension_numbers<[1], [0], [0], [1], [0, 0, 1, 1], [], []>} : vector<512x128xbf16>, vector<128x128xbf16>, vector<512x128xf32> -> vector<512x128xf32>
    %66 = arith.addf %59, %65 : vector<512x128xf32>
    %c0_72 = arith.constant 0 : index
    %c2_73 = arith.constant 2 : index
    %c2_74 = arith.constant 2 : index
    %c0_75 = arith.constant 0 : index
    %67 = vector.load %arg7[%c0_72, %c2_73, %c2_74, %c0_75] : memref<2x18x18x128xf32, #tpu.memory_space<vmem>>, vector<2x16x16x128xf32>
    %68 = vector.shape_cast %67 : vector<2x16x16x128xf32> to vector<512x128xf32>
    %69 = arith.truncf %68 : vector<512x128xf32> to vector<512x128xbf16>
    %c8 = arith.constant 8 : index
    %c0_76 = arith.constant 0 : index
    %c0_77 = arith.constant 0 : index
    %70 = vector.load %arg3[%c8, %c0_76, %c0_77] : memref<9x128x128xbf16, #tpu.memory_space<vmem>>, vector<1x128x128xbf16>
    %71 = vector.shape_cast %70 : vector<1x128x128xbf16> to vector<128x128xbf16>
    %cst_78 = arith.constant dense<0.000000e+00> : vector<512x128xf32>
    %72 = tpu.matmul %69, %71, %cst_78 {dimension_numbers = #tpu.dot_dimension_numbers<[1], [0], [0], [1], [0, 0, 1, 1], [], []>} : vector<512x128xbf16>, vector<128x128xbf16>, vector<512x128xf32> -> vector<512x128xf32>
    %73 = arith.addf %66, %72 : vector<512x128xf32>
    %cst_79 = arith.constant dense<0.000000e+00> : vector<128xf32>
    %74 = vector.multi_reduction <add>, %73, %cst_79 [0] : vector<512x128xf32> to vector<128xf32>
    %75 = vector.shape_cast %74 : vector<128xf32> to vector<1x128xf32>
    %cst_80 = arith.constant 0.001953125 : f32
    %76 = vector.broadcast %cst_80 : f32 to vector<1x128xf32>
    %77 = arith.mulf %75, %76 : vector<1x128xf32>
    %78 = arith.mulf %73, %73 : vector<512x128xf32>
    %cst_81 = arith.constant dense<0.000000e+00> : vector<128xf32>
    %79 = vector.multi_reduction <add>, %78, %cst_81 [0] : vector<512x128xf32> to vector<128xf32>
    %80 = vector.shape_cast %79 : vector<128xf32> to vector<1x128xf32>
    %cst_82 = arith.constant 0.001953125 : f32
    %81 = vector.broadcast %cst_82 : f32 to vector<1x128xf32>
    %82 = arith.mulf %80, %81 : vector<1x128xf32>
    %83 = arith.mulf %77, %77 : vector<1x128xf32>
    %84 = arith.subf %82, %83 : vector<1x128xf32>
    %cst_83 = arith.constant 0.000000e+00 : f32
    %85 = vector.broadcast %cst_83 : f32 to vector<1x128xf32>
    %86 = arith.maximumf %84, %85 : vector<1x128xf32>
    %cst_84 = arith.constant 9.99999974E-5 : f32
    %87 = vector.broadcast %cst_84 : f32 to vector<1x128xf32>
    %88 = arith.addf %86, %87 : vector<1x128xf32>
    %89 = math.rsqrt %88 : vector<1x128xf32>
    %c0_85 = arith.constant 0 : index
    %c0_86 = arith.constant 0 : index
    %c0_87 = arith.constant 0 : index
    %90 = vector.load %arg4[%c0_85, %c0_86, %c0_87] : memref<1x1x128xf32, #tpu.memory_space<vmem>>, vector<1x1x128xf32>
    %91 = vector.shape_cast %90 : vector<1x1x128xf32> to vector<1x128xf32>
    %92 = arith.mulf %89, %91 : vector<1x128xf32>
    %93 = vector.broadcast %77 : vector<1x128xf32> to vector<512x128xf32>
    %94 = arith.subf %73, %93 : vector<512x128xf32>
    %95 = vector.broadcast %92 : vector<1x128xf32> to vector<512x128xf32>
    %96 = arith.mulf %94, %95 : vector<512x128xf32>
    %c0_88 = arith.constant 0 : index
    %c0_89 = arith.constant 0 : index
    %c0_90 = arith.constant 0 : index
    %97 = vector.load %arg5[%c0_88, %c0_89, %c0_90] : memref<1x1x128xf32, #tpu.memory_space<vmem>>, vector<1x1x128xf32>
    %98 = vector.shape_cast %97 : vector<1x1x128xf32> to vector<1x128xf32>
    %99 = vector.broadcast %98 : vector<1x128xf32> to vector<512x128xf32>
    %100 = arith.addf %96, %99 : vector<512x128xf32>
    %cst_91 = arith.constant 0.000000e+00 : f32
    %101 = vector.broadcast %cst_91 : f32 to vector<512x128xf32>
    %102 = arith.maximumf %100, %101 : vector<512x128xf32>
    %103 = vector.shape_cast %102 : vector<512x128xf32> to vector<2x256x128xf32>
    %104 = vector.extract_strided_slice %103 {offsets = [0, 0, 0], sizes = [1, 256, 128], strides = [1, 1, 1]} : vector<2x256x128xf32> to vector<1x256x128xf32>
    %105 = vector.shape_cast %104 : vector<1x256x128xf32> to vector<256x128xf32>
    %106 = tpu.transpose %105, [1, 0] : vector<256x128xf32> -> vector<128x256xf32>
    %107 = vector.extract_strided_slice %106 {offsets = [0, 0], sizes = [32, 256], strides = [1, 1]} : vector<128x256xf32> to vector<32x256xf32>
    %c0_92 = arith.constant 0 : index
    %c0_93 = arith.constant 0 : index
    %c0_94 = arith.constant 0 : index
    %108 = vector.load %arg6[%c0_92, %c0_93, %c0_94] : memref<2x32x256xf32, #tpu.memory_space<vmem>>, vector<1x32x256xf32>
    %109 = vector.shape_cast %108 : vector<1x32x256xf32> to vector<32x256xf32>
    %110 = vector.shape_cast %107 : vector<32x256xf32> to vector<1x32x256xf32>
    tpu.vector_store %arg6[%c0_92, %c0_93, %c0_94], %110 {strides = array<i32>} : memref<2x32x256xf32, #tpu.memory_space<vmem>>, vector<1x32x256xf32>,
    %111 = vector.extract_strided_slice %103 {offsets = [1, 0, 0], sizes = [1, 256, 128], strides = [1, 1, 1]} : vector<2x256x128xf32> to vector<1x256x128xf32>
    %112 = vector.shape_cast %111 : vector<1x256x128xf32> to vector<256x128xf32>
    %113 = tpu.transpose %112, [1, 0] : vector<256x128xf32> -> vector<128x256xf32>
    %114 = vector.extract_strided_slice %113 {offsets = [0, 0], sizes = [32, 256], strides = [1, 1]} : vector<128x256xf32> to vector<32x256xf32>
    %c1_95 = arith.constant 1 : index
    %c0_96 = arith.constant 0 : index
    %c0_97 = arith.constant 0 : index
    %115 = vector.load %arg6[%c1_95, %c0_96, %c0_97] : memref<2x32x256xf32, #tpu.memory_space<vmem>>, vector<1x32x256xf32>
    %116 = vector.shape_cast %115 : vector<1x32x256xf32> to vector<32x256xf32>
    %117 = vector.shape_cast %114 : vector<32x256xf32> to vector<1x32x256xf32>
    tpu.vector_store %arg6[%c1_95, %c0_96, %c0_97], %117 {strides = array<i32>} : memref<2x32x256xf32, #tpu.memory_space<vmem>>, vector<1x32x256xf32>,
    return
  }
}

</mosaic_0001>

<llo_original>
// kernel: cnnblock0_forward.1
$region0: #{cnnblock0_forward.1}
  #allocation0 [shape = 'u32[]', space=smem, size = 0x4, offset = 0x4, fixed_abs, tag = 'smem constant byte address 0x4 - core index']
  #allocation1 [shape = 'u32[144,128]{1,0:T(1,128)}', space=vmem, size = 0x12000, scoped, tag = 'internal scratch']
  #allocation2 [shape = 'f32[2,18,18,128]{3,2,1,0:T(8,128)}', space=vmem, size = 0x6c000, scoped, tag = 'scratch operand']
  %s0 = inlined_call_operand.vmem [shape: bf16[512,128], index: 0, kind: input, shape index: {}]
  %s1 = inlined_call_operand.vmem [shape: bf16[128,128], index: 1, kind: input, shape index: {}]
  %s2 = inlined_call_operand.vmem [shape: f32[1,128], index: 2, kind: input, shape index: {}]
  %s3 = inlined_call_operand.vmem [shape: bf16[9,128,128], index: 3, kind: input, shape index: {}]
  %s4 = inlined_call_operand.vmem [shape: f32[1,1,128], index: 4, kind: input, shape index: {}]
  %s5 = inlined_call_operand.vmem [shape: f32[1,1,128], index: 5, kind: input, shape index: {}]
  %s6 = inlined_call_operand.vmem [shape: f32[2,32,256], index: 6, kind: output, shape index: {}]
  %s7 = sld [smem:[#allocation0]]
  $region34: #{cnnblock0_forward.1} parent=0
    _
  %s9 = ssub.s32 1, %s7
  %s10 = scalar_select 0, %s9, %s7
  // Predicated region
  $region2: #{cnnblock0_forward.1} parent=0 // pred_check
    _
  $region3: #{cnnblock0_forward.1} parent=0 // pred_check_branch
    %12 = sbr.rel (0) target = $region5
  $region4: #{cnnblock0_forward.1} parent=0 // pred_region
    _
  $region5: #{cnnblock0_forward.1} parent=0 // pred_fallthru
    _
  // Predicated region
  $region6: #{cnnblock0_forward.1} parent=0 // pred_check
    _
  $region7: #{cnnblock0_forward.1} parent=0 // pred_check_branch
    %14 = sbr.rel (0) target = $region9
  $region8: #{cnnblock0_forward.1} parent=0 // pred_region
    _
  $region9: #{cnnblock0_forward.1} parent=0 // pred_fallthru
    _
  // Predicated region
  $region10: #{cnnblock0_forward.1} parent=0 // pred_check
    _
  $region11: #{cnnblock0_forward.1} parent=0 // pred_check_branch
    %16 = sbr.rel (0) target = $region13
  $region12: #{cnnblock0_forward.1} parent=0 // pred_region
    _
  $region13: #{cnnblock0_forward.1} parent=0 // pred_fallthru
    _
  // Predicated region
  $region14: #{cnnblock0_forward.1} parent=0 // pred_check
    _
  $region15: #{cnnblock0_forward.1} parent=0 // pred_check_branch
    %18 = sbr.rel (0) target = $region17
  $region16: #{cnnblock0_forward.1} parent=0 // pred_region
    _
  $region17: #{cnnblock0_forward.1} parent=0 // pred_fallthru
    _
  // Predicated region
  $region18: #{cnnblock0_forward.1} parent=0 // pred_check
    _
  $region19: #{cnnblock0_forward.1} parent=0 // pred_check_branch
    %20 = sbr.rel (0) target = $region21
  $region20: #{cnnblock0_forward.1} parent=0 // pred_region
    _
  $region21: #{cnnblock0_forward.1} parent=0 // pred_fallthru
    _
  // Predicated region
  $region22: #{cnnblock0_forward.1} parent=0 // pred_check
    _
  $region23: #{cnnblock0_forward.1} parent=0 // pred_check_branch
    %22 = sbr.rel (0) target = $region25
  $region24: #{cnnblock0_forward.1} parent=0 // pred_region
    _
  $region25: #{cnnblock0_forward.1} parent=0 // pred_fallthru
    _
  %v24 = vld [vmem:[%s0] sm:$0xf]
  %v25 = vld [vmem:[%s0 + $0x4] sm:$0xf]
  %v26 = vld [vmem:[%s0 + $0x8] sm:$0xf]
  %v27 = vld [vmem:[%s0 + $0xc] sm:$0xf]
  %v28 = vld [vmem:[%s0 + $0x10] sm:$0xf]
  %v29 = vld [vmem:[%s0 + $0x14] sm:$0xf]
  %v30 = vld [vmem:[%s0 + $0x18] sm:$0xf]
  %v31 = vld [vmem:[%s0 + $0x1c] sm:$0xf]
  %v32 = vld [vmem:[%s0 + $0x20] sm:$0xf]
  %v33 = vld [vmem:[%s0 + $0x24] sm:$0xf]
  %v34 = vld [vmem:[%s0 + $0x28] sm:$0xf]
  %v35 = vld [vmem:[%s0 + $0x2c] sm:$0xf]
  %v36 = vld [vmem:[%s0 + $0x30] sm:$0xf]
  %v37 = vld [vmem:[%s0 + $0x34] sm:$0xf]
  %v38 = vld [vmem:[%s0 + $0x38] sm:$0xf]
  %v39 = vld [vmem:[%s0 + $0x3c] sm:$0xf]
  %v40 = vld [vmem:[%s0 + $0x40] sm:$0xf]
  %v41 = vld [vmem:[%s0 + $0x44] sm:$0xf]
  %v42 = vld [vmem:[%s0 + $0x48] sm:$0xf]
  %v43 = vld [vmem:[%s0 + $0x4c] sm:$0xf]
  %v44 = vld [vmem:[%s0 + $0x50] sm:$0xf]
  %v45 = vld [vmem:[%s0 + $0x54] sm:$0xf]
  %v46 = vld [vmem:[%s0 + $0x58] sm:$0xf]
  %v47 = vld [vmem:[%s0 + $0x5c] sm:$0xf]
  %v48 = vld [vmem:[%s0 + $0x60] sm:$0xf]
  %v49 = vld [vmem:[%s0 + $0x64] sm:$0xf]
  %v50 = vld [vmem:[%s0 + $0x68] sm:$0xf]
  %v51 = vld [vmem:[%s0 + $0x6c] sm:$0xf]
  %v52 = vld [vmem:[%s0 + $0x70] sm:$0xf]
  %v53 = vld [vmem:[%s0 + $0x74] sm:$0xf]
  %v54 = vld [vmem:[%s0 + $0x78] sm:$0xf]
  %v55 = vld [vmem:[%s0 + $0x7c] sm:$0xf]
  %v56 = vld [vmem:[%s0 + $0x80] sm:$0xf]
  %v57 = vld [vmem:[%s0 + $0x84] sm:$0xf]
  %v58 = vld [vmem:[%s0 + $0x88] sm:$0xf]
  %v59 = vld [vmem:[%s0 + $0x8c] sm:$0xf]
  %v60 = vld [vmem:[%s0 + $0x90] sm:$0xf]
  %v61 = vld [vmem:[%s0 + $0x94] sm:$0xf]
  %v62 = vld [vmem:[%s0 + $0x98] sm:$0xf]
  %v63 = vld [vmem:[%s0 + $0x9c] sm:$0xf]
  %v64 = vld [vmem:[%s0 + $0xa0] sm:$0xf]
  %v65 = vld [vmem:[%s0 + $0xa4] sm:$0xf]
  %v66 = vld [vmem:[%s0 + $0xa8] sm:$0xf]
  %v67 = vld [vmem:[%s0 + $0xac] sm:$0xf]
  %v68 = vld [vmem:[%s0 + $0xb0] sm:$0xf]
  %v69 = vld [vmem:[%s0 + $0xb4] sm:$0xf]
  %v70 = vld [vmem:[%s0 + $0xb8] sm:$0xf]
  %v71 = vld [vmem:[%s0 + $0xbc] sm:$0xf]
  %v72 = vld [vmem:[%s0 + $0xc0] sm:$0xf]
  %v73 = vld [vmem:[%s0 + $0xc4] sm:$0xf]
  %v74 = vld [vmem:[%s0 + $0xc8] sm:$0xf]
  %v75 = vld [vmem:[%s0 + $0xcc] sm:$0xf]
  %v76 = vld [vmem:[%s0 + $0xd0] sm:$0xf]
  %v77 = vld [vmem:[%s0 + $0xd4] sm:$0xf]
  %v78 = vld [vmem:[%s0 + $0xd8] sm:$0xf]
  %v79 = vld [vmem:[%s0 + $0xdc] sm:$0xf]
  %v80 = vld [vmem:[%s0 + $0xe0] sm:$0xf]
  %v81 = vld [vmem:[%s0 + $0xe4] sm:$0xf]
  %v82 = vld [vmem:[%s0 + $0xe8] sm:$0xf]
  %v83 = vld [vmem:[%s0 + $0xec] sm:$0xf]
  %v84 = vld [vmem:[%s0 + $0xf0] sm:$0xf]
  %v85 = vld [vmem:[%s0 + $0xf4] sm:$0xf]
  %v86 = vld [vmem:[%s0 + $0xf8] sm:$0xf]
  %v87 = vld [vmem:[%s0 + $0xfc] sm:$0xf]
  %v88 = vld [vmem:[%s1] sm:$0xf]
  %v89 = vld [vmem:[%s1 + $0x4] sm:$0xf]
  %v90 = vld [vmem:[%s1 + $0x8] sm:$0xf]
  %v91 = vld [vmem:[%s1 + $0xc] sm:$0xf]
  %v92 = vld [vmem:[%s1 + $0x10] sm:$0xf]
  %v93 = vld [vmem:[%s1 + $0x14] sm:$0xf]
  %v94 = vld [vmem:[%s1 + $0x18] sm:$0xf]
  %v95 = vld [vmem:[%s1 + $0x1c] sm:$0xf]
  %v96 = vld [vmem:[%s1 + $0x20] sm:$0xf]
  %v97 = vld [vmem:[%s1 + $0x24] sm:$0xf]
  %v98 = vld [vmem:[%s1 + $0x28] sm:$0xf]
  %v99 = vld [vmem:[%s1 + $0x2c] sm:$0xf]
  %v100 = vld [vmem:[%s1 + $0x30] sm:$0xf]
  %v101 = vld [vmem:[%s1 + $0x34] sm:$0xf]
  %v102 = vld [vmem:[%s1 + $0x38] sm:$0xf]
  %v103 = vld [vmem:[%s1 + $0x3c] sm:$0xf]
  %v104 = vld [vmem:[%s2] sm:$0x1]
  %v106 = vlaneseq
  %v107 = vshrl.u32 %v106, 7
  %v108 = vsub.s32 0, %v107
  %v109 = vrot.slane %v104, %v108
  %v175 = vunpack.c.l.b16 %v24
  %v176 = vunpack.c.l.b16 %v25
  %v177 = vunpack.c.l.b16 %v26
  %v178 = vunpack.c.l.b16 %v27
  %v179 = vunpack.c.l.b16 %v28
  %v180 = vunpack.c.l.b16 %v29
  %v181 = vunpack.c.l.b16 %v30
  %v182 = vunpack.c.l.b16 %v31
  %v183 = vunpack.c.l.b16 %v32
  %v184 = vunpack.c.l.b16 %v33
  %v185 = vunpack.c.l.b16 %v34
  %v186 = vunpack.c.l.b16 %v35
  %v187 = vunpack.c.l.b16 %v36
  %v188 = vunpack.c.l.b16 %v37
  %v189 = vunpack.c.l.b16 %v38
  %v190 = vunpack.c.l.b16 %v39
  %v191 = vunpack.c.l.b16 %v40
  %v192 = vunpack.c.l.b16 %v41
  %v193 = vunpack.c.l.b16 %v42
  %v194 = vunpack.c.l.b16 %v43
  %v195 = vunpack.c.l.b16 %v44
  %v196 = vunpack.c.l.b16 %v45
  %v197 = vunpack.c.l.b16 %v46
  %v198 = vunpack.c.l.b16 %v47
  %v199 = vunpack.c.l.b16 %v48
  %v200 = vunpack.c.l.b16 %v49
  %v201 = vunpack.c.l.b16 %v50
  %v202 = vunpack.c.l.b16 %v51
  %v203 = vunpack.c.l.b16 %v52
  %v204 = vunpack.c.l.b16 %v53
  %v205 = vunpack.c.l.b16 %v54
  %v206 = vunpack.c.l.b16 %v55
  %v207 = vunpack.c.l.b16 %v56
  %v208 = vunpack.c.l.b16 %v57
  %v209 = vunpack.c.l.b16 %v58
  %v210 = vunpack.c.l.b16 %v59
  %v211 = vunpack.c.l.b16 %v60
  %v212 = vunpack.c.l.b16 %v61
  %v213 = vunpack.c.l.b16 %v62
  %v214 = vunpack.c.l.b16 %v63
  %v215 = vunpack.c.l.b16 %v64
  %v216 = vunpack.c.l.b16 %v65
  %v217 = vunpack.c.l.b16 %v66
  %v218 = vunpack.c.l.b16 %v67
  %v219 = vunpack.c.l.b16 %v68
  %v220 = vunpack.c.l.b16 %v69
  %v221 = vunpack.c.l.b16 %v70
  %v222 = vunpack.c.l.b16 %v71
  %v223 = vunpack.c.l.b16 %v72
  %v224 = vunpack.c.l.b16 %v73
  %v225 = vunpack.c.l.b16 %v74
  %v226 = vunpack.c.l.b16 %v75
  %v227 = vunpack.c.l.b16 %v76
  %v228 = vunpack.c.l.b16 %v77
  %v229 = vunpack.c.l.b16 %v78
  %v230 = vunpack.c.l.b16 %v79
  %v231 = vunpack.c.l.b16 %v80
  %v232 = vunpack.c.l.b16 %v81
  %v233 = vunpack.c.l.b16 %v82
  %v234 = vunpack.c.l.b16 %v83
  %v235 = vunpack.c.l.b16 %v84
  %v236 = vunpack.c.l.b16 %v85
  %v237 = vunpack.c.l.b16 %v86
  %v238 = vunpack.c.l.b16 %v87
  %v239 = vpack.c.b16 %v176, %v175
  %v240 = vpack.c.b16 %v178, %v177
  %v241 = vpack.c.b16 %v180, %v179
  %v242 = vpack.c.b16 %v182, %v181
  %v243 = vpack.c.b16 %v184, %v183
  %v244 = vpack.c.b16 %v186, %v185
  %v245 = vpack.c.b16 %v188, %v187
  %v246 = vpack.c.b16 %v190, %v189
  %v247 = vpack.c.b16 %v192, %v191
  %v248 = vpack.c.b16 %v194, %v193
  %v249 = vpack.c.b16 %v196, %v195
  %v250 = vpack.c.b16 %v198, %v197
  %v251 = vpack.c.b16 %v200, %v199
  %v252 = vpack.c.b16 %v202, %v201
  %v253 = vpack.c.b16 %v204, %v203
  %v254 = vpack.c.b16 %v206, %v205
  %v255 = vpack.c.b16 %v208, %v207
  %v256 = vpack.c.b16 %v210, %v209
  %v257 = vpack.c.b16 %v212, %v211
  %v258 = vpack.c.b16 %v214, %v213
  %v259 = vpack.c.b16 %v216, %v215
  %v260 = vpack.c.b16 %v218, %v217
  %v261 = vpack.c.b16 %v220, %v219
  %v262 = vpack.c.b16 %v222, %v221
  %v263 = vpack.c.b16 %v224, %v223
  %v264 = vpack.c.b16 %v226, %v225
  %v265 = vpack.c.b16 %v228, %v227
  %v266 = vpack.c.b16 %v230, %v229
  %v267 = vpack.c.b16 %v232, %v231
  %v268 = vpack.c.b16 %v234, %v233
  %v269 = vpack.c.b16 %v236, %v235
  %v270 = vpack.c.b16 %v238, %v237
  %v319 = vunpack.c.l.b16 %v88
  %v320 = vunpack.c.l.b16 %v89
  %v321 = vunpack.c.l.b16 %v90
  %v322 = vunpack.c.l.b16 %v91
  %v323 = vunpack.c.l.b16 %v92
  %v324 = vunpack.c.l.b16 %v93
  %v325 = vunpack.c.l.b16 %v94
  %v326 = vunpack.c.l.b16 %v95
  %v327 = vunpack.c.l.b16 %v96
  %v328 = vunpack.c.l.b16 %v97
  %v329 = vunpack.c.l.b16 %v98
  %v330 = vunpack.c.l.b16 %v99
  %v331 = vunpack.c.l.b16 %v100
  %v332 = vunpack.c.l.b16 %v101
  %v333 = vunpack.c.l.b16 %v102
  %v334 = vunpack.c.l.b16 %v103
  %v335 = vpack.c.b16 %v320, %v319
  %v336 = vpack.c.b16 %v322, %v321
  %v337 = vpack.c.b16 %v324, %v323
  %v338 = vpack.c.b16 %v326, %v325
  %v339 = vpack.c.b16 %v328, %v327
  %v340 = vpack.c.b16 %v330, %v329
  %v341 = vpack.c.b16 %v332, %v331
  %v342 = vpack.c.b16 %v334, %v333
  %351 = vmatprep.subr.bf16.mxu0 0
  %352 = vmatpush1.bf16.msra.mxu0 %v335
  %353 = vmatprep.subr.bf16.mxu0 0
  %354 = vmatpush1.bf16.msra.mxu0 %v336
  %355 = vmatprep.subr.bf16.mxu0 0
  %356 = vmatpush1.bf16.msra.mxu0 %v337
  %357 = vmatprep.subr.bf16.mxu0 0
  %358 = vmatpush1.bf16.msra.mxu0 %v338
  %359 = vmatprep.subr.bf16.mxu0 0
  %360 = vmatpush1.bf16.msra.mxu0 %v339
  %361 = vmatprep.subr.bf16.mxu0 0
  %362 = vmatpush1.bf16.msra.mxu0 %v340
  %363 = vmatprep.subr.bf16.mxu0 0
  %364 = vmatpush1.bf16.msra.mxu0 %v341
  %365 = vmatprep.subr.bf16.mxu0 0
  %366 = vmatpush1.bf16.msra.mxu0 %v342
  %367 = vmatprep.subr.bf16.mxu0 0
  %368 = vmatpush1.bf16.msra.mxu0 0
  %369 = vmatprep.subr.bf16.mxu0 0
  %370 = vmatpush1.bf16.msra.mxu0 0
  %371 = vmatprep.subr.bf16.mxu0 0
  %372 = vmatpush1.bf16.msra.mxu0 0
  %373 = vmatprep.subr.bf16.mxu0 0
  %374 = vmatpush1.bf16.msra.mxu0 0
  %375 = vmatprep.subr.bf16.mxu0 0
  %376 = vmatpush1.bf16.msra.mxu0 0
  %377 = vmatprep.subr.bf16.mxu0 0
  %378 = vmatpush1.bf16.msra.mxu0 0
  %379 = vmatprep.subr.bf16.mxu0 0
  %380 = vmatpush1.bf16.msra.mxu0 0
  %381 = vmatprep.subr.bf16.mxu0 0
  %382 = vmatpush1.bf16.msra.mxu0 0
  %383 = vmatprep.mubr.bf16.mxu0 0
  %384 = vmatmul.mubr.bf16.gmra.mrb[0].mxu0 %v239
  %v385 = vpop.f32.mrb[0].mxu0
  %v386 = vadd.f32 %v109, %v385
  %v387 = vpop.f32.mrb[0].mxu0
  %v388 = vpop.f32.mrb[0].mxu0
  %v389 = vadd.f32 %v109, %v388
  %v390 = vpop.f32.mrb[0].mxu0
  %391 = vmatprep.mubr.bf16.mxu0 0
  %392 = vmatmul.mubr.bf16.gmra.mrb[0].mxu0 %v240
  %v393 = vpop.f32.mrb[0].mxu0
  %v394 = vadd.f32 %v109, %v393
  %v395 = vpop.f32.mrb[0].mxu0
  %v396 = vpop.f32.mrb[0].mxu0
  %v397 = vadd.f32 %v109, %v396
  %v398 = vpop.f32.mrb[0].mxu0
  %399 = vmatprep.mubr.bf16.mxu0 0
  %400 = vmatmul.mubr.bf16.gmra.mrb[0].mxu0 %v241
  %v401 = vpop.f32.mrb[0].mxu0
  %v402 = vadd.f32 %v109, %v401
  %v403 = vpop.f32.mrb[0].mxu0
  %v404 = vpop.f32.mrb[0].mxu0
  %v405 = vadd.f32 %v109, %v404
  %v406 = vpop.f32.mrb[0].mxu0
  %407 = vmatprep.mubr.bf16.mxu0 0
  %408 = vmatmul.mubr.bf16.gmra.mrb[0].mxu0 %v242
  %v409 = vpop.f32.mrb[0].mxu0
  %v410 = vadd.f32 %v109, %v409
  %v411 = vpop.f32.mrb[0].mxu0
  %v412 = vpop.f32.mrb[0].mxu0
  %v413 = vadd.f32 %v109, %v412
  %v414 = vpop.f32.mrb[0].mxu0
  %415 = vmatprep.mubr.bf16.mxu0 0
  %416 = vmatmul.mubr.bf16.gmra.mrb[0].mxu0 %v243
  %v417 = vpop.f32.mrb[0].mxu0
  %v418 = vadd.f32 %v109, %v417
  %v419 = vpop.f32.mrb[0].mxu0
  %v420 = vpop.f32.mrb[0].mxu0
  %v421 = vadd.f32 %v109, %v420
  %v422 = vpop.f32.mrb[0].mxu0
  %423 = vmatprep.mubr.bf16.mxu0 0
  %424 = vmatmul.mubr.bf16.gmra.mrb[0].mxu0 %v244
  %v425 = vpop.f32.mrb[0].mxu0
  %v426 = vadd.f32 %v109, %v425
  %v427 = vpop.f32.mrb[0].mxu0
  %v428 = vpop.f32.mrb[0].mxu0
  %v429 = vadd.f32 %v109, %v428
  %v430 = vpop.f32.mrb[0].mxu0
  %431 = vmatprep.mubr.bf16.mxu0 0
  %432 = vmatmul.mubr.bf16.gmra.mrb[0].mxu0 %v245
  %v433 = vpop.f32.mrb[0].mxu0
  %v434 = vadd.f32 %v109, %v433
  %v435 = vpop.f32.mrb[0].mxu0
  %v436 = vpop.f32.mrb[0].mxu0
  %v437 = vadd.f32 %v109, %v436
  %v438 = vpop.f32.mrb[0].mxu0
  %439 = vmatprep.mubr.bf16.mxu0 0
  %440 = vmatmul.mubr.bf16.gmra.mrb[0].mxu0 %v246
  %v441 = vpop.f32.mrb[0].mxu0
  %v442 = vadd.f32 %v109, %v441
  %v443 = vpop.f32.mrb[0].mxu0
  %v444 = vpop.f32.mrb[0].mxu0
  %v445 = vadd.f32 %v109, %v444
  %v446 = vpop.f32.mrb[0].mxu0
  %447 = vmatprep.mubr.bf16.mxu0 0
  %448 = vmatmul.mubr.bf16.gmra.mrb[0].mxu0 %v247
  %v449 = vpop.f32.mrb[0].mxu0
  %v450 = vadd.f32 %v109, %v449
  %v451 = vpop.f32.mrb[0].mxu0
  %v452 = vpop.f32.mrb[0].mxu0
  %v453 = vadd.f32 %v109, %v452
  %v454 = vpop.f32.mrb[0].mxu0
  %455 = vmatprep.mubr.bf16.mxu0 0
  %456 = vmatmul.mubr.bf16.gmra.mrb[0].mxu0 %v248
  %v457 = vpop.f32.mrb[0].mxu0
  %v458 = vadd.f32 %v109, %v457
  %v459 = vpop.f32.mrb[0].mxu0
  %v460 = vpop.f32.mrb[0].mxu0
  %v461 = vadd.f32 %v109, %v460
  %v462 = vpop.f32.mrb[0].mxu0
  %463 = vmatprep.mubr.bf16.mxu0 0
  %464 = vmatmul.mubr.bf16.gmra.mrb[0].mxu0 %v249
  %v465 = vpop.f32.mrb[0].mxu0
  %v466 = vadd.f32 %v109, %v465
  %v467 = vpop.f32.mrb[0].mxu0
  %v468 = vpop.f32.mrb[0].mxu0
  %v469 = vadd.f32 %v109, %v468
  %v470 = vpop.f32.mrb[0].mxu0
  %471 = vmatprep.mubr.bf16.mxu0 0
  %472 = vmatmul.mubr.bf16.gmra.mrb[0].mxu0 %v250
  %v473 = vpop.f32.mrb[0].mxu0
  %v474 = vadd.f32 %v109, %v473
  %v475 = vpop.f32.mrb[0].mxu0
  %v476 = vpop.f32.mrb[0].mxu0
  %v477 = vadd.f32 %v109, %v476
  %v478 = vpop.f32.mrb[0].mxu0
  %479 = vmatprep.mubr.bf16.mxu0 0
  %480 = vmatmul.mubr.bf16.gmra.mrb[0].mxu0 %v251
  %v481 = vpop.f32.mrb[0].mxu0
  %v482 = vadd.f32 %v109, %v481
  %v483 = vpop.f32.mrb[0].mxu0
  %v484 = vpop.f32.mrb[0].mxu0
  %v485 = vadd.f32 %v109, %v484
  %v486 = vpop.f32.mrb[0].mxu0
  %487 = vmatprep.mubr.bf16.mxu0 0
  %488 = vmatmul.mubr.bf16.gmra.mrb[0].mxu0 %v252
  %v489 = vpop.f32.mrb[0].mxu0
  %v490 = vadd.f32 %v109, %v489
  %v491 = vpop.f32.mrb[0].mxu0
  %v492 = vpop.f32.mrb[0].mxu0
  %v493 = vadd.f32 %v109, %v492
  %v494 = vpop.f32.mrb[0].mxu0
  %495 = vmatprep.mubr.bf16.mxu0 0
  %496 = vmatmul.mubr.bf16.gmra.mrb[0].mxu0 %v253
  %v497 = vpop.f32.mrb[0].mxu0
  %v498 = vadd.f32 %v109, %v497
  %v499 = vpop.f32.mrb[0].mxu0
  %v500 = vpop.f32.mrb[0].mxu0
  %v501 = vadd.f32 %v109, %v500
  %v502 = vpop.f32.mrb[0].mxu0
  %503 = vmatprep.mubr.bf16.mxu0 0
  %504 = vmatmul.mubr.bf16.gmra.mrb[0].mxu0 %v254
  %v505 = vpop.f32.mrb[0].mxu0
  %v506 = vadd.f32 %v109, %v505
  %v507 = vpop.f32.mrb[0].mxu0
  %v508 = vpop.f32.mrb[0].mxu0
  %v509 = vadd.f32 %v109, %v508
  %v510 = vpop.f32.mrb[0].mxu0
  %511 = vmatprep.mubr.bf16.mxu0 0
  %512 = vmatmul.mubr.bf16.gmra.mrb[0].mxu0 %v255
  %v513 = vpop.f32.mrb[0].mxu0
  %v514 = vadd.f32 %v109, %v513
  %v515 = vpop.f32.mrb[0].mxu0
  %v516 = vpop.f32.mrb[0].mxu0
  %v517 = vadd.f32 %v109, %v516
  %v518 = vpop.f32.mrb[0].mxu0
  %519 = vmatprep.mubr.bf16.mxu0 0
  %520 = vmatmul.mubr.bf16.gmra.mrb[0].mxu0 %v256
  %v521 = vpop.f32.mrb[0].mxu0
  %v522 = vadd.f32 %v109, %v521
  %v523 = vpop.f32.mrb[0].mxu0
  %v524 = vpop.f32.mrb[0].mxu0
  %v525 = vadd.f32 %v109, %v524
  %v526 = vpop.f32.mrb[0].mxu0
  %527 = vmatprep.mubr.bf16.mxu0 0
  %528 = vmatmul.mubr.bf16.gmra.mrb[0].mxu0 %v257
  %v529 = vpop.f32.mrb[0].mxu0
  %v530 = vadd.f32 %v109, %v529
  %v531 = vpop.f32.mrb[0].mxu0
  %v532 = vpop.f32.mrb[0].mxu0
  %v533 = vadd.f32 %v109, %v532
  %v534 = vpop.f32.mrb[0].mxu0
  %535 = vmatprep.mubr.bf16.mxu0 0
  %536 = vmatmul.mubr.bf16.gmra.mrb[0].mxu0 %v258
  %v537 = vpop.f32.mrb[0].mxu0
  %v538 = vadd.f32 %v109, %v537
  %v539 = vpop.f32.mrb[0].mxu0
  %v540 = vpop.f32.mrb[0].mxu0
  %v541 = vadd.f32 %v109, %v540
  %v542 = vpop.f32.mrb[0].mxu0
  %543 = vmatprep.mubr.bf16.mxu0 0
  %544 = vmatmul.mubr.bf16.gmra.mrb[0].mxu0 %v259
  %v545 = vpop.f32.mrb[0].mxu0
  %v546 = vadd.f32 %v109, %v545
  %v547 = vpop.f32.mrb[0].mxu0
  %v548 = vpop.f32.mrb[0].mxu0
  %v549 = vadd.f32 %v109, %v548
  %v550 = vpop.f32.mrb[0].mxu0
  %551 = vmatprep.mubr.bf16.mxu0 0
  %552 = vmatmul.mubr.bf16.gmra.mrb[0].mxu0 %v260
  %v553 = vpop.f32.mrb[0].mxu0
  %v554 = vadd.f32 %v109, %v553
  %v555 = vpop.f32.mrb[0].mxu0
  %v556 = vpop.f32.mrb[0].mxu0
  %v557 = vadd.f32 %v109, %v556
  %v558 = vpop.f32.mrb[0].mxu0
  %559 = vmatprep.mubr.bf16.mxu0 0
  %560 = vmatmul.mubr.bf16.gmra.mrb[0].mxu0 %v261
  %v561 = vpop.f32.mrb[0].mxu0
  %v562 = vadd.f32 %v109, %v561
  %v563 = vpop.f32.mrb[0].mxu0
  %v564 = vpop.f32.mrb[0].mxu0
  %v565 = vadd.f32 %v109, %v564
  %v566 = vpop.f32.mrb[0].mxu0
  %567 = vmatprep.mubr.bf16.mxu0 0
  %568 = vmatmul.mubr.bf16.gmra.mrb[0].mxu0 %v262
  %v569 = vpop.f32.mrb[0].mxu0
  %v570 = vadd.f32 %v109, %v569
  %v571 = vpop.f32.mrb[0].mxu0
  %v572 = vpop.f32.mrb[0].mxu0
  %v573 = vadd.f32 %v109, %v572
  %v574 = vpop.f32.mrb[0].mxu0
  %575 = vmatprep.mubr.bf16.mxu0 0
  %576 = vmatmul.mubr.bf16.gmra.mrb[0].mxu0 %v263
  %v577 = vpop.f32.mrb[0].mxu0
  %v578 = vadd.f32 %v109, %v577
  %v579 = vpop.f32.mrb[0].mxu0
  %v580 = vpop.f32.mrb[0].mxu0
  %v581 = vadd.f32 %v109, %v580
  %v582 = vpop.f32.mrb[0].mxu0
  %583 = vmatprep.mubr.bf16.mxu0 0
  %584 = vmatmul.mubr.bf16.gmra.mrb[0].mxu0 %v264
  %v585 = vpop.f32.mrb[0].mxu0
  %v586 = vadd.f32 %v109, %v585
  %v587 = vpop.f32.mrb[0].mxu0
  %v588 = vpop.f32.mrb[0].mxu0
  %v589 = vadd.f32 %v109, %v588
  %v590 = vpop.f32.mrb[0].mxu0
  %591 = vmatprep.mubr.bf16.mxu0 0
  %592 = vmatmul.mubr.bf16.gmra.mrb[0].mxu0 %v265
  %v593 = vpop.f32.mrb[0].mxu0
  %v594 = vadd.f32 %v109, %v593
  %v595 = vpop.f32.mrb[0].mxu0
  %v596 = vpop.f32.mrb[0].mxu0
  %v597 = vadd.f32 %v109, %v596
  %v598 = vpop.f32.mrb[0].mxu0
  %599 = vmatprep.mubr.bf16.mxu0 0
  %600 = vmatmul.mubr.bf16.gmra.mrb[0].mxu0 %v266
  %v601 = vpop.f32.mrb[0].mxu0
  %v602 = vadd.f32 %v109, %v601
  %v603 = vpop.f32.mrb[0].mxu0
  %v604 = vpop.f32.mrb[0].mxu0
  %v605 = vadd.f32 %v109, %v604
  %v606 = vpop.f32.mrb[0].mxu0
  %607 = vmatprep.mubr.bf16.mxu0 0
  %608 = vmatmul.mubr.bf16.gmra.mrb[0].mxu0 %v267
  %v609 = vpop.f32.mrb[0].mxu0
  %v610 = vadd.f32 %v109, %v609
  %v611 = vpop.f32.mrb[0].mxu0
  %v612 = vpop.f32.mrb[0].mxu0
  %v613 = vadd.f32 %v109, %v612
  %v614 = vpop.f32.mrb[0].mxu0
  %615 = vmatprep.mubr.bf16.mxu0 0
  %616 = vmatmul.mubr.bf16.gmra.mrb[0].mxu0 %v268
  %v617 = vpop.f32.mrb[0].mxu0
  %v618 = vadd.f32 %v109, %v617
  %v619 = vpop.f32.mrb[0].mxu0
  %v620 = vpop.f32.mrb[0].mxu0
  %v621 = vadd.f32 %v109, %v620
  %v622 = vpop.f32.mrb[0].mxu0
  %623 = vmatprep.mubr.bf16.mxu0 0
  %624 = vmatmul.mubr.bf16.gmra.mrb[0].mxu0 %v269
  %v625 = vpop.f32.mrb[0].mxu0
  %v626 = vadd.f32 %v109, %v625
  %v627 = vpop.f32.mrb[0].mxu0
  %v628 = vpop.f32.mrb[0].mxu0
  %v629 = vadd.f32 %v109, %v628
  %v630 = vpop.f32.mrb[0].mxu0
  %631 = vmatprep.mubr.bf16.mxu0 0
  %632 = vmatmul.mubr.bf16.gmra.mrb[0].mxu0 %v270
  %v633 = vpop.f32.mrb[0].mxu0
  %v634 = vadd.f32 %v109, %v633
  %v635 = vpop.f32.mrb[0].mxu0
  %v636 = vpop.f32.mrb[0].mxu0
  %v637 = vadd.f32 %v109, %v636
  %v638 = vpop.f32.mrb[0].mxu0
  %639 = vdwg.mxu0
  %v640 = vmax.f32 %v386, 0.0
  %v641 = vmax.f32 %v389, 0.0
  %v642 = vmax.f32 %v394, 0.0
  %v643 = vmax.f32 %v397, 0.0
  %v644 = vmax.f32 %v402, 0.0
  %v645 = vmax.f32 %v405, 0.0
  %v646 = vmax.f32 %v410, 0.0
  %v647 = vmax.f32 %v413, 0.0
  %v648 = vmax.f32 %v418, 0.0
  %v649 = vmax.f32 %v421, 0.0
  %v650 = vmax.f32 %v426, 0.0
  %v651 = vmax.f32 %v429, 0.0
  %v652 = vmax.f32 %v434, 0.0
  %v653 = vmax.f32 %v437, 0.0
  %v654 = vmax.f32 %v442, 0.0
  %v655 = vmax.f32 %v445, 0.0
  %v656 = vmax.f32 %v450, 0.0
  %v657 = vmax.f32 %v453, 0.0
  %v658 = vmax.f32 %v458, 0.0
  %v659 = vmax.f32 %v461, 0.0
  %v660 = vmax.f32 %v466, 0.0
  %v661 = vmax.f32 %v469, 0.0
  %v662 = vmax.f32 %v474, 0.0
  %v663 = vmax.f32 %v477, 0.0
  %v664 = vmax.f32 %v482, 0.0
  %v665 = vmax.f32 %v485, 0.0
  %v666 = vmax.f32 %v490, 0.0
  %v667 = vmax.f32 %v493, 0.0
  %v668 = vmax.f32 %v498, 0.0
  %v669 = vmax.f32 %v501, 0.0
  %v670 = vmax.f32 %v506, 0.0
  %v671 = vmax.f32 %v509, 0.0
  %v672 = vmax.f32 %v514, 0.0
  %v673 = vmax.f32 %v517, 0.0
  %v674 = vmax.f32 %v522, 0.0
  %v675 = vmax.f32 %v525, 0.0
  %v676 = vmax.f32 %v530, 0.0
  %v677 = vmax.f32 %v533, 0.0
  %v678 = vmax.f32 %v538, 0.0
  %v679 = vmax.f32 %v541, 0.0
  %v680 = vmax.f32 %v546, 0.0
  %v681 = vmax.f32 %v549, 0.0
  %v682 = vmax.f32 %v554, 0.0
  %v683 = vmax.f32 %v557, 0.0
  %v684 = vmax.f32 %v562, 0.0
  %v685 = vmax.f32 %v565, 0.0
  %v686 = vmax.f32 %v570, 0.0
  %v687 = vmax.f32 %v573, 0.0
  %v688 = vmax.f32 %v578, 0.0
  %v689 = vmax.f32 %v581, 0.0
  %v690 = vmax.f32 %v586, 0.0
  %v691 = vmax.f32 %v589, 0.0
  %v692 = vmax.f32 %v594, 0.0
  %v693 = vmax.f32 %v597, 0.0
  %v694 = vmax.f32 %v602, 0.0
  %v695 = vmax.f32 %v605, 0.0
  %v696 = vmax.f32 %v610, 0.0
  %v697 = vmax.f32 %v613, 0.0
  %v698 = vmax.f32 %v618, 0.0
  %v699 = vmax.f32 %v621, 0.0
  %v700 = vmax.f32 %v626, 0.0
  %v701 = vmax.f32 %v629, 0.0
  %v702 = vmax.f32 %v634, 0.0
  %v703 = vmax.f32 %v637, 0.0
  %704 = vst [vmem:[#allocation2] sm:$0xff] 0.0
  %705 = vst [vmem:[#allocation2 + $0x8] sm:$0xff] 0.0
  %706 = vst [vmem:[#allocation2 + $0x10] sm:$0x3] 0.0
  %707 = vst [vmem:[#allocation2 + $0x18] sm:$0xff] 0.0
  %708 = vst [vmem:[#allocation2 + $0x20] sm:$0xff] 0.0
  %709 = vst [vmem:[#allocation2 + $0x28] sm:$0x3] 0.0
  %710 = vst [vmem:[#allocation2 + $0x30] sm:$0xff] 0.0
  %711 = vst [vmem:[#allocation2 + $0x38] sm:$0xff] 0.0
  %712 = vst [vmem:[#allocation2 + $0x40] sm:$0x3] 0.0
  %713 = vst [vmem:[#allocation2 + $0x48] sm:$0xff] 0.0
  %714 = vst [vmem:[#allocation2 + $0x50] sm:$0xff] 0.0
  %715 = vst [vmem:[#allocation2 + $0x58] sm:$0x3] 0.0
  %716 = vst [vmem:[#allocation2 + $0x60] sm:$0xff] 0.0
  %717 = vst [vmem:[#allocation2 + $0x68] sm:$0xff] 0.0
  %718 = vst [vmem:[#allocation2 + $0x70] sm:$0x3] 0.0
  %719 = vst [vmem:[#allocation2 + $0x78] sm:$0xff] 0.0
  %720 = vst [vmem:[#allocation2 + $0x80] sm:$0xff] 0.0
  %721 = vst [vmem:[#allocation2 + $0x88] sm:$0x3] 0.0
  %722 = vst [vmem:[#allocation2 + $0x90] sm:$0xff] 0.0
  %723 = vst [vmem:[#allocation2 + $0x98] sm:$0xff] 0.0
  %724 = vst [vmem:[#allocation2 + $0xa0] sm:$0x3] 0.0
  %725 = vst [vmem:[#allocation2 + $0xa8] sm:$0xff] 0.0
  %726 = vst [vmem:[#allocation2 + $0xb0] sm:$0xff] 0.0
  %727 = vst [vmem:[#allocation2 + $0xb8] sm:$0x3] 0.0
  %728 = vst [vmem:[#allocation2 + $0xc0] sm:$0xff] 0.0
  %729 = vst [vmem:[#allocation2 + $0xc8] sm:$0xff] 0.0
  %730 = vst [vmem:[#allocation2 + $0xd0] sm:$0x3] 0.0
  %731 = vst [vmem:[#allocation2 + $0xd8] sm:$0xff] 0.0
  %732 = vst [vmem:[#allocation2 + $0xe0] sm:$0xff] 0.0
  %733 = vst [vmem:[#allocation2 + $0xe8] sm:$0x3] 0.0
  %734 = vst [vmem:[#allocation2 + $0xf0] sm:$0xff] 0.0
  %735 = vst [vmem:[#allocation2 + $0xf8] sm:$0xff] 0.0
  %736 = vst [vmem:[#allocation2 + $0x100] sm:$0x3] 0.0
  %737 = vst [vmem:[#allocation2 + $0x108] sm:$0xff] 0.0
  %738 = vst [vmem:[#allocation2 + $0x110] sm:$0xff] 0.0
  %739 = vst [vmem:[#allocation2 + $0x118] sm:$0x3] 0.0
  %740 = vst [vmem:[#allocation2 + $0x120] sm:$0xff] 0.0
  %741 = vst [vmem:[#allocation2 + $0x128] sm:$0xff] 0.0
  %742 = vst [vmem:[#allocation2 + $0x130] sm:$0x3] 0.0
  %743 = vst [vmem:[#allocation2 + $0x138] sm:$0xff] 0.0
  %744 = vst [vmem:[#allocation2 + $0x140] sm:$0xff] 0.0
  %745 = vst [vmem:[#allocation2 + $0x148] sm:$0x3] 0.0
  %746 = vst [vmem:[#allocation2 + $0x150] sm:$0xff] 0.0
  %747 = vst [vmem:[#allocation2 + $0x158] sm:$0xff] 0.0
  %748 = vst [vmem:[#allocation2 + $0x160] sm:$0x3] 0.0
  %749 = vst [vmem:[#allocation2 + $0x168] sm:$0xff] 0.0
  %750 = vst [vmem:[#allocation2 + $0x170] sm:$0xff] 0.0
  %751 = vst [vmem:[#allocation2 + $0x178] sm:$0x3] 0.0
  %752 = vst [vmem:[#allocation2 + $0x180] sm:$0xff] 0.0
  %753 = vst [vmem:[#allocation2 + $0x188] sm:$0xff] 0.0
  %754 = vst [vmem:[#allocation2 + $0x190] sm:$0x3] 0.0
  %755 = vst [vmem:[#allocation2 + $0x198] sm:$0xff] 0.0
  %756 = vst [vmem:[#allocation2 + $0x1a0] sm:$0xff] 0.0
  %757 = vst [vmem:[#allocation2 + $0x1a8] sm:$0x3] 0.0
  %758 = vst [vmem:[#allocation2 + $0x1b0] sm:$0xff] 0.0
  %759 = vst [vmem:[#allocation2 + $0x1b8] sm:$0xff] 0.0
  %760 = vst [vmem:[#allocation2 + $0x1c0] sm:$0x3] 0.0
  %761 = vst [vmem:[#allocation2 + $0x1c8] sm:$0xff] 0.0
  %762 = vst [vmem:[#allocation2 + $0x1d0] sm:$0xff] 0.0
  %763 = vst [vmem:[#allocation2 + $0x1d8] sm:$0x3] 0.0
  %764 = vst [vmem:[#allocation2 + $0x1e0] sm:$0xff] 0.0
  %765 = vst [vmem:[#allocation2 + $0x1e8] sm:$0xff] 0.0
  %766 = vst [vmem:[#allocation2 + $0x1f0] sm:$0x3] 0.0
  %767 = vst [vmem:[#allocation2 + $0x1f8] sm:$0xff] 0.0
  %768 = vst [vmem:[#allocation2 + $0x200] sm:$0xff] 0.0
  %769 = vst [vmem:[#allocation2 + $0x208] sm:$0x3] 0.0
  %770 = vst [vmem:[#allocation2 + $0x210] sm:$0xff] 0.0
  %771 = vst [vmem:[#allocation2 + $0x218] sm:$0xff] 0.0
  %772 = vst [vmem:[#allocation2 + $0x220] sm:$0x3] 0.0
  %773 = vst [vmem:[#allocation2 + $0x228] sm:$0xff] 0.0
  %774 = vst [vmem:[#allocation2 + $0x230] sm:$0xff] 0.0
  %775 = vst [vmem:[#allocation2 + $0x238] sm:$0x3] 0.0
  %776 = vst [vmem:[#allocation2 + $0x240] sm:$0xff] 0.0
  %777 = vst [vmem:[#allocation2 + $0x248] sm:$0xff] 0.0
  %778 = vst [vmem:[#allocation2 + $0x250] sm:$0x3] 0.0
  %779 = vst [vmem:[#allocation2 + $0x258] sm:$0xff] 0.0
  %780 = vst [vmem:[#allocation2 + $0x260] sm:$0xff] 0.0
  %781 = vst [vmem:[#allocation2 + $0x268] sm:$0x3] 0.0
  %782 = vst [vmem:[#allocation2 + $0x270] sm:$0xff] 0.0
  %783 = vst [vmem:[#allocation2 + $0x278] sm:$0xff] 0.0
  %784 = vst [vmem:[#allocation2 + $0x280] sm:$0x3] 0.0
  %785 = vst [vmem:[#allocation2 + $0x288] sm:$0xff] 0.0
  %786 = vst [vmem:[#allocation2 + $0x290] sm:$0xff] 0.0
  %787 = vst [vmem:[#allocation2 + $0x298] sm:$0x3] 0.0
  %788 = vst [vmem:[#allocation2 + $0x2a0] sm:$0xff] 0.0
  %789 = vst [vmem:[#allocation2 + $0x2a8] sm:$0xff] 0.0
  %790 = vst [vmem:[#allocation2 + $0x2b0] sm:$0x3] 0.0
  %791 = vst [vmem:[#allocation2 + $0x2b8] sm:$0xff] 0.0
  %792 = vst [vmem:[#allocation2 + $0x2c0] sm:$0xff] 0.0
  %793 = vst [vmem:[#allocation2 + $0x2c8] sm:$0x3] 0.0
  %794 = vst [vmem:[#allocation2 + $0x2d0] sm:$0xff] 0.0
  %795 = vst [vmem:[#allocation2 + $0x2d8] sm:$0xff] 0.0
  %796 = vst [vmem:[#allocation2 + $0x2e0] sm:$0x3] 0.0
  %797 = vst [vmem:[#allocation2 + $0x2e8] sm:$0xff] 0.0
  %798 = vst [vmem:[#allocation2 + $0x2f0] sm:$0xff] 0.0
  %799 = vst [vmem:[#allocation2 + $0x2f8] sm:$0x3] 0.0
  %800 = vst [vmem:[#allocation2 + $0x300] sm:$0xff] 0.0
  %801 = vst [vmem:[#allocation2 + $0x308] sm:$0xff] 0.0
  %802 = vst [vmem:[#allocation2 + $0x310] sm:$0x3] 0.0
  %803 = vst [vmem:[#allocation2 + $0x318] sm:$0xff] 0.0
  %804 = vst [vmem:[#allocation2 + $0x320] sm:$0xff] 0.0
  %805 = vst [vmem:[#allocation2 + $0x328] sm:$0x3] 0.0
  %806 = vst [vmem:[#allocation2 + $0x330] sm:$0xff] 0.0
  %807 = vst [vmem:[#allocation2 + $0x338] sm:$0xff] 0.0
  %808 = vst [vmem:[#allocation2 + $0x340] sm:$0x3] 0.0
  %809 = vst [vmem:[#allocation2 + $0x348] sm:$0xff] 0.0
  %810 = vst [vmem:[#allocation2 + $0x350] sm:$0xff] 0.0
  %811 = vst [vmem:[#allocation2 + $0x358] sm:$0x3] 0.0
  %s812 = scalar_lea.vmem [#allocation2], 24
  %813 = vst [vmem:[%s812 + $0x1] sm:$0xff] %v640
  %814 = vst [vmem:[%s812 + $0x9] sm:$0xff] %v641
  %815 = vst [vmem:[%s812 + $0x19] sm:$0xff] %v642
  %816 = vst [vmem:[%s812 + $0x21] sm:$0xff] %v643
  %817 = vst [vmem:[%s812 + $0x31] sm:$0xff] %v644
  %818 = vst [vmem:[%s812 + $0x39] sm:$0xff] %v645
  %819 = vst [vmem:[%s812 + $0x49] sm:$0xff] %v646
  %820 = vst [vmem:[%s812 + $0x51] sm:$0xff] %v647
  %821 = vst [vmem:[%s812 + $0x61] sm:$0xff] %v648
  %822 = vst [vmem:[%s812 + $0x69] sm:$0xff] %v649
  %823 = vst [vmem:[%s812 + $0x79] sm:$0xff] %v650
  %824 = vst [vmem:[%s812 + $0x81] sm:$0xff] %v651
  %825 = vst [vmem:[%s812 + $0x91] sm:$0xff] %v652
  %826 = vst [vmem:[%s812 + $0x99] sm:$0xff] %v653
  %827 = vst [vmem:[%s812 + $0xa9] sm:$0xff] %v654
  %828 = vst [vmem:[%s812 + $0xb1] sm:$0xff] %v655
  %829 = vst [vmem:[%s812 + $0xc1] sm:$0xff] %v656
  %830 = vst [vmem:[%s812 + $0xc9] sm:$0xff] %v657
  %831 = vst [vmem:[%s812 + $0xd9] sm:$0xff] %v658
  %832 = vst [vmem:[%s812 + $0xe1] sm:$0xff] %v659
  %833 = vst [vmem:[%s812 + $0xf1] sm:$0xff] %v660
  %834 = vst [vmem:[%s812 + $0xf9] sm:$0xff] %v661
  %835 = vst [vmem:[%s812 + $0x109] sm:$0xff] %v662
  %836 = vst [vmem:[%s812 + $0x111] sm:$0xff] %v663
  %837 = vst [vmem:[%s812 + $0x121] sm:$0xff] %v664
  %838 = vst [vmem:[%s812 + $0x129] sm:$0xff] %v665
  %839 = vst [vmem:[%s812 + $0x139] sm:$0xff] %v666
  %840 = vst [vmem:[%s812 + $0x141] sm:$0xff] %v667
  %841 = vst [vmem:[%s812 + $0x151] sm:$0xff] %v668
  %842 = vst [vmem:[%s812 + $0x159] sm:$0xff] %v669
  %843 = vst [vmem:[%s812 + $0x169] sm:$0xff] %v670
  %844 = vst [vmem:[%s812 + $0x171] sm:$0xff] %v671
  %845 = vst [vmem:[%s812 + $0x1b1] sm:$0xff] %v672
  %846 = vst [vmem:[%s812 + $0x1b9] sm:$0xff] %v673
  %847 = vst [vmem:[%s812 + $0x1c9] sm:$0xff] %v674
  %848 = vst [vmem:[%s812 + $0x1d1] sm:$0xff] %v675
  %849 = vst [vmem:[%s812 + $0x1e1] sm:$0xff] %v676
  %850 = vst [vmem:[%s812 + $0x1e9] sm:$0xff] %v677
  %851 = vst [vmem:[%s812 + $0x1f9] sm:$0xff] %v678
  %852 = vst [vmem:[%s812 + $0x201] sm:$0xff] %v679
  %853 = vst [vmem:[%s812 + $0x211] sm:$0xff] %v680
  %854 = vst [vmem:[%s812 + $0x219] sm:$0xff] %v681
  %855 = vst [vmem:[%s812 + $0x229] sm:$0xff] %v682
  %856 = vst [vmem:[%s812 + $0x231] sm:$0xff] %v683
  %857 = vst [vmem:[%s812 + $0x241] sm:$0xff] %v684
  %858 = vst [vmem:[%s812 + $0x249] sm:$0xff] %v685
  %859 = vst [vmem:[%s812 + $0x259] sm:$0xff] %v686
  %860 = vst [vmem:[%s812 + $0x261] sm:$0xff] %v687
  %861 = vst [vmem:[%s812 + $0x271] sm:$0xff] %v688
  %862 = vst [vmem:[%s812 + $0x279] sm:$0xff] %v689
  %863 = vst [vmem:[%s812 + $0x289] sm:$0xff] %v690
  %864 = vst [vmem:[%s812 + $0x291] sm:$0xff] %v691
  %865 = vst [vmem:[%s812 + $0x2a1] sm:$0xff] %v692
  %866 = vst [vmem:[%s812 + $0x2a9] sm:$0xff] %v693
  %867 = vst [vmem:[%s812 + $0x2b9] sm:$0xff] %v694
  %868 = vst [vmem:[%s812 + $0x2c1] sm:$0xff] %v695
  %869 = vst [vmem:[%s812 + $0x2d1] sm:$0xff] %v696
  %870 = vst [vmem:[%s812 + $0x2d9] sm:$0xff] %v697
  %871 = vst [vmem:[%s812 + $0x2e9] sm:$0xff] %v698
  %872 = vst [vmem:[%s812 + $0x2f1] sm:$0xff] %v699
  %873 = vst [vmem:[%s812 + $0x301] sm:$0xff] %v700
  %874 = vst [vmem:[%s812 + $0x309] sm:$0xff] %v701
  %875 = vst [vmem:[%s812 + $0x319] sm:$0xff] %v702
  %876 = vst [vmem:[%s812 + $0x321] sm:$0xff] %v703
  %v877 = vld [vmem:[#allocation2] sm:$0xff]
  %v878 = vld [vmem:[#allocation2 + $0x8] sm:$0xff]
  %v879 = vld [vmem:[#allocation2 + $0x18] sm:$0xff]
  %v880 = vld [vmem:[#allocation2 + $0x20] sm:$0xff]
  %v881 = vld [vmem:[#allocation2 + $0x30] sm:$0xff]
  %v882 = vld [vmem:[#allocation2 + $0x38] sm:$0xff]
  %v883 = vld [vmem:[#allocation2 + $0x48] sm:$0xff]
  %v884 = vld [vmem:[#allocation2 + $0x50] sm:$0xff]
  %v885 = vld [vmem:[#allocation2 + $0x60] sm:$0xff]
  %v886 = vld [vmem:[#allocation2 + $0x68] sm:$0xff]
  %v887 = vld [vmem:[#allocation2 + $0x78] sm:$0xff]
  %v888 = vld [vmem:[#allocation2 + $0x80] sm:$0xff]
  %v889 = vld [vmem:[#allocation2 + $0x90] sm:$0xff]
  %v890 = vld [vmem:[#allocation2 + $0x98] sm:$0xff]
  %v891 = vld [vmem:[#allocation2 + $0xa8] sm:$0xff]
  %v892 = vld [vmem:[#allocation2 + $0xb0] sm:$0xff]
  %v893 = vld [vmem:[#allocation2 + $0xc0] sm:$0xff]
  %v894 = vld [vmem:[#allocation2 + $0xc8] sm:$0xff]
  %v895 = vld [vmem:[#allocation2 + $0xd8] sm:$0xff]
  %v896 = vld [vmem:[#allocation2 + $0xe0] sm:$0xff]
  %v897 = vld [vmem:[#allocation2 + $0xf0] sm:$0xff]
  %v898 = vld [vmem:[#allocation2 + $0xf8] sm:$0xff]
  %v899 = vld [vmem:[#allocation2 + $0x108] sm:$0xff]
  %v900 = vld [vmem:[#allocation2 + $0x110] sm:$0xff]
  %v901 = vld [vmem:[#allocation2 + $0x120] sm:$0xff]
  %v902 = vld [vmem:[#allocation2 + $0x128] sm:$0xff]
  %v903 = vld [vmem:[#allocation2 + $0x138] sm:$0xff]
  %v904 = vld [vmem:[#allocation2 + $0x140] sm:$0xff]
  %v905 = vld [vmem:[#allocation2 + $0x150] sm:$0xff]
  %v906 = vld [vmem:[#allocation2 + $0x158] sm:$0xff]
  %v907 = vld [vmem:[#allocation2 + $0x168] sm:$0xff]
  %v908 = vld [vmem:[#allocation2 + $0x170] sm:$0xff]
  %v909 = vld [vmem:[#allocation2 + $0x1b0] sm:$0xff]
  %v910 = vld [vmem:[#allocation2 + $0x1b8] sm:$0xff]
  %v911 = vld [vmem:[#allocation2 + $0x1c8] sm:$0xff]
  %v912 = vld [vmem:[#allocation2 + $0x1d0] sm:$0xff]
  %v913 = vld [vmem:[#allocation2 + $0x1e0] sm:$0xff]
  %v914 = vld [vmem:[#allocation2 + $0x1e8] sm:$0xff]
  %v915 = vld [vmem:[#allocation2 + $0x1f8] sm:$0xff]
  %v916 = vld [vmem:[#allocation2 + $0x200] sm:$0xff]
  %v917 = vld [vmem:[#allocation2 + $0x210] sm:$0xff]
  %v918 = vld [vmem:[#allocation2 + $0x218] sm:$0xff]
  %v919 = vld [vmem:[#allocation2 + $0x228] sm:$0xff]
  %v920 = vld [vmem:[#allocation2 + $0x230] sm:$0xff]
  %v921 = vld [vmem:[#allocation2 + $0x240] sm:$0xff]
  %v922 = vld [vmem:[#allocation2 + $0x248] sm:$0xff]
  %v923 = vld [vmem:[#allocation2 + $0x258] sm:$0xff]
  %v924 = vld [vmem:[#allocation2 + $0x260] sm:$0xff]
  %v925 = vld [vmem:[#allocation2 + $0x270] sm:$0xff]
  %v926 = vld [vmem:[#allocation2 + $0x278] sm:$0xff]
  %v927 = vld [vmem:[#allocation2 + $0x288] sm:$0xff]
  %v928 = vld [vmem:[#allocation2 + $0x290] sm:$0xff]
  %v929 = vld [vmem:[#allocation2 + $0x2a0] sm:$0xff]
  %v930 = vld [vmem:[#allocation2 + $0x2a8] sm:$0xff]
  %v931 = vld [vmem:[#allocation2 + $0x2b8] sm:$0xff]
  %v932 = vld [vmem:[#allocation2 + $0x2c0] sm:$0xff]
  %v933 = vld [vmem:[#allocation2 + $0x2d0] sm:$0xff]
  %v934 = vld [vmem:[#allocation2 + $0x2d8] sm:$0xff]
  %v935 = vld [vmem:[#allocation2 + $0x2e8] sm:$0xff]
  %v936 = vld [vmem:[#allocation2 + $0x2f0] sm:$0xff]
  %v937 = vld [vmem:[#allocation2 + $0x300] sm:$0xff]
  %v938 = vld [vmem:[#allocation2 + $0x308] sm:$0xff]
  %v939 = vld [vmem:[#allocation2 + $0x318] sm:$0xff]
  %v940 = vld [vmem:[#allocation2 + $0x320] sm:$0xff]
  %v941 = vpack.c.bf16 %v878, %v877
  %v942 = vpack.c.bf16 %v880, %v879
  %v943 = vpack.c.bf16 %v882, %v881
  %v944 = vpack.c.bf16 %v884, %v883
  %v945 = vpack.c.bf16 %v886, %v885
  %v946 = vpack.c.bf16 %v888, %v887
  %v947 = vpack.c.bf16 %v890, %v889
  %v948 = vpack.c.bf16 %v892, %v891
  %v949 = vpack.c.bf16 %v894, %v893
  %v950 = vpack.c.bf16 %v896, %v895
  %v951 = vpack.c.bf16 %v898, %v897
  %v952 = vpack.c.bf16 %v900, %v899
  %v953 = vpack.c.bf16 %v902, %v901
  %v954 = vpack.c.bf16 %v904, %v903
  %v955 = vpack.c.bf16 %v906, %v905
  %v956 = vpack.c.bf16 %v908, %v907
  %v957 = vpack.c.bf16 %v910, %v909
  %v958 = vpack.c.bf16 %v912, %v911
  %v959 = vpack.c.bf16 %v914, %v913
  %v960 = vpack.c.bf16 %v916, %v915
  %v961 = vpack.c.bf16 %v918, %v917
  %v962 = vpack.c.bf16 %v920, %v919
  %v963 = vpack.c.bf16 %v922, %v921
  %v964 = vpack.c.bf16 %v924, %v923
  %v965 = vpack.c.bf16 %v926, %v925
  %v966 = vpack.c.bf16 %v928, %v927
  %v967 = vpack.c.bf16 %v930, %v929
  %v968 = vpack.c.bf16 %v932, %v931
  %v969 = vpack.c.bf16 %v934, %v933
  %v970 = vpack.c.bf16 %v936, %v935
  %v971 = vpack.c.bf16 %v938, %v937
  %v972 = vpack.c.bf16 %v940, %v939
  %v973 = vld [vmem:[%s3] sm:$0xf]
  %v974 = vld [vmem:[%s3 + $0x4] sm:$0xf]
  %v975 = vld [vmem:[%s3 + $0x8] sm:$0xf]
  %v976 = vld [vmem:[%s3 + $0xc] sm:$0xf]
  %v977 = vld [vmem:[%s3 + $0x10] sm:$0xf]
  %v978 = vld [vmem:[%s3 + $0x14] sm:$0xf]
  %v979 = vld [vmem:[%s3 + $0x18] sm:$0xf]
  %v980 = vld [vmem:[%s3 + $0x1c] sm:$0xf]
  %v981 = vld [vmem:[%s3 + $0x20] sm:$0xf]
  %v982 = vld [vmem:[%s3 + $0x24] sm:$0xf]
  %v983 = vld [vmem:[%s3 + $0x28] sm:$0xf]
  %v984 = vld [vmem:[%s3 + $0x2c] sm:$0xf]
  %v985 = vld [vmem:[%s3 + $0x30] sm:$0xf]
  %v986 = vld [vmem:[%s3 + $0x34] sm:$0xf]
  %v987 = vld [vmem:[%s3 + $0x38] sm:$0xf]
  %v988 = vld [vmem:[%s3 + $0x3c] sm:$0xf]
  %v989 = vld [vmem:[#allocation2 + $0x1] sm:$0xff]
  %v990 = vld [vmem:[#allocation2 + $0x9] sm:$0xff]
  %v991 = vld [vmem:[#allocation2 + $0x19] sm:$0xff]
  %v992 = vld [vmem:[#allocation2 + $0x21] sm:$0xff]
  %v993 = vld [vmem:[#allocation2 + $0x31] sm:$0xff]
  %v994 = vld [vmem:[#allocation2 + $0x39] sm:$0xff]
  %v995 = vld [vmem:[#allocation2 + $0x49] sm:$0xff]
  %v996 = vld [vmem:[#allocation2 + $0x51] sm:$0xff]
  %v997 = vld [vmem:[#allocation2 + $0x61] sm:$0xff]
  %v998 = vld [vmem:[#allocation2 + $0x69] sm:$0xff]
  %v999 = vld [vmem:[#allocation2 + $0x79] sm:$0xff]
  %v1000 = vld [vmem:[#allocation2 + $0x81] sm:$0xff]
  %v1001 = vld [vmem:[#allocation2 + $0x91] sm:$0xff]
  %v1002 = vld [vmem:[#allocation2 + $0x99] sm:$0xff]
  %v1003 = vld [vmem:[#allocation2 + $0xa9] sm:$0xff]
  %v1004 = vld [vmem:[#allocation2 + $0xb1] sm:$0xff]
  %v1005 = vld [vmem:[#allocation2 + $0xc1] sm:$0xff]
  %v1006 = vld [vmem:[#allocation2 + $0xc9] sm:$0xff]
  %v1007 = vld [vmem:[#allocation2 + $0xd9] sm:$0xff]
  %v1008 = vld [vmem:[#allocation2 + $0xe1] sm:$0xff]
  %v1009 = vld [vmem:[#allocation2 + $0xf1] sm:$0xff]
  %v1010 = vld [vmem:[#allocation2 + $0xf9] sm:$0xff]
  %v1011 = vld [vmem:[#allocation2 + $0x109] sm:$0xff]
  %v1012 = vld [vmem:[#allocation2 + $0x111] sm:$0xff]
  %v1013 = vld [vmem:[#allocation2 + $0x121] sm:$0xff]
  %v1014 = vld [vmem:[#allocation2 + $0x129] sm:$0xff]
  %v1015 = vld [vmem:[#allocation2 + $0x139] sm:$0xff]
  %v1016 = vld [vmem:[#allocation2 + $0x141] sm:$0xff]
  %v1017 = vld [vmem:[#allocation2 + $0x151] sm:$0xff]
  %v1018 = vld [vmem:[#allocation2 + $0x159] sm:$0xff]
  %v1019 = vld [vmem:[#allocation2 + $0x169] sm:$0xff]
  %v1020 = vld [vmem:[#allocation2 + $0x171] sm:$0xff]
  %v1021 = vld [vmem:[#allocation2 + $0x1b1] sm:$0xff]
  %v1022 = vld [vmem:[#allocation2 + $0x1b9] sm:$0xff]
  %v1023 = vld [vmem:[#allocation2 + $0x1c9] sm:$0xff]
  %v1024 = vld [vmem:[#allocation2 + $0x1d1] sm:$0xff]
  %v1025 = vld [vmem:[#allocation2 + $0x1e1] sm:$0xff]
  %v1026 = vld [vmem:[#allocation2 + $0x1e9] sm:$0xff]
  %v1027 = vld [vmem:[#allocation2 + $0x1f9] sm:$0xff]
  %v1028 = vld [vmem:[#allocation2 + $0x201] sm:$0xff]
  %v1029 = vld [vmem:[#allocation2 + $0x211] sm:$0xff]
  %v1030 = vld [vmem:[#allocation2 + $0x219] sm:$0xff]
  %v1031 = vld [vmem:[#allocation2 + $0x229] sm:$0xff]
  %v1032 = vld [vmem:[#allocation2 + $0x231] sm:$0xff]
  %v1033 = vld [vmem:[#allocation2 + $0x241] sm:$0xff]
  %v1034 = vld [vmem:[#allocation2 + $0x249] sm:$0xff]
  %v1035 = vld [vmem:[#allocation2 + $0x259] sm:$0xff]
  %v1036 = vld [vmem:[#allocation2 + $0x261] sm:$0xff]
  %v1037 = vld [vmem:[#allocation2 + $0x271] sm:$0xff]
  %v1038 = vld [vmem:[#allocation2 + $0x279] sm:$0xff]
  %v1039 = vld [vmem:[#allocation2 + $0x289] sm:$0xff]
  %v1040 = vld [vmem:[#allocation2 + $0x291] sm:$0xff]
  %v1041 = vld [vmem:[#allocation2 + $0x2a1] sm:$0xff]
  %v1042 = vld [vmem:[#allocation2 + $0x2a9] sm:$0xff]
  %v1043 = vld [vmem:[#allocation2 + $0x2b9] sm:$0xff]
  %v1044 = vld [vmem:[#allocation2 + $0x2c1] sm:$0xff]
  %v1045 = vld [vmem:[#allocation2 + $0x2d1] sm:$0xff]
  %v1046 = vld [vmem:[#allocation2 + $0x2d9] sm:$0xff]
  %v1047 = vld [vmem:[#allocation2 + $0x2e9] sm:$0xff]
  %v1048 = vld [vmem:[#allocation2 + $0x2f1] sm:$0xff]
  %v1049 = vld [vmem:[#allocation2 + $0x301] sm:$0xff]
  %v1050 = vld [vmem:[#allocation2 + $0x309] sm:$0xff]
  %v1051 = vld [vmem:[#allocation2 + $0x319] sm:$0xff]
  %v1052 = vld [vmem:[#allocation2 + $0x321] sm:$0xff]
  %v1053 = vpack.c.bf16 %v990, %v989
  %v1054 = vpack.c.bf16 %v992, %v991
  %v1055 = vpack.c.bf16 %v994, %v993
  %v1056 = vpack.c.bf16 %v996, %v995
  %v1057 = vpack.c.bf16 %v998, %v997
  %v1058 = vpack.c.bf16 %v1000, %v999
  %v1059 = vpack.c.bf16 %v1002, %v1001
  %v1060 = vpack.c.bf16 %v1004, %v1003
  %v1061 = vpack.c.bf16 %v1006, %v1005
  %v1062 = vpack.c.bf16 %v1008, %v1007
  %v1063 = vpack.c.bf16 %v1010, %v1009
  %v1064 = vpack.c.bf16 %v1012, %v1011
  %v1065 = vpack.c.bf16 %v1014, %v1013
  %v1066 = vpack.c.bf16 %v1016, %v1015
  %v1067 = vpack.c.bf16 %v1018, %v1017
  %v1068 = vpack.c.bf16 %v1020, %v1019
  %v1069 = vpack.c.bf16 %v1022, %v1021
  %v1070 = vpack.c.bf16 %v1024, %v1023
  %v1071 = vpack.c.bf16 %v1026, %v1025
  %v1072 = vpack.c.bf16 %v1028, %v1027
  %v1073 = vpack.c.bf16 %v1030, %v1029
  %v1074 = vpack.c.bf16 %v1032, %v1031
  %v1075 = vpack.c.bf16 %v1034, %v1033
  %v1076 = vpack.c.bf16 %v1036, %v1035
  %v1077 = vpack.c.bf16 %v1038, %v1037
  %v1078 = vpack.c.bf16 %v1040, %v1039
  %v1079 = vpack.c.bf16 %v1042, %v1041
  %v1080 = vpack.c.bf16 %v1044, %v1043
  %v1081 = vpack.c.bf16 %v1046, %v1045
  %v1082 = vpack.c.bf16 %v1048, %v1047
  %v1083 = vpack.c.bf16 %v1050, %v1049
  %v1084 = vpack.c.bf16 %v1052, %v1051
  %s1085 = scalar_lea.vmem %s3, 64
  %v1086 = vld [vmem:[%s1085] sm:$0xf]
  %v1087 = vld [vmem:[%s1085 + $0x4] sm:$0xf]
  %v1088 = vld [vmem:[%s1085 + $0x8] sm:$0xf]
  %v1089 = vld [vmem:[%s1085 + $0xc] sm:$0xf]
  %v1090 = vld [vmem:[%s1085 + $0x10] sm:$0xf]
  %v1091 = vld [vmem:[%s1085 + $0x14] sm:$0xf]
  %v1092 = vld [vmem:[%s1085 + $0x18] sm:$0xf]
  %v1093 = vld [vmem:[%s1085 + $0x1c] sm:$0xf]
  %v1094 = vld [vmem:[%s1085 + $0x20] sm:$0xf]
  %v1095 = vld [vmem:[%s1085 + $0x24] sm:$0xf]
  %v1096 = vld [vmem:[%s1085 + $0x28] sm:$0xf]
  %v1097 = vld [vmem:[%s1085 + $0x2c] sm:$0xf]
  %v1098 = vld [vmem:[%s1085 + $0x30] sm:$0xf]
  %v1099 = vld [vmem:[%s1085 + $0x34] sm:$0xf]
  %v1100 = vld [vmem:[%s1085 + $0x38] sm:$0xf]
  %v1101 = vld [vmem:[%s1085 + $0x3c] sm:$0xf]
  %v1118 = vunpack.c.l.b16 %v1086
  %v1119 = vunpack.c.l.b16 %v1087
  %v1120 = vunpack.c.l.b16 %v1088
  %v1121 = vunpack.c.l.b16 %v1089
  %v1122 = vunpack.c.l.b16 %v1090
  %v1123 = vunpack.c.l.b16 %v1091
  %v1124 = vunpack.c.l.b16 %v1092
  %v1125 = vunpack.c.l.b16 %v1093
  %v1126 = vunpack.c.l.b16 %v1094
  %v1127 = vunpack.c.l.b16 %v1095
  %v1128 = vunpack.c.l.b16 %v1096
  %v1129 = vunpack.c.l.b16 %v1097
  %v1130 = vunpack.c.l.b16 %v1098
  %v1131 = vunpack.c.l.b16 %v1099
  %v1132 = vunpack.c.l.b16 %v1100
  %v1133 = vunpack.c.l.b16 %v1101
  %v1134 = vpack.c.b16 %v1119, %v1118
  %v1135 = vpack.c.b16 %v1121, %v1120
  %v1136 = vpack.c.b16 %v1123, %v1122
  %v1137 = vpack.c.b16 %v1125, %v1124
  %v1138 = vpack.c.b16 %v1127, %v1126
  %v1139 = vpack.c.b16 %v1129, %v1128
  %v1140 = vpack.c.b16 %v1131, %v1130
  %v1141 = vpack.c.b16 %v1133, %v1132
  %1150 = vmatprep.subr.bf16.mxu0 0
  %1151 = vmatpush1.bf16.msra.mxu0 %v1134
  %1152 = vmatprep.subr.bf16.mxu0 0
  %1153 = vmatpush1.bf16.msra.mxu0 %v1135
  %1154 = vmatprep.subr.bf16.mxu0 0
  %1155 = vmatpush1.bf16.msra.mxu0 %v1136
  %1156 = vmatprep.subr.bf16.mxu0 0
  %1157 = vmatpush1.bf16.msra.mxu0 %v1137
  %1158 = vmatprep.subr.bf16.mxu0 0
  %1159 = vmatpush1.bf16.msra.mxu0 %v1138
  %1160 = vmatprep.subr.bf16.mxu0 0
  %1161 = vmatpush1.bf16.msra.mxu0 %v1139
  %1162 = vmatprep.subr.bf16.mxu0 0
  %1163 = vmatpush1.bf16.msra.mxu0 %v1140
  %1164 = vmatprep.subr.bf16.mxu0 0
  %1165 = vmatpush1.bf16.msra.mxu0 %v1141
  %1166 = vmatprep.subr.bf16.mxu0 0
  %1167 = vmatpush1.bf16.msra.mxu0 0
  %1168 = vmatprep.subr.bf16.mxu0 0
  %1169 = vmatpush1.bf16.msra.mxu0 0
  %1170 = vmatprep.subr.bf16.mxu0 0
  %1171 = vmatpush1.bf16.msra.mxu0 0
  %1172 = vmatprep.subr.bf16.mxu0 0
  %1173 = vmatpush1.bf16.msra.mxu0 0
  %1174 = vmatprep.subr.bf16.mxu0 0
  %1175 = vmatpush1.bf16.msra.mxu0 0
  %1176 = vmatprep.subr.bf16.mxu0 0
  %1177 = vmatpush1.bf16.msra.mxu0 0
  %1178 = vmatprep.subr.bf16.mxu0 0
  %1179 = vmatpush1.bf16.msra.mxu0 0
  %1180 = vmatprep.subr.bf16.mxu0 0
  %1181 = vmatpush1.bf16.msra.mxu0 0
  %1182 = vmatprep.mubr.bf16.mxu0 0
  %1183 = vmatmul.mubr.bf16.gmra.mrb[0].mxu0 %v1053
  %v1184 = vpop.f32.mrb[0].mxu0
  %v1185 = vadd.f32 0.0, %v1184
  %v1186 = vpop.f32.mrb[0].mxu0
  %v1187 = vpop.f32.mrb[0].mxu0
  %v1188 = vadd.f32 0.0, %v1187
  %v1189 = vpop.f32.mrb[0].mxu0
  %1190 = vmatprep.mubr.bf16.mxu0 0
  %1191 = vmatmul.mubr.bf16.gmra.mrb[0].mxu0 %v1054
  %v1192 = vpop.f32.mrb[0].mxu0
  %v1193 = vadd.f32 0.0, %v1192
  %v1194 = vpop.f32.mrb[0].mxu0
  %v1195 = vpop.f32.mrb[0].mxu0
  %v1196 = vadd.f32 0.0, %v1195
  %v1197 = vpop.f32.mrb[0].mxu0
  %1198 = vmatprep.mubr.bf16.mxu0 0
  %1199 = vmatmul.mubr.bf16.gmra.mrb[0].mxu0 %v1055
  %v1200 = vpop.f32.mrb[0].mxu0
  %v1201 = vadd.f32 0.0, %v1200
  %v1202 = vpop.f32.mrb[0].mxu0
  %v1203 = vpop.f32.mrb[0].mxu0
  %v1204 = vadd.f32 0.0, %v1203
  %v1205 = vpop.f32.mrb[0].mxu0
  %1206 = vmatprep.mubr.bf16.mxu0 0
  %1207 = vmatmul.mubr.bf16.gmra.mrb[0].mxu0 %v1056
  %v1208 = vpop.f32.mrb[0].mxu0
  %v1209 = vadd.f32 0.0, %v1208
  %v1210 = vpop.f32.mrb[0].mxu0
  %v1211 = vpop.f32.mrb[0].mxu0
  %v1212 = vadd.f32 0.0, %v1211
  %v1213 = vpop.f32.mrb[0].mxu0
  %1214 = vmatprep.mubr.bf16.mxu0 0
  %1215 = vmatmul.mubr.bf16.gmra.mrb[0].mxu0 %v1057
  %v1216 = vpop.f32.mrb[0].mxu0
  %v1217 = vadd.f32 0.0, %v1216
  %v1218 = vpop.f32.mrb[0].mxu0
  %v1219 = vpop.f32.mrb[0].mxu0
  %v1220 = vadd.f32 0.0, %v1219
  %v1221 = vpop.f32.mrb[0].mxu0
  %1222 = vmatprep.mubr.bf16.mxu0 0
  %1223 = vmatmul.mubr.bf16.gmra.mrb[0].mxu0 %v1058
  %v1224 = vpop.f32.mrb[0].mxu0
  %v1225 = vadd.f32 0.0, %v1224
  %v1226 = vpop.f32.mrb[0].mxu0
  %v1227 = vpop.f32.mrb[0].mxu0
  %v1228 = vadd.f32 0.0, %v1227
  %v1229 = vpop.f32.mrb[0].mxu0
  %1230 = vmatprep.mubr.bf16.mxu0 0
  %1231 = vmatmul.mubr.bf16.gmra.mrb[0].mxu0 %v1059
  %v1232 = vpop.f32.mrb[0].mxu0
  %v1233 = vadd.f32 0.0, %v1232
  %v1234 = vpop.f32.mrb[0].mxu0
  %v1235 = vpop.f32.mrb[0].mxu0
  %v1236 = vadd.f32 0.0, %v1235
  %v1237 = vpop.f32.mrb[0].mxu0
  %1238 = vmatprep.mubr.bf16.mxu0 0
  %1239 = vmatmul.mubr.bf16.gmra.mrb[0].mxu0 %v1060
  %v1240 = vpop.f32.mrb[0].mxu0
  %v1241 = vadd.f32 0.0, %v1240
  %v1242 = vpop.f32.mrb[0].mxu0
  %v1243 = vpop.f32.mrb[0].mxu0
  %v1244 = vadd.f32 0.0, %v1243
  %v1245 = vpop.f32.mrb[0].mxu0
  %1246 = vmatprep.mubr.bf16.mxu0 0
  %1247 = vmatmul.mubr.bf16.gmra.mrb[0].mxu0 %v1061
  %v1248 = vpop.f32.mrb[0].mxu0
  %v1249 = vadd.f32 0.0, %v1248
  %v1250 = vpop.f32.mrb[0].mxu0
  %v1251 = vpop.f32.mrb[0].mxu0
  %v1252 = vadd.f32 0.0, %v1251
  %v1253 = vpop.f32.mrb[0].mxu0
  %1254 = vmatprep.mubr.bf16.mxu0 0
  %1255 = vmatmul.mubr.bf16.gmra.mrb[0].mxu0 %v1062
  %v1256 = vpop.f32.mrb[0].mxu0
  %v1257 = vadd.f32 0.0, %v1256
  %v1258 = vpop.f32.mrb[0].mxu0
  %v1259 = vpop.f32.mrb[0].mxu0
  %v1260 = vadd.f32 0.0, %v1259
  %v1261 = vpop.f32.mrb[0].mxu0
  %1262 = vmatprep.mubr.bf16.mxu0 0
  %1263 = vmatmul.mubr.bf16.gmra.mrb[0].mxu0 %v1063
  %v1264 = vpop.f32.mrb[0].mxu0
  %v1265 = vadd.f32 0.0, %v1264
  %v1266 = vpop.f32.mrb[0].mxu0
  %v1267 = vpop.f32.mrb[0].mxu0
  %v1268 = vadd.f32 0.0, %v1267
  %v1269 = vpop.f32.mrb[0].mxu0
  %1270 = vmatprep.mubr.bf16.mxu0 0
  %1271 = vmatmul.mubr.bf16.gmra.mrb[0].mxu0 %v1064
  %v1272 = vpop.f32.mrb[0].mxu0
  %v1273 = vadd.f32 0.0, %v1272
  %v1274 = vpop.f32.mrb[0].mxu0
  %v1275 = vpop.f32.mrb[0].mxu0
  %v1276 = vadd.f32 0.0, %v1275
  %v1277 = vpop.f32.mrb[0].mxu0
  %1278 = vmatprep.mubr.bf16.mxu0 0
  %1279 = vmatmul.mubr.bf16.gmra.mrb[0].mxu0 %v1065
  %v1280 = vpop.f32.mrb[0].mxu0
  %v1281 = vadd.f32 0.0, %v1280
  %v1282 = vpop.f32.mrb[0].mxu0
  %v1283 = vpop.f32.mrb[0].mxu0
  %v1284 = vadd.f32 0.0, %v1283
  %v1285 = vpop.f32.mrb[0].mxu0
  %1286 = vmatprep.mubr.bf16.mxu0 0
  %1287 = vmatmul.mubr.bf16.gmra.mrb[0].mxu0 %v1066
  %v1288 = vpop.f32.mrb[0].mxu0
  %v1289 = vadd.f32 0.0, %v1288
  %v1290 = vpop.f32.mrb[0].mxu0
  %v1291 = vpop.f32.mrb[0].mxu0
  %v1292 = vadd.f32 0.0, %v1291
  %v1293 = vpop.f32.mrb[0].mxu0
  %1294 = vmatprep.mubr.bf16.mxu0 0
  %1295 = vmatmul.mubr.bf16.gmra.mrb[0].mxu0 %v1067
  %v1296 = vpop.f32.mrb[0].mxu0
  %v1297 = vadd.f32 0.0, %v1296
  %v1298 = vpop.f32.mrb[0].mxu0
  %v1299 = vpop.f32.mrb[0].mxu0
  %v1300 = vadd.f32 0.0, %v1299
  %v1301 = vpop.f32.mrb[0].mxu0
  %1302 = vmatprep.mubr.bf16.mxu0 0
  %1303 = vmatmul.mubr.bf16.gmra.mrb[0].mxu0 %v1068
  %v1304 = vpop.f32.mrb[0].mxu0
  %v1305 = vadd.f32 0.0, %v1304
  %v1306 = vpop.f32.mrb[0].mxu0
  %v1307 = vpop.f32.mrb[0].mxu0
  %v1308 = vadd.f32 0.0, %v1307
  %v1309 = vpop.f32.mrb[0].mxu0
  %1310 = vmatprep.mubr.bf16.mxu0 0
  %1311 = vmatmul.mubr.bf16.gmra.mrb[0].mxu0 %v1069
  %v1312 = vpop.f32.mrb[0].mxu0
  %v1313 = vadd.f32 0.0, %v1312
  %v1314 = vpop.f32.mrb[0].mxu0
  %v1315 = vpop.f32.mrb[0].mxu0
  %v1316 = vadd.f32 0.0, %v1315
  %v1317 = vpop.f32.mrb[0].mxu0
  %1318 = vmatprep.mubr.bf16.mxu0 0
  %1319 = vmatmul.mubr.bf16.gmra.mrb[0].mxu0 %v1070
  %v1320 = vpop.f32.mrb[0].mxu0
  %v1321 = vadd.f32 0.0, %v1320
  %v1322 = vpop.f32.mrb[0].mxu0
  %v1323 = vpop.f32.mrb[0].mxu0
  %v1324 = vadd.f32 0.0, %v1323
  %v1325 = vpop.f32.mrb[0].mxu0
  %1326 = vmatprep.mubr.bf16.mxu0 0
  %1327 = vmatmul.mubr.bf16.gmra.mrb[0].mxu0 %v1071
  %v1328 = vpop.f32.mrb[0].mxu0
  %v1329 = vadd.f32 0.0, %v1328
  %v1330 = vpop.f32.mrb[0].mxu0
  %v1331 = vpop.f32.mrb[0].mxu0
  %v1332 = vadd.f32 0.0, %v1331
  %v1333 = vpop.f32.mrb[0].mxu0
  %1334 = vmatprep.mubr.bf16.mxu0 0
  %1335 = vmatmul.mubr.bf16.gmra.mrb[0].mxu0 %v1072
  %v1336 = vpop.f32.mrb[0].mxu0
  %v1337 = vadd.f32 0.0, %v1336
  %v1338 = vpop.f32.mrb[0].mxu0
  %v1339 = vpop.f32.mrb[0].mxu0
  %v1340 = vadd.f32 0.0, %v1339
  %v1341 = vpop.f32.mrb[0].mxu0
  %1342 = vmatprep.mubr.bf16.mxu0 0
  %1343 = vmatmul.mubr.bf16.gmra.mrb[0].mxu0 %v1073
  %v1344 = vpop.f32.mrb[0].mxu0
  %v1345 = vadd.f32 0.0, %v1344
  %v1346 = vpop.f32.mrb[0].mxu0
  %v1347 = vpop.f32.mrb[0].mxu0
  %v1348 = vadd.f32 0.0, %v1347
  %v1349 = vpop.f32.mrb[0].mxu0
  %1350 = vmatprep.mubr.bf16.mxu0 0
  %1351 = vmatmul.mubr.bf16.gmra.mrb[0].mxu0 %v1074
  %v1352 = vpop.f32.mrb[0].mxu0
  %v1353 = vadd.f32 0.0, %v1352
  %v1354 = vpop.f32.mrb[0].mxu0
  %v1355 = vpop.f32.mrb[0].mxu0
  %v1356 = vadd.f32 0.0, %v1355
  %v1357 = vpop.f32.mrb[0].mxu0
  %1358 = vmatprep.mubr.bf16.mxu0 0
  %1359 = vmatmul.mubr.bf16.gmra.mrb[0].mxu0 %v1075
  %v1360 = vpop.f32.mrb[0].mxu0
  %v1361 = vadd.f32 0.0, %v1360
  %v1362 = vpop.f32.mrb[0].mxu0
  %v1363 = vpop.f32.mrb[0].mxu0
  %v1364 = vadd.f32 0.0, %v1363
  %v1365 = vpop.f32.mrb[0].mxu0
  %1366 = vmatprep.mubr.bf16.mxu0 0
  %1367 = vmatmul.mubr.bf16.gmra.mrb[0].mxu0 %v1076
  %v1368 = vpop.f32.mrb[0].mxu0
  %v1369 = vadd.f32 0.0, %v1368
  %v1370 = vpop.f32.mrb[0].mxu0
  %v1371 = vpop.f32.mrb[0].mxu0
  %v1372 = vadd.f32 0.0, %v1371
  %v1373 = vpop.f32.mrb[0].mxu0
  %1374 = vmatprep.mubr.bf16.mxu0 0
  %1375 = vmatmul.mubr.bf16.gmra.mrb[0].mxu0 %v1077
  %v1376 = vpop.f32.mrb[0].mxu0
  %v1377 = vadd.f32 0.0, %v1376
  %v1378 = vpop.f32.mrb[0].mxu0
  %v1379 = vpop.f32.mrb[0].mxu0
  %v1380 = vadd.f32 0.0, %v1379
  %v1381 = vpop.f32.mrb[0].mxu0
  %1382 = vmatprep.mubr.bf16.mxu0 0
  %1383 = vmatmul.mubr.bf16.gmra.mrb[0].mxu0 %v1078
  %v1384 = vpop.f32.mrb[0].mxu0
  %v1385 = vadd.f32 0.0, %v1384
  %v1386 = vpop.f32.mrb[0].mxu0
  %v1387 = vpop.f32.mrb[0].mxu0
  %v1388 = vadd.f32 0.0, %v1387
  %v1389 = vpop.f32.mrb[0].mxu0
  %1390 = vmatprep.mubr.bf16.mxu0 0
  %1391 = vmatmul.mubr.bf16.gmra.mrb[0].mxu0 %v1079
  %v1392 = vpop.f32.mrb[0].mxu0
  %v1393 = vadd.f32 0.0, %v1392
  %v1394 = vpop.f32.mrb[0].mxu0
  %v1395 = vpop.f32.mrb[0].mxu0
  %v1396 = vadd.f32 0.0, %v1395
  %v1397 = vpop.f32.mrb[0].mxu0
  %1398 = vmatprep.mubr.bf16.mxu0 0
  %1399 = vmatmul.mubr.bf16.gmra.mrb[0].mxu0 %v1080
  %v1400 = vpop.f32.mrb[0].mxu0
  %v1401 = vadd.f32 0.0, %v1400
  %v1402 = vpop.f32.mrb[0].mxu0
  %v1403 = vpop.f32.mrb[0].mxu0
  %v1404 = vadd.f32 0.0, %v1403
  %v1405 = vpop.f32.mrb[0].mxu0
  %1406 = vmatprep.mubr.bf16.mxu0 0
  %1407 = vmatmul.mubr.bf16.gmra.mrb[0].mxu0 %v1081
  %v1408 = vpop.f32.mrb[0].mxu0
  %v1409 = vadd.f32 0.0, %v1408
  %v1410 = vpop.f32.mrb[0].mxu0
  %v1411 = vpop.f32.mrb[0].mxu0
  %v1412 = vadd.f32 0.0, %v1411
  %v1413 = vpop.f32.mrb[0].mxu0
  %1414 = vmatprep.mubr.bf16.mxu0 0
  %1415 = vmatmul.mubr.bf16.gmra.mrb[0].mxu0 %v1082
  %v1416 = vpop.f32.mrb[0].mxu0
  %v1417 = vadd.f32 0.0, %v1416
  %v1418 = vpop.f32.mrb[0].mxu0
  %v1419 = vpop.f32.mrb[0].mxu0
  %v1420 = vadd.f32 0.0, %v1419
  %v1421 = vpop.f32.mrb[0].mxu0
  %1422 = vmatprep.mubr.bf16.mxu0 0
  %1423 = vmatmul.mubr.bf16.gmra.mrb[0].mxu0 %v1083
  %v1424 = vpop.f32.mrb[0].mxu0
  %v1425 = vadd.f32 0.0, %v1424
  %v1426 = vpop.f32.mrb[0].mxu0
  %v1427 = vpop.f32.mrb[0].mxu0
  %v1428 = vadd.f32 0.0, %v1427
  %v1429 = vpop.f32.mrb[0].mxu0
  %1430 = vmatprep.mubr.bf16.mxu0 0
  %1431 = vmatmul.mubr.bf16.gmra.mrb[0].mxu0 %v1084
  %v1432 = vpop.f32.mrb[0].mxu0
  %v1433 = vadd.f32 0.0, %v1432
  %v1434 = vpop.f32.mrb[0].mxu0
  %v1435 = vpop.f32.mrb[0].mxu0
  %v1436 = vadd.f32 0.0, %v1435
  %v1437 = vpop.f32.mrb[0].mxu0
  %1438 = vdwg.mxu0
  %v1455 = vunpack.c.l.b16 %v973
  %v1456 = vunpack.c.l.b16 %v974
  %v1457 = vunpack.c.l.b16 %v975
  %v1458 = vunpack.c.l.b16 %v976
  %v1459 = vunpack.c.l.b16 %v977
  %v1460 = vunpack.c.l.b16 %v978
  %v1461 = vunpack.c.l.b16 %v979
  %v1462 = vunpack.c.l.b16 %v980
  %v1463 = vunpack.c.l.b16 %v981
  %v1464 = vunpack.c.l.b16 %v982
  %v1465 = vunpack.c.l.b16 %v983
  %v1466 = vunpack.c.l.b16 %v984
  %v1467 = vunpack.c.l.b16 %v985
  %v1468 = vunpack.c.l.b16 %v986
  %v1469 = vunpack.c.l.b16 %v987
  %v1470 = vunpack.c.l.b16 %v988
  %v1471 = vpack.c.b16 %v1456, %v1455
  %v1472 = vpack.c.b16 %v1458, %v1457
  %v1473 = vpack.c.b16 %v1460, %v1459
  %v1474 = vpack.c.b16 %v1462, %v1461
  %v1475 = vpack.c.b16 %v1464, %v1463
  %v1476 = vpack.c.b16 %v1466, %v1465
  %v1477 = vpack.c.b16 %v1468, %v1467
  %v1478 = vpack.c.b16 %v1470, %v1469
  %1487 = vmatprep.subr.bf16.mxu0 0
  %1488 = vmatpush1.bf16.msra.mxu0 %v1471
  %1489 = vmatprep.subr.bf16.mxu0 0
  %1490 = vmatpush1.bf16.msra.mxu0 %v1472
  %1491 = vmatprep.subr.bf16.mxu0 0
  %1492 = vmatpush1.bf16.msra.mxu0 %v1473
  %1493 = vmatprep.subr.bf16.mxu0 0
  %1494 = vmatpush1.bf16.msra.mxu0 %v1474
  %1495 = vmatprep.subr.bf16.mxu0 0
  %1496 = vmatpush1.bf16.msra.mxu0 %v1475
  %1497 = vmatprep.subr.bf16.mxu0 0
  %1498 = vmatpush1.bf16.msra.mxu0 %v1476
  %1499 = vmatprep.subr.bf16.mxu0 0
  %1500 = vmatpush1.bf16.msra.mxu0 %v1477
  %1501 = vmatprep.subr.bf16.mxu0 0
  %1502 = vmatpush1.bf16.msra.mxu0 %v1478
  %1503 = vmatprep.subr.bf16.mxu0 0
  %1504 = vmatpush1.bf16.msra.mxu0 0
  %1505 = vmatprep.subr.bf16.mxu0 0
  %1506 = vmatpush1.bf16.msra.mxu0 0
  %1507 = vmatprep.subr.bf16.mxu0 0
  %1508 = vmatpush1.bf16.msra.mxu0 0
  %1509 = vmatprep.subr.bf16.mxu0 0
  %1510 = vmatpush1.bf16.msra.mxu0 0
  %1511 = vmatprep.subr.bf16.mxu0 0
  %1512 = vmatpush1.bf16.msra.mxu0 0
  %1513 = vmatprep.subr.bf16.mxu0 0
  %1514 = vmatpush1.bf16.msra.mxu0 0
  %1515 = vmatprep.subr.bf16.mxu0 0
  %1516 = vmatpush1.bf16.msra.mxu0 0
  %1517 = vmatprep.subr.bf16.mxu0 0
  %1518 = vmatpush1.bf16.msra.mxu0 0
  %1519 = vmatprep.mubr.bf16.mxu0 0
  %1520 = vmatmul.mubr.bf16.gmra.mrb[0].mxu0 %v941
  %v1521 = vpop.f32.mrb[0].mxu0
  %v1522 = vadd.f32 %v1185, %v1521
  %v1523 = vpop.f32.mrb[0].mxu0
  %v1524 = vpop.f32.mrb[0].mxu0
  %v1525 = vadd.f32 %v1188, %v1524
  %v1526 = vpop.f32.mrb[0].mxu0
  %1527 = vmatprep.mubr.bf16.mxu0 0
  %1528 = vmatmul.mubr.bf16.gmra.mrb[0].mxu0 %v942
  %v1529 = vpop.f32.mrb[0].mxu0
  %v1530 = vadd.f32 %v1193, %v1529
  %v1531 = vpop.f32.mrb[0].mxu0
  %v1532 = vpop.f32.mrb[0].mxu0
  %v1533 = vadd.f32 %v1196, %v1532
  %v1534 = vpop.f32.mrb[0].mxu0
  %1535 = vmatprep.mubr.bf16.mxu0 0
  %1536 = vmatmul.mubr.bf16.gmra.mrb[0].mxu0 %v943
  %v1537 = vpop.f32.mrb[0].mxu0
  %v1538 = vadd.f32 %v1201, %v1537
  %v1539 = vpop.f32.mrb[0].mxu0
  %v1540 = vpop.f32.mrb[0].mxu0
  %v1541 = vadd.f32 %v1204, %v1540
  %v1542 = vpop.f32.mrb[0].mxu0
  %1543 = vmatprep.mubr.bf16.mxu0 0
  %1544 = vmatmul.mubr.bf16.gmra.mrb[0].mxu0 %v944
  %v1545 = vpop.f32.mrb[0].mxu0
  %v1546 = vadd.f32 %v1209, %v1545
  %v1547 = vpop.f32.mrb[0].mxu0
  %v1548 = vpop.f32.mrb[0].mxu0
  %v1549 = vadd.f32 %v1212, %v1548
  %v1550 = vpop.f32.mrb[0].mxu0
  %1551 = vmatprep.mubr.bf16.mxu0 0
  %1552 = vmatmul.mubr.bf16.gmra.mrb[0].mxu0 %v945
  %v1553 = vpop.f32.mrb[0].mxu0
  %v1554 = vadd.f32 %v1217, %v1553
  %v1555 = vpop.f32.mrb[0].mxu0
  %v1556 = vpop.f32.mrb[0].mxu0
  %v1557 = vadd.f32 %v1220, %v1556
  %v1558 = vpop.f32.mrb[0].mxu0
  %1559 = vmatprep.mubr.bf16.mxu0 0
  %1560 = vmatmul.mubr.bf16.gmra.mrb[0].mxu0 %v946
  %v1561 = vpop.f32.mrb[0].mxu0
  %v1562 = vadd.f32 %v1225, %v1561
  %v1563 = vpop.f32.mrb[0].mxu0
  %v1564 = vpop.f32.mrb[0].mxu0
  %v1565 = vadd.f32 %v1228, %v1564
  %v1566 = vpop.f32.mrb[0].mxu0
  %1567 = vmatprep.mubr.bf16.mxu0 0
  %1568 = vmatmul.mubr.bf16.gmra.mrb[0].mxu0 %v947
  %v1569 = vpop.f32.mrb[0].mxu0
  %v1570 = vadd.f32 %v1233, %v1569
  %v1571 = vpop.f32.mrb[0].mxu0
  %v1572 = vpop.f32.mrb[0].mxu0
  %v1573 = vadd.f32 %v1236, %v1572
  %v1574 = vpop.f32.mrb[0].mxu0
  %1575 = vmatprep.mubr.bf16.mxu0 0
  %1576 = vmatmul.mubr.bf16.gmra.mrb[0].mxu0 %v948
  %v1577 = vpop.f32.mrb[0].mxu0
  %v1578 = vadd.f32 %v1241, %v1577
  %v1579 = vpop.f32.mrb[0].mxu0
  %v1580 = vpop.f32.mrb[0].mxu0
  %v1581 = vadd.f32 %v1244, %v1580
  %v1582 = vpop.f32.mrb[0].mxu0
  %1583 = vmatprep.mubr.bf16.mxu0 0
  %1584 = vmatmul.mubr.bf16.gmra.mrb[0].mxu0 %v949
  %v1585 = vpop.f32.mrb[0].mxu0
  %v1586 = vadd.f32 %v1249, %v1585
  %v1587 = vpop.f32.mrb[0].mxu0
  %v1588 = vpop.f32.mrb[0].mxu0
  %v1589 = vadd.f32 %v1252, %v1588
  %v1590 = vpop.f32.mrb[0].mxu0
  %1591 = vmatprep.mubr.bf16.mxu0 0
  %1592 = vmatmul.mubr.bf16.gmra.mrb[0].mxu0 %v950
  %v1593 = vpop.f32.mrb[0].mxu0
  %v1594 = vadd.f32 %v1257, %v1593
  %v1595 = vpop.f32.mrb[0].mxu0
  %v1596 = vpop.f32.mrb[0].mxu0
  %v1597 = vadd.f32 %v1260, %v1596
  %v1598 = vpop.f32.mrb[0].mxu0
  %1599 = vmatprep.mubr.bf16.mxu0 0
  %1600 = vmatmul.mubr.bf16.gmra.mrb[0].mxu0 %v951
  %v1601 = vpop.f32.mrb[0].mxu0
  %v1602 = vadd.f32 %v1265, %v1601
  %v1603 = vpop.f32.mrb[0].mxu0
  %v1604 = vpop.f32.mrb[0].mxu0
  %v1605 = vadd.f32 %v1268, %v1604
  %v1606 = vpop.f32.mrb[0].mxu0
  %1607 = vmatprep.mubr.bf16.mxu0 0
  %1608 = vmatmul.mubr.bf16.gmra.mrb[0].mxu0 %v952
  %v1609 = vpop.f32.mrb[0].mxu0
  %v1610 = vadd.f32 %v1273, %v1609
  %v1611 = vpop.f32.mrb[0].mxu0
  %v1612 = vpop.f32.mrb[0].mxu0
  %v1613 = vadd.f32 %v1276, %v1612
  %v1614 = vpop.f32.mrb[0].mxu0
  %1615 = vmatprep.mubr.bf16.mxu0 0
  %1616 = vmatmul.mubr.bf16.gmra.mrb[0].mxu0 %v953
  %v1617 = vpop.f32.mrb[0].mxu0
  %v1618 = vadd.f32 %v1281, %v1617
  %v1619 = vpop.f32.mrb[0].mxu0
  %v1620 = vpop.f32.mrb[0].mxu0
  %v1621 = vadd.f32 %v1284, %v1620
  %v1622 = vpop.f32.mrb[0].mxu0
  %1623 = vmatprep.mubr.bf16.mxu0 0
  %1624 = vmatmul.mubr.bf16.gmra.mrb[0].mxu0 %v954
  %v1625 = vpop.f32.mrb[0].mxu0
  %v1626 = vadd.f32 %v1289, %v1625
  %v1627 = vpop.f32.mrb[0].mxu0
  %v1628 = vpop.f32.mrb[0].mxu0
  %v1629 = vadd.f32 %v1292, %v1628
  %v1630 = vpop.f32.mrb[0].mxu0
  %1631 = vmatprep.mubr.bf16.mxu0 0
  %1632 = vmatmul.mubr.bf16.gmra.mrb[0].mxu0 %v955
  %v1633 = vpop.f32.mrb[0].mxu0
  %v1634 = vadd.f32 %v1297, %v1633
  %v1635 = vpop.f32.mrb[0].mxu0
  %v1636 = vpop.f32.mrb[0].mxu0
  %v1637 = vadd.f32 %v1300, %v1636
  %v1638 = vpop.f32.mrb[0].mxu0
  %1639 = vmatprep.mubr.bf16.mxu0 0
  %1640 = vmatmul.mubr.bf16.gmra.mrb[0].mxu0 %v956
  %v1641 = vpop.f32.mrb[0].mxu0
  %v1642 = vadd.f32 %v1305, %v1641
  %v1643 = vpop.f32.mrb[0].mxu0
  %v1644 = vpop.f32.mrb[0].mxu0
  %v1645 = vadd.f32 %v1308, %v1644
  %v1646 = vpop.f32.mrb[0].mxu0
  %1647 = vmatprep.mubr.bf16.mxu0 0
  %1648 = vmatmul.mubr.bf16.gmra.mrb[0].mxu0 %v957
  %v1649 = vpop.f32.mrb[0].mxu0
  %v1650 = vadd.f32 %v1313, %v1649
  %v1651 = vpop.f32.mrb[0].mxu0
  %v1652 = vpop.f32.mrb[0].mxu0
  %v1653 = vadd.f32 %v1316, %v1652
  %v1654 = vpop.f32.mrb[0].mxu0
  %1655 = vmatprep.mubr.bf16.mxu0 0
  %1656 = vmatmul.mubr.bf16.gmra.mrb[0].mxu0 %v958
  %v1657 = vpop.f32.mrb[0].mxu0
  %v1658 = vadd.f32 %v1321, %v1657
  %v1659 = vpop.f32.mrb[0].mxu0
  %v1660 = vpop.f32.mrb[0].mxu0
  %v1661 = vadd.f32 %v1324, %v1660
  %v1662 = vpop.f32.mrb[0].mxu0
  %1663 = vmatprep.mubr.bf16.mxu0 0
  %1664 = vmatmul.mubr.bf16.gmra.mrb[0].mxu0 %v959
  %v1665 = vpop.f32.mrb[0].mxu0
  %v1666 = vadd.f32 %v1329, %v1665
  %v1667 = vpop.f32.mrb[0].mxu0
  %v1668 = vpop.f32.mrb[0].mxu0
  %v1669 = vadd.f32 %v1332, %v1668
  %v1670 = vpop.f32.mrb[0].mxu0
  %1671 = vmatprep.mubr.bf16.mxu0 0
  %1672 = vmatmul.mubr.bf16.gmra.mrb[0].mxu0 %v960
  %v1673 = vpop.f32.mrb[0].mxu0
  %v1674 = vadd.f32 %v1337, %v1673
  %v1675 = vpop.f32.mrb[0].mxu0
  %v1676 = vpop.f32.mrb[0].mxu0
  %v1677 = vadd.f32 %v1340, %v1676
  %v1678 = vpop.f32.mrb[0].mxu0
  %1679 = vmatprep.mubr.bf16.mxu0 0
  %1680 = vmatmul.mubr.bf16.gmra.mrb[0].mxu0 %v961
  %v1681 = vpop.f32.mrb[0].mxu0
  %v1682 = vadd.f32 %v1345, %v1681
  %v1683 = vpop.f32.mrb[0].mxu0
  %v1684 = vpop.f32.mrb[0].mxu0
  %v1685 = vadd.f32 %v1348, %v1684
  %v1686 = vpop.f32.mrb[0].mxu0
  %1687 = vmatprep.mubr.bf16.mxu0 0
  %1688 = vmatmul.mubr.bf16.gmra.mrb[0].mxu0 %v962
  %v1689 = vpop.f32.mrb[0].mxu0
  %v1690 = vadd.f32 %v1353, %v1689
  %v1691 = vpop.f32.mrb[0].mxu0
  %v1692 = vpop.f32.mrb[0].mxu0
  %v1693 = vadd.f32 %v1356, %v1692
  %v1694 = vpop.f32.mrb[0].mxu0
  %1695 = vmatprep.mubr.bf16.mxu0 0
  %1696 = vmatmul.mubr.bf16.gmra.mrb[0].mxu0 %v963
  %v1697 = vpop.f32.mrb[0].mxu0
  %v1698 = vadd.f32 %v1361, %v1697
  %v1699 = vpop.f32.mrb[0].mxu0
  %v1700 = vpop.f32.mrb[0].mxu0
  %v1701 = vadd.f32 %v1364, %v1700
  %v1702 = vpop.f32.mrb[0].mxu0
  %1703 = vmatprep.mubr.bf16.mxu0 0
  %1704 = vmatmul.mubr.bf16.gmra.mrb[0].mxu0 %v964
  %v1705 = vpop.f32.mrb[0].mxu0
  %v1706 = vadd.f32 %v1369, %v1705
  %v1707 = vpop.f32.mrb[0].mxu0
  %v1708 = vpop.f32.mrb[0].mxu0
  %v1709 = vadd.f32 %v1372, %v1708
  %v1710 = vpop.f32.mrb[0].mxu0
  %1711 = vmatprep.mubr.bf16.mxu0 0
  %1712 = vmatmul.mubr.bf16.gmra.mrb[0].mxu0 %v965
  %v1713 = vpop.f32.mrb[0].mxu0
  %v1714 = vadd.f32 %v1377, %v1713
  %v1715 = vpop.f32.mrb[0].mxu0
  %v1716 = vpop.f32.mrb[0].mxu0
  %v1717 = vadd.f32 %v1380, %v1716
  %v1718 = vpop.f32.mrb[0].mxu0
  %1719 = vmatprep.mubr.bf16.mxu0 0
  %1720 = vmatmul.mubr.bf16.gmra.mrb[0].mxu0 %v966
  %v1721 = vpop.f32.mrb[0].mxu0
  %v1722 = vadd.f32 %v1385, %v1721
  %v1723 = vpop.f32.mrb[0].mxu0
  %v1724 = vpop.f32.mrb[0].mxu0
  %v1725 = vadd.f32 %v1388, %v1724
  %v1726 = vpop.f32.mrb[0].mxu0
  %1727 = vmatprep.mubr.bf16.mxu0 0
  %1728 = vmatmul.mubr.bf16.gmra.mrb[0].mxu0 %v967
  %v1729 = vpop.f32.mrb[0].mxu0
  %v1730 = vadd.f32 %v1393, %v1729
  %v1731 = vpop.f32.mrb[0].mxu0
  %v1732 = vpop.f32.mrb[0].mxu0
  %v1733 = vadd.f32 %v1396, %v1732
  %v1734 = vpop.f32.mrb[0].mxu0
  %1735 = vmatprep.mubr.bf16.mxu0 0
  %1736 = vmatmul.mubr.bf16.gmra.mrb[0].mxu0 %v968
  %v1737 = vpop.f32.mrb[0].mxu0
  %v1738 = vadd.f32 %v1401, %v1737
  %v1739 = vpop.f32.mrb[0].mxu0
  %v1740 = vpop.f32.mrb[0].mxu0
  %v1741 = vadd.f32 %v1404, %v1740
  %v1742 = vpop.f32.mrb[0].mxu0
  %1743 = vmatprep.mubr.bf16.mxu0 0
  %1744 = vmatmul.mubr.bf16.gmra.mrb[0].mxu0 %v969
  %v1745 = vpop.f32.mrb[0].mxu0
  %v1746 = vadd.f32 %v1409, %v1745
  %v1747 = vpop.f32.mrb[0].mxu0
  %v1748 = vpop.f32.mrb[0].mxu0
  %v1749 = vadd.f32 %v1412, %v1748
  %v1750 = vpop.f32.mrb[0].mxu0
  %1751 = vmatprep.mubr.bf16.mxu0 0
  %1752 = vmatmul.mubr.bf16.gmra.mrb[0].mxu0 %v970
  %v1753 = vpop.f32.mrb[0].mxu0
  %v1754 = vadd.f32 %v1417, %v1753
  %v1755 = vpop.f32.mrb[0].mxu0
  %v1756 = vpop.f32.mrb[0].mxu0
  %v1757 = vadd.f32 %v1420, %v1756
  %v1758 = vpop.f32.mrb[0].mxu0
  %1759 = vmatprep.mubr.bf16.mxu0 0
  %1760 = vmatmul.mubr.bf16.gmra.mrb[0].mxu0 %v971
  %v1761 = vpop.f32.mrb[0].mxu0
  %v1762 = vadd.f32 %v1425, %v1761
  %v1763 = vpop.f32.mrb[0].mxu0
  %v1764 = vpop.f32.mrb[0].mxu0
  %v1765 = vadd.f32 %v1428, %v1764
  %v1766 = vpop.f32.mrb[0].mxu0
  %1767 = vmatprep.mubr.bf16.mxu0 0
  %1768 = vmatmul.mubr.bf16.gmra.mrb[0].mxu0 %v972
  %v1769 = vpop.f32.mrb[0].mxu0
  %v1770 = vadd.f32 %v1433, %v1769
  %v1771 = vpop.f32.mrb[0].mxu0
  %v1772 = vpop.f32.mrb[0].mxu0
  %v1773 = vadd.f32 %v1436, %v1772
  %v1774 = vpop.f32.mrb[0].mxu0
  %1775 = vdwg.mxu0
  %v1776 = vld [vmem:[#allocation2 + $0x2] sm:$0xff]
  %v1777 = vld [vmem:[#allocation2 + $0xa] sm:$0xff]
  %v1778 = vld [vmem:[#allocation2 + $0x1a] sm:$0xff]
  %v1779 = vld [vmem:[#allocation2 + $0x22] sm:$0xff]
  %v1780 = vld [vmem:[#allocation2 + $0x32] sm:$0xff]
  %v1781 = vld [vmem:[#allocation2 + $0x3a] sm:$0xff]
  %v1782 = vld [vmem:[#allocation2 + $0x4a] sm:$0xff]
  %v1783 = vld [vmem:[#allocation2 + $0x52] sm:$0xff]
  %v1784 = vld [vmem:[#allocation2 + $0x62] sm:$0xff]
  %v1785 = vld [vmem:[#allocation2 + $0x6a] sm:$0xff]
  %v1786 = vld [vmem:[#allocation2 + $0x7a] sm:$0xff]
  %v1787 = vld [vmem:[#allocation2 + $0x82] sm:$0xff]
  %v1788 = vld [vmem:[#allocation2 + $0x92] sm:$0xff]
  %v1789 = vld [vmem:[#allocation2 + $0x9a] sm:$0xff]
  %v1790 = vld [vmem:[#allocation2 + $0xaa] sm:$0xff]
  %v1791 = vld [vmem:[#allocation2 + $0xb2] sm:$0xff]
  %v1792 = vld [vmem:[#allocation2 + $0xc2] sm:$0xff]
  %v1793 = vld [vmem:[#allocation2 + $0xca] sm:$0xff]
  %v1794 = vld [vmem:[#allocation2 + $0xda] sm:$0xff]
  %v1795 = vld [vmem:[#allocation2 + $0xe2] sm:$0xff]
  %v1796 = vld [vmem:[#allocation2 + $0xf2] sm:$0xff]
  %v1797 = vld [vmem:[#allocation2 + $0xfa] sm:$0xff]
  %v1798 = vld [vmem:[#allocation2 + $0x10a] sm:$0xff]
  %v1799 = vld [vmem:[#allocation2 + $0x112] sm:$0xff]
  %v1800 = vld [vmem:[#allocation2 + $0x122] sm:$0xff]
  %v1801 = vld [vmem:[#allocation2 + $0x12a] sm:$0xff]
  %v1802 = vld [vmem:[#allocation2 + $0x13a] sm:$0xff]
  %v1803 = vld [vmem:[#allocation2 + $0x142] sm:$0xff]
  %v1804 = vld [vmem:[#allocation2 + $0x152] sm:$0xff]
  %v1805 = vld [vmem:[#allocation2 + $0x15a] sm:$0xff]
  %v1806 = vld [vmem:[#allocation2 + $0x16a] sm:$0xff]
  %v1807 = vld [vmem:[#allocation2 + $0x172] sm:$0xff]
  %v1808 = vld [vmem:[#allocation2 + $0x1b2] sm:$0xff]
  %v1809 = vld [vmem:[#allocation2 + $0x1ba] sm:$0xff]
  %v1810 = vld [vmem:[#allocation2 + $0x1ca] sm:$0xff]
  %v1811 = vld [vmem:[#allocation2 + $0x1d2] sm:$0xff]
  %v1812 = vld [vmem:[#allocation2 + $0x1e2] sm:$0xff]
  %v1813 = vld [vmem:[#allocation2 + $0x1ea] sm:$0xff]
  %v1814 = vld [vmem:[#allocation2 + $0x1fa] sm:$0xff]
  %v1815 = vld [vmem:[#allocation2 + $0x202] sm:$0xff]
  %v1816 = vld [vmem:[#allocation2 + $0x212] sm:$0xff]
  %v1817 = vld [vmem:[#allocation2 + $0x21a] sm:$0xff]
  %v1818 = vld [vmem:[#allocation2 + $0x22a] sm:$0xff]
  %v1819 = vld [vmem:[#allocation2 + $0x232] sm:$0xff]
  %v1820 = vld [vmem:[#allocation2 + $0x242] sm:$0xff]
  %v1821 = vld [vmem:[#allocation2 + $0x24a] sm:$0xff]
  %v1822 = vld [vmem:[#allocation2 + $0x25a] sm:$0xff]
  %v1823 = vld [vmem:[#allocation2 + $0x262] sm:$0xff]
  %v1824 = vld [vmem:[#allocation2 + $0x272] sm:$0xff]
  %v1825 = vld [vmem:[#allocation2 + $0x27a] sm:$0xff]
  %v1826 = vld [vmem:[#allocation2 + $0x28a] sm:$0xff]
  %v1827 = vld [vmem:[#allocation2 + $0x292] sm:$0xff]
  %v1828 = vld [vmem:[#allocation2 + $0x2a2] sm:$0xff]
  %v1829 = vld [vmem:[#allocation2 + $0x2aa] sm:$0xff]
  %v1830 = vld [vmem:[#allocation2 + $0x2ba] sm:$0xff]
  %v1831 = vld [vmem:[#allocation2 + $0x2c2] sm:$0xff]
  %v1832 = vld [vmem:[#allocation2 + $0x2d2] sm:$0xff]
  %v1833 = vld [vmem:[#allocation2 + $0x2da] sm:$0xff]
  %v1834 = vld [vmem:[#allocation2 + $0x2ea] sm:$0xff]
  %v1835 = vld [vmem:[#allocation2 + $0x2f2] sm:$0xff]
  %v1836 = vld [vmem:[#allocation2 + $0x302] sm:$0xff]
  %v1837 = vld [vmem:[#allocation2 + $0x30a] sm:$0xff]
  %v1838 = vld [vmem:[#allocation2 + $0x31a] sm:$0xff]
  %v1839 = vld [vmem:[#allocation2 + $0x322] sm:$0xff]
  %v1840 = vpack.c.bf16 %v1777, %v1776
  %v1841 = vpack.c.bf16 %v1779, %v1778
  %v1842 = vpack.c.bf16 %v1781, %v1780
  %v1843 = vpack.c.bf16 %v1783, %v1782
  %v1844 = vpack.c.bf16 %v1785, %v1784
  %v1845 = vpack.c.bf16 %v1787, %v1786
  %v1846 = vpack.c.bf16 %v1789, %v1788
  %v1847 = vpack.c.bf16 %v1791, %v1790
  %v1848 = vpack.c.bf16 %v1793, %v1792
  %v1849 = vpack.c.bf16 %v1795, %v1794
  %v1850 = vpack.c.bf16 %v1797, %v1796
  %v1851 = vpack.c.bf16 %v1799, %v1798
  %v1852 = vpack.c.bf16 %v1801, %v1800
  %v1853 = vpack.c.bf16 %v1803, %v1802
  %v1854 = vpack.c.bf16 %v1805, %v1804
  %v1855 = vpack.c.bf16 %v1807, %v1806
  %v1856 = vpack.c.bf16 %v1809, %v1808
  %v1857 = vpack.c.bf16 %v1811, %v1810
  %v1858 = vpack.c.bf16 %v1813, %v1812
  %v1859 = vpack.c.bf16 %v1815, %v1814
  %v1860 = vpack.c.bf16 %v1817, %v1816
  %v1861 = vpack.c.bf16 %v1819, %v1818
  %v1862 = vpack.c.bf16 %v1821, %v1820
  %v1863 = vpack.c.bf16 %v1823, %v1822
  %v1864 = vpack.c.bf16 %v1825, %v1824
  %v1865 = vpack.c.bf16 %v1827, %v1826
  %v1866 = vpack.c.bf16 %v1829, %v1828
  %v1867 = vpack.c.bf16 %v1831, %v1830
  %v1868 = vpack.c.bf16 %v1833, %v1832
  %v1869 = vpack.c.bf16 %v1835, %v1834
  %v1870 = vpack.c.bf16 %v1837, %v1836
  %v1871 = vpack.c.bf16 %v1839, %v1838
  %s1872 = scalar_lea.vmem %s3, 128
  %v1873 = vld [vmem:[%s1872] sm:$0xf]
  %v1874 = vld [vmem:[%s1872 + $0x4] sm:$0xf]
  %v1875 = vld [vmem:[%s1872 + $0x8] sm:$0xf]
  %v1876 = vld [vmem:[%s1872 + $0xc] sm:$0xf]
  %v1877 = vld [vmem:[%s1872 + $0x10] sm:$0xf]
  %v1878 = vld [vmem:[%s1872 + $0x14] sm:$0xf]
  %v1879 = vld [vmem:[%s1872 + $0x18] sm:$0xf]
  %v1880 = vld [vmem:[%s1872 + $0x1c] sm:$0xf]
  %v1881 = vld [vmem:[%s1872 + $0x20] sm:$0xf]
  %v1882 = vld [vmem:[%s1872 + $0x24] sm:$0xf]
  %v1883 = vld [vmem:[%s1872 + $0x28] sm:$0xf]
  %v1884 = vld [vmem:[%s1872 + $0x2c] sm:$0xf]
  %v1885 = vld [vmem:[%s1872 + $0x30] sm:$0xf]
  %v1886 = vld [vmem:[%s1872 + $0x34] sm:$0xf]
  %v1887 = vld [vmem:[%s1872 + $0x38] sm:$0xf]
  %v1888 = vld [vmem:[%s1872 + $0x3c] sm:$0xf]
  %v1905 = vunpack.c.l.b16 %v1873
  %v1906 = vunpack.c.l.b16 %v1874
  %v1907 = vunpack.c.l.b16 %v1875
  %v1908 = vunpack.c.l.b16 %v1876
  %v1909 = vunpack.c.l.b16 %v1877
  %v1910 = vunpack.c.l.b16 %v1878
  %v1911 = vunpack.c.l.b16 %v1879
  %v1912 = vunpack.c.l.b16 %v1880
  %v1913 = vunpack.c.l.b16 %v1881
  %v1914 = vunpack.c.l.b16 %v1882
  %v1915 = vunpack.c.l.b16 %v1883
  %v1916 = vunpack.c.l.b16 %v1884
  %v1917 = vunpack.c.l.b16 %v1885
  %v1918 = vunpack.c.l.b16 %v1886
  %v1919 = vunpack.c.l.b16 %v1887
  %v1920 = vunpack.c.l.b16 %v1888
  %v1921 = vpack.c.b16 %v1906, %v1905
  %v1922 = vpack.c.b16 %v1908, %v1907
  %v1923 = vpack.c.b16 %v1910, %v1909
  %v1924 = vpack.c.b16 %v1912, %v1911
  %v1925 = vpack.c.b16 %v1914, %v1913
  %v1926 = vpack.c.b16 %v1916, %v1915
  %v1927 = vpack.c.b16 %v1918, %v1917
  %v1928 = vpack.c.b16 %v1920, %v1919
  %1937 = vmatprep.subr.bf16.mxu0 0
  %1938 = vmatpush1.bf16.msra.mxu0 %v1921
  %1939 = vmatprep.subr.bf16.mxu0 0
  %1940 = vmatpush1.bf16.msra.mxu0 %v1922
  %1941 = vmatprep.subr.bf16.mxu0 0
  %1942 = vmatpush1.bf16.msra.mxu0 %v1923
  %1943 = vmatprep.subr.bf16.mxu0 0
  %1944 = vmatpush1.bf16.msra.mxu0 %v1924
  %1945 = vmatprep.subr.bf16.mxu0 0
  %1946 = vmatpush1.bf16.msra.mxu0 %v1925
  %1947 = vmatprep.subr.bf16.mxu0 0
  %1948 = vmatpush1.bf16.msra.mxu0 %v1926
  %1949 = vmatprep.subr.bf16.mxu0 0
  %1950 = vmatpush1.bf16.msra.mxu0 %v1927
  %1951 = vmatprep.subr.bf16.mxu0 0
  %1952 = vmatpush1.bf16.msra.mxu0 %v1928
  %1953 = vmatprep.subr.bf16.mxu0 0
  %1954 = vmatpush1.bf16.msra.mxu0 0
  %1955 = vmatprep.subr.bf16.mxu0 0
  %1956 = vmatpush1.bf16.msra.mxu0 0
  %1957 = vmatprep.subr.bf16.mxu0 0
  %1958 = vmatpush1.bf16.msra.mxu0 0
  %1959 = vmatprep.subr.bf16.mxu0 0
  %1960 = vmatpush1.bf16.msra.mxu0 0
  %1961 = vmatprep.subr.bf16.mxu0 0
  %1962 = vmatpush1.bf16.msra.mxu0 0
  %1963 = vmatprep.subr.bf16.mxu0 0
  %1964 = vmatpush1.bf16.msra.mxu0 0
  %1965 = vmatprep.subr.bf16.mxu0 0
  %1966 = vmatpush1.bf16.msra.mxu0 0
  %1967 = vmatprep.subr.bf16.mxu0 0
  %1968 = vmatpush1.bf16.msra.mxu0 0
  %1969 = vmatprep.mubr.bf16.mxu0 0
  %1970 = vmatmul.mubr.bf16.gmra.mrb[0].mxu0 %v1840
  %v1971 = vpop.f32.mrb[0].mxu0
  %v1972 = vadd.f32 0.0, %v1971
  %v1973 = vpop.f32.mrb[0].mxu0
  %v1974 = vpop.f32.mrb[0].mxu0
  %v1975 = vadd.f32 0.0, %v1974
  %v1976 = vpop.f32.mrb[0].mxu0
  %1977 = vmatprep.mubr.bf16.mxu0 0
  %1978 = vmatmul.mubr.bf16.gmra.mrb[0].mxu0 %v1841
  %v1979 = vpop.f32.mrb[0].mxu0
  %v1980 = vadd.f32 0.0, %v1979
  %v1981 = vpop.f32.mrb[0].mxu0
  %v1982 = vpop.f32.mrb[0].mxu0
  %v1983 = vadd.f32 0.0, %v1982
  %v1984 = vpop.f32.mrb[0].mxu0
  %1985 = vmatprep.mubr.bf16.mxu0 0
  %1986 = vmatmul.mubr.bf16.gmra.mrb[0].mxu0 %v1842
  %v1987 = vpop.f32.mrb[0].mxu0
  %v1988 = vadd.f32 0.0, %v1987
  %v1989 = vpop.f32.mrb[0].mxu0
  %v1990 = vpop.f32.mrb[0].mxu0
  %v1991 = vadd.f32 0.0, %v1990
  %v1992 = vpop.f32.mrb[0].mxu0
  %1993 = vmatprep.mubr.bf16.mxu0 0
  %1994 = vmatmul.mubr.bf16.gmra.mrb[0].mxu0 %v1843
  %v1995 = vpop.f32.mrb[0].mxu0
  %v1996 = vadd.f32 0.0, %v1995
  %v1997 = vpop.f32.mrb[0].mxu0
  %v1998 = vpop.f32.mrb[0].mxu0
  %v1999 = vadd.f32 0.0, %v1998
  %v2000 = vpop.f32.mrb[0].mxu0
  %2001 = vmatprep.mubr.bf16.mxu0 0
  %2002 = vmatmul.mubr.bf16.gmra.mrb[0].mxu0 %v1844
  %v2003 = vpop.f32.mrb[0].mxu0
  %v2004 = vadd.f32 0.0, %v2003
  %v2005 = vpop.f32.mrb[0].mxu0
  %v2006 = vpop.f32.mrb[0].mxu0
  %v2007 = vadd.f32 0.0, %v2006
  %v2008 = vpop.f32.mrb[0].mxu0
  %2009 = vmatprep.mubr.bf16.mxu0 0
  %2010 = vmatmul.mubr.bf16.gmra.mrb[0].mxu0 %v1845
  %v2011 = vpop.f32.mrb[0].mxu0
  %v2012 = vadd.f32 0.0, %v2011
  %v2013 = vpop.f32.mrb[0].mxu0
  %v2014 = vpop.f32.mrb[0].mxu0
  %v2015 = vadd.f32 0.0, %v2014
  %v2016 = vpop.f32.mrb[0].mxu0
  %2017 = vmatprep.mubr.bf16.mxu0 0
  %2018 = vmatmul.mubr.bf16.gmra.mrb[0].mxu0 %v1846
  %v2019 = vpop.f32.mrb[0].mxu0
  %v2020 = vadd.f32 0.0, %v2019
  %v2021 = vpop.f32.mrb[0].mxu0
  %v2022 = vpop.f32.mrb[0].mxu0
  %v2023 = vadd.f32 0.0, %v2022
  %v2024 = vpop.f32.mrb[0].mxu0
  %2025 = vmatprep.mubr.bf16.mxu0 0
  %2026 = vmatmul.mubr.bf16.gmra.mrb[0].mxu0 %v1847
  %v2027 = vpop.f32.mrb[0].mxu0
  %v2028 = vadd.f32 0.0, %v2027
  %v2029 = vpop.f32.mrb[0].mxu0
  %v2030 = vpop.f32.mrb[0].mxu0
  %v2031 = vadd.f32 0.0, %v2030
  %v2032 = vpop.f32.mrb[0].mxu0
  %2033 = vmatprep.mubr.bf16.mxu0 0
  %2034 = vmatmul.mubr.bf16.gmra.mrb[0].mxu0 %v1848
  %v2035 = vpop.f32.mrb[0].mxu0
  %v2036 = vadd.f32 0.0, %v2035
  %v2037 = vpop.f32.mrb[0].mxu0
  %v2038 = vpop.f32.mrb[0].mxu0
  %v2039 = vadd.f32 0.0, %v2038
  %v2040 = vpop.f32.mrb[0].mxu0
  %2041 = vmatprep.mubr.bf16.mxu0 0
  %2042 = vmatmul.mubr.bf16.gmra.mrb[0].mxu0 %v1849
  %v2043 = vpop.f32.mrb[0].mxu0
  %v2044 = vadd.f32 0.0, %v2043
  %v2045 = vpop.f32.mrb[0].mxu0
  %v2046 = vpop.f32.mrb[0].mxu0
  %v2047 = vadd.f32 0.0, %v2046
  %v2048 = vpop.f32.mrb[0].mxu0
  %2049 = vmatprep.mubr.bf16.mxu0 0
  %2050 = vmatmul.mubr.bf16.gmra.mrb[0].mxu0 %v1850
  %v2051 = vpop.f32.mrb[0].mxu0
  %v2052 = vadd.f32 0.0, %v2051
  %v2053 = vpop.f32.mrb[0].mxu0
  %v2054 = vpop.f32.mrb[0].mxu0
  %v2055 = vadd.f32 0.0, %v2054
  %v2056 = vpop.f32.mrb[0].mxu0
  %2057 = vmatprep.mubr.bf16.mxu0 0
  %2058 = vmatmul.mubr.bf16.gmra.mrb[0].mxu0 %v1851
  %v2059 = vpop.f32.mrb[0].mxu0
  %v2060 = vadd.f32 0.0, %v2059
  %v2061 = vpop.f32.mrb[0].mxu0
  %v2062 = vpop.f32.mrb[0].mxu0
  %v2063 = vadd.f32 0.0, %v2062
  %v2064 = vpop.f32.mrb[0].mxu0
  %2065 = vmatprep.mubr.bf16.mxu0 0
  %2066 = vmatmul.mubr.bf16.gmra.mrb[0].mxu0 %v1852
  %v2067 = vpop.f32.mrb[0].mxu0
  %v2068 = vadd.f32 0.0, %v2067
  %v2069 = vpop.f32.mrb[0].mxu0
  %v2070 = vpop.f32.mrb[0].mxu0
  %v2071 = vadd.f32 0.0, %v2070
  %v2072 = vpop.f32.mrb[0].mxu0
  %2073 = vmatprep.mubr.bf16.mxu0 0
  %2074 = vmatmul.mubr.bf16.gmra.mrb[0].mxu0 %v1853
  %v2075 = vpop.f32.mrb[0].mxu0
  %v2076 = vadd.f32 0.0, %v2075
  %v2077 = vpop.f32.mrb[0].mxu0
  %v2078 = vpop.f32.mrb[0].mxu0
  %v2079 = vadd.f32 0.0, %v2078
  %v2080 = vpop.f32.mrb[0].mxu0
  %2081 = vmatprep.mubr.bf16.mxu0 0
  %2082 = vmatmul.mubr.bf16.gmra.mrb[0].mxu0 %v1854
  %v2083 = vpop.f32.mrb[0].mxu0
  %v2084 = vadd.f32 0.0, %v2083
  %v2085 = vpop.f32.mrb[0].mxu0
  %v2086 = vpop.f32.mrb[0].mxu0
  %v2087 = vadd.f32 0.0, %v2086
  %v2088 = vpop.f32.mrb[0].mxu0
  %2089 = vmatprep.mubr.bf16.mxu0 0
  %2090 = vmatmul.mubr.bf16.gmra.mrb[0].mxu0 %v1855
  %v2091 = vpop.f32.mrb[0].mxu0
  %v2092 = vadd.f32 0.0, %v2091
  %v2093 = vpop.f32.mrb[0].mxu0
  %v2094 = vpop.f32.mrb[0].mxu0
  %v2095 = vadd.f32 0.0, %v2094
  %v2096 = vpop.f32.mrb[0].mxu0
  %2097 = vmatprep.mubr.bf16.mxu0 0
  %2098 = vmatmul.mubr.bf16.gmra.mrb[0].mxu0 %v1856
  %v2099 = vpop.f32.mrb[0].mxu0
  %v2100 = vadd.f32 0.0, %v2099
  %v2101 = vpop.f32.mrb[0].mxu0
  %v2102 = vpop.f32.mrb[0].mxu0
  %v2103 = vadd.f32 0.0, %v2102
  %v2104 = vpop.f32.mrb[0].mxu0
  %2105 = vmatprep.mubr.bf16.mxu0 0
  %2106 = vmatmul.mubr.bf16.gmra.mrb[0].mxu0 %v1857
  %v2107 = vpop.f32.mrb[0].mxu0
  %v2108 = vadd.f32 0.0, %v2107
  %v2109 = vpop.f32.mrb[0].mxu0
  %v2110 = vpop.f32.mrb[0].mxu0
  %v2111 = vadd.f32 0.0, %v2110
  %v2112 = vpop.f32.mrb[0].mxu0
  %2113 = vmatprep.mubr.bf16.mxu0 0
  %2114 = vmatmul.mubr.bf16.gmra.mrb[0].mxu0 %v1858
  %v2115 = vpop.f32.mrb[0].mxu0
  %v2116 = vadd.f32 0.0, %v2115
  %v2117 = vpop.f32.mrb[0].mxu0
  %v2118 = vpop.f32.mrb[0].mxu0
  %v2119 = vadd.f32 0.0, %v2118
  %v2120 = vpop.f32.mrb[0].mxu0
  %2121 = vmatprep.mubr.bf16.mxu0 0
  %2122 = vmatmul.mubr.bf16.gmra.mrb[0].mxu0 %v1859
  %v2123 = vpop.f32.mrb[0].mxu0
  %v2124 = vadd.f32 0.0, %v2123
  %v2125 = vpop.f32.mrb[0].mxu0
  %v2126 = vpop.f32.mrb[0].mxu0
  %v2127 = vadd.f32 0.0, %v2126
  %v2128 = vpop.f32.mrb[0].mxu0
  %2129 = vmatprep.mubr.bf16.mxu0 0
  %2130 = vmatmul.mubr.bf16.gmra.mrb[0].mxu0 %v1860
  %v2131 = vpop.f32.mrb[0].mxu0
  %v2132 = vadd.f32 0.0, %v2131
  %v2133 = vpop.f32.mrb[0].mxu0
  %v2134 = vpop.f32.mrb[0].mxu0
  %v2135 = vadd.f32 0.0, %v2134
  %v2136 = vpop.f32.mrb[0].mxu0
  %2137 = vmatprep.mubr.bf16.mxu0 0
  %2138 = vmatmul.mubr.bf16.gmra.mrb[0].mxu0 %v1861
  %v2139 = vpop.f32.mrb[0].mxu0
  %v2140 = vadd.f32 0.0, %v2139
  %v2141 = vpop.f32.mrb[0].mxu0
  %v2142 = vpop.f32.mrb[0].mxu0
  %v2143 = vadd.f32 0.0, %v2142
  %v2144 = vpop.f32.mrb[0].mxu0
  %2145 = vmatprep.mubr.bf16.mxu0 0
  %2146 = vmatmul.mubr.bf16.gmra.mrb[0].mxu0 %v1862
  %v2147 = vpop.f32.mrb[0].mxu0
  %v2148 = vadd.f32 0.0, %v2147
  %v2149 = vpop.f32.mrb[0].mxu0
  %v2150 = vpop.f32.mrb[0].mxu0
  %v2151 = vadd.f32 0.0, %v2150
  %v2152 = vpop.f32.mrb[0].mxu0
  %2153 = vmatprep.mubr.bf16.mxu0 0
  %2154 = vmatmul.mubr.bf16.gmra.mrb[0].mxu0 %v1863
  %v2155 = vpop.f32.mrb[0].mxu0
  %v2156 = vadd.f32 0.0, %v2155
  %v2157 = vpop.f32.mrb[0].mxu0
  %v2158 = vpop.f32.mrb[0].mxu0
  %v2159 = vadd.f32 0.0, %v2158
  %v2160 = vpop.f32.mrb[0].mxu0
  %2161 = vmatprep.mubr.bf16.mxu0 0
  %2162 = vmatmul.mubr.bf16.gmra.mrb[0].mxu0 %v1864
  %v2163 = vpop.f32.mrb[0].mxu0
  %v2164 = vadd.f32 0.0, %v2163
  %v2165 = vpop.f32.mrb[0].mxu0
  %v2166 = vpop.f32.mrb[0].mxu0
  %v2167 = vadd.f32 0.0, %v2166
  %v2168 = vpop.f32.mrb[0].mxu0
  %2169 = vmatprep.mubr.bf16.mxu0 0
  %2170 = vmatmul.mubr.bf16.gmra.mrb[0].mxu0 %v1865
  %v2171 = vpop.f32.mrb[0].mxu0
  %v2172 = vadd.f32 0.0, %v2171
  %v2173 = vpop.f32.mrb[0].mxu0
  %v2174 = vpop.f32.mrb[0].mxu0
  %v2175 = vadd.f32 0.0, %v2174
  %v2176 = vpop.f32.mrb[0].mxu0
  %2177 = vmatprep.mubr.bf16.mxu0 0
  %2178 = vmatmul.mubr.bf16.gmra.mrb[0].mxu0 %v1866
  %v2179 = vpop.f32.mrb[0].mxu0
  %v2180 = vadd.f32 0.0, %v2179
  %v2181 = vpop.f32.mrb[0].mxu0
  %v2182 = vpop.f32.mrb[0].mxu0
  %v2183 = vadd.f32 0.0, %v2182
  %v2184 = vpop.f32.mrb[0].mxu0
  %2185 = vmatprep.mubr.bf16.mxu0 0
  %2186 = vmatmul.mubr.bf16.gmra.mrb[0].mxu0 %v1867
  %v2187 = vpop.f32.mrb[0].mxu0
  %v2188 = vadd.f32 0.0, %v2187
  %v2189 = vpop.f32.mrb[0].mxu0
  %v2190 = vpop.f32.mrb[0].mxu0
  %v2191 = vadd.f32 0.0, %v2190
  %v2192 = vpop.f32.mrb[0].mxu0
  %2193 = vmatprep.mubr.bf16.mxu0 0
  %2194 = vmatmul.mubr.bf16.gmra.mrb[0].mxu0 %v1868
  %v2195 = vpop.f32.mrb[0].mxu0
  %v2196 = vadd.f32 0.0, %v2195
  %v2197 = vpop.f32.mrb[0].mxu0
  %v2198 = vpop.f32.mrb[0].mxu0
  %v2199 = vadd.f32 0.0, %v2198
  %v2200 = vpop.f32.mrb[0].mxu0
  %2201 = vmatprep.mubr.bf16.mxu0 0
  %2202 = vmatmul.mubr.bf16.gmra.mrb[0].mxu0 %v1869
  %v2203 = vpop.f32.mrb[0].mxu0
  %v2204 = vadd.f32 0.0, %v2203
  %v2205 = vpop.f32.mrb[0].mxu0
  %v2206 = vpop.f32.mrb[0].mxu0
  %v2207 = vadd.f32 0.0, %v2206
  %v2208 = vpop.f32.mrb[0].mxu0
  %2209 = vmatprep.mubr.bf16.mxu0 0
  %2210 = vmatmul.mubr.bf16.gmra.mrb[0].mxu0 %v1870
  %v2211 = vpop.f32.mrb[0].mxu0
  %v2212 = vadd.f32 0.0, %v2211
  %v2213 = vpop.f32.mrb[0].mxu0
  %v2214 = vpop.f32.mrb[0].mxu0
  %v2215 = vadd.f32 0.0, %v2214
  %v2216 = vpop.f32.mrb[0].mxu0
  %2217 = vmatprep.mubr.bf16.mxu0 0
  %2218 = vmatmul.mubr.bf16.gmra.mrb[0].mxu0 %v1871
  %v2219 = vpop.f32.mrb[0].mxu0
  %v2220 = vadd.f32 0.0, %v2219
  %v2221 = vpop.f32.mrb[0].mxu0
  %v2222 = vpop.f32.mrb[0].mxu0
  %v2223 = vadd.f32 0.0, %v2222
  %v2224 = vpop.f32.mrb[0].mxu0
  %2225 = vdwg.mxu0
  %v2226 = vadd.f32 %v1522, %v1972
  %v2227 = vadd.f32 %v1525, %v1975
  %v2228 = vadd.f32 %v1530, %v1980
  %v2229 = vadd.f32 %v1533, %v1983
  %v2230 = vadd.f32 %v1538, %v1988
  %v2231 = vadd.f32 %v1541, %v1991
  %v2232 = vadd.f32 %v1546, %v1996
  %v2233 = vadd.f32 %v1549, %v1999
  %v2234 = vadd.f32 %v1554, %v2004
  %v2235 = vadd.f32 %v1557, %v2007
  %v2236 = vadd.f32 %v1562, %v2012
  %v2237 = vadd.f32 %v1565, %v2015
  %v2238 = vadd.f32 %v1570, %v2020
  %v2239 = vadd.f32 %v1573, %v2023
  %v2240 = vadd.f32 %v1578, %v2028
  %v2241 = vadd.f32 %v1581, %v2031
  %v2242 = vadd.f32 %v1586, %v2036
  %v2243 = vadd.f32 %v1589, %v2039
  %v2244 = vadd.f32 %v1594, %v2044
  %v2245 = vadd.f32 %v1597, %v2047
  %v2246 = vadd.f32 %v1602, %v2052
  %v2247 = vadd.f32 %v1605, %v2055
  %v2248 = vadd.f32 %v1610, %v2060
  %v2249 = vadd.f32 %v1613, %v2063
  %v2250 = vadd.f32 %v1618, %v2068
  %v2251 = vadd.f32 %v1621, %v2071
  %v2252 = vadd.f32 %v1626, %v2076
  %v2253 = vadd.f32 %v1629, %v2079
  %v2254 = vadd.f32 %v1634, %v2084
  %v2255 = vadd.f32 %v1637, %v2087
  %v2256 = vadd.f32 %v1642, %v2092
  %v2257 = vadd.f32 %v1645, %v2095
  %v2258 = vadd.f32 %v1650, %v2100
  %v2259 = vadd.f32 %v1653, %v2103
  %v2260 = vadd.f32 %v1658, %v2108
  %v2261 = vadd.f32 %v1661, %v2111
  %v2262 = vadd.f32 %v1666, %v2116
  %v2263 = vadd.f32 %v1669, %v2119
  %v2264 = vadd.f32 %v1674, %v2124
  %v2265 = vadd.f32 %v1677, %v2127
  %v2266 = vadd.f32 %v1682, %v2132
  %v2267 = vadd.f32 %v1685, %v2135
  %v2268 = vadd.f32 %v1690, %v2140
  %v2269 = vadd.f32 %v1693, %v2143
  %v2270 = vadd.f32 %v1698, %v2148
  %v2271 = vadd.f32 %v1701, %v2151
  %v2272 = vadd.f32 %v1706, %v2156
  %v2273 = vadd.f32 %v1709, %v2159
  %v2274 = vadd.f32 %v1714, %v2164
  %v2275 = vadd.f32 %v1717, %v2167
  %v2276 = vadd.f32 %v1722, %v2172
  %v2277 = vadd.f32 %v1725, %v2175
  %v2278 = vadd.f32 %v1730, %v2180
  %v2279 = vadd.f32 %v1733, %v2183
  %v2280 = vadd.f32 %v1738, %v2188
  %v2281 = vadd.f32 %v1741, %v2191
  %v2282 = vadd.f32 %v1746, %v2196
  %v2283 = vadd.f32 %v1749, %v2199
  %v2284 = vadd.f32 %v1754, %v2204
  %v2285 = vadd.f32 %v1757, %v2207
  %v2286 = vadd.f32 %v1762, %v2212
  %v2287 = vadd.f32 %v1765, %v2215
  %v2288 = vadd.f32 %v1770, %v2220
  %v2289 = vadd.f32 %v1773, %v2223
  %v2290 = vld [vmem:[%s812] sm:$0xff]
  %v2291 = vld [vmem:[%s812 + $0x8] sm:$0xff]
  %v2292 = vld [vmem:[%s812 + $0x18] sm:$0xff]
  %v2293 = vld [vmem:[%s812 + $0x20] sm:$0xff]
  %v2294 = vld [vmem:[%s812 + $0x30] sm:$0xff]
  %v2295 = vld [vmem:[%s812 + $0x38] sm:$0xff]
  %v2296 = vld [vmem:[%s812 + $0x48] sm:$0xff]
  %v2297 = vld [vmem:[%s812 + $0x50] sm:$0xff]
  %v2298 = vld [vmem:[%s812 + $0x60] sm:$0xff]
  %v2299 = vld [vmem:[%s812 + $0x68] sm:$0xff]
  %v2300 = vld [vmem:[%s812 + $0x78] sm:$0xff]
  %v2301 = vld [vmem:[%s812 + $0x80] sm:$0xff]
  %v2302 = vld [vmem:[%s812 + $0x90] sm:$0xff]
  %v2303 = vld [vmem:[%s812 + $0x98] sm:$0xff]
  %v2304 = vld [vmem:[%s812 + $0xa8] sm:$0xff]
  %v2305 = vld [vmem:[%s812 + $0xb0] sm:$0xff]
  %v2306 = vld [vmem:[%s812 + $0xc0] sm:$0xff]
  %v2307 = vld [vmem:[%s812 + $0xc8] sm:$0xff]
  %v2308 = vld [vmem:[%s812 + $0xd8] sm:$0xff]
  %v2309 = vld [vmem:[%s812 + $0xe0] sm:$0xff]
  %v2310 = vld [vmem:[%s812 + $0xf0] sm:$0xff]
  %v2311 = vld [vmem:[%s812 + $0xf8] sm:$0xff]
  %v2312 = vld [vmem:[%s812 + $0x108] sm:$0xff]
  %v2313 = vld [vmem:[%s812 + $0x110] sm:$0xff]
  %v2314 = vld [vmem:[%s812 + $0x120] sm:$0xff]
  %v2315 = vld [vmem:[%s812 + $0x128] sm:$0xff]
  %v2316 = vld [vmem:[%s812 + $0x138] sm:$0xff]
  %v2317 = vld [vmem:[%s812 + $0x140] sm:$0xff]
  %v2318 = vld [vmem:[%s812 + $0x150] sm:$0xff]
  %v2319 = vld [vmem:[%s812 + $0x158] sm:$0xff]
  %v2320 = vld [vmem:[%s812 + $0x168] sm:$0xff]
  %v2321 = vld [vmem:[%s812 + $0x170] sm:$0xff]
  %v2322 = vld [vmem:[%s812 + $0x1b0] sm:$0xff]
  %v2323 = vld [vmem:[%s812 + $0x1b8] sm:$0xff]
  %v2324 = vld [vmem:[%s812 + $0x1c8] sm:$0xff]
  %v2325 = vld [vmem:[%s812 + $0x1d0] sm:$0xff]
  %v2326 = vld [vmem:[%s812 + $0x1e0] sm:$0xff]
  %v2327 = vld [vmem:[%s812 + $0x1e8] sm:$0xff]
  %v2328 = vld [vmem:[%s812 + $0x1f8] sm:$0xff]
  %v2329 = vld [vmem:[%s812 + $0x200] sm:$0xff]
  %v2330 = vld [vmem:[%s812 + $0x210] sm:$0xff]
  %v2331 = vld [vmem:[%s812 + $0x218] sm:$0xff]
  %v2332 = vld [vmem:[%s812 + $0x228] sm:$0xff]
  %v2333 = vld [vmem:[%s812 + $0x230] sm:$0xff]
  %v2334 = vld [vmem:[%s812 + $0x240] sm:$0xff]
  %v2335 = vld [vmem:[%s812 + $0x248] sm:$0xff]
  %v2336 = vld [vmem:[%s812 + $0x258] sm:$0xff]
  %v2337 = vld [vmem:[%s812 + $0x260] sm:$0xff]
  %v2338 = vld [vmem:[%s812 + $0x270] sm:$0xff]
  %v2339 = vld [vmem:[%s812 + $0x278] sm:$0xff]
  %v2340 = vld [vmem:[%s812 + $0x288] sm:$0xff]
  %v2341 = vld [vmem:[%s812 + $0x290] sm:$0xff]
  %v2342 = vld [vmem:[%s812 + $0x2a0] sm:$0xff]
  %v2343 = vld [vmem:[%s812 + $0x2a8] sm:$0xff]
  %v2344 = vld [vmem:[%s812 + $0x2b8] sm:$0xff]
  %v2345 = vld [vmem:[%s812 + $0x2c0] sm:$0xff]
  %v2346 = vld [vmem:[%s812 + $0x2d0] sm:$0xff]
  %v2347 = vld [vmem:[%s812 + $0x2d8] sm:$0xff]
  %v2348 = vld [vmem:[%s812 + $0x2e8] sm:$0xff]
  %v2349 = vld [vmem:[%s812 + $0x2f0] sm:$0xff]
  %v2350 = vld [vmem:[%s812 + $0x300] sm:$0xff]
  %v2351 = vld [vmem:[%s812 + $0x308] sm:$0xff]
  %v2352 = vld [vmem:[%s812 + $0x318] sm:$0xff]
  %v2353 = vld [vmem:[%s812 + $0x320] sm:$0xff]
  %v2354 = vpack.c.bf16 %v2291, %v2290
  %v2355 = vpack.c.bf16 %v2293, %v2292
  %v2356 = vpack.c.bf16 %v2295, %v2294
  %v2357 = vpack.c.bf16 %v2297, %v2296
  %v2358 = vpack.c.bf16 %v2299, %v2298
  %v2359 = vpack.c.bf16 %v2301, %v2300
  %v2360 = vpack.c.bf16 %v2303, %v2302
  %v2361 = vpack.c.bf16 %v2305, %v2304
  %v2362 = vpack.c.bf16 %v2307, %v2306
  %v2363 = vpack.c.bf16 %v2309, %v2308
  %v2364 = vpack.c.bf16 %v2311, %v2310
  %v2365 = vpack.c.bf16 %v2313, %v2312
  %v2366 = vpack.c.bf16 %v2315, %v2314
  %v2367 = vpack.c.bf16 %v2317, %v2316
  %v2368 = vpack.c.bf16 %v2319, %v2318
  %v2369 = vpack.c.bf16 %v2321, %v2320
  %v2370 = vpack.c.bf16 %v2323, %v2322
  %v2371 = vpack.c.bf16 %v2325, %v2324
  %v2372 = vpack.c.bf16 %v2327, %v2326
  %v2373 = vpack.c.bf16 %v2329, %v2328
  %v2374 = vpack.c.bf16 %v2331, %v2330
  %v2375 = vpack.c.bf16 %v2333, %v2332
  %v2376 = vpack.c.bf16 %v2335, %v2334
  %v2377 = vpack.c.bf16 %v2337, %v2336
  %v2378 = vpack.c.bf16 %v2339, %v2338
  %v2379 = vpack.c.bf16 %v2341, %v2340
  %v2380 = vpack.c.bf16 %v2343, %v2342
  %v2381 = vpack.c.bf16 %v2345, %v2344
  %v2382 = vpack.c.bf16 %v2347, %v2346
  %v2383 = vpack.c.bf16 %v2349, %v2348
  %v2384 = vpack.c.bf16 %v2351, %v2350
  %v2385 = vpack.c.bf16 %v2353, %v2352
  %s2386 = scalar_lea.vmem %s3, 192
  %v2387 = vld [vmem:[%s2386] sm:$0xf]
  %v2388 = vld [vmem:[%s2386 + $0x4] sm:$0xf]
  %v2389 = vld [vmem:[%s2386 + $0x8] sm:$0xf]
  %v2390 = vld [vmem:[%s2386 + $0xc] sm:$0xf]
  %v2391 = vld [vmem:[%s2386 + $0x10] sm:$0xf]
  %v2392 = vld [vmem:[%s2386 + $0x14] sm:$0xf]
  %v2393 = vld [vmem:[%s2386 + $0x18] sm:$0xf]
  %v2394 = vld [vmem:[%s2386 + $0x1c] sm:$0xf]
  %v2395 = vld [vmem:[%s2386 + $0x20] sm:$0xf]
  %v2396 = vld [vmem:[%s2386 + $0x24] sm:$0xf]
  %v2397 = vld [vmem:[%s2386 + $0x28] sm:$0xf]
  %v2398 = vld [vmem:[%s2386 + $0x2c] sm:$0xf]
  %v2399 = vld [vmem:[%s2386 + $0x30] sm:$0xf]
  %v2400 = vld [vmem:[%s2386 + $0x34] sm:$0xf]
  %v2401 = vld [vmem:[%s2386 + $0x38] sm:$0xf]
  %v2402 = vld [vmem:[%s2386 + $0x3c] sm:$0xf]
  %v2419 = vunpack.c.l.b16 %v2387
  %v2420 = vunpack.c.l.b16 %v2388
  %v2421 = vunpack.c.l.b16 %v2389
  %v2422 = vunpack.c.l.b16 %v2390
  %v2423 = vunpack.c.l.b16 %v2391
  %v2424 = vunpack.c.l.b16 %v2392
  %v2425 = vunpack.c.l.b16 %v2393
  %v2426 = vunpack.c.l.b16 %v2394
  %v2427 = vunpack.c.l.b16 %v2395
  %v2428 = vunpack.c.l.b16 %v2396
  %v2429 = vunpack.c.l.b16 %v2397
  %v2430 = vunpack.c.l.b16 %v2398
  %v2431 = vunpack.c.l.b16 %v2399
  %v2432 = vunpack.c.l.b16 %v2400
  %v2433 = vunpack.c.l.b16 %v2401
  %v2434 = vunpack.c.l.b16 %v2402
  %v2435 = vpack.c.b16 %v2420, %v2419
  %v2436 = vpack.c.b16 %v2422, %v2421
  %v2437 = vpack.c.b16 %v2424, %v2423
  %v2438 = vpack.c.b16 %v2426, %v2425
  %v2439 = vpack.c.b16 %v2428, %v2427
  %v2440 = vpack.c.b16 %v2430, %v2429
  %v2441 = vpack.c.b16 %v2432, %v2431
  %v2442 = vpack.c.b16 %v2434, %v2433
  %2451 = vmatprep.subr.bf16.mxu0 0
  %2452 = vmatpush1.bf16.msra.mxu0 %v2435
  %2453 = vmatprep.subr.bf16.mxu0 0
  %2454 = vmatpush1.bf16.msra.mxu0 %v2436
  %2455 = vmatprep.subr.bf16.mxu0 0
  %2456 = vmatpush1.bf16.msra.mxu0 %v2437
  %2457 = vmatprep.subr.bf16.mxu0 0
  %2458 = vmatpush1.bf16.msra.mxu0 %v2438
  %2459 = vmatprep.subr.bf16.mxu0 0
  %2460 = vmatpush1.bf16.msra.mxu0 %v2439
  %2461 = vmatprep.subr.bf16.mxu0 0
  %2462 = vmatpush1.bf16.msra.mxu0 %v2440
  %2463 = vmatprep.subr.bf16.mxu0 0
  %2464 = vmatpush1.bf16.msra.mxu0 %v2441
  %2465 = vmatprep.subr.bf16.mxu0 0
  %2466 = vmatpush1.bf16.msra.mxu0 %v2442
  %2467 = vmatprep.subr.bf16.mxu0 0
  %2468 = vmatpush1.bf16.msra.mxu0 0
  %2469 = vmatprep.subr.bf16.mxu0 0
  %2470 = vmatpush1.bf16.msra.mxu0 0
  %2471 = vmatprep.subr.bf16.mxu0 0
  %2472 = vmatpush1.bf16.msra.mxu0 0
  %2473 = vmatprep.subr.bf16.mxu0 0
  %2474 = vmatpush1.bf16.msra.mxu0 0
  %2475 = vmatprep.subr.bf16.mxu0 0
  %2476 = vmatpush1.bf16.msra.mxu0 0
  %2477 = vmatprep.subr.bf16.mxu0 0
  %2478 = vmatpush1.bf16.msra.mxu0 0
  %2479 = vmatprep.subr.bf16.mxu0 0
  %2480 = vmatpush1.bf16.msra.mxu0 0
  %2481 = vmatprep.subr.bf16.mxu0 0
  %2482 = vmatpush1.bf16.msra.mxu0 0
  %2483 = vmatprep.mubr.bf16.mxu0 0
  %2484 = vmatmul.mubr.bf16.gmra.mrb[0].mxu0 %v2354
  %v2485 = vpop.f32.mrb[0].mxu0
  %v2486 = vadd.f32 0.0, %v2485
  %v2487 = vpop.f32.mrb[0].mxu0
  %v2488 = vpop.f32.mrb[0].mxu0
  %v2489 = vadd.f32 0.0, %v2488
  %v2490 = vpop.f32.mrb[0].mxu0
  %2491 = vmatprep.mubr.bf16.mxu0 0
  %2492 = vmatmul.mubr.bf16.gmra.mrb[0].mxu0 %v2355
  %v2493 = vpop.f32.mrb[0].mxu0
  %v2494 = vadd.f32 0.0, %v2493
  %v2495 = vpop.f32.mrb[0].mxu0
  %v2496 = vpop.f32.mrb[0].mxu0
  %v2497 = vadd.f32 0.0, %v2496
  %v2498 = vpop.f32.mrb[0].mxu0
  %2499 = vmatprep.mubr.bf16.mxu0 0
  %2500 = vmatmul.mubr.bf16.gmra.mrb[0].mxu0 %v2356
  %v2501 = vpop.f32.mrb[0].mxu0
  %v2502 = vadd.f32 0.0, %v2501
  %v2503 = vpop.f32.mrb[0].mxu0
  %v2504 = vpop.f32.mrb[0].mxu0
  %v2505 = vadd.f32 0.0, %v2504
  %v2506 = vpop.f32.mrb[0].mxu0
  %2507 = vmatprep.mubr.bf16.mxu0 0
  %2508 = vmatmul.mubr.bf16.gmra.mrb[0].mxu0 %v2357
  %v2509 = vpop.f32.mrb[0].mxu0
  %v2510 = vadd.f32 0.0, %v2509
  %v2511 = vpop.f32.mrb[0].mxu0
  %v2512 = vpop.f32.mrb[0].mxu0
  %v2513 = vadd.f32 0.0, %v2512
  %v2514 = vpop.f32.mrb[0].mxu0
  %2515 = vmatprep.mubr.bf16.mxu0 0
  %2516 = vmatmul.mubr.bf16.gmra.mrb[0].mxu0 %v2358
  %v2517 = vpop.f32.mrb[0].mxu0
  %v2518 = vadd.f32 0.0, %v2517
  %v2519 = vpop.f32.mrb[0].mxu0
  %v2520 = vpop.f32.mrb[0].mxu0
  %v2521 = vadd.f32 0.0, %v2520
  %v2522 = vpop.f32.mrb[0].mxu0
  %2523 = vmatprep.mubr.bf16.mxu0 0
  %2524 = vmatmul.mubr.bf16.gmra.mrb[0].mxu0 %v2359
  %v2525 = vpop.f32.mrb[0].mxu0
  %v2526 = vadd.f32 0.0, %v2525
  %v2527 = vpop.f32.mrb[0].mxu0
  %v2528 = vpop.f32.mrb[0].mxu0
  %v2529 = vadd.f32 0.0, %v2528
  %v2530 = vpop.f32.mrb[0].mxu0
  %2531 = vmatprep.mubr.bf16.mxu0 0
  %2532 = vmatmul.mubr.bf16.gmra.mrb[0].mxu0 %v2360
  %v2533 = vpop.f32.mrb[0].mxu0
  %v2534 = vadd.f32 0.0, %v2533
  %v2535 = vpop.f32.mrb[0].mxu0
  %v2536 = vpop.f32.mrb[0].mxu0
  %v2537 = vadd.f32 0.0, %v2536
  %v2538 = vpop.f32.mrb[0].mxu0
  %2539 = vmatprep.mubr.bf16.mxu0 0
  %2540 = vmatmul.mubr.bf16.gmra.mrb[0].mxu0 %v2361
  %v2541 = vpop.f32.mrb[0].mxu0
  %v2542 = vadd.f32 0.0, %v2541
  %v2543 = vpop.f32.mrb[0].mxu0
  %v2544 = vpop.f32.mrb[0].mxu0
  %v2545 = vadd.f32 0.0, %v2544
  %v2546 = vpop.f32.mrb[0].mxu0
  %2547 = vmatprep.mubr.bf16.mxu0 0
  %2548 = vmatmul.mubr.bf16.gmra.mrb[0].mxu0 %v2362
  %v2549 = vpop.f32.mrb[0].mxu0
  %v2550 = vadd.f32 0.0, %v2549
  %v2551 = vpop.f32.mrb[0].mxu0
  %v2552 = vpop.f32.mrb[0].mxu0
  %v2553 = vadd.f32 0.0, %v2552
  %v2554 = vpop.f32.mrb[0].mxu0
  %2555 = vmatprep.mubr.bf16.mxu0 0
  %2556 = vmatmul.mubr.bf16.gmra.mrb[0].mxu0 %v2363
  %v2557 = vpop.f32.mrb[0].mxu0
  %v2558 = vadd.f32 0.0, %v2557
  %v2559 = vpop.f32.mrb[0].mxu0
  %v2560 = vpop.f32.mrb[0].mxu0
  %v2561 = vadd.f32 0.0, %v2560
  %v2562 = vpop.f32.mrb[0].mxu0
  %2563 = vmatprep.mubr.bf16.mxu0 0
  %2564 = vmatmul.mubr.bf16.gmra.mrb[0].mxu0 %v2364
  %v2565 = vpop.f32.mrb[0].mxu0
  %v2566 = vadd.f32 0.0, %v2565
  %v2567 = vpop.f32.mrb[0].mxu0
  %v2568 = vpop.f32.mrb[0].mxu0
  %v2569 = vadd.f32 0.0, %v2568
  %v2570 = vpop.f32.mrb[0].mxu0
  %2571 = vmatprep.mubr.bf16.mxu0 0
  %2572 = vmatmul.mubr.bf16.gmra.mrb[0].mxu0 %v2365
  %v2573 = vpop.f32.mrb[0].mxu0
  %v2574 = vadd.f32 0.0, %v2573
  %v2575 = vpop.f32.mrb[0].mxu0
  %v2576 = vpop.f32.mrb[0].mxu0
  %v2577 = vadd.f32 0.0, %v2576
  %v2578 = vpop.f32.mrb[0].mxu0
  %2579 = vmatprep.mubr.bf16.mxu0 0
  %2580 = vmatmul.mubr.bf16.gmra.mrb[0].mxu0 %v2366
  %v2581 = vpop.f32.mrb[0].mxu0
  %v2582 = vadd.f32 0.0, %v2581
  %v2583 = vpop.f32.mrb[0].mxu0
  %v2584 = vpop.f32.mrb[0].mxu0
  %v2585 = vadd.f32 0.0, %v2584
  %v2586 = vpop.f32.mrb[0].mxu0
  %2587 = vmatprep.mubr.bf16.mxu0 0
  %2588 = vmatmul.mubr.bf16.gmra.mrb[0].mxu0 %v2367
  %v2589 = vpop.f32.mrb[0].mxu0
  %v2590 = vadd.f32 0.0, %v2589
  %v2591 = vpop.f32.mrb[0].mxu0
  %v2592 = vpop.f32.mrb[0].mxu0
  %v2593 = vadd.f32 0.0, %v2592
  %v2594 = vpop.f32.mrb[0].mxu0
  %2595 = vmatprep.mubr.bf16.mxu0 0
  %2596 = vmatmul.mubr.bf16.gmra.mrb[0].mxu0 %v2368
  %v2597 = vpop.f32.mrb[0].mxu0
  %v2598 = vadd.f32 0.0, %v2597
  %v2599 = vpop.f32.mrb[0].mxu0
  %v2600 = vpop.f32.mrb[0].mxu0
  %v2601 = vadd.f32 0.0, %v2600
  %v2602 = vpop.f32.mrb[0].mxu0
  %2603 = vmatprep.mubr.bf16.mxu0 0
  %2604 = vmatmul.mubr.bf16.gmra.mrb[0].mxu0 %v2369
  %v2605 = vpop.f32.mrb[0].mxu0
  %v2606 = vadd.f32 0.0, %v2605
  %v2607 = vpop.f32.mrb[0].mxu0
  %v2608 = vpop.f32.mrb[0].mxu0
  %v2609 = vadd.f32 0.0, %v2608
  %v2610 = vpop.f32.mrb[0].mxu0
  %2611 = vmatprep.mubr.bf16.mxu0 0
  %2612 = vmatmul.mubr.bf16.gmra.mrb[0].mxu0 %v2370
  %v2613 = vpop.f32.mrb[0].mxu0
  %v2614 = vadd.f32 0.0, %v2613
  %v2615 = vpop.f32.mrb[0].mxu0
  %v2616 = vpop.f32.mrb[0].mxu0
  %v2617 = vadd.f32 0.0, %v2616
  %v2618 = vpop.f32.mrb[0].mxu0
  %2619 = vmatprep.mubr.bf16.mxu0 0
  %2620 = vmatmul.mubr.bf16.gmra.mrb[0].mxu0 %v2371
  %v2621 = vpop.f32.mrb[0].mxu0
  %v2622 = vadd.f32 0.0, %v2621
  %v2623 = vpop.f32.mrb[0].mxu0
  %v2624 = vpop.f32.mrb[0].mxu0
  %v2625 = vadd.f32 0.0, %v2624
  %v2626 = vpop.f32.mrb[0].mxu0
  %2627 = vmatprep.mubr.bf16.mxu0 0
  %2628 = vmatmul.mubr.bf16.gmra.mrb[0].mxu0 %v2372
  %v2629 = vpop.f32.mrb[0].mxu0
  %v2630 = vadd.f32 0.0, %v2629
  %v2631 = vpop.f32.mrb[0].mxu0
  %v2632 = vpop.f32.mrb[0].mxu0
  %v2633 = vadd.f32 0.0, %v2632
  %v2634 = vpop.f32.mrb[0].mxu0
  %2635 = vmatprep.mubr.bf16.mxu0 0
  %2636 = vmatmul.mubr.bf16.gmra.mrb[0].mxu0 %v2373
  %v2637 = vpop.f32.mrb[0].mxu0
  %v2638 = vadd.f32 0.0, %v2637
  %v2639 = vpop.f32.mrb[0].mxu0
  %v2640 = vpop.f32.mrb[0].mxu0
  %v2641 = vadd.f32 0.0, %v2640
  %v2642 = vpop.f32.mrb[0].mxu0
  %2643 = vmatprep.mubr.bf16.mxu0 0
  %2644 = vmatmul.mubr.bf16.gmra.mrb[0].mxu0 %v2374
  %v2645 = vpop.f32.mrb[0].mxu0
  %v2646 = vadd.f32 0.0, %v2645
  %v2647 = vpop.f32.mrb[0].mxu0
  %v2648 = vpop.f32.mrb[0].mxu0
  %v2649 = vadd.f32 0.0, %v2648
  %v2650 = vpop.f32.mrb[0].mxu0
  %2651 = vmatprep.mubr.bf16.mxu0 0
  %2652 = vmatmul.mubr.bf16.gmra.mrb[0].mxu0 %v2375
  %v2653 = vpop.f32.mrb[0].mxu0
  %v2654 = vadd.f32 0.0, %v2653
  %v2655 = vpop.f32.mrb[0].mxu0
  %v2656 = vpop.f32.mrb[0].mxu0
  %v2657 = vadd.f32 0.0, %v2656
  %v2658 = vpop.f32.mrb[0].mxu0
  %2659 = vmatprep.mubr.bf16.mxu0 0
  %2660 = vmatmul.mubr.bf16.gmra.mrb[0].mxu0 %v2376
  %v2661 = vpop.f32.mrb[0].mxu0
  %v2662 = vadd.f32 0.0, %v2661
  %v2663 = vpop.f32.mrb[0].mxu0
  %v2664 = vpop.f32.mrb[0].mxu0
  %v2665 = vadd.f32 0.0, %v2664
  %v2666 = vpop.f32.mrb[0].mxu0
  %2667 = vmatprep.mubr.bf16.mxu0 0
  %2668 = vmatmul.mubr.bf16.gmra.mrb[0].mxu0 %v2377
  %v2669 = vpop.f32.mrb[0].mxu0
  %v2670 = vadd.f32 0.0, %v2669
  %v2671 = vpop.f32.mrb[0].mxu0
  %v2672 = vpop.f32.mrb[0].mxu0
  %v2673 = vadd.f32 0.0, %v2672
  %v2674 = vpop.f32.mrb[0].mxu0
  %2675 = vmatprep.mubr.bf16.mxu0 0
  %2676 = vmatmul.mubr.bf16.gmra.mrb[0].mxu0 %v2378
  %v2677 = vpop.f32.mrb[0].mxu0
  %v2678 = vadd.f32 0.0, %v2677
  %v2679 = vpop.f32.mrb[0].mxu0
  %v2680 = vpop.f32.mrb[0].mxu0
  %v2681 = vadd.f32 0.0, %v2680
  %v2682 = vpop.f32.mrb[0].mxu0
  %2683 = vmatprep.mubr.bf16.mxu0 0
  %2684 = vmatmul.mubr.bf16.gmra.mrb[0].mxu0 %v2379
  %v2685 = vpop.f32.mrb[0].mxu0
  %v2686 = vadd.f32 0.0, %v2685
  %v2687 = vpop.f32.mrb[0].mxu0
  %v2688 = vpop.f32.mrb[0].mxu0
  %v2689 = vadd.f32 0.0, %v2688
  %v2690 = vpop.f32.mrb[0].mxu0
  %2691 = vmatprep.mubr.bf16.mxu0 0
  %2692 = vmatmul.mubr.bf16.gmra.mrb[0].mxu0 %v2380
  %v2693 = vpop.f32.mrb[0].mxu0
  %v2694 = vadd.f32 0.0, %v2693
  %v2695 = vpop.f32.mrb[0].mxu0
  %v2696 = vpop.f32.mrb[0].mxu0
  %v2697 = vadd.f32 0.0, %v2696
  %v2698 = vpop.f32.mrb[0].mxu0
  %2699 = vmatprep.mubr.bf16.mxu0 0
  %2700 = vmatmul.mubr.bf16.gmra.mrb[0].mxu0 %v2381
  %v2701 = vpop.f32.mrb[0].mxu0
  %v2702 = vadd.f32 0.0, %v2701
  %v2703 = vpop.f32.mrb[0].mxu0
  %v2704 = vpop.f32.mrb[0].mxu0
  %v2705 = vadd.f32 0.0, %v2704
  %v2706 = vpop.f32.mrb[0].mxu0
  %2707 = vmatprep.mubr.bf16.mxu0 0
  %2708 = vmatmul.mubr.bf16.gmra.mrb[0].mxu0 %v2382
  %v2709 = vpop.f32.mrb[0].mxu0
  %v2710 = vadd.f32 0.0, %v2709
  %v2711 = vpop.f32.mrb[0].mxu0
  %v2712 = vpop.f32.mrb[0].mxu0
  %v2713 = vadd.f32 0.0, %v2712
  %v2714 = vpop.f32.mrb[0].mxu0
  %2715 = vmatprep.mubr.bf16.mxu0 0
  %2716 = vmatmul.mubr.bf16.gmra.mrb[0].mxu0 %v2383
  %v2717 = vpop.f32.mrb[0].mxu0
  %v2718 = vadd.f32 0.0, %v2717
  %v2719 = vpop.f32.mrb[0].mxu0
  %v2720 = vpop.f32.mrb[0].mxu0
  %v2721 = vadd.f32 0.0, %v2720
  %v2722 = vpop.f32.mrb[0].mxu0
  %2723 = vmatprep.mubr.bf16.mxu0 0
  %2724 = vmatmul.mubr.bf16.gmra.mrb[0].mxu0 %v2384
  %v2725 = vpop.f32.mrb[0].mxu0
  %v2726 = vadd.f32 0.0, %v2725
  %v2727 = vpop.f32.mrb[0].mxu0
  %v2728 = vpop.f32.mrb[0].mxu0
  %v2729 = vadd.f32 0.0, %v2728
  %v2730 = vpop.f32.mrb[0].mxu0
  %2731 = vmatprep.mubr.bf16.mxu0 0
  %2732 = vmatmul.mubr.bf16.gmra.mrb[0].mxu0 %v2385
  %v2733 = vpop.f32.mrb[0].mxu0
  %v2734 = vadd.f32 0.0, %v2733
  %v2735 = vpop.f32.mrb[0].mxu0
  %v2736 = vpop.f32.mrb[0].mxu0
  %v2737 = vadd.f32 0.0, %v2736
  %v2738 = vpop.f32.mrb[0].mxu0
  %2739 = vdwg.mxu0
  %v2740 = vadd.f32 %v2226, %v2486
  %v2741 = vadd.f32 %v2227, %v2489
  %v2742 = vadd.f32 %v2228, %v2494
  %v2743 = vadd.f32 %v2229, %v2497
  %v2744 = vadd.f32 %v2230, %v2502
  %v2745 = vadd.f32 %v2231, %v2505
  %v2746 = vadd.f32 %v2232, %v2510
  %v2747 = vadd.f32 %v2233, %v2513
  %v2748 = vadd.f32 %v2234, %v2518
  %v2749 = vadd.f32 %v2235, %v2521
  %v2750 = vadd.f32 %v2236, %v2526
  %v2751 = vadd.f32 %v2237, %v2529
  %v2752 = vadd.f32 %v2238, %v2534
  %v2753 = vadd.f32 %v2239, %v2537
  %v2754 = vadd.f32 %v2240, %v2542
  %v2755 = vadd.f32 %v2241, %v2545
  %v2756 = vadd.f32 %v2242, %v2550
  %v2757 = vadd.f32 %v2243, %v2553
  %v2758 = vadd.f32 %v2244, %v2558
  %v2759 = vadd.f32 %v2245, %v2561
  %v2760 = vadd.f32 %v2246, %v2566
  %v2761 = vadd.f32 %v2247, %v2569
  %v2762 = vadd.f32 %v2248, %v2574
  %v2763 = vadd.f32 %v2249, %v2577
  %v2764 = vadd.f32 %v2250, %v2582
  %v2765 = vadd.f32 %v2251, %v2585
  %v2766 = vadd.f32 %v2252, %v2590
  %v2767 = vadd.f32 %v2253, %v2593
  %v2768 = vadd.f32 %v2254, %v2598
  %v2769 = vadd.f32 %v2255, %v2601
  %v2770 = vadd.f32 %v2256, %v2606
  %v2771 = vadd.f32 %v2257, %v2609
  %v2772 = vadd.f32 %v2258, %v2614
  %v2773 = vadd.f32 %v2259, %v2617
  %v2774 = vadd.f32 %v2260, %v2622
  %v2775 = vadd.f32 %v2261, %v2625
  %v2776 = vadd.f32 %v2262, %v2630
  %v2777 = vadd.f32 %v2263, %v2633
  %v2778 = vadd.f32 %v2264, %v2638
  %v2779 = vadd.f32 %v2265, %v2641
  %v2780 = vadd.f32 %v2266, %v2646
  %v2781 = vadd.f32 %v2267, %v2649
  %v2782 = vadd.f32 %v2268, %v2654
  %v2783 = vadd.f32 %v2269, %v2657
  %v2784 = vadd.f32 %v2270, %v2662
  %v2785 = vadd.f32 %v2271, %v2665
  %v2786 = vadd.f32 %v2272, %v2670
  %v2787 = vadd.f32 %v2273, %v2673
  %v2788 = vadd.f32 %v2274, %v2678
  %v2789 = vadd.f32 %v2275, %v2681
  %v2790 = vadd.f32 %v2276, %v2686
  %v2791 = vadd.f32 %v2277, %v2689
  %v2792 = vadd.f32 %v2278, %v2694
  %v2793 = vadd.f32 %v2279, %v2697
  %v2794 = vadd.f32 %v2280, %v2702
  %v2795 = vadd.f32 %v2281, %v2705
  %v2796 = vadd.f32 %v2282, %v2710
  %v2797 = vadd.f32 %v2283, %v2713
  %v2798 = vadd.f32 %v2284, %v2718
  %v2799 = vadd.f32 %v2285, %v2721
  %v2800 = vadd.f32 %v2286, %v2726
  %v2801 = vadd.f32 %v2287, %v2729
  %v2802 = vadd.f32 %v2288, %v2734
  %v2803 = vadd.f32 %v2289, %v2737
  %v2804 = vld [vmem:[%s812 + $0x1] sm:$0xff]
  %v2805 = vld [vmem:[%s812 + $0x9] sm:$0xff]
  %v2806 = vld [vmem:[%s812 + $0x19] sm:$0xff]
  %v2807 = vld [vmem:[%s812 + $0x21] sm:$0xff]
  %v2808 = vld [vmem:[%s812 + $0x31] sm:$0xff]
  %v2809 = vld [vmem:[%s812 + $0x39] sm:$0xff]
  %v2810 = vld [vmem:[%s812 + $0x49] sm:$0xff]
  %v2811 = vld [vmem:[%s812 + $0x51] sm:$0xff]
  %v2812 = vld [vmem:[%s812 + $0x61] sm:$0xff]
  %v2813 = vld [vmem:[%s812 + $0x69] sm:$0xff]
  %v2814 = vld [vmem:[%s812 + $0x79] sm:$0xff]
  %v2815 = vld [vmem:[%s812 + $0x81] sm:$0xff]
  %v2816 = vld [vmem:[%s812 + $0x91] sm:$0xff]
  %v2817 = vld [vmem:[%s812 + $0x99] sm:$0xff]
  %v2818 = vld [vmem:[%s812 + $0xa9] sm:$0xff]
  %v2819 = vld [vmem:[%s812 + $0xb1] sm:$0xff]
  %v2820 = vld [vmem:[%s812 + $0xc1] sm:$0xff]
  %v2821 = vld [vmem:[%s812 + $0xc9] sm:$0xff]
  %v2822 = vld [vmem:[%s812 + $0xd9] sm:$0xff]
  %v2823 = vld [vmem:[%s812 + $0xe1] sm:$0xff]
  %v2824 = vld [vmem:[%s812 + $0xf1] sm:$0xff]
  %v2825 = vld [vmem:[%s812 + $0xf9] sm:$0xff]
  %v2826 = vld [vmem:[%s812 + $0x109] sm:$0xff]
  %v2827 = vld [vmem:[%s812 + $0x111] sm:$0xff]
  %v2828 = vld [vmem:[%s812 + $0x121] sm:$0xff]
  %v2829 = vld [vmem:[%s812 + $0x129] sm:$0xff]
  %v2830 = vld [vmem:[%s812 + $0x139] sm:$0xff]
  %v2831 = vld [vmem:[%s812 + $0x141] sm:$0xff]
  %v2832 = vld [vmem:[%s812 + $0x151] sm:$0xff]
  %v2833 = vld [vmem:[%s812 + $0x159] sm:$0xff]
  %v2834 = vld [vmem:[%s812 + $0x169] sm:$0xff]
  %v2835 = vld [vmem:[%s812 + $0x171] sm:$0xff]
  %v2836 = vld [vmem:[%s812 + $0x1b1] sm:$0xff]
  %v2837 = vld [vmem:[%s812 + $0x1b9] sm:$0xff]
  %v2838 = vld [vmem:[%s812 + $0x1c9] sm:$0xff]
  %v2839 = vld [vmem:[%s812 + $0x1d1] sm:$0xff]
  %v2840 = vld [vmem:[%s812 + $0x1e1] sm:$0xff]
  %v2841 = vld [vmem:[%s812 + $0x1e9] sm:$0xff]
  %v2842 = vld [vmem:[%s812 + $0x1f9] sm:$0xff]
  %v2843 = vld [vmem:[%s812 + $0x201] sm:$0xff]
  %v2844 = vld [vmem:[%s812 + $0x211] sm:$0xff]
  %v2845 = vld [vmem:[%s812 + $0x219] sm:$0xff]
  %v2846 = vld [vmem:[%s812 + $0x229] sm:$0xff]
  %v2847 = vld [vmem:[%s812 + $0x231] sm:$0xff]
  %v2848 = vld [vmem:[%s812 + $0x241] sm:$0xff]
  %v2849 = vld [vmem:[%s812 + $0x249] sm:$0xff]
  %v2850 = vld [vmem:[%s812 + $0x259] sm:$0xff]
  %v2851 = vld [vmem:[%s812 + $0x261] sm:$0xff]
  %v2852 = vld [vmem:[%s812 + $0x271] sm:$0xff]
  %v2853 = vld [vmem:[%s812 + $0x279] sm:$0xff]
  %v2854 = vld [vmem:[%s812 + $0x289] sm:$0xff]
  %v2855 = vld [vmem:[%s812 + $0x291] sm:$0xff]
  %v2856 = vld [vmem:[%s812 + $0x2a1] sm:$0xff]
  %v2857 = vld [vmem:[%s812 + $0x2a9] sm:$0xff]
  %v2858 = vld [vmem:[%s812 + $0x2b9] sm:$0xff]
  %v2859 = vld [vmem:[%s812 + $0x2c1] sm:$0xff]
  %v2860 = vld [vmem:[%s812 + $0x2d1] sm:$0xff]
  %v2861 = vld [vmem:[%s812 + $0x2d9] sm:$0xff]
  %v2862 = vld [vmem:[%s812 + $0x2e9] sm:$0xff]
  %v2863 = vld [vmem:[%s812 + $0x2f1] sm:$0xff]
  %v2864 = vld [vmem:[%s812 + $0x301] sm:$0xff]
  %v2865 = vld [vmem:[%s812 + $0x309] sm:$0xff]
  %v2866 = vld [vmem:[%s812 + $0x319] sm:$0xff]
  %v2867 = vld [vmem:[%s812 + $0x321] sm:$0xff]
  %v2868 = vpack.c.bf16 %v2805, %v2804
  %v2869 = vpack.c.bf16 %v2807, %v2806
  %v2870 = vpack.c.bf16 %v2809, %v2808
  %v2871 = vpack.c.bf16 %v2811, %v2810
  %v2872 = vpack.c.bf16 %v2813, %v2812
  %v2873 = vpack.c.bf16 %v2815, %v2814
  %v2874 = vpack.c.bf16 %v2817, %v2816
  %v2875 = vpack.c.bf16 %v2819, %v2818
  %v2876 = vpack.c.bf16 %v2821, %v2820
  %v2877 = vpack.c.bf16 %v2823, %v2822
  %v2878 = vpack.c.bf16 %v2825, %v2824
  %v2879 = vpack.c.bf16 %v2827, %v2826
  %v2880 = vpack.c.bf16 %v2829, %v2828
  %v2881 = vpack.c.bf16 %v2831, %v2830
  %v2882 = vpack.c.bf16 %v2833, %v2832
  %v2883 = vpack.c.bf16 %v2835, %v2834
  %v2884 = vpack.c.bf16 %v2837, %v2836
  %v2885 = vpack.c.bf16 %v2839, %v2838
  %v2886 = vpack.c.bf16 %v2841, %v2840
  %v2887 = vpack.c.bf16 %v2843, %v2842
  %v2888 = vpack.c.bf16 %v2845, %v2844
  %v2889 = vpack.c.bf16 %v2847, %v2846
  %v2890 = vpack.c.bf16 %v2849, %v2848
  %v2891 = vpack.c.bf16 %v2851, %v2850
  %v2892 = vpack.c.bf16 %v2853, %v2852
  %v2893 = vpack.c.bf16 %v2855, %v2854
  %v2894 = vpack.c.bf16 %v2857, %v2856
  %v2895 = vpack.c.bf16 %v2859, %v2858
  %v2896 = vpack.c.bf16 %v2861, %v2860
  %v2897 = vpack.c.bf16 %v2863, %v2862
  %v2898 = vpack.c.bf16 %v2865, %v2864
  %v2899 = vpack.c.bf16 %v2867, %v2866
  %s2900 = scalar_lea.vmem %s3, 256
  %v2901 = vld [vmem:[%s2900] sm:$0xf]
  %v2902 = vld [vmem:[%s2900 + $0x4] sm:$0xf]
  %v2903 = vld [vmem:[%s2900 + $0x8] sm:$0xf]
  %v2904 = vld [vmem:[%s2900 + $0xc] sm:$0xf]
  %v2905 = vld [vmem:[%s2900 + $0x10] sm:$0xf]
  %v2906 = vld [vmem:[%s2900 + $0x14] sm:$0xf]
  %v2907 = vld [vmem:[%s2900 + $0x18] sm:$0xf]
  %v2908 = vld [vmem:[%s2900 + $0x1c] sm:$0xf]
  %v2909 = vld [vmem:[%s2900 + $0x20] sm:$0xf]
  %v2910 = vld [vmem:[%s2900 + $0x24] sm:$0xf]
  %v2911 = vld [vmem:[%s2900 + $0x28] sm:$0xf]
  %v2912 = vld [vmem:[%s2900 + $0x2c] sm:$0xf]
  %v2913 = vld [vmem:[%s2900 + $0x30] sm:$0xf]
  %v2914 = vld [vmem:[%s2900 + $0x34] sm:$0xf]
  %v2915 = vld [vmem:[%s2900 + $0x38] sm:$0xf]
  %v2916 = vld [vmem:[%s2900 + $0x3c] sm:$0xf]
  %v2933 = vunpack.c.l.b16 %v2901
  %v2934 = vunpack.c.l.b16 %v2902
  %v2935 = vunpack.c.l.b16 %v2903
  %v2936 = vunpack.c.l.b16 %v2904
  %v2937 = vunpack.c.l.b16 %v2905
  %v2938 = vunpack.c.l.b16 %v2906
  %v2939 = vunpack.c.l.b16 %v2907
  %v2940 = vunpack.c.l.b16 %v2908
  %v2941 = vunpack.c.l.b16 %v2909
  %v2942 = vunpack.c.l.b16 %v2910
  %v2943 = vunpack.c.l.b16 %v2911
  %v2944 = vunpack.c.l.b16 %v2912
  %v2945 = vunpack.c.l.b16 %v2913
  %v2946 = vunpack.c.l.b16 %v2914
  %v2947 = vunpack.c.l.b16 %v2915
  %v2948 = vunpack.c.l.b16 %v2916
  %v2949 = vpack.c.b16 %v2934, %v2933
  %v2950 = vpack.c.b16 %v2936, %v2935
  %v2951 = vpack.c.b16 %v2938, %v2937
  %v2952 = vpack.c.b16 %v2940, %v2939
  %v2953 = vpack.c.b16 %v2942, %v2941
  %v2954 = vpack.c.b16 %v2944, %v2943
  %v2955 = vpack.c.b16 %v2946, %v2945
  %v2956 = vpack.c.b16 %v2948, %v2947
  %2965 = vmatprep.subr.bf16.mxu0 0
  %2966 = vmatpush1.bf16.msra.mxu0 %v2949
  %2967 = vmatprep.subr.bf16.mxu0 0
  %2968 = vmatpush1.bf16.msra.mxu0 %v2950
  %2969 = vmatprep.subr.bf16.mxu0 0
  %2970 = vmatpush1.bf16.msra.mxu0 %v2951
  %2971 = vmatprep.subr.bf16.mxu0 0
  %2972 = vmatpush1.bf16.msra.mxu0 %v2952
  %2973 = vmatprep.subr.bf16.mxu0 0
  %2974 = vmatpush1.bf16.msra.mxu0 %v2953
  %2975 = vmatprep.subr.bf16.mxu0 0
  %2976 = vmatpush1.bf16.msra.mxu0 %v2954
  %2977 = vmatprep.subr.bf16.mxu0 0
  %2978 = vmatpush1.bf16.msra.mxu0 %v2955
  %2979 = vmatprep.subr.bf16.mxu0 0
  %2980 = vmatpush1.bf16.msra.mxu0 %v2956
  %2981 = vmatprep.subr.bf16.mxu0 0
  %2982 = vmatpush1.bf16.msra.mxu0 0
  %2983 = vmatprep.subr.bf16.mxu0 0
  %2984 = vmatpush1.bf16.msra.mxu0 0
  %2985 = vmatprep.subr.bf16.mxu0 0
  %2986 = vmatpush1.bf16.msra.mxu0 0
  %2987 = vmatprep.subr.bf16.mxu0 0
  %2988 = vmatpush1.bf16.msra.mxu0 0
  %2989 = vmatprep.subr.bf16.mxu0 0
  %2990 = vmatpush1.bf16.msra.mxu0 0
  %2991 = vmatprep.subr.bf16.mxu0 0
  %2992 = vmatpush1.bf16.msra.mxu0 0
  %2993 = vmatprep.subr.bf16.mxu0 0
  %2994 = vmatpush1.bf16.msra.mxu0 0
  %2995 = vmatprep.subr.bf16.mxu0 0
  %2996 = vmatpush1.bf16.msra.mxu0 0
  %2997 = vmatprep.mubr.bf16.mxu0 0
  %2998 = vmatmul.mubr.bf16.gmra.mrb[0].mxu0 %v2868
  %v2999 = vpop.f32.mrb[0].mxu0
  %v3000 = vadd.f32 0.0, %v2999
  %v3001 = vpop.f32.mrb[0].mxu0
  %v3002 = vpop.f32.mrb[0].mxu0
  %v3003 = vadd.f32 0.0, %v3002
  %v3004 = vpop.f32.mrb[0].mxu0
  %3005 = vmatprep.mubr.bf16.mxu0 0
  %3006 = vmatmul.mubr.bf16.gmra.mrb[0].mxu0 %v2869
  %v3007 = vpop.f32.mrb[0].mxu0
  %v3008 = vadd.f32 0.0, %v3007
  %v3009 = vpop.f32.mrb[0].mxu0
  %v3010 = vpop.f32.mrb[0].mxu0
  %v3011 = vadd.f32 0.0, %v3010
  %v3012 = vpop.f32.mrb[0].mxu0
  %3013 = vmatprep.mubr.bf16.mxu0 0
  %3014 = vmatmul.mubr.bf16.gmra.mrb[0].mxu0 %v2870
  %v3015 = vpop.f32.mrb[0].mxu0
  %v3016 = vadd.f32 0.0, %v3015
  %v3017 = vpop.f32.mrb[0].mxu0
  %v3018 = vpop.f32.mrb[0].mxu0
  %v3019 = vadd.f32 0.0, %v3018
  %v3020 = vpop.f32.mrb[0].mxu0
  %3021 = vmatprep.mubr.bf16.mxu0 0
  %3022 = vmatmul.mubr.bf16.gmra.mrb[0].mxu0 %v2871
  %v3023 = vpop.f32.mrb[0].mxu0
  %v3024 = vadd.f32 0.0, %v3023
  %v3025 = vpop.f32.mrb[0].mxu0
  %v3026 = vpop.f32.mrb[0].mxu0
  %v3027 = vadd.f32 0.0, %v3026
  %v3028 = vpop.f32.mrb[0].mxu0
  %3029 = vmatprep.mubr.bf16.mxu0 0
  %3030 = vmatmul.mubr.bf16.gmra.mrb[0].mxu0 %v2872
  %v3031 = vpop.f32.mrb[0].mxu0
  %v3032 = vadd.f32 0.0, %v3031
  %v3033 = vpop.f32.mrb[0].mxu0
  %v3034 = vpop.f32.mrb[0].mxu0
  %v3035 = vadd.f32 0.0, %v3034
  %v3036 = vpop.f32.mrb[0].mxu0
  %3037 = vmatprep.mubr.bf16.mxu0 0
  %3038 = vmatmul.mubr.bf16.gmra.mrb[0].mxu0 %v2873
  %v3039 = vpop.f32.mrb[0].mxu0
  %v3040 = vadd.f32 0.0, %v3039
  %v3041 = vpop.f32.mrb[0].mxu0
  %v3042 = vpop.f32.mrb[0].mxu0
  %v3043 = vadd.f32 0.0, %v3042
  %v3044 = vpop.f32.mrb[0].mxu0
  %3045 = vmatprep.mubr.bf16.mxu0 0
  %3046 = vmatmul.mubr.bf16.gmra.mrb[0].mxu0 %v2874
  %v3047 = vpop.f32.mrb[0].mxu0
  %v3048 = vadd.f32 0.0, %v3047
  %v3049 = vpop.f32.mrb[0].mxu0
  %v3050 = vpop.f32.mrb[0].mxu0
  %v3051 = vadd.f32 0.0, %v3050
  %v3052 = vpop.f32.mrb[0].mxu0
  %3053 = vmatprep.mubr.bf16.mxu0 0
  %3054 = vmatmul.mubr.bf16.gmra.mrb[0].mxu0 %v2875
  %v3055 = vpop.f32.mrb[0].mxu0
  %v3056 = vadd.f32 0.0, %v3055
  %v3057 = vpop.f32.mrb[0].mxu0
  %v3058 = vpop.f32.mrb[0].mxu0
  %v3059 = vadd.f32 0.0, %v3058
  %v3060 = vpop.f32.mrb[0].mxu0
  %3061 = vmatprep.mubr.bf16.mxu0 0
  %3062 = vmatmul.mubr.bf16.gmra.mrb[0].mxu0 %v2876
  %v3063 = vpop.f32.mrb[0].mxu0
  %v3064 = vadd.f32 0.0, %v3063
  %v3065 = vpop.f32.mrb[0].mxu0
  %v3066 = vpop.f32.mrb[0].mxu0
  %v3067 = vadd.f32 0.0, %v3066
  %v3068 = vpop.f32.mrb[0].mxu0
  %3069 = vmatprep.mubr.bf16.mxu0 0
  %3070 = vmatmul.mubr.bf16.gmra.mrb[0].mxu0 %v2877
  %v3071 = vpop.f32.mrb[0].mxu0
  %v3072 = vadd.f32 0.0, %v3071
  %v3073 = vpop.f32.mrb[0].mxu0
  %v3074 = vpop.f32.mrb[0].mxu0
  %v3075 = vadd.f32 0.0, %v3074
  %v3076 = vpop.f32.mrb[0].mxu0
  %3077 = vmatprep.mubr.bf16.mxu0 0
  %3078 = vmatmul.mubr.bf16.gmra.mrb[0].mxu0 %v2878
  %v3079 = vpop.f32.mrb[0].mxu0
  %v3080 = vadd.f32 0.0, %v3079
  %v3081 = vpop.f32.mrb[0].mxu0
  %v3082 = vpop.f32.mrb[0].mxu0
  %v3083 = vadd.f32 0.0, %v3082
  %v3084 = vpop.f32.mrb[0].mxu0
  %3085 = vmatprep.mubr.bf16.mxu0 0
  %3086 = vmatmul.mubr.bf16.gmra.mrb[0].mxu0 %v2879
  %v3087 = vpop.f32.mrb[0].mxu0
  %v3088 = vadd.f32 0.0, %v3087
  %v3089 = vpop.f32.mrb[0].mxu0
  %v3090 = vpop.f32.mrb[0].mxu0
  %v3091 = vadd.f32 0.0, %v3090
  %v3092 = vpop.f32.mrb[0].mxu0
  %3093 = vmatprep.mubr.bf16.mxu0 0
  %3094 = vmatmul.mubr.bf16.gmra.mrb[0].mxu0 %v2880
  %v3095 = vpop.f32.mrb[0].mxu0
  %v3096 = vadd.f32 0.0, %v3095
  %v3097 = vpop.f32.mrb[0].mxu0
  %v3098 = vpop.f32.mrb[0].mxu0
  %v3099 = vadd.f32 0.0, %v3098
  %v3100 = vpop.f32.mrb[0].mxu0
  %3101 = vmatprep.mubr.bf16.mxu0 0
  %3102 = vmatmul.mubr.bf16.gmra.mrb[0].mxu0 %v2881
  %v3103 = vpop.f32.mrb[0].mxu0
  %v3104 = vadd.f32 0.0, %v3103
  %v3105 = vpop.f32.mrb[0].mxu0
  %v3106 = vpop.f32.mrb[0].mxu0
  %v3107 = vadd.f32 0.0, %v3106
  %v3108 = vpop.f32.mrb[0].mxu0
  %3109 = vmatprep.mubr.bf16.mxu0 0
  %3110 = vmatmul.mubr.bf16.gmra.mrb[0].mxu0 %v2882
  %v3111 = vpop.f32.mrb[0].mxu0
  %v3112 = vadd.f32 0.0, %v3111
  %v3113 = vpop.f32.mrb[0].mxu0
  %v3114 = vpop.f32.mrb[0].mxu0
  %v3115 = vadd.f32 0.0, %v3114
  %v3116 = vpop.f32.mrb[0].mxu0
  %3117 = vmatprep.mubr.bf16.mxu0 0
  %3118 = vmatmul.mubr.bf16.gmra.mrb[0].mxu0 %v2883
  %v3119 = vpop.f32.mrb[0].mxu0
  %v3120 = vadd.f32 0.0, %v3119
  %v3121 = vpop.f32.mrb[0].mxu0
  %v3122 = vpop.f32.mrb[0].mxu0
  %v3123 = vadd.f32 0.0, %v3122
  %v3124 = vpop.f32.mrb[0].mxu0
  %3125 = vmatprep.mubr.bf16.mxu0 0
  %3126 = vmatmul.mubr.bf16.gmra.mrb[0].mxu0 %v2884
  %v3127 = vpop.f32.mrb[0].mxu0
  %v3128 = vadd.f32 0.0, %v3127
  %v3129 = vpop.f32.mrb[0].mxu0
  %v3130 = vpop.f32.mrb[0].mxu0
  %v3131 = vadd.f32 0.0, %v3130
  %v3132 = vpop.f32.mrb[0].mxu0
  %3133 = vmatprep.mubr.bf16.mxu0 0
  %3134 = vmatmul.mubr.bf16.gmra.mrb[0].mxu0 %v2885
  %v3135 = vpop.f32.mrb[0].mxu0
  %v3136 = vadd.f32 0.0, %v3135
  %v3137 = vpop.f32.mrb[0].mxu0
  %v3138 = vpop.f32.mrb[0].mxu0
  %v3139 = vadd.f32 0.0, %v3138
  %v3140 = vpop.f32.mrb[0].mxu0
  %3141 = vmatprep.mubr.bf16.mxu0 0
  %3142 = vmatmul.mubr.bf16.gmra.mrb[0].mxu0 %v2886
  %v3143 = vpop.f32.mrb[0].mxu0
  %v3144 = vadd.f32 0.0, %v3143
  %v3145 = vpop.f32.mrb[0].mxu0
  %v3146 = vpop.f32.mrb[0].mxu0
  %v3147 = vadd.f32 0.0, %v3146
  %v3148 = vpop.f32.mrb[0].mxu0
  %3149 = vmatprep.mubr.bf16.mxu0 0
  %3150 = vmatmul.mubr.bf16.gmra.mrb[0].mxu0 %v2887
  %v3151 = vpop.f32.mrb[0].mxu0
  %v3152 = vadd.f32 0.0, %v3151
  %v3153 = vpop.f32.mrb[0].mxu0
  %v3154 = vpop.f32.mrb[0].mxu0
  %v3155 = vadd.f32 0.0, %v3154
  %v3156 = vpop.f32.mrb[0].mxu0
  %3157 = vmatprep.mubr.bf16.mxu0 0
  %3158 = vmatmul.mubr.bf16.gmra.mrb[0].mxu0 %v2888
  %v3159 = vpop.f32.mrb[0].mxu0
  %v3160 = vadd.f32 0.0, %v3159
  %v3161 = vpop.f32.mrb[0].mxu0
  %v3162 = vpop.f32.mrb[0].mxu0
  %v3163 = vadd.f32 0.0, %v3162
  %v3164 = vpop.f32.mrb[0].mxu0
  %3165 = vmatprep.mubr.bf16.mxu0 0
  %3166 = vmatmul.mubr.bf16.gmra.mrb[0].mxu0 %v2889
  %v3167 = vpop.f32.mrb[0].mxu0
  %v3168 = vadd.f32 0.0, %v3167
  %v3169 = vpop.f32.mrb[0].mxu0
  %v3170 = vpop.f32.mrb[0].mxu0
  %v3171 = vadd.f32 0.0, %v3170
  %v3172 = vpop.f32.mrb[0].mxu0
  %3173 = vmatprep.mubr.bf16.mxu0 0
  %3174 = vmatmul.mubr.bf16.gmra.mrb[0].mxu0 %v2890
  %v3175 = vpop.f32.mrb[0].mxu0
  %v3176 = vadd.f32 0.0, %v3175
  %v3177 = vpop.f32.mrb[0].mxu0
  %v3178 = vpop.f32.mrb[0].mxu0
  %v3179 = vadd.f32 0.0, %v3178
  %v3180 = vpop.f32.mrb[0].mxu0
  %3181 = vmatprep.mubr.bf16.mxu0 0
  %3182 = vmatmul.mubr.bf16.gmra.mrb[0].mxu0 %v2891
  %v3183 = vpop.f32.mrb[0].mxu0
  %v3184 = vadd.f32 0.0, %v3183
  %v3185 = vpop.f32.mrb[0].mxu0
  %v3186 = vpop.f32.mrb[0].mxu0
  %v3187 = vadd.f32 0.0, %v3186
  %v3188 = vpop.f32.mrb[0].mxu0
  %3189 = vmatprep.mubr.bf16.mxu0 0
  %3190 = vmatmul.mubr.bf16.gmra.mrb[0].mxu0 %v2892
  %v3191 = vpop.f32.mrb[0].mxu0
  %v3192 = vadd.f32 0.0, %v3191
  %v3193 = vpop.f32.mrb[0].mxu0
  %v3194 = vpop.f32.mrb[0].mxu0
  %v3195 = vadd.f32 0.0, %v3194
  %v3196 = vpop.f32.mrb[0].mxu0
  %3197 = vmatprep.mubr.bf16.mxu0 0
  %3198 = vmatmul.mubr.bf16.gmra.mrb[0].mxu0 %v2893
  %v3199 = vpop.f32.mrb[0].mxu0
  %v3200 = vadd.f32 0.0, %v3199
  %v3201 = vpop.f32.mrb[0].mxu0
  %v3202 = vpop.f32.mrb[0].mxu0
  %v3203 = vadd.f32 0.0, %v3202
  %v3204 = vpop.f32.mrb[0].mxu0
  %3205 = vmatprep.mubr.bf16.mxu0 0
  %3206 = vmatmul.mubr.bf16.gmra.mrb[0].mxu0 %v2894
  %v3207 = vpop.f32.mrb[0].mxu0
  %v3208 = vadd.f32 0.0, %v3207
  %v3209 = vpop.f32.mrb[0].mxu0
  %v3210 = vpop.f32.mrb[0].mxu0
  %v3211 = vadd.f32 0.0, %v3210
  %v3212 = vpop.f32.mrb[0].mxu0
  %3213 = vmatprep.mubr.bf16.mxu0 0
  %3214 = vmatmul.mubr.bf16.gmra.mrb[0].mxu0 %v2895
  %v3215 = vpop.f32.mrb[0].mxu0
  %v3216 = vadd.f32 0.0, %v3215
  %v3217 = vpop.f32.mrb[0].mxu0
  %v3218 = vpop.f32.mrb[0].mxu0
  %v3219 = vadd.f32 0.0, %v3218
  %v3220 = vpop.f32.mrb[0].mxu0
  %3221 = vmatprep.mubr.bf16.mxu0 0
  %3222 = vmatmul.mubr.bf16.gmra.mrb[0].mxu0 %v2896
  %v3223 = vpop.f32.mrb[0].mxu0
  %v3224 = vadd.f32 0.0, %v3223
  %v3225 = vpop.f32.mrb[0].mxu0
  %v3226 = vpop.f32.mrb[0].mxu0
  %v3227 = vadd.f32 0.0, %v3226
  %v3228 = vpop.f32.mrb[0].mxu0
  %3229 = vmatprep.mubr.bf16.mxu0 0
  %3230 = vmatmul.mubr.bf16.gmra.mrb[0].mxu0 %v2897
  %v3231 = vpop.f32.mrb[0].mxu0
  %v3232 = vadd.f32 0.0, %v3231
  %v3233 = vpop.f32.mrb[0].mxu0
  %v3234 = vpop.f32.mrb[0].mxu0
  %v3235 = vadd.f32 0.0, %v3234
  %v3236 = vpop.f32.mrb[0].mxu0
  %3237 = vmatprep.mubr.bf16.mxu0 0
  %3238 = vmatmul.mubr.bf16.gmra.mrb[0].mxu0 %v2898
  %v3239 = vpop.f32.mrb[0].mxu0
  %v3240 = vadd.f32 0.0, %v3239
  %v3241 = vpop.f32.mrb[0].mxu0
  %v3242 = vpop.f32.mrb[0].mxu0
  %v3243 = vadd.f32 0.0, %v3242
  %v3244 = vpop.f32.mrb[0].mxu0
  %3245 = vmatprep.mubr.bf16.mxu0 0
  %3246 = vmatmul.mubr.bf16.gmra.mrb[0].mxu0 %v2899
  %v3247 = vpop.f32.mrb[0].mxu0
  %v3248 = vadd.f32 0.0, %v3247
  %v3249 = vpop.f32.mrb[0].mxu0
  %v3250 = vpop.f32.mrb[0].mxu0
  %v3251 = vadd.f32 0.0, %v3250
  %v3252 = vpop.f32.mrb[0].mxu0
  %3253 = vdwg.mxu0
  %v3254 = vadd.f32 %v2740, %v3000
  %v3255 = vadd.f32 %v2741, %v3003
  %v3256 = vadd.f32 %v2742, %v3008
  %v3257 = vadd.f32 %v2743, %v3011
  %v3258 = vadd.f32 %v2744, %v3016
  %v3259 = vadd.f32 %v2745, %v3019
  %v3260 = vadd.f32 %v2746, %v3024
  %v3261 = vadd.f32 %v2747, %v3027
  %v3262 = vadd.f32 %v2748, %v3032
  %v3263 = vadd.f32 %v2749, %v3035
  %v3264 = vadd.f32 %v2750, %v3040
  %v3265 = vadd.f32 %v2751, %v3043
  %v3266 = vadd.f32 %v2752, %v3048
  %v3267 = vadd.f32 %v2753, %v3051
  %v3268 = vadd.f32 %v2754, %v3056
  %v3269 = vadd.f32 %v2755, %v3059
  %v3270 = vadd.f32 %v2756, %v3064
  %v3271 = vadd.f32 %v2757, %v3067
  %v3272 = vadd.f32 %v2758, %v3072
  %v3273 = vadd.f32 %v2759, %v3075
  %v3274 = vadd.f32 %v2760, %v3080
  %v3275 = vadd.f32 %v2761, %v3083
  %v3276 = vadd.f32 %v2762, %v3088
  %v3277 = vadd.f32 %v2763, %v3091
  %v3278 = vadd.f32 %v2764, %v3096
  %v3279 = vadd.f32 %v2765, %v3099
  %v3280 = vadd.f32 %v2766, %v3104
  %v3281 = vadd.f32 %v2767, %v3107
  %v3282 = vadd.f32 %v2768, %v3112
  %v3283 = vadd.f32 %v2769, %v3115
  %v3284 = vadd.f32 %v2770, %v3120
  %v3285 = vadd.f32 %v2771, %v3123
  %v3286 = vadd.f32 %v2772, %v3128
  %v3287 = vadd.f32 %v2773, %v3131
  %v3288 = vadd.f32 %v2774, %v3136
  %v3289 = vadd.f32 %v2775, %v3139
  %v3290 = vadd.f32 %v2776, %v3144
  %v3291 = vadd.f32 %v2777, %v3147
  %v3292 = vadd.f32 %v2778, %v3152
  %v3293 = vadd.f32 %v2779, %v3155
  %v3294 = vadd.f32 %v2780, %v3160
  %v3295 = vadd.f32 %v2781, %v3163
  %v3296 = vadd.f32 %v2782, %v3168
  %v3297 = vadd.f32 %v2783, %v3171
  %v3298 = vadd.f32 %v2784, %v3176
  %v3299 = vadd.f32 %v2785, %v3179
  %v3300 = vadd.f32 %v2786, %v3184
  %v3301 = vadd.f32 %v2787, %v3187
  %v3302 = vadd.f32 %v2788, %v3192
  %v3303 = vadd.f32 %v2789, %v3195
  %v3304 = vadd.f32 %v2790, %v3200
  %v3305 = vadd.f32 %v2791, %v3203
  %v3306 = vadd.f32 %v2792, %v3208
  %v3307 = vadd.f32 %v2793, %v3211
  %v3308 = vadd.f32 %v2794, %v3216
  %v3309 = vadd.f32 %v2795, %v3219
  %v3310 = vadd.f32 %v2796, %v3224
  %v3311 = vadd.f32 %v2797, %v3227
  %v3312 = vadd.f32 %v2798, %v3232
  %v3313 = vadd.f32 %v2799, %v3235
  %v3314 = vadd.f32 %v2800, %v3240
  %v3315 = vadd.f32 %v2801, %v3243
  %v3316 = vadd.f32 %v2802, %v3248
  %v3317 = vadd.f32 %v2803, %v3251
  %v3318 = vld [vmem:[%s812 + $0x2] sm:$0xff]
  %v3319 = vld [vmem:[%s812 + $0xa] sm:$0xff]
  %v3320 = vld [vmem:[%s812 + $0x1a] sm:$0xff]
  %v3321 = vld [vmem:[%s812 + $0x22] sm:$0xff]
  %v3322 = vld [vmem:[%s812 + $0x32] sm:$0xff]
  %v3323 = vld [vmem:[%s812 + $0x3a] sm:$0xff]
  %v3324 = vld [vmem:[%s812 + $0x4a] sm:$0xff]
  %v3325 = vld [vmem:[%s812 + $0x52] sm:$0xff]
  %v3326 = vld [vmem:[%s812 + $0x62] sm:$0xff]
  %v3327 = vld [vmem:[%s812 + $0x6a] sm:$0xff]
  %v3328 = vld [vmem:[%s812 + $0x7a] sm:$0xff]
  %v3329 = vld [vmem:[%s812 + $0x82] sm:$0xff]
  %v3330 = vld [vmem:[%s812 + $0x92] sm:$0xff]
  %v3331 = vld [vmem:[%s812 + $0x9a] sm:$0xff]
  %v3332 = vld [vmem:[%s812 + $0xaa] sm:$0xff]
  %v3333 = vld [vmem:[%s812 + $0xb2] sm:$0xff]
  %v3334 = vld [vmem:[%s812 + $0xc2] sm:$0xff]
  %v3335 = vld [vmem:[%s812 + $0xca] sm:$0xff]
  %v3336 = vld [vmem:[%s812 + $0xda] sm:$0xff]
  %v3337 = vld [vmem:[%s812 + $0xe2] sm:$0xff]
  %v3338 = vld [vmem:[%s812 + $0xf2] sm:$0xff]
  %v3339 = vld [vmem:[%s812 + $0xfa] sm:$0xff]
  %v3340 = vld [vmem:[%s812 + $0x10a] sm:$0xff]
  %v3341 = vld [vmem:[%s812 + $0x112] sm:$0xff]
  %v3342 = vld [vmem:[%s812 + $0x122] sm:$0xff]
  %v3343 = vld [vmem:[%s812 + $0x12a] sm:$0xff]
  %v3344 = vld [vmem:[%s812 + $0x13a] sm:$0xff]
  %v3345 = vld [vmem:[%s812 + $0x142] sm:$0xff]
  %v3346 = vld [vmem:[%s812 + $0x152] sm:$0xff]
  %v3347 = vld [vmem:[%s812 + $0x15a] sm:$0xff]
  %v3348 = vld [vmem:[%s812 + $0x16a] sm:$0xff]
  %v3349 = vld [vmem:[%s812 + $0x172] sm:$0xff]
  %v3350 = vld [vmem:[%s812 + $0x1b2] sm:$0xff]
  %v3351 = vld [vmem:[%s812 + $0x1ba] sm:$0xff]
  %v3352 = vld [vmem:[%s812 + $0x1ca] sm:$0xff]
  %v3353 = vld [vmem:[%s812 + $0x1d2] sm:$0xff]
  %v3354 = vld [vmem:[%s812 + $0x1e2] sm:$0xff]
  %v3355 = vld [vmem:[%s812 + $0x1ea] sm:$0xff]
  %v3356 = vld [vmem:[%s812 + $0x1fa] sm:$0xff]
  %v3357 = vld [vmem:[%s812 + $0x202] sm:$0xff]
  %v3358 = vld [vmem:[%s812 + $0x212] sm:$0xff]
  %v3359 = vld [vmem:[%s812 + $0x21a] sm:$0xff]
  %v3360 = vld [vmem:[%s812 + $0x22a] sm:$0xff]
  %v3361 = vld [vmem:[%s812 + $0x232] sm:$0xff]
  %v3362 = vld [vmem:[%s812 + $0x242] sm:$0xff]
  %v3363 = vld [vmem:[%s812 + $0x24a] sm:$0xff]
  %v3364 = vld [vmem:[%s812 + $0x25a] sm:$0xff]
  %v3365 = vld [vmem:[%s812 + $0x262] sm:$0xff]
  %v3366 = vld [vmem:[%s812 + $0x272] sm:$0xff]
  %v3367 = vld [vmem:[%s812 + $0x27a] sm:$0xff]
  %v3368 = vld [vmem:[%s812 + $0x28a] sm:$0xff]
  %v3369 = vld [vmem:[%s812 + $0x292] sm:$0xff]
  %v3370 = vld [vmem:[%s812 + $0x2a2] sm:$0xff]
  %v3371 = vld [vmem:[%s812 + $0x2aa] sm:$0xff]
  %v3372 = vld [vmem:[%s812 + $0x2ba] sm:$0xff]
  %v3373 = vld [vmem:[%s812 + $0x2c2] sm:$0xff]
  %v3374 = vld [vmem:[%s812 + $0x2d2] sm:$0xff]
  %v3375 = vld [vmem:[%s812 + $0x2da] sm:$0xff]
  %v3376 = vld [vmem:[%s812 + $0x2ea] sm:$0xff]
  %v3377 = vld [vmem:[%s812 + $0x2f2] sm:$0xff]
  %v3378 = vld [vmem:[%s812 + $0x302] sm:$0xff]
  %v3379 = vld [vmem:[%s812 + $0x30a] sm:$0xff]
  %v3380 = vld [vmem:[%s812 + $0x31a] sm:$0xff]
  %v3381 = vld [vmem:[%s812 + $0x322] sm:$0xff]
  %v3382 = vpack.c.bf16 %v3319, %v3318
  %v3383 = vpack.c.bf16 %v3321, %v3320
  %v3384 = vpack.c.bf16 %v3323, %v3322
  %v3385 = vpack.c.bf16 %v3325, %v3324
  %v3386 = vpack.c.bf16 %v3327, %v3326
  %v3387 = vpack.c.bf16 %v3329, %v3328
  %v3388 = vpack.c.bf16 %v3331, %v3330
  %v3389 = vpack.c.bf16 %v3333, %v3332
  %v3390 = vpack.c.bf16 %v3335, %v3334
  %v3391 = vpack.c.bf16 %v3337, %v3336
  %v3392 = vpack.c.bf16 %v3339, %v3338
  %v3393 = vpack.c.bf16 %v3341, %v3340
  %v3394 = vpack.c.bf16 %v3343, %v3342
  %v3395 = vpack.c.bf16 %v3345, %v3344
  %v3396 = vpack.c.bf16 %v3347, %v3346
  %v3397 = vpack.c.bf16 %v3349, %v3348
  %v3398 = vpack.c.bf16 %v3351, %v3350
  %v3399 = vpack.c.bf16 %v3353, %v3352
  %v3400 = vpack.c.bf16 %v3355, %v3354
  %v3401 = vpack.c.bf16 %v3357, %v3356
  %v3402 = vpack.c.bf16 %v3359, %v3358
  %v3403 = vpack.c.bf16 %v3361, %v3360
  %v3404 = vpack.c.bf16 %v3363, %v3362
  %v3405 = vpack.c.bf16 %v3365, %v3364
  %v3406 = vpack.c.bf16 %v3367, %v3366
  %v3407 = vpack.c.bf16 %v3369, %v3368
  %v3408 = vpack.c.bf16 %v3371, %v3370
  %v3409 = vpack.c.bf16 %v3373, %v3372
  %v3410 = vpack.c.bf16 %v3375, %v3374
  %v3411 = vpack.c.bf16 %v3377, %v3376
  %v3412 = vpack.c.bf16 %v3379, %v3378
  %v3413 = vpack.c.bf16 %v3381, %v3380
  %s3414 = scalar_lea.vmem %s3, 320
  %v3415 = vld [vmem:[%s3414] sm:$0xf]
  %v3416 = vld [vmem:[%s3414 + $0x4] sm:$0xf]
  %v3417 = vld [vmem:[%s3414 + $0x8] sm:$0xf]
  %v3418 = vld [vmem:[%s3414 + $0xc] sm:$0xf]
  %v3419 = vld [vmem:[%s3414 + $0x10] sm:$0xf]
  %v3420 = vld [vmem:[%s3414 + $0x14] sm:$0xf]
  %v3421 = vld [vmem:[%s3414 + $0x18] sm:$0xf]
  %v3422 = vld [vmem:[%s3414 + $0x1c] sm:$0xf]
  %v3423 = vld [vmem:[%s3414 + $0x20] sm:$0xf]
  %v3424 = vld [vmem:[%s3414 + $0x24] sm:$0xf]
  %v3425 = vld [vmem:[%s3414 + $0x28] sm:$0xf]
  %v3426 = vld [vmem:[%s3414 + $0x2c] sm:$0xf]
  %v3427 = vld [vmem:[%s3414 + $0x30] sm:$0xf]
  %v3428 = vld [vmem:[%s3414 + $0x34] sm:$0xf]
  %v3429 = vld [vmem:[%s3414 + $0x38] sm:$0xf]
  %v3430 = vld [vmem:[%s3414 + $0x3c] sm:$0xf]
  %v3447 = vunpack.c.l.b16 %v3415
  %v3448 = vunpack.c.l.b16 %v3416
  %v3449 = vunpack.c.l.b16 %v3417
  %v3450 = vunpack.c.l.b16 %v3418
  %v3451 = vunpack.c.l.b16 %v3419
  %v3452 = vunpack.c.l.b16 %v3420
  %v3453 = vunpack.c.l.b16 %v3421
  %v3454 = vunpack.c.l.b16 %v3422
  %v3455 = vunpack.c.l.b16 %v3423
  %v3456 = vunpack.c.l.b16 %v3424
  %v3457 = vunpack.c.l.b16 %v3425
  %v3458 = vunpack.c.l.b16 %v3426
  %v3459 = vunpack.c.l.b16 %v3427
  %v3460 = vunpack.c.l.b16 %v3428
  %v3461 = vunpack.c.l.b16 %v3429
  %v3462 = vunpack.c.l.b16 %v3430
  %v3463 = vpack.c.b16 %v3448, %v3447
  %v3464 = vpack.c.b16 %v3450, %v3449
  %v3465 = vpack.c.b16 %v3452, %v3451
  %v3466 = vpack.c.b16 %v3454, %v3453
  %v3467 = vpack.c.b16 %v3456, %v3455
  %v3468 = vpack.c.b16 %v3458, %v3457
  %v3469 = vpack.c.b16 %v3460, %v3459
  %v3470 = vpack.c.b16 %v3462, %v3461
  %3479 = vmatprep.subr.bf16.mxu0 0
  %3480 = vmatpush1.bf16.msra.mxu0 %v3463
  %3481 = vmatprep.subr.bf16.mxu0 0
  %3482 = vmatpush1.bf16.msra.mxu0 %v3464
  %3483 = vmatprep.subr.bf16.mxu0 0
  %3484 = vmatpush1.bf16.msra.mxu0 %v3465
  %3485 = vmatprep.subr.bf16.mxu0 0
  %3486 = vmatpush1.bf16.msra.mxu0 %v3466
  %3487 = vmatprep.subr.bf16.mxu0 0
  %3488 = vmatpush1.bf16.msra.mxu0 %v3467
  %3489 = vmatprep.subr.bf16.mxu0 0
  %3490 = vmatpush1.bf16.msra.mxu0 %v3468
  %3491 = vmatprep.subr.bf16.mxu0 0
  %3492 = vmatpush1.bf16.msra.mxu0 %v3469
  %3493 = vmatprep.subr.bf16.mxu0 0
  %3494 = vmatpush1.bf16.msra.mxu0 %v3470
  %3495 = vmatprep.subr.bf16.mxu0 0
  %3496 = vmatpush1.bf16.msra.mxu0 0
  %3497 = vmatprep.subr.bf16.mxu0 0
  %3498 = vmatpush1.bf16.msra.mxu0 0
  %3499 = vmatprep.subr.bf16.mxu0 0
  %3500 = vmatpush1.bf16.msra.mxu0 0
  %3501 = vmatprep.subr.bf16.mxu0 0
  %3502 = vmatpush1.bf16.msra.mxu0 0
  %3503 = vmatprep.subr.bf16.mxu0 0
  %3504 = vmatpush1.bf16.msra.mxu0 0
  %3505 = vmatprep.subr.bf16.mxu0 0
  %3506 = vmatpush1.bf16.msra.mxu0 0
  %3507 = vmatprep.subr.bf16.mxu0 0
  %3508 = vmatpush1.bf16.msra.mxu0 0
  %3509 = vmatprep.subr.bf16.mxu0 0
  %3510 = vmatpush1.bf16.msra.mxu0 0
  %3511 = vmatprep.mubr.bf16.mxu0 0
  %3512 = vmatmul.mubr.bf16.gmra.mrb[0].mxu0 %v3382
  %v3513 = vpop.f32.mrb[0].mxu0
  %v3514 = vadd.f32 0.0, %v3513
  %v3515 = vpop.f32.mrb[0].mxu0
  %v3516 = vpop.f32.mrb[0].mxu0
  %v3517 = vadd.f32 0.0, %v3516
  %v3518 = vpop.f32.mrb[0].mxu0
  %3519 = vmatprep.mubr.bf16.mxu0 0
  %3520 = vmatmul.mubr.bf16.gmra.mrb[0].mxu0 %v3383
  %v3521 = vpop.f32.mrb[0].mxu0
  %v3522 = vadd.f32 0.0, %v3521
  %v3523 = vpop.f32.mrb[0].mxu0
  %v3524 = vpop.f32.mrb[0].mxu0
  %v3525 = vadd.f32 0.0, %v3524
  %v3526 = vpop.f32.mrb[0].mxu0
  %3527 = vmatprep.mubr.bf16.mxu0 0
  %3528 = vmatmul.mubr.bf16.gmra.mrb[0].mxu0 %v3384
  %v3529 = vpop.f32.mrb[0].mxu0
  %v3530 = vadd.f32 0.0, %v3529
  %v3531 = vpop.f32.mrb[0].mxu0
  %v3532 = vpop.f32.mrb[0].mxu0
  %v3533 = vadd.f32 0.0, %v3532
  %v3534 = vpop.f32.mrb[0].mxu0
  %3535 = vmatprep.mubr.bf16.mxu0 0
  %3536 = vmatmul.mubr.bf16.gmra.mrb[0].mxu0 %v3385
  %v3537 = vpop.f32.mrb[0].mxu0
  %v3538 = vadd.f32 0.0, %v3537
  %v3539 = vpop.f32.mrb[0].mxu0
  %v3540 = vpop.f32.mrb[0].mxu0
  %v3541 = vadd.f32 0.0, %v3540
  %v3542 = vpop.f32.mrb[0].mxu0
  %3543 = vmatprep.mubr.bf16.mxu0 0
  %3544 = vmatmul.mubr.bf16.gmra.mrb[0].mxu0 %v3386
  %v3545 = vpop.f32.mrb[0].mxu0
  %v3546 = vadd.f32 0.0, %v3545
  %v3547 = vpop.f32.mrb[0].mxu0
  %v3548 = vpop.f32.mrb[0].mxu0
  %v3549 = vadd.f32 0.0, %v3548
  %v3550 = vpop.f32.mrb[0].mxu0
  %3551 = vmatprep.mubr.bf16.mxu0 0
  %3552 = vmatmul.mubr.bf16.gmra.mrb[0].mxu0 %v3387
  %v3553 = vpop.f32.mrb[0].mxu0
  %v3554 = vadd.f32 0.0, %v3553
  %v3555 = vpop.f32.mrb[0].mxu0
  %v3556 = vpop.f32.mrb[0].mxu0
  %v3557 = vadd.f32 0.0, %v3556
  %v3558 = vpop.f32.mrb[0].mxu0
  %3559 = vmatprep.mubr.bf16.mxu0 0
  %3560 = vmatmul.mubr.bf16.gmra.mrb[0].mxu0 %v3388
  %v3561 = vpop.f32.mrb[0].mxu0
  %v3562 = vadd.f32 0.0, %v3561
  %v3563 = vpop.f32.mrb[0].mxu0
  %v3564 = vpop.f32.mrb[0].mxu0
  %v3565 = vadd.f32 0.0, %v3564
  %v3566 = vpop.f32.mrb[0].mxu0
  %3567 = vmatprep.mubr.bf16.mxu0 0
  %3568 = vmatmul.mubr.bf16.gmra.mrb[0].mxu0 %v3389
  %v3569 = vpop.f32.mrb[0].mxu0
  %v3570 = vadd.f32 0.0, %v3569
  %v3571 = vpop.f32.mrb[0].mxu0
  %v3572 = vpop.f32.mrb[0].mxu0
  %v3573 = vadd.f32 0.0, %v3572
  %v3574 = vpop.f32.mrb[0].mxu0
  %3575 = vmatprep.mubr.bf16.mxu0 0
  %3576 = vmatmul.mubr.bf16.gmra.mrb[0].mxu0 %v3390
  %v3577 = vpop.f32.mrb[0].mxu0
  %v3578 = vadd.f32 0.0, %v3577
  %v3579 = vpop.f32.mrb[0].mxu0
  %v3580 = vpop.f32.mrb[0].mxu0
  %v3581 = vadd.f32 0.0, %v3580
  %v3582 = vpop.f32.mrb[0].mxu0
  %3583 = vmatprep.mubr.bf16.mxu0 0
  %3584 = vmatmul.mubr.bf16.gmra.mrb[0].mxu0 %v3391
  %v3585 = vpop.f32.mrb[0].mxu0
  %v3586 = vadd.f32 0.0, %v3585
  %v3587 = vpop.f32.mrb[0].mxu0
  %v3588 = vpop.f32.mrb[0].mxu0
  %v3589 = vadd.f32 0.0, %v3588
  %v3590 = vpop.f32.mrb[0].mxu0
  %3591 = vmatprep.mubr.bf16.mxu0 0
  %3592 = vmatmul.mubr.bf16.gmra.mrb[0].mxu0 %v3392
  %v3593 = vpop.f32.mrb[0].mxu0
  %v3594 = vadd.f32 0.0, %v3593
  %v3595 = vpop.f32.mrb[0].mxu0
  %v3596 = vpop.f32.mrb[0].mxu0
  %v3597 = vadd.f32 0.0, %v3596
  %v3598 = vpop.f32.mrb[0].mxu0
  %3599 = vmatprep.mubr.bf16.mxu0 0
  %3600 = vmatmul.mubr.bf16.gmra.mrb[0].mxu0 %v3393
  %v3601 = vpop.f32.mrb[0].mxu0
  %v3602 = vadd.f32 0.0, %v3601
  %v3603 = vpop.f32.mrb[0].mxu0
  %v3604 = vpop.f32.mrb[0].mxu0
  %v3605 = vadd.f32 0.0, %v3604
  %v3606 = vpop.f32.mrb[0].mxu0
  %3607 = vmatprep.mubr.bf16.mxu0 0
  %3608 = vmatmul.mubr.bf16.gmra.mrb[0].mxu0 %v3394
  %v3609 = vpop.f32.mrb[0].mxu0
  %v3610 = vadd.f32 0.0, %v3609
  %v3611 = vpop.f32.mrb[0].mxu0
  %v3612 = vpop.f32.mrb[0].mxu0
  %v3613 = vadd.f32 0.0, %v3612
  %v3614 = vpop.f32.mrb[0].mxu0
  %3615 = vmatprep.mubr.bf16.mxu0 0
  %3616 = vmatmul.mubr.bf16.gmra.mrb[0].mxu0 %v3395
  %v3617 = vpop.f32.mrb[0].mxu0
  %v3618 = vadd.f32 0.0, %v3617
  %v3619 = vpop.f32.mrb[0].mxu0
  %v3620 = vpop.f32.mrb[0].mxu0
  %v3621 = vadd.f32 0.0, %v3620
  %v3622 = vpop.f32.mrb[0].mxu0
  %3623 = vmatprep.mubr.bf16.mxu0 0
  %3624 = vmatmul.mubr.bf16.gmra.mrb[0].mxu0 %v3396
  %v3625 = vpop.f32.mrb[0].mxu0
  %v3626 = vadd.f32 0.0, %v3625
  %v3627 = vpop.f32.mrb[0].mxu0
  %v3628 = vpop.f32.mrb[0].mxu0
  %v3629 = vadd.f32 0.0, %v3628
  %v3630 = vpop.f32.mrb[0].mxu0
  %3631 = vmatprep.mubr.bf16.mxu0 0
  %3632 = vmatmul.mubr.bf16.gmra.mrb[0].mxu0 %v3397
  %v3633 = vpop.f32.mrb[0].mxu0
  %v3634 = vadd.f32 0.0, %v3633
  %v3635 = vpop.f32.mrb[0].mxu0
  %v3636 = vpop.f32.mrb[0].mxu0
  %v3637 = vadd.f32 0.0, %v3636
  %v3638 = vpop.f32.mrb[0].mxu0
  %3639 = vmatprep.mubr.bf16.mxu0 0
  %3640 = vmatmul.mubr.bf16.gmra.mrb[0].mxu0 %v3398
  %v3641 = vpop.f32.mrb[0].mxu0
  %v3642 = vadd.f32 0.0, %v3641
  %v3643 = vpop.f32.mrb[0].mxu0
  %v3644 = vpop.f32.mrb[0].mxu0
  %v3645 = vadd.f32 0.0, %v3644
  %v3646 = vpop.f32.mrb[0].mxu0
  %3647 = vmatprep.mubr.bf16.mxu0 0
  %3648 = vmatmul.mubr.bf16.gmra.mrb[0].mxu0 %v3399
  %v3649 = vpop.f32.mrb[0].mxu0
  %v3650 = vadd.f32 0.0, %v3649
  %v3651 = vpop.f32.mrb[0].mxu0
  %v3652 = vpop.f32.mrb[0].mxu0
  %v3653 = vadd.f32 0.0, %v3652
  %v3654 = vpop.f32.mrb[0].mxu0
  %3655 = vmatprep.mubr.bf16.mxu0 0
  %3656 = vmatmul.mubr.bf16.gmra.mrb[0].mxu0 %v3400
  %v3657 = vpop.f32.mrb[0].mxu0
  %v3658 = vadd.f32 0.0, %v3657
  %v3659 = vpop.f32.mrb[0].mxu0
  %v3660 = vpop.f32.mrb[0].mxu0
  %v3661 = vadd.f32 0.0, %v3660
  %v3662 = vpop.f32.mrb[0].mxu0
  %3663 = vmatprep.mubr.bf16.mxu0 0
  %3664 = vmatmul.mubr.bf16.gmra.mrb[0].mxu0 %v3401
  %v3665 = vpop.f32.mrb[0].mxu0
  %v3666 = vadd.f32 0.0, %v3665
  %v3667 = vpop.f32.mrb[0].mxu0
  %v3668 = vpop.f32.mrb[0].mxu0
  %v3669 = vadd.f32 0.0, %v3668
  %v3670 = vpop.f32.mrb[0].mxu0
  %3671 = vmatprep.mubr.bf16.mxu0 0
  %3672 = vmatmul.mubr.bf16.gmra.mrb[0].mxu0 %v3402
  %v3673 = vpop.f32.mrb[0].mxu0
  %v3674 = vadd.f32 0.0, %v3673
  %v3675 = vpop.f32.mrb[0].mxu0
  %v3676 = vpop.f32.mrb[0].mxu0
  %v3677 = vadd.f32 0.0, %v3676
  %v3678 = vpop.f32.mrb[0].mxu0
  %3679 = vmatprep.mubr.bf16.mxu0 0
  %3680 = vmatmul.mubr.bf16.gmra.mrb[0].mxu0 %v3403
  %v3681 = vpop.f32.mrb[0].mxu0
  %v3682 = vadd.f32 0.0, %v3681
  %v3683 = vpop.f32.mrb[0].mxu0
  %v3684 = vpop.f32.mrb[0].mxu0
  %v3685 = vadd.f32 0.0, %v3684
  %v3686 = vpop.f32.mrb[0].mxu0
  %3687 = vmatprep.mubr.bf16.mxu0 0
  %3688 = vmatmul.mubr.bf16.gmra.mrb[0].mxu0 %v3404
  %v3689 = vpop.f32.mrb[0].mxu0
  %v3690 = vadd.f32 0.0, %v3689
  %v3691 = vpop.f32.mrb[0].mxu0
  %v3692 = vpop.f32.mrb[0].mxu0
  %v3693 = vadd.f32 0.0, %v3692
  %v3694 = vpop.f32.mrb[0].mxu0
  %3695 = vmatprep.mubr.bf16.mxu0 0
  %3696 = vmatmul.mubr.bf16.gmra.mrb[0].mxu0 %v3405
  %v3697 = vpop.f32.mrb[0].mxu0
  %v3698 = vadd.f32 0.0, %v3697
  %v3699 = vpop.f32.mrb[0].mxu0
  %v3700 = vpop.f32.mrb[0].mxu0
  %v3701 = vadd.f32 0.0, %v3700
  %v3702 = vpop.f32.mrb[0].mxu0
  %3703 = vmatprep.mubr.bf16.mxu0 0
  %3704 = vmatmul.mubr.bf16.gmra.mrb[0].mxu0 %v3406
  %v3705 = vpop.f32.mrb[0].mxu0
  %v3706 = vadd.f32 0.0, %v3705
  %v3707 = vpop.f32.mrb[0].mxu0
  %v3708 = vpop.f32.mrb[0].mxu0
  %v3709 = vadd.f32 0.0, %v3708
  %v3710 = vpop.f32.mrb[0].mxu0
  %3711 = vmatprep.mubr.bf16.mxu0 0
  %3712 = vmatmul.mubr.bf16.gmra.mrb[0].mxu0 %v3407
  %v3713 = vpop.f32.mrb[0].mxu0
  %v3714 = vadd.f32 0.0, %v3713
  %v3715 = vpop.f32.mrb[0].mxu0
  %v3716 = vpop.f32.mrb[0].mxu0
  %v3717 = vadd.f32 0.0, %v3716
  %v3718 = vpop.f32.mrb[0].mxu0
  %3719 = vmatprep.mubr.bf16.mxu0 0
  %3720 = vmatmul.mubr.bf16.gmra.mrb[0].mxu0 %v3408
  %v3721 = vpop.f32.mrb[0].mxu0
  %v3722 = vadd.f32 0.0, %v3721
  %v3723 = vpop.f32.mrb[0].mxu0
  %v3724 = vpop.f32.mrb[0].mxu0
  %v3725 = vadd.f32 0.0, %v3724
  %v3726 = vpop.f32.mrb[0].mxu0
  %3727 = vmatprep.mubr.bf16.mxu0 0
  %3728 = vmatmul.mubr.bf16.gmra.mrb[0].mxu0 %v3409
  %v3729 = vpop.f32.mrb[0].mxu0
  %v3730 = vadd.f32 0.0, %v3729
  %v3731 = vpop.f32.mrb[0].mxu0
  %v3732 = vpop.f32.mrb[0].mxu0
  %v3733 = vadd.f32 0.0, %v3732
  %v3734 = vpop.f32.mrb[0].mxu0
  %3735 = vmatprep.mubr.bf16.mxu0 0
  %3736 = vmatmul.mubr.bf16.gmra.mrb[0].mxu0 %v3410
  %v3737 = vpop.f32.mrb[0].mxu0
  %v3738 = vadd.f32 0.0, %v3737
  %v3739 = vpop.f32.mrb[0].mxu0
  %v3740 = vpop.f32.mrb[0].mxu0
  %v3741 = vadd.f32 0.0, %v3740
  %v3742 = vpop.f32.mrb[0].mxu0
  %3743 = vmatprep.mubr.bf16.mxu0 0
  %3744 = vmatmul.mubr.bf16.gmra.mrb[0].mxu0 %v3411
  %v3745 = vpop.f32.mrb[0].mxu0
  %v3746 = vadd.f32 0.0, %v3745
  %v3747 = vpop.f32.mrb[0].mxu0
  %v3748 = vpop.f32.mrb[0].mxu0
  %v3749 = vadd.f32 0.0, %v3748
  %v3750 = vpop.f32.mrb[0].mxu0
  %3751 = vmatprep.mubr.bf16.mxu0 0
  %3752 = vmatmul.mubr.bf16.gmra.mrb[0].mxu0 %v3412
  %v3753 = vpop.f32.mrb[0].mxu0
  %v3754 = vadd.f32 0.0, %v3753
  %v3755 = vpop.f32.mrb[0].mxu0
  %v3756 = vpop.f32.mrb[0].mxu0
  %v3757 = vadd.f32 0.0, %v3756
  %v3758 = vpop.f32.mrb[0].mxu0
  %3759 = vmatprep.mubr.bf16.mxu0 0
  %3760 = vmatmul.mubr.bf16.gmra.mrb[0].mxu0 %v3413
  %v3761 = vpop.f32.mrb[0].mxu0
  %v3762 = vadd.f32 0.0, %v3761
  %v3763 = vpop.f32.mrb[0].mxu0
  %v3764 = vpop.f32.mrb[0].mxu0
  %v3765 = vadd.f32 0.0, %v3764
  %v3766 = vpop.f32.mrb[0].mxu0
  %3767 = vdwg.mxu0
  %v3768 = vadd.f32 %v3254, %v3514
  %v3769 = vadd.f32 %v3255, %v3517
  %v3770 = vadd.f32 %v3256, %v3522
  %v3771 = vadd.f32 %v3257, %v3525
  %v3772 = vadd.f32 %v3258, %v3530
  %v3773 = vadd.f32 %v3259, %v3533
  %v3774 = vadd.f32 %v3260, %v3538
  %v3775 = vadd.f32 %v3261, %v3541
  %v3776 = vadd.f32 %v3262, %v3546
  %v3777 = vadd.f32 %v3263, %v3549
  %v3778 = vadd.f32 %v3264, %v3554
  %v3779 = vadd.f32 %v3265, %v3557
  %v3780 = vadd.f32 %v3266, %v3562
  %v3781 = vadd.f32 %v3267, %v3565
  %v3782 = vadd.f32 %v3268, %v3570
  %v3783 = vadd.f32 %v3269, %v3573
  %v3784 = vadd.f32 %v3270, %v3578
  %v3785 = vadd.f32 %v3271, %v3581
  %v3786 = vadd.f32 %v3272, %v3586
  %v3787 = vadd.f32 %v3273, %v3589
  %v3788 = vadd.f32 %v3274, %v3594
  %v3789 = vadd.f32 %v3275, %v3597
  %v3790 = vadd.f32 %v3276, %v3602
  %v3791 = vadd.f32 %v3277, %v3605
  %v3792 = vadd.f32 %v3278, %v3610
  %v3793 = vadd.f32 %v3279, %v3613
  %v3794 = vadd.f32 %v3280, %v3618
  %v3795 = vadd.f32 %v3281, %v3621
  %v3796 = vadd.f32 %v3282, %v3626
  %v3797 = vadd.f32 %v3283, %v3629
  %v3798 = vadd.f32 %v3284, %v3634
  %v3799 = vadd.f32 %v3285, %v3637
  %v3800 = vadd.f32 %v3286, %v3642
  %v3801 = vadd.f32 %v3287, %v3645
  %v3802 = vadd.f32 %v3288, %v3650
  %v3803 = vadd.f32 %v3289, %v3653
  %v3804 = vadd.f32 %v3290, %v3658
  %v3805 = vadd.f32 %v3291, %v3661
  %v3806 = vadd.f32 %v3292, %v3666
  %v3807 = vadd.f32 %v3293, %v3669
  %v3808 = vadd.f32 %v3294, %v3674
  %v3809 = vadd.f32 %v3295, %v3677
  %v3810 = vadd.f32 %v3296, %v3682
  %v3811 = vadd.f32 %v3297, %v3685
  %v3812 = vadd.f32 %v3298, %v3690
  %v3813 = vadd.f32 %v3299, %v3693
  %v3814 = vadd.f32 %v3300, %v3698
  %v3815 = vadd.f32 %v3301, %v3701
  %v3816 = vadd.f32 %v3302, %v3706
  %v3817 = vadd.f32 %v3303, %v3709
  %v3818 = vadd.f32 %v3304, %v3714
  %v3819 = vadd.f32 %v3305, %v3717
  %v3820 = vadd.f32 %v3306, %v3722
  %v3821 = vadd.f32 %v3307, %v3725
  %v3822 = vadd.f32 %v3308, %v3730
  %v3823 = vadd.f32 %v3309, %v3733
  %v3824 = vadd.f32 %v3310, %v3738
  %v3825 = vadd.f32 %v3311, %v3741
  %v3826 = vadd.f32 %v3312, %v3746
  %v3827 = vadd.f32 %v3313, %v3749
  %v3828 = vadd.f32 %v3314, %v3754
  %v3829 = vadd.f32 %v3315, %v3757
  %v3830 = vadd.f32 %v3316, %v3762
  %v3831 = vadd.f32 %v3317, %v3765
  %s3832 = scalar_lea.vmem [#allocation2], 48
  %v3833 = vld [vmem:[%s3832] sm:$0xff]
  %v3834 = vld [vmem:[%s3832 + $0x8] sm:$0xff]
  %v3835 = vld [vmem:[%s3832 + $0x18] sm:$0xff]
  %v3836 = vld [vmem:[%s3832 + $0x20] sm:$0xff]
  %v3837 = vld [vmem:[%s3832 + $0x30] sm:$0xff]
  %v3838 = vld [vmem:[%s3832 + $0x38] sm:$0xff]
  %v3839 = vld [vmem:[%s3832 + $0x48] sm:$0xff]
  %v3840 = vld [vmem:[%s3832 + $0x50] sm:$0xff]
  %v3841 = vld [vmem:[%s3832 + $0x60] sm:$0xff]
  %v3842 = vld [vmem:[%s3832 + $0x68] sm:$0xff]
  %v3843 = vld [vmem:[%s3832 + $0x78] sm:$0xff]
  %v3844 = vld [vmem:[%s3832 + $0x80] sm:$0xff]
  %v3845 = vld [vmem:[%s3832 + $0x90] sm:$0xff]
  %v3846 = vld [vmem:[%s3832 + $0x98] sm:$0xff]
  %v3847 = vld [vmem:[%s3832 + $0xa8] sm:$0xff]
  %v3848 = vld [vmem:[%s3832 + $0xb0] sm:$0xff]
  %v3849 = vld [vmem:[%s3832 + $0xc0] sm:$0xff]
  %v3850 = vld [vmem:[%s3832 + $0xc8] sm:$0xff]
  %v3851 = vld [vmem:[%s3832 + $0xd8] sm:$0xff]
  %v3852 = vld [vmem:[%s3832 + $0xe0] sm:$0xff]
  %v3853 = vld [vmem:[%s3832 + $0xf0] sm:$0xff]
  %v3854 = vld [vmem:[%s3832 + $0xf8] sm:$0xff]
  %v3855 = vld [vmem:[%s3832 + $0x108] sm:$0xff]
  %v3856 = vld [vmem:[%s3832 + $0x110] sm:$0xff]
  %v3857 = vld [vmem:[%s3832 + $0x120] sm:$0xff]
  %v3858 = vld [vmem:[%s3832 + $0x128] sm:$0xff]
  %v3859 = vld [vmem:[%s3832 + $0x138] sm:$0xff]
  %v3860 = vld [vmem:[%s3832 + $0x140] sm:$0xff]
  %v3861 = vld [vmem:[%s3832 + $0x150] sm:$0xff]
  %v3862 = vld [vmem:[%s3832 + $0x158] sm:$0xff]
  %v3863 = vld [vmem:[%s3832 + $0x168] sm:$0xff]
  %v3864 = vld [vmem:[%s3832 + $0x170] sm:$0xff]
  %v3865 = vld [vmem:[%s3832 + $0x1b0] sm:$0xff]
  %v3866 = vld [vmem:[%s3832 + $0x1b8] sm:$0xff]
  %v3867 = vld [vmem:[%s3832 + $0x1c8] sm:$0xff]
  %v3868 = vld [vmem:[%s3832 + $0x1d0] sm:$0xff]
  %v3869 = vld [vmem:[%s3832 + $0x1e0] sm:$0xff]
  %v3870 = vld [vmem:[%s3832 + $0x1e8] sm:$0xff]
  %v3871 = vld [vmem:[%s3832 + $0x1f8] sm:$0xff]
  %v3872 = vld [vmem:[%s3832 + $0x200] sm:$0xff]
  %v3873 = vld [vmem:[%s3832 + $0x210] sm:$0xff]
  %v3874 = vld [vmem:[%s3832 + $0x218] sm:$0xff]
  %v3875 = vld [vmem:[%s3832 + $0x228] sm:$0xff]
  %v3876 = vld [vmem:[%s3832 + $0x230] sm:$0xff]
  %v3877 = vld [vmem:[%s3832 + $0x240] sm:$0xff]
  %v3878 = vld [vmem:[%s3832 + $0x248] sm:$0xff]
  %v3879 = vld [vmem:[%s3832 + $0x258] sm:$0xff]
  %v3880 = vld [vmem:[%s3832 + $0x260] sm:$0xff]
  %v3881 = vld [vmem:[%s3832 + $0x270] sm:$0xff]
  %v3882 = vld [vmem:[%s3832 + $0x278] sm:$0xff]
  %v3883 = vld [vmem:[%s3832 + $0x288] sm:$0xff]
  %v3884 = vld [vmem:[%s3832 + $0x290] sm:$0xff]
  %v3885 = vld [vmem:[%s3832 + $0x2a0] sm:$0xff]
  %v3886 = vld [vmem:[%s3832 + $0x2a8] sm:$0xff]
  %v3887 = vld [vmem:[%s3832 + $0x2b8] sm:$0xff]
  %v3888 = vld [vmem:[%s3832 + $0x2c0] sm:$0xff]
  %v3889 = vld [vmem:[%s3832 + $0x2d0] sm:$0xff]
  %v3890 = vld [vmem:[%s3832 + $0x2d8] sm:$0xff]
  %v3891 = vld [vmem:[%s3832 + $0x2e8] sm:$0xff]
  %v3892 = vld [vmem:[%s3832 + $0x2f0] sm:$0xff]
  %v3893 = vld [vmem:[%s3832 + $0x300] sm:$0xff]
  %v3894 = vld [vmem:[%s3832 + $0x308] sm:$0xff]
  %v3895 = vld [vmem:[%s3832 + $0x318] sm:$0xff]
  %v3896 = vld [vmem:[%s3832 + $0x320] sm:$0xff]
  %v3897 = vpack.c.bf16 %v3834, %v3833
  %v3898 = vpack.c.bf16 %v3836, %v3835
  %v3899 = vpack.c.bf16 %v3838, %v3837
  %v3900 = vpack.c.bf16 %v3840, %v3839
  %v3901 = vpack.c.bf16 %v3842, %v3841
  %v3902 = vpack.c.bf16 %v3844, %v3843
  %v3903 = vpack.c.bf16 %v3846, %v3845
  %v3904 = vpack.c.bf16 %v3848, %v3847
  %v3905 = vpack.c.bf16 %v3850, %v3849
  %v3906 = vpack.c.bf16 %v3852, %v3851
  %v3907 = vpack.c.bf16 %v3854, %v3853
  %v3908 = vpack.c.bf16 %v3856, %v3855
  %v3909 = vpack.c.bf16 %v3858, %v3857
  %v3910 = vpack.c.bf16 %v3860, %v3859
  %v3911 = vpack.c.bf16 %v3862, %v3861
  %v3912 = vpack.c.bf16 %v3864, %v3863
  %v3913 = vpack.c.bf16 %v3866, %v3865
  %v3914 = vpack.c.bf16 %v3868, %v3867
  %v3915 = vpack.c.bf16 %v3870, %v3869
  %v3916 = vpack.c.bf16 %v3872, %v3871
  %v3917 = vpack.c.bf16 %v3874, %v3873
  %v3918 = vpack.c.bf16 %v3876, %v3875
  %v3919 = vpack.c.bf16 %v3878, %v3877
  %v3920 = vpack.c.bf16 %v3880, %v3879
  %v3921 = vpack.c.bf16 %v3882, %v3881
  %v3922 = vpack.c.bf16 %v3884, %v3883
  %v3923 = vpack.c.bf16 %v3886, %v3885
  %v3924 = vpack.c.bf16 %v3888, %v3887
  %v3925 = vpack.c.bf16 %v3890, %v3889
  %v3926 = vpack.c.bf16 %v3892, %v3891
  %v3927 = vpack.c.bf16 %v3894, %v3893
  %v3928 = vpack.c.bf16 %v3896, %v3895
  %s3929 = scalar_lea.vmem %s3, 384
  %v3930 = vld [vmem:[%s3929] sm:$0xf]
  %v3931 = vld [vmem:[%s3929 + $0x4] sm:$0xf]
  %v3932 = vld [vmem:[%s3929 + $0x8] sm:$0xf]
  %v3933 = vld [vmem:[%s3929 + $0xc] sm:$0xf]
  %v3934 = vld [vmem:[%s3929 + $0x10] sm:$0xf]
  %v3935 = vld [vmem:[%s3929 + $0x14] sm:$0xf]
  %v3936 = vld [vmem:[%s3929 + $0x18] sm:$0xf]
  %v3937 = vld [vmem:[%s3929 + $0x1c] sm:$0xf]
  %v3938 = vld [vmem:[%s3929 + $0x20] sm:$0xf]
  %v3939 = vld [vmem:[%s3929 + $0x24] sm:$0xf]
  %v3940 = vld [vmem:[%s3929 + $0x28] sm:$0xf]
  %v3941 = vld [vmem:[%s3929 + $0x2c] sm:$0xf]
  %v3942 = vld [vmem:[%s3929 + $0x30] sm:$0xf]
  %v3943 = vld [vmem:[%s3929 + $0x34] sm:$0xf]
  %v3944 = vld [vmem:[%s3929 + $0x38] sm:$0xf]
  %v3945 = vld [vmem:[%s3929 + $0x3c] sm:$0xf]
  %v3962 = vunpack.c.l.b16 %v3930
  %v3963 = vunpack.c.l.b16 %v3931
  %v3964 = vunpack.c.l.b16 %v3932
  %v3965 = vunpack.c.l.b16 %v3933
  %v3966 = vunpack.c.l.b16 %v3934
  %v3967 = vunpack.c.l.b16 %v3935
  %v3968 = vunpack.c.l.b16 %v3936
  %v3969 = vunpack.c.l.b16 %v3937
  %v3970 = vunpack.c.l.b16 %v3938
  %v3971 = vunpack.c.l.b16 %v3939
  %v3972 = vunpack.c.l.b16 %v3940
  %v3973 = vunpack.c.l.b16 %v3941
  %v3974 = vunpack.c.l.b16 %v3942
  %v3975 = vunpack.c.l.b16 %v3943
  %v3976 = vunpack.c.l.b16 %v3944
  %v3977 = vunpack.c.l.b16 %v3945
  %v3978 = vpack.c.b16 %v3963, %v3962
  %v3979 = vpack.c.b16 %v3965, %v3964
  %v3980 = vpack.c.b16 %v3967, %v3966
  %v3981 = vpack.c.b16 %v3969, %v3968
  %v3982 = vpack.c.b16 %v3971, %v3970
  %v3983 = vpack.c.b16 %v3973, %v3972
  %v3984 = vpack.c.b16 %v3975, %v3974
  %v3985 = vpack.c.b16 %v3977, %v3976
  %3994 = vmatprep.subr.bf16.mxu0 0
  %3995 = vmatpush1.bf16.msra.mxu0 %v3978
  %3996 = vmatprep.subr.bf16.mxu0 0
  %3997 = vmatpush1.bf16.msra.mxu0 %v3979
  %3998 = vmatprep.subr.bf16.mxu0 0
  %3999 = vmatpush1.bf16.msra.mxu0 %v3980
  %4000 = vmatprep.subr.bf16.mxu0 0
  %4001 = vmatpush1.bf16.msra.mxu0 %v3981
  %4002 = vmatprep.subr.bf16.mxu0 0
  %4003 = vmatpush1.bf16.msra.mxu0 %v3982
  %4004 = vmatprep.subr.bf16.mxu0 0
  %4005 = vmatpush1.bf16.msra.mxu0 %v3983
  %4006 = vmatprep.subr.bf16.mxu0 0
  %4007 = vmatpush1.bf16.msra.mxu0 %v3984
  %4008 = vmatprep.subr.bf16.mxu0 0
  %4009 = vmatpush1.bf16.msra.mxu0 %v3985
  %4010 = vmatprep.subr.bf16.mxu0 0
  %4011 = vmatpush1.bf16.msra.mxu0 0
  %4012 = vmatprep.subr.bf16.mxu0 0
  %4013 = vmatpush1.bf16.msra.mxu0 0
  %4014 = vmatprep.subr.bf16.mxu0 0
  %4015 = vmatpush1.bf16.msra.mxu0 0
  %4016 = vmatprep.subr.bf16.mxu0 0
  %4017 = vmatpush1.bf16.msra.mxu0 0
  %4018 = vmatprep.subr.bf16.mxu0 0
  %4019 = vmatpush1.bf16.msra.mxu0 0
  %4020 = vmatprep.subr.bf16.mxu0 0
  %4021 = vmatpush1.bf16.msra.mxu0 0
  %4022 = vmatprep.subr.bf16.mxu0 0
  %4023 = vmatpush1.bf16.msra.mxu0 0
  %4024 = vmatprep.subr.bf16.mxu0 0
  %4025 = vmatpush1.bf16.msra.mxu0 0
  %4026 = vmatprep.mubr.bf16.mxu0 0
  %4027 = vmatmul.mubr.bf16.gmra.mrb[0].mxu0 %v3897
  %v4028 = vpop.f32.mrb[0].mxu0
  %v4029 = vadd.f32 0.0, %v4028
  %v4030 = vpop.f32.mrb[0].mxu0
  %v4031 = vpop.f32.mrb[0].mxu0
  %v4032 = vadd.f32 0.0, %v4031
  %v4033 = vpop.f32.mrb[0].mxu0
  %4034 = vmatprep.mubr.bf16.mxu0 0
  %4035 = vmatmul.mubr.bf16.gmra.mrb[0].mxu0 %v3898
  %v4036 = vpop.f32.mrb[0].mxu0
  %v4037 = vadd.f32 0.0, %v4036
  %v4038 = vpop.f32.mrb[0].mxu0
  %v4039 = vpop.f32.mrb[0].mxu0
  %v4040 = vadd.f32 0.0, %v4039
  %v4041 = vpop.f32.mrb[0].mxu0
  %4042 = vmatprep.mubr.bf16.mxu0 0
  %4043 = vmatmul.mubr.bf16.gmra.mrb[0].mxu0 %v3899
  %v4044 = vpop.f32.mrb[0].mxu0
  %v4045 = vadd.f32 0.0, %v4044
  %v4046 = vpop.f32.mrb[0].mxu0
  %v4047 = vpop.f32.mrb[0].mxu0
  %v4048 = vadd.f32 0.0, %v4047
  %v4049 = vpop.f32.mrb[0].mxu0
  %4050 = vmatprep.mubr.bf16.mxu0 0
  %4051 = vmatmul.mubr.bf16.gmra.mrb[0].mxu0 %v3900
  %v4052 = vpop.f32.mrb[0].mxu0
  %v4053 = vadd.f32 0.0, %v4052
  %v4054 = vpop.f32.mrb[0].mxu0
  %v4055 = vpop.f32.mrb[0].mxu0
  %v4056 = vadd.f32 0.0, %v4055
  %v4057 = vpop.f32.mrb[0].mxu0
  %4058 = vmatprep.mubr.bf16.mxu0 0
  %4059 = vmatmul.mubr.bf16.gmra.mrb[0].mxu0 %v3901
  %v4060 = vpop.f32.mrb[0].mxu0
  %v4061 = vadd.f32 0.0, %v4060
  %v4062 = vpop.f32.mrb[0].mxu0
  %v4063 = vpop.f32.mrb[0].mxu0
  %v4064 = vadd.f32 0.0, %v4063
  %v4065 = vpop.f32.mrb[0].mxu0
  %4066 = vmatprep.mubr.bf16.mxu0 0
  %4067 = vmatmul.mubr.bf16.gmra.mrb[0].mxu0 %v3902
  %v4068 = vpop.f32.mrb[0].mxu0
  %v4069 = vadd.f32 0.0, %v4068
  %v4070 = vpop.f32.mrb[0].mxu0
  %v4071 = vpop.f32.mrb[0].mxu0
  %v4072 = vadd.f32 0.0, %v4071
  %v4073 = vpop.f32.mrb[0].mxu0
  %4074 = vmatprep.mubr.bf16.mxu0 0
  %4075 = vmatmul.mubr.bf16.gmra.mrb[0].mxu0 %v3903
  %v4076 = vpop.f32.mrb[0].mxu0
  %v4077 = vadd.f32 0.0, %v4076
  %v4078 = vpop.f32.mrb[0].mxu0
  %v4079 = vpop.f32.mrb[0].mxu0
  %v4080 = vadd.f32 0.0, %v4079
  %v4081 = vpop.f32.mrb[0].mxu0
  %4082 = vmatprep.mubr.bf16.mxu0 0
  %4083 = vmatmul.mubr.bf16.gmra.mrb[0].mxu0 %v3904
  %v4084 = vpop.f32.mrb[0].mxu0
  %v4085 = vadd.f32 0.0, %v4084
  %v4086 = vpop.f32.mrb[0].mxu0
  %v4087 = vpop.f32.mrb[0].mxu0
  %v4088 = vadd.f32 0.0, %v4087
  %v4089 = vpop.f32.mrb[0].mxu0
  %4090 = vmatprep.mubr.bf16.mxu0 0
  %4091 = vmatmul.mubr.bf16.gmra.mrb[0].mxu0 %v3905
  %v4092 = vpop.f32.mrb[0].mxu0
  %v4093 = vadd.f32 0.0, %v4092
  %v4094 = vpop.f32.mrb[0].mxu0
  %v4095 = vpop.f32.mrb[0].mxu0
  %v4096 = vadd.f32 0.0, %v4095
  %v4097 = vpop.f32.mrb[0].mxu0
  %4098 = vmatprep.mubr.bf16.mxu0 0
  %4099 = vmatmul.mubr.bf16.gmra.mrb[0].mxu0 %v3906
  %v4100 = vpop.f32.mrb[0].mxu0
  %v4101 = vadd.f32 0.0, %v4100
  %v4102 = vpop.f32.mrb[0].mxu0
  %v4103 = vpop.f32.mrb[0].mxu0
  %v4104 = vadd.f32 0.0, %v4103
  %v4105 = vpop.f32.mrb[0].mxu0
  %4106 = vmatprep.mubr.bf16.mxu0 0
  %4107 = vmatmul.mubr.bf16.gmra.mrb[0].mxu0 %v3907
  %v4108 = vpop.f32.mrb[0].mxu0
  %v4109 = vadd.f32 0.0, %v4108
  %v4110 = vpop.f32.mrb[0].mxu0
  %v4111 = vpop.f32.mrb[0].mxu0
  %v4112 = vadd.f32 0.0, %v4111
  %v4113 = vpop.f32.mrb[0].mxu0
  %4114 = vmatprep.mubr.bf16.mxu0 0
  %4115 = vmatmul.mubr.bf16.gmra.mrb[0].mxu0 %v3908
  %v4116 = vpop.f32.mrb[0].mxu0
  %v4117 = vadd.f32 0.0, %v4116
  %v4118 = vpop.f32.mrb[0].mxu0
  %v4119 = vpop.f32.mrb[0].mxu0
  %v4120 = vadd.f32 0.0, %v4119
  %v4121 = vpop.f32.mrb[0].mxu0
  %4122 = vmatprep.mubr.bf16.mxu0 0
  %4123 = vmatmul.mubr.bf16.gmra.mrb[0].mxu0 %v3909
  %v4124 = vpop.f32.mrb[0].mxu0
  %v4125 = vadd.f32 0.0, %v4124
  %v4126 = vpop.f32.mrb[0].mxu0
  %v4127 = vpop.f32.mrb[0].mxu0
  %v4128 = vadd.f32 0.0, %v4127
  %v4129 = vpop.f32.mrb[0].mxu0
  %4130 = vmatprep.mubr.bf16.mxu0 0
  %4131 = vmatmul.mubr.bf16.gmra.mrb[0].mxu0 %v3910
  %v4132 = vpop.f32.mrb[0].mxu0
  %v4133 = vadd.f32 0.0, %v4132
  %v4134 = vpop.f32.mrb[0].mxu0
  %v4135 = vpop.f32.mrb[0].mxu0
  %v4136 = vadd.f32 0.0, %v4135
  %v4137 = vpop.f32.mrb[0].mxu0
  %4138 = vmatprep.mubr.bf16.mxu0 0
  %4139 = vmatmul.mubr.bf16.gmra.mrb[0].mxu0 %v3911
  %v4140 = vpop.f32.mrb[0].mxu0
  %v4141 = vadd.f32 0.0, %v4140
  %v4142 = vpop.f32.mrb[0].mxu0
  %v4143 = vpop.f32.mrb[0].mxu0
  %v4144 = vadd.f32 0.0, %v4143
  %v4145 = vpop.f32.mrb[0].mxu0
  %4146 = vmatprep.mubr.bf16.mxu0 0
  %4147 = vmatmul.mubr.bf16.gmra.mrb[0].mxu0 %v3912
  %v4148 = vpop.f32.mrb[0].mxu0
  %v4149 = vadd.f32 0.0, %v4148
  %v4150 = vpop.f32.mrb[0].mxu0
  %v4151 = vpop.f32.mrb[0].mxu0
  %v4152 = vadd.f32 0.0, %v4151
  %v4153 = vpop.f32.mrb[0].mxu0
  %4154 = vmatprep.mubr.bf16.mxu0 0
  %4155 = vmatmul.mubr.bf16.gmra.mrb[0].mxu0 %v3913
  %v4156 = vpop.f32.mrb[0].mxu0
  %v4157 = vadd.f32 0.0, %v4156
  %v4158 = vpop.f32.mrb[0].mxu0
  %v4159 = vpop.f32.mrb[0].mxu0
  %v4160 = vadd.f32 0.0, %v4159
  %v4161 = vpop.f32.mrb[0].mxu0
  %4162 = vmatprep.mubr.bf16.mxu0 0
  %4163 = vmatmul.mubr.bf16.gmra.mrb[0].mxu0 %v3914
  %v4164 = vpop.f32.mrb[0].mxu0
  %v4165 = vadd.f32 0.0, %v4164
  %v4166 = vpop.f32.mrb[0].mxu0
  %v4167 = vpop.f32.mrb[0].mxu0
  %v4168 = vadd.f32 0.0, %v4167
  %v4169 = vpop.f32.mrb[0].mxu0
  %4170 = vmatprep.mubr.bf16.mxu0 0
  %4171 = vmatmul.mubr.bf16.gmra.mrb[0].mxu0 %v3915
  %v4172 = vpop.f32.mrb[0].mxu0
  %v4173 = vadd.f32 0.0, %v4172
  %v4174 = vpop.f32.mrb[0].mxu0
  %v4175 = vpop.f32.mrb[0].mxu0
  %v4176 = vadd.f32 0.0, %v4175
  %v4177 = vpop.f32.mrb[0].mxu0
  %4178 = vmatprep.mubr.bf16.mxu0 0
  %4179 = vmatmul.mubr.bf16.gmra.mrb[0].mxu0 %v3916
  %v4180 = vpop.f32.mrb[0].mxu0
  %v4181 = vadd.f32 0.0, %v4180
  %v4182 = vpop.f32.mrb[0].mxu0
  %v4183 = vpop.f32.mrb[0].mxu0
  %v4184 = vadd.f32 0.0, %v4183
  %v4185 = vpop.f32.mrb[0].mxu0
  %4186 = vmatprep.mubr.bf16.mxu0 0
  %4187 = vmatmul.mubr.bf16.gmra.mrb[0].mxu0 %v3917
  %v4188 = vpop.f32.mrb[0].mxu0
  %v4189 = vadd.f32 0.0, %v4188
  %v4190 = vpop.f32.mrb[0].mxu0
  %v4191 = vpop.f32.mrb[0].mxu0
  %v4192 = vadd.f32 0.0, %v4191
  %v4193 = vpop.f32.mrb[0].mxu0
  %4194 = vmatprep.mubr.bf16.mxu0 0
  %4195 = vmatmul.mubr.bf16.gmra.mrb[0].mxu0 %v3918
  %v4196 = vpop.f32.mrb[0].mxu0
  %v4197 = vadd.f32 0.0, %v4196
  %v4198 = vpop.f32.mrb[0].mxu0
  %v4199 = vpop.f32.mrb[0].mxu0
  %v4200 = vadd.f32 0.0, %v4199
  %v4201 = vpop.f32.mrb[0].mxu0
  %4202 = vmatprep.mubr.bf16.mxu0 0
  %4203 = vmatmul.mubr.bf16.gmra.mrb[0].mxu0 %v3919
  %v4204 = vpop.f32.mrb[0].mxu0
  %v4205 = vadd.f32 0.0, %v4204
  %v4206 = vpop.f32.mrb[0].mxu0
  %v4207 = vpop.f32.mrb[0].mxu0
  %v4208 = vadd.f32 0.0, %v4207
  %v4209 = vpop.f32.mrb[0].mxu0
  %4210 = vmatprep.mubr.bf16.mxu0 0
  %4211 = vmatmul.mubr.bf16.gmra.mrb[0].mxu0 %v3920
  %v4212 = vpop.f32.mrb[0].mxu0
  %v4213 = vadd.f32 0.0, %v4212
  %v4214 = vpop.f32.mrb[0].mxu0
  %v4215 = vpop.f32.mrb[0].mxu0
  %v4216 = vadd.f32 0.0, %v4215
  %v4217 = vpop.f32.mrb[0].mxu0
  %4218 = vmatprep.mubr.bf16.mxu0 0
  %4219 = vmatmul.mubr.bf16.gmra.mrb[0].mxu0 %v3921
  %v4220 = vpop.f32.mrb[0].mxu0
  %v4221 = vadd.f32 0.0, %v4220
  %v4222 = vpop.f32.mrb[0].mxu0
  %v4223 = vpop.f32.mrb[0].mxu0
  %v4224 = vadd.f32 0.0, %v4223
  %v4225 = vpop.f32.mrb[0].mxu0
  %4226 = vmatprep.mubr.bf16.mxu0 0
  %4227 = vmatmul.mubr.bf16.gmra.mrb[0].mxu0 %v3922
  %v4228 = vpop.f32.mrb[0].mxu0
  %v4229 = vadd.f32 0.0, %v4228
  %v4230 = vpop.f32.mrb[0].mxu0
  %v4231 = vpop.f32.mrb[0].mxu0
  %v4232 = vadd.f32 0.0, %v4231
  %v4233 = vpop.f32.mrb[0].mxu0
  %4234 = vmatprep.mubr.bf16.mxu0 0
  %4235 = vmatmul.mubr.bf16.gmra.mrb[0].mxu0 %v3923
  %v4236 = vpop.f32.mrb[0].mxu0
  %v4237 = vadd.f32 0.0, %v4236
  %v4238 = vpop.f32.mrb[0].mxu0
  %v4239 = vpop.f32.mrb[0].mxu0
  %v4240 = vadd.f32 0.0, %v4239
  %v4241 = vpop.f32.mrb[0].mxu0
  %4242 = vmatprep.mubr.bf16.mxu0 0
  %4243 = vmatmul.mubr.bf16.gmra.mrb[0].mxu0 %v3924
  %v4244 = vpop.f32.mrb[0].mxu0
  %v4245 = vadd.f32 0.0, %v4244
  %v4246 = vpop.f32.mrb[0].mxu0
  %v4247 = vpop.f32.mrb[0].mxu0
  %v4248 = vadd.f32 0.0, %v4247
  %v4249 = vpop.f32.mrb[0].mxu0
  %4250 = vmatprep.mubr.bf16.mxu0 0
  %4251 = vmatmul.mubr.bf16.gmra.mrb[0].mxu0 %v3925
  %v4252 = vpop.f32.mrb[0].mxu0
  %v4253 = vadd.f32 0.0, %v4252
  %v4254 = vpop.f32.mrb[0].mxu0
  %v4255 = vpop.f32.mrb[0].mxu0
  %v4256 = vadd.f32 0.0, %v4255
  %v4257 = vpop.f32.mrb[0].mxu0
  %4258 = vmatprep.mubr.bf16.mxu0 0
  %4259 = vmatmul.mubr.bf16.gmra.mrb[0].mxu0 %v3926
  %v4260 = vpop.f32.mrb[0].mxu0
  %v4261 = vadd.f32 0.0, %v4260
  %v4262 = vpop.f32.mrb[0].mxu0
  %v4263 = vpop.f32.mrb[0].mxu0
  %v4264 = vadd.f32 0.0, %v4263
  %v4265 = vpop.f32.mrb[0].mxu0
  %4266 = vmatprep.mubr.bf16.mxu0 0
  %4267 = vmatmul.mubr.bf16.gmra.mrb[0].mxu0 %v3927
  %v4268 = vpop.f32.mrb[0].mxu0
  %v4269 = vadd.f32 0.0, %v4268
  %v4270 = vpop.f32.mrb[0].mxu0
  %v4271 = vpop.f32.mrb[0].mxu0
  %v4272 = vadd.f32 0.0, %v4271
  %v4273 = vpop.f32.mrb[0].mxu0
  %4274 = vmatprep.mubr.bf16.mxu0 0
  %4275 = vmatmul.mubr.bf16.gmra.mrb[0].mxu0 %v3928
  %v4276 = vpop.f32.mrb[0].mxu0
  %v4277 = vadd.f32 0.0, %v4276
  %v4278 = vpop.f32.mrb[0].mxu0
  %v4279 = vpop.f32.mrb[0].mxu0
  %v4280 = vadd.f32 0.0, %v4279
  %v4281 = vpop.f32.mrb[0].mxu0
  %4282 = vdwg.mxu0
  %v4283 = vadd.f32 %v3768, %v4029
  %v4284 = vadd.f32 %v3769, %v4032
  %v4285 = vadd.f32 %v3770, %v4037
  %v4286 = vadd.f32 %v3771, %v4040
  %v4287 = vadd.f32 %v3772, %v4045
  %v4288 = vadd.f32 %v3773, %v4048
  %v4289 = vadd.f32 %v3774, %v4053
  %v4290 = vadd.f32 %v3775, %v4056
  %v4291 = vadd.f32 %v3776, %v4061
  %v4292 = vadd.f32 %v3777, %v4064
  %v4293 = vadd.f32 %v3778, %v4069
  %v4294 = vadd.f32 %v3779, %v4072
  %v4295 = vadd.f32 %v3780, %v4077
  %v4296 = vadd.f32 %v3781, %v4080
  %v4297 = vadd.f32 %v3782, %v4085
  %v4298 = vadd.f32 %v3783, %v4088
  %v4299 = vadd.f32 %v3784, %v4093
  %v4300 = vadd.f32 %v3785, %v4096
  %v4301 = vadd.f32 %v3786, %v4101
  %v4302 = vadd.f32 %v3787, %v4104
  %v4303 = vadd.f32 %v3788, %v4109
  %v4304 = vadd.f32 %v3789, %v4112
  %v4305 = vadd.f32 %v3790, %v4117
  %v4306 = vadd.f32 %v3791, %v4120
  %v4307 = vadd.f32 %v3792, %v4125
  %v4308 = vadd.f32 %v3793, %v4128
  %v4309 = vadd.f32 %v3794, %v4133
  %v4310 = vadd.f32 %v3795, %v4136
  %v4311 = vadd.f32 %v3796, %v4141
  %v4312 = vadd.f32 %v3797, %v4144
  %v4313 = vadd.f32 %v3798, %v4149
  %v4314 = vadd.f32 %v3799, %v4152
  %v4315 = vadd.f32 %v3800, %v4157
  %v4316 = vadd.f32 %v3801, %v4160
  %v4317 = vadd.f32 %v3802, %v4165
  %v4318 = vadd.f32 %v3803, %v4168
  %v4319 = vadd.f32 %v3804, %v4173
  %v4320 = vadd.f32 %v3805, %v4176
  %v4321 = vadd.f32 %v3806, %v4181
  %v4322 = vadd.f32 %v3807, %v4184
  %v4323 = vadd.f32 %v3808, %v4189
  %v4324 = vadd.f32 %v3809, %v4192
  %v4325 = vadd.f32 %v3810, %v4197
  %v4326 = vadd.f32 %v3811, %v4200
  %v4327 = vadd.f32 %v3812, %v4205
  %v4328 = vadd.f32 %v3813, %v4208
  %v4329 = vadd.f32 %v3814, %v4213
  %v4330 = vadd.f32 %v3815, %v4216
  %v4331 = vadd.f32 %v3816, %v4221
  %v4332 = vadd.f32 %v3817, %v4224
  %v4333 = vadd.f32 %v3818, %v4229
  %v4334 = vadd.f32 %v3819, %v4232
  %v4335 = vadd.f32 %v3820, %v4237
  %v4336 = vadd.f32 %v3821, %v4240
  %v4337 = vadd.f32 %v3822, %v4245
  %v4338 = vadd.f32 %v3823, %v4248
  %v4339 = vadd.f32 %v3824, %v4253
  %v4340 = vadd.f32 %v3825, %v4256
  %v4341 = vadd.f32 %v3826, %v4261
  %v4342 = vadd.f32 %v3827, %v4264
  %v4343 = vadd.f32 %v3828, %v4269
  %v4344 = vadd.f32 %v3829, %v4272
  %v4345 = vadd.f32 %v3830, %v4277
  %v4346 = vadd.f32 %v3831, %v4280
  %v4347 = vld [vmem:[%s3832 + $0x1] sm:$0xff]
  %v4348 = vld [vmem:[%s3832 + $0x9] sm:$0xff]
  %v4349 = vld [vmem:[%s3832 + $0x19] sm:$0xff]
  %v4350 = vld [vmem:[%s3832 + $0x21] sm:$0xff]
  %v4351 = vld [vmem:[%s3832 + $0x31] sm:$0xff]
  %v4352 = vld [vmem:[%s3832 + $0x39] sm:$0xff]
  %v4353 = vld [vmem:[%s3832 + $0x49] sm:$0xff]
  %v4354 = vld [vmem:[%s3832 + $0x51] sm:$0xff]
  %v4355 = vld [vmem:[%s3832 + $0x61] sm:$0xff]
  %v4356 = vld [vmem:[%s3832 + $0x69] sm:$0xff]
  %v4357 = vld [vmem:[%s3832 + $0x79] sm:$0xff]
  %v4358 = vld [vmem:[%s3832 + $0x81] sm:$0xff]
  %v4359 = vld [vmem:[%s3832 + $0x91] sm:$0xff]
  %v4360 = vld [vmem:[%s3832 + $0x99] sm:$0xff]
  %v4361 = vld [vmem:[%s3832 + $0xa9] sm:$0xff]
  %v4362 = vld [vmem:[%s3832 + $0xb1] sm:$0xff]
  %v4363 = vld [vmem:[%s3832 + $0xc1] sm:$0xff]
  %v4364 = vld [vmem:[%s3832 + $0xc9] sm:$0xff]
  %v4365 = vld [vmem:[%s3832 + $0xd9] sm:$0xff]
  %v4366 = vld [vmem:[%s3832 + $0xe1] sm:$0xff]
  %v4367 = vld [vmem:[%s3832 + $0xf1] sm:$0xff]
  %v4368 = vld [vmem:[%s3832 + $0xf9] sm:$0xff]
  %v4369 = vld [vmem:[%s3832 + $0x109] sm:$0xff]
  %v4370 = vld [vmem:[%s3832 + $0x111] sm:$0xff]
  %v4371 = vld [vmem:[%s3832 + $0x121] sm:$0xff]
  %v4372 = vld [vmem:[%s3832 + $0x129] sm:$0xff]
  %v4373 = vld [vmem:[%s3832 + $0x139] sm:$0xff]
  %v4374 = vld [vmem:[%s3832 + $0x141] sm:$0xff]
  %v4375 = vld [vmem:[%s3832 + $0x151] sm:$0xff]
  %v4376 = vld [vmem:[%s3832 + $0x159] sm:$0xff]
  %v4377 = vld [vmem:[%s3832 + $0x169] sm:$0xff]
  %v4378 = vld [vmem:[%s3832 + $0x171] sm:$0xff]
  %v4379 = vld [vmem:[%s3832 + $0x1b1] sm:$0xff]
  %v4380 = vld [vmem:[%s3832 + $0x1b9] sm:$0xff]
  %v4381 = vld [vmem:[%s3832 + $0x1c9] sm:$0xff]
  %v4382 = vld [vmem:[%s3832 + $0x1d1] sm:$0xff]
  %v4383 = vld [vmem:[%s3832 + $0x1e1] sm:$0xff]
  %v4384 = vld [vmem:[%s3832 + $0x1e9] sm:$0xff]
  %v4385 = vld [vmem:[%s3832 + $0x1f9] sm:$0xff]
  %v4386 = vld [vmem:[%s3832 + $0x201] sm:$0xff]
  %v4387 = vld [vmem:[%s3832 + $0x211] sm:$0xff]
  %v4388 = vld [vmem:[%s3832 + $0x219] sm:$0xff]
  %v4389 = vld [vmem:[%s3832 + $0x229] sm:$0xff]
  %v4390 = vld [vmem:[%s3832 + $0x231] sm:$0xff]
  %v4391 = vld [vmem:[%s3832 + $0x241] sm:$0xff]
  %v4392 = vld [vmem:[%s3832 + $0x249] sm:$0xff]
  %v4393 = vld [vmem:[%s3832 + $0x259] sm:$0xff]
  %v4394 = vld [vmem:[%s3832 + $0x261] sm:$0xff]
  %v4395 = vld [vmem:[%s3832 + $0x271] sm:$0xff]
  %v4396 = vld [vmem:[%s3832 + $0x279] sm:$0xff]
  %v4397 = vld [vmem:[%s3832 + $0x289] sm:$0xff]
  %v4398 = vld [vmem:[%s3832 + $0x291] sm:$0xff]
  %v4399 = vld [vmem:[%s3832 + $0x2a1] sm:$0xff]
  %v4400 = vld [vmem:[%s3832 + $0x2a9] sm:$0xff]
  %v4401 = vld [vmem:[%s3832 + $0x2b9] sm:$0xff]
  %v4402 = vld [vmem:[%s3832 + $0x2c1] sm:$0xff]
  %v4403 = vld [vmem:[%s3832 + $0x2d1] sm:$0xff]
  %v4404 = vld [vmem:[%s3832 + $0x2d9] sm:$0xff]
  %v4405 = vld [vmem:[%s3832 + $0x2e9] sm:$0xff]
  %v4406 = vld [vmem:[%s3832 + $0x2f1] sm:$0xff]
  %v4407 = vld [vmem:[%s3832 + $0x301] sm:$0xff]
  %v4408 = vld [vmem:[%s3832 + $0x309] sm:$0xff]
  %v4409 = vld [vmem:[%s3832 + $0x319] sm:$0xff]
  %v4410 = vld [vmem:[%s3832 + $0x321] sm:$0xff]
  %v4411 = vpack.c.bf16 %v4348, %v4347
  %v4412 = vpack.c.bf16 %v4350, %v4349
  %v4413 = vpack.c.bf16 %v4352, %v4351
  %v4414 = vpack.c.bf16 %v4354, %v4353
  %v4415 = vpack.c.bf16 %v4356, %v4355
  %v4416 = vpack.c.bf16 %v4358, %v4357
  %v4417 = vpack.c.bf16 %v4360, %v4359
  %v4418 = vpack.c.bf16 %v4362, %v4361
  %v4419 = vpack.c.bf16 %v4364, %v4363
  %v4420 = vpack.c.bf16 %v4366, %v4365
  %v4421 = vpack.c.bf16 %v4368, %v4367
  %v4422 = vpack.c.bf16 %v4370, %v4369
  %v4423 = vpack.c.bf16 %v4372, %v4371
  %v4424 = vpack.c.bf16 %v4374, %v4373
  %v4425 = vpack.c.bf16 %v4376, %v4375
  %v4426 = vpack.c.bf16 %v4378, %v4377
  %v4427 = vpack.c.bf16 %v4380, %v4379
  %v4428 = vpack.c.bf16 %v4382, %v4381
  %v4429 = vpack.c.bf16 %v4384, %v4383
  %v4430 = vpack.c.bf16 %v4386, %v4385
  %v4431 = vpack.c.bf16 %v4388, %v4387
  %v4432 = vpack.c.bf16 %v4390, %v4389
  %v4433 = vpack.c.bf16 %v4392, %v4391
  %v4434 = vpack.c.bf16 %v4394, %v4393
  %v4435 = vpack.c.bf16 %v4396, %v4395
  %v4436 = vpack.c.bf16 %v4398, %v4397
  %v4437 = vpack.c.bf16 %v4400, %v4399
  %v4438 = vpack.c.bf16 %v4402, %v4401
  %v4439 = vpack.c.bf16 %v4404, %v4403
  %v4440 = vpack.c.bf16 %v4406, %v4405
  %v4441 = vpack.c.bf16 %v4408, %v4407
  %v4442 = vpack.c.bf16 %v4410, %v4409
  %s4443 = scalar_lea.vmem %s3, 448
  %v4444 = vld [vmem:[%s4443] sm:$0xf]
  %v4445 = vld [vmem:[%s4443 + $0x4] sm:$0xf]
  %v4446 = vld [vmem:[%s4443 + $0x8] sm:$0xf]
  %v4447 = vld [vmem:[%s4443 + $0xc] sm:$0xf]
  %v4448 = vld [vmem:[%s4443 + $0x10] sm:$0xf]
  %v4449 = vld [vmem:[%s4443 + $0x14] sm:$0xf]
  %v4450 = vld [vmem:[%s4443 + $0x18] sm:$0xf]
  %v4451 = vld [vmem:[%s4443 + $0x1c] sm:$0xf]
  %v4452 = vld [vmem:[%s4443 + $0x20] sm:$0xf]
  %v4453 = vld [vmem:[%s4443 + $0x24] sm:$0xf]
  %v4454 = vld [vmem:[%s4443 + $0x28] sm:$0xf]
  %v4455 = vld [vmem:[%s4443 + $0x2c] sm:$0xf]
  %v4456 = vld [vmem:[%s4443 + $0x30] sm:$0xf]
  %v4457 = vld [vmem:[%s4443 + $0x34] sm:$0xf]
  %v4458 = vld [vmem:[%s4443 + $0x38] sm:$0xf]
  %v4459 = vld [vmem:[%s4443 + $0x3c] sm:$0xf]
  %v4476 = vunpack.c.l.b16 %v4444
  %v4477 = vunpack.c.l.b16 %v4445
  %v4478 = vunpack.c.l.b16 %v4446
  %v4479 = vunpack.c.l.b16 %v4447
  %v4480 = vunpack.c.l.b16 %v4448
  %v4481 = vunpack.c.l.b16 %v4449
  %v4482 = vunpack.c.l.b16 %v4450
  %v4483 = vunpack.c.l.b16 %v4451
  %v4484 = vunpack.c.l.b16 %v4452
  %v4485 = vunpack.c.l.b16 %v4453
  %v4486 = vunpack.c.l.b16 %v4454
  %v4487 = vunpack.c.l.b16 %v4455
  %v4488 = vunpack.c.l.b16 %v4456
  %v4489 = vunpack.c.l.b16 %v4457
  %v4490 = vunpack.c.l.b16 %v4458
  %v4491 = vunpack.c.l.b16 %v4459
  %v4492 = vpack.c.b16 %v4477, %v4476
  %v4493 = vpack.c.b16 %v4479, %v4478
  %v4494 = vpack.c.b16 %v4481, %v4480
  %v4495 = vpack.c.b16 %v4483, %v4482
  %v4496 = vpack.c.b16 %v4485, %v4484
  %v4497 = vpack.c.b16 %v4487, %v4486
  %v4498 = vpack.c.b16 %v4489, %v4488
  %v4499 = vpack.c.b16 %v4491, %v4490
  %4508 = vmatprep.subr.bf16.mxu0 0
  %4509 = vmatpush1.bf16.msra.mxu0 %v4492
  %4510 = vmatprep.subr.bf16.mxu0 0
  %4511 = vmatpush1.bf16.msra.mxu0 %v4493
  %4512 = vmatprep.subr.bf16.mxu0 0
  %4513 = vmatpush1.bf16.msra.mxu0 %v4494
  %4514 = vmatprep.subr.bf16.mxu0 0
  %4515 = vmatpush1.bf16.msra.mxu0 %v4495
  %4516 = vmatprep.subr.bf16.mxu0 0
  %4517 = vmatpush1.bf16.msra.mxu0 %v4496
  %4518 = vmatprep.subr.bf16.mxu0 0
  %4519 = vmatpush1.bf16.msra.mxu0 %v4497
  %4520 = vmatprep.subr.bf16.mxu0 0
  %4521 = vmatpush1.bf16.msra.mxu0 %v4498
  %4522 = vmatprep.subr.bf16.mxu0 0
  %4523 = vmatpush1.bf16.msra.mxu0 %v4499
  %4524 = vmatprep.subr.bf16.mxu0 0
  %4525 = vmatpush1.bf16.msra.mxu0 0
  %4526 = vmatprep.subr.bf16.mxu0 0
  %4527 = vmatpush1.bf16.msra.mxu0 0
  %4528 = vmatprep.subr.bf16.mxu0 0
  %4529 = vmatpush1.bf16.msra.mxu0 0
  %4530 = vmatprep.subr.bf16.mxu0 0
  %4531 = vmatpush1.bf16.msra.mxu0 0
  %4532 = vmatprep.subr.bf16.mxu0 0
  %4533 = vmatpush1.bf16.msra.mxu0 0
  %4534 = vmatprep.subr.bf16.mxu0 0
  %4535 = vmatpush1.bf16.msra.mxu0 0
  %4536 = vmatprep.subr.bf16.mxu0 0
  %4537 = vmatpush1.bf16.msra.mxu0 0
  %4538 = vmatprep.subr.bf16.mxu0 0
  %4539 = vmatpush1.bf16.msra.mxu0 0
  %4540 = vmatprep.mubr.bf16.mxu0 0
  %4541 = vmatmul.mubr.bf16.gmra.mrb[0].mxu0 %v4411
  %v4542 = vpop.f32.mrb[0].mxu0
  %v4543 = vadd.f32 0.0, %v4542
  %v4544 = vpop.f32.mrb[0].mxu0
  %v4545 = vpop.f32.mrb[0].mxu0
  %v4546 = vadd.f32 0.0, %v4545
  %v4547 = vpop.f32.mrb[0].mxu0
  %4548 = vmatprep.mubr.bf16.mxu0 0
  %4549 = vmatmul.mubr.bf16.gmra.mrb[0].mxu0 %v4412
  %v4550 = vpop.f32.mrb[0].mxu0
  %v4551 = vadd.f32 0.0, %v4550
  %v4552 = vpop.f32.mrb[0].mxu0
  %v4553 = vpop.f32.mrb[0].mxu0
  %v4554 = vadd.f32 0.0, %v4553
  %v4555 = vpop.f32.mrb[0].mxu0
  %4556 = vmatprep.mubr.bf16.mxu0 0
  %4557 = vmatmul.mubr.bf16.gmra.mrb[0].mxu0 %v4413
  %v4558 = vpop.f32.mrb[0].mxu0
  %v4559 = vadd.f32 0.0, %v4558
  %v4560 = vpop.f32.mrb[0].mxu0
  %v4561 = vpop.f32.mrb[0].mxu0
  %v4562 = vadd.f32 0.0, %v4561
  %v4563 = vpop.f32.mrb[0].mxu0
  %4564 = vmatprep.mubr.bf16.mxu0 0
  %4565 = vmatmul.mubr.bf16.gmra.mrb[0].mxu0 %v4414
  %v4566 = vpop.f32.mrb[0].mxu0
  %v4567 = vadd.f32 0.0, %v4566
  %v4568 = vpop.f32.mrb[0].mxu0
  %v4569 = vpop.f32.mrb[0].mxu0
  %v4570 = vadd.f32 0.0, %v4569
  %v4571 = vpop.f32.mrb[0].mxu0
  %4572 = vmatprep.mubr.bf16.mxu0 0
  %4573 = vmatmul.mubr.bf16.gmra.mrb[0].mxu0 %v4415
  %v4574 = vpop.f32.mrb[0].mxu0
  %v4575 = vadd.f32 0.0, %v4574
  %v4576 = vpop.f32.mrb[0].mxu0
  %v4577 = vpop.f32.mrb[0].mxu0
  %v4578 = vadd.f32 0.0, %v4577
  %v4579 = vpop.f32.mrb[0].mxu0
  %4580 = vmatprep.mubr.bf16.mxu0 0
  %4581 = vmatmul.mubr.bf16.gmra.mrb[0].mxu0 %v4416
  %v4582 = vpop.f32.mrb[0].mxu0
  %v4583 = vadd.f32 0.0, %v4582
  %v4584 = vpop.f32.mrb[0].mxu0
  %v4585 = vpop.f32.mrb[0].mxu0
  %v4586 = vadd.f32 0.0, %v4585
  %v4587 = vpop.f32.mrb[0].mxu0
  %4588 = vmatprep.mubr.bf16.mxu0 0
  %4589 = vmatmul.mubr.bf16.gmra.mrb[0].mxu0 %v4417
  %v4590 = vpop.f32.mrb[0].mxu0
  %v4591 = vadd.f32 0.0, %v4590
  %v4592 = vpop.f32.mrb[0].mxu0
  %v4593 = vpop.f32.mrb[0].mxu0
  %v4594 = vadd.f32 0.0, %v4593
  %v4595 = vpop.f32.mrb[0].mxu0
  %4596 = vmatprep.mubr.bf16.mxu0 0
  %4597 = vmatmul.mubr.bf16.gmra.mrb[0].mxu0 %v4418
  %v4598 = vpop.f32.mrb[0].mxu0
  %v4599 = vadd.f32 0.0, %v4598
  %v4600 = vpop.f32.mrb[0].mxu0
  %v4601 = vpop.f32.mrb[0].mxu0
  %v4602 = vadd.f32 0.0, %v4601
  %v4603 = vpop.f32.mrb[0].mxu0
  %4604 = vmatprep.mubr.bf16.mxu0 0
  %4605 = vmatmul.mubr.bf16.gmra.mrb[0].mxu0 %v4419
  %v4606 = vpop.f32.mrb[0].mxu0
  %v4607 = vadd.f32 0.0, %v4606
  %v4608 = vpop.f32.mrb[0].mxu0
  %v4609 = vpop.f32.mrb[0].mxu0
  %v4610 = vadd.f32 0.0, %v4609
  %v4611 = vpop.f32.mrb[0].mxu0
  %4612 = vmatprep.mubr.bf16.mxu0 0
  %4613 = vmatmul.mubr.bf16.gmra.mrb[0].mxu0 %v4420
  %v4614 = vpop.f32.mrb[0].mxu0
  %v4615 = vadd.f32 0.0, %v4614
  %v4616 = vpop.f32.mrb[0].mxu0
  %v4617 = vpop.f32.mrb[0].mxu0
  %v4618 = vadd.f32 0.0, %v4617
  %v4619 = vpop.f32.mrb[0].mxu0
  %4620 = vmatprep.mubr.bf16.mxu0 0
  %4621 = vmatmul.mubr.bf16.gmra.mrb[0].mxu0 %v4421
  %v4622 = vpop.f32.mrb[0].mxu0
  %v4623 = vadd.f32 0.0, %v4622
  %v4624 = vpop.f32.mrb[0].mxu0
  %v4625 = vpop.f32.mrb[0].mxu0
  %v4626 = vadd.f32 0.0, %v4625
  %v4627 = vpop.f32.mrb[0].mxu0
  %4628 = vmatprep.mubr.bf16.mxu0 0
  %4629 = vmatmul.mubr.bf16.gmra.mrb[0].mxu0 %v4422
  %v4630 = vpop.f32.mrb[0].mxu0
  %v4631 = vadd.f32 0.0, %v4630
  %v4632 = vpop.f32.mrb[0].mxu0
  %v4633 = vpop.f32.mrb[0].mxu0
  %v4634 = vadd.f32 0.0, %v4633
  %v4635 = vpop.f32.mrb[0].mxu0
  %4636 = vmatprep.mubr.bf16.mxu0 0
  %4637 = vmatmul.mubr.bf16.gmra.mrb[0].mxu0 %v4423
  %v4638 = vpop.f32.mrb[0].mxu0
  %v4639 = vadd.f32 0.0, %v4638
  %v4640 = vpop.f32.mrb[0].mxu0
  %v4641 = vpop.f32.mrb[0].mxu0
  %v4642 = vadd.f32 0.0, %v4641
  %v4643 = vpop.f32.mrb[0].mxu0
  %4644 = vmatprep.mubr.bf16.mxu0 0
  %4645 = vmatmul.mubr.bf16.gmra.mrb[0].mxu0 %v4424
  %v4646 = vpop.f32.mrb[0].mxu0
  %v4647 = vadd.f32 0.0, %v4646
  %v4648 = vpop.f32.mrb[0].mxu0
  %v4649 = vpop.f32.mrb[0].mxu0
  %v4650 = vadd.f32 0.0, %v4649
  %v4651 = vpop.f32.mrb[0].mxu0
  %4652 = vmatprep.mubr.bf16.mxu0 0
  %4653 = vmatmul.mubr.bf16.gmra.mrb[0].mxu0 %v4425
  %v4654 = vpop.f32.mrb[0].mxu0
  %v4655 = vadd.f32 0.0, %v4654
  %v4656 = vpop.f32.mrb[0].mxu0
  %v4657 = vpop.f32.mrb[0].mxu0
  %v4658 = vadd.f32 0.0, %v4657
  %v4659 = vpop.f32.mrb[0].mxu0
  %4660 = vmatprep.mubr.bf16.mxu0 0
  %4661 = vmatmul.mubr.bf16.gmra.mrb[0].mxu0 %v4426
  %v4662 = vpop.f32.mrb[0].mxu0
  %v4663 = vadd.f32 0.0, %v4662
  %v4664 = vpop.f32.mrb[0].mxu0
  %v4665 = vpop.f32.mrb[0].mxu0
  %v4666 = vadd.f32 0.0, %v4665
  %v4667 = vpop.f32.mrb[0].mxu0
  %4668 = vmatprep.mubr.bf16.mxu0 0
  %4669 = vmatmul.mubr.bf16.gmra.mrb[0].mxu0 %v4427
  %v4670 = vpop.f32.mrb[0].mxu0
  %v4671 = vadd.f32 0.0, %v4670
  %v4672 = vpop.f32.mrb[0].mxu0
  %v4673 = vpop.f32.mrb[0].mxu0
  %v4674 = vadd.f32 0.0, %v4673
  %v4675 = vpop.f32.mrb[0].mxu0
  %4676 = vmatprep.mubr.bf16.mxu0 0
  %4677 = vmatmul.mubr.bf16.gmra.mrb[0].mxu0 %v4428
  %v4678 = vpop.f32.mrb[0].mxu0
  %v4679 = vadd.f32 0.0, %v4678
  %v4680 = vpop.f32.mrb[0].mxu0
  %v4681 = vpop.f32.mrb[0].mxu0
  %v4682 = vadd.f32 0.0, %v4681
  %v4683 = vpop.f32.mrb[0].mxu0
  %4684 = vmatprep.mubr.bf16.mxu0 0
  %4685 = vmatmul.mubr.bf16.gmra.mrb[0].mxu0 %v4429
  %v4686 = vpop.f32.mrb[0].mxu0
  %v4687 = vadd.f32 0.0, %v4686
  %v4688 = vpop.f32.mrb[0].mxu0
  %v4689 = vpop.f32.mrb[0].mxu0
  %v4690 = vadd.f32 0.0, %v4689
  %v4691 = vpop.f32.mrb[0].mxu0
  %4692 = vmatprep.mubr.bf16.mxu0 0
  %4693 = vmatmul.mubr.bf16.gmra.mrb[0].mxu0 %v4430
  %v4694 = vpop.f32.mrb[0].mxu0
  %v4695 = vadd.f32 0.0, %v4694
  %v4696 = vpop.f32.mrb[0].mxu0
  %v4697 = vpop.f32.mrb[0].mxu0
  %v4698 = vadd.f32 0.0, %v4697
  %v4699 = vpop.f32.mrb[0].mxu0
  %4700 = vmatprep.mubr.bf16.mxu0 0
  %4701 = vmatmul.mubr.bf16.gmra.mrb[0].mxu0 %v4431
  %v4702 = vpop.f32.mrb[0].mxu0
  %v4703 = vadd.f32 0.0, %v4702
  %v4704 = vpop.f32.mrb[0].mxu0
  %v4705 = vpop.f32.mrb[0].mxu0
  %v4706 = vadd.f32 0.0, %v4705
  %v4707 = vpop.f32.mrb[0].mxu0
  %4708 = vmatprep.mubr.bf16.mxu0 0
  %4709 = vmatmul.mubr.bf16.gmra.mrb[0].mxu0 %v4432
  %v4710 = vpop.f32.mrb[0].mxu0
  %v4711 = vadd.f32 0.0, %v4710
  %v4712 = vpop.f32.mrb[0].mxu0
  %v4713 = vpop.f32.mrb[0].mxu0
  %v4714 = vadd.f32 0.0, %v4713
  %v4715 = vpop.f32.mrb[0].mxu0
  %4716 = vmatprep.mubr.bf16.mxu0 0
  %4717 = vmatmul.mubr.bf16.gmra.mrb[0].mxu0 %v4433
  %v4718 = vpop.f32.mrb[0].mxu0
  %v4719 = vadd.f32 0.0, %v4718
  %v4720 = vpop.f32.mrb[0].mxu0
  %v4721 = vpop.f32.mrb[0].mxu0
  %v4722 = vadd.f32 0.0, %v4721
  %v4723 = vpop.f32.mrb[0].mxu0
  %4724 = vmatprep.mubr.bf16.mxu0 0
  %4725 = vmatmul.mubr.bf16.gmra.mrb[0].mxu0 %v4434
  %v4726 = vpop.f32.mrb[0].mxu0
  %v4727 = vadd.f32 0.0, %v4726
  %v4728 = vpop.f32.mrb[0].mxu0
  %v4729 = vpop.f32.mrb[0].mxu0
  %v4730 = vadd.f32 0.0, %v4729
  %v4731 = vpop.f32.mrb[0].mxu0
  %4732 = vmatprep.mubr.bf16.mxu0 0
  %4733 = vmatmul.mubr.bf16.gmra.mrb[0].mxu0 %v4435
  %v4734 = vpop.f32.mrb[0].mxu0
  %v4735 = vadd.f32 0.0, %v4734
  %v4736 = vpop.f32.mrb[0].mxu0
  %v4737 = vpop.f32.mrb[0].mxu0
  %v4738 = vadd.f32 0.0, %v4737
  %v4739 = vpop.f32.mrb[0].mxu0
  %4740 = vmatprep.mubr.bf16.mxu0 0
  %4741 = vmatmul.mubr.bf16.gmra.mrb[0].mxu0 %v4436
  %v4742 = vpop.f32.mrb[0].mxu0
  %v4743 = vadd.f32 0.0, %v4742
  %v4744 = vpop.f32.mrb[0].mxu0
  %v4745 = vpop.f32.mrb[0].mxu0
  %v4746 = vadd.f32 0.0, %v4745
  %v4747 = vpop.f32.mrb[0].mxu0
  %4748 = vmatprep.mubr.bf16.mxu0 0
  %4749 = vmatmul.mubr.bf16.gmra.mrb[0].mxu0 %v4437
  %v4750 = vpop.f32.mrb[0].mxu0
  %v4751 = vadd.f32 0.0, %v4750
  %v4752 = vpop.f32.mrb[0].mxu0
  %v4753 = vpop.f32.mrb[0].mxu0
  %v4754 = vadd.f32 0.0, %v4753
  %v4755 = vpop.f32.mrb[0].mxu0
  %4756 = vmatprep.mubr.bf16.mxu0 0
  %4757 = vmatmul.mubr.bf16.gmra.mrb[0].mxu0 %v4438
  %v4758 = vpop.f32.mrb[0].mxu0
  %v4759 = vadd.f32 0.0, %v4758
  %v4760 = vpop.f32.mrb[0].mxu0
  %v4761 = vpop.f32.mrb[0].mxu0
  %v4762 = vadd.f32 0.0, %v4761
  %v4763 = vpop.f32.mrb[0].mxu0
  %4764 = vmatprep.mubr.bf16.mxu0 0
  %4765 = vmatmul.mubr.bf16.gmra.mrb[0].mxu0 %v4439
  %v4766 = vpop.f32.mrb[0].mxu0
  %v4767 = vadd.f32 0.0, %v4766
  %v4768 = vpop.f32.mrb[0].mxu0
  %v4769 = vpop.f32.mrb[0].mxu0
  %v4770 = vadd.f32 0.0, %v4769
  %v4771 = vpop.f32.mrb[0].mxu0
  %4772 = vmatprep.mubr.bf16.mxu0 0
  %4773 = vmatmul.mubr.bf16.gmra.mrb[0].mxu0 %v4440
  %v4774 = vpop.f32.mrb[0].mxu0
  %v4775 = vadd.f32 0.0, %v4774
  %v4776 = vpop.f32.mrb[0].mxu0
  %v4777 = vpop.f32.mrb[0].mxu0
  %v4778 = vadd.f32 0.0, %v4777
  %v4779 = vpop.f32.mrb[0].mxu0
  %4780 = vmatprep.mubr.bf16.mxu0 0
  %4781 = vmatmul.mubr.bf16.gmra.mrb[0].mxu0 %v4441
  %v4782 = vpop.f32.mrb[0].mxu0
  %v4783 = vadd.f32 0.0, %v4782
  %v4784 = vpop.f32.mrb[0].mxu0
  %v4785 = vpop.f32.mrb[0].mxu0
  %v4786 = vadd.f32 0.0, %v4785
  %v4787 = vpop.f32.mrb[0].mxu0
  %4788 = vmatprep.mubr.bf16.mxu0 0
  %4789 = vmatmul.mubr.bf16.gmra.mrb[0].mxu0 %v4442
  %v4790 = vpop.f32.mrb[0].mxu0
  %v4791 = vadd.f32 0.0, %v4790
  %v4792 = vpop.f32.mrb[0].mxu0
  %v4793 = vpop.f32.mrb[0].mxu0
  %v4794 = vadd.f32 0.0, %v4793
  %v4795 = vpop.f32.mrb[0].mxu0
  %4796 = vdwg.mxu0
  %v4797 = vadd.f32 %v4283, %v4543
  %v4798 = vadd.f32 %v4284, %v4546
  %v4799 = vadd.f32 %v4285, %v4551
  %v4800 = vadd.f32 %v4286, %v4554
  %v4801 = vadd.f32 %v4287, %v4559
  %v4802 = vadd.f32 %v4288, %v4562
  %v4803 = vadd.f32 %v4289, %v4567
  %v4804 = vadd.f32 %v4290, %v4570
  %v4805 = vadd.f32 %v4291, %v4575
  %v4806 = vadd.f32 %v4292, %v4578
  %v4807 = vadd.f32 %v4293, %v4583
  %v4808 = vadd.f32 %v4294, %v4586
  %v4809 = vadd.f32 %v4295, %v4591
  %v4810 = vadd.f32 %v4296, %v4594
  %v4811 = vadd.f32 %v4297, %v4599
  %v4812 = vadd.f32 %v4298, %v4602
  %v4813 = vadd.f32 %v4299, %v4607
  %v4814 = vadd.f32 %v4300, %v4610
  %v4815 = vadd.f32 %v4301, %v4615
  %v4816 = vadd.f32 %v4302, %v4618
  %v4817 = vadd.f32 %v4303, %v4623
  %v4818 = vadd.f32 %v4304, %v4626
  %v4819 = vadd.f32 %v4305, %v4631
  %v4820 = vadd.f32 %v4306, %v4634
  %v4821 = vadd.f32 %v4307, %v4639
  %v4822 = vadd.f32 %v4308, %v4642
  %v4823 = vadd.f32 %v4309, %v4647
  %v4824 = vadd.f32 %v4310, %v4650
  %v4825 = vadd.f32 %v4311, %v4655
  %v4826 = vadd.f32 %v4312, %v4658
  %v4827 = vadd.f32 %v4313, %v4663
  %v4828 = vadd.f32 %v4314, %v4666
  %v4829 = vadd.f32 %v4315, %v4671
  %v4830 = vadd.f32 %v4316, %v4674
  %v4831 = vadd.f32 %v4317, %v4679
  %v4832 = vadd.f32 %v4318, %v4682
  %v4833 = vadd.f32 %v4319, %v4687
  %v4834 = vadd.f32 %v4320, %v4690
  %v4835 = vadd.f32 %v4321, %v4695
  %v4836 = vadd.f32 %v4322, %v4698
  %v4837 = vadd.f32 %v4323, %v4703
  %v4838 = vadd.f32 %v4324, %v4706
  %v4839 = vadd.f32 %v4325, %v4711
  %v4840 = vadd.f32 %v4326, %v4714
  %v4841 = vadd.f32 %v4327, %v4719
  %v4842 = vadd.f32 %v4328, %v4722
  %v4843 = vadd.f32 %v4329, %v4727
  %v4844 = vadd.f32 %v4330, %v4730
  %v4845 = vadd.f32 %v4331, %v4735
  %v4846 = vadd.f32 %v4332, %v4738
  %v4847 = vadd.f32 %v4333, %v4743
  %v4848 = vadd.f32 %v4334, %v4746
  %v4849 = vadd.f32 %v4335, %v4751
  %v4850 = vadd.f32 %v4336, %v4754
  %v4851 = vadd.f32 %v4337, %v4759
  %v4852 = vadd.f32 %v4338, %v4762
  %v4853 = vadd.f32 %v4339, %v4767
  %v4854 = vadd.f32 %v4340, %v4770
  %v4855 = vadd.f32 %v4341, %v4775
  %v4856 = vadd.f32 %v4342, %v4778
  %v4857 = vadd.f32 %v4343, %v4783
  %v4858 = vadd.f32 %v4344, %v4786
  %v4859 = vadd.f32 %v4345, %v4791
  %v4860 = vadd.f32 %v4346, %v4794
  %v4861 = vld [vmem:[%s3832 + $0x2] sm:$0xff]
  %v4862 = vld [vmem:[%s3832 + $0xa] sm:$0xff]
  %v4863 = vld [vmem:[%s3832 + $0x1a] sm:$0xff]
  %v4864 = vld [vmem:[%s3832 + $0x22] sm:$0xff]
  %v4865 = vld [vmem:[%s3832 + $0x32] sm:$0xff]
  %v4866 = vld [vmem:[%s3832 + $0x3a] sm:$0xff]
  %v4867 = vld [vmem:[%s3832 + $0x4a] sm:$0xff]
  %v4868 = vld [vmem:[%s3832 + $0x52] sm:$0xff]
  %v4869 = vld [vmem:[%s3832 + $0x62] sm:$0xff]
  %v4870 = vld [vmem:[%s3832 + $0x6a] sm:$0xff]
  %v4871 = vld [vmem:[%s3832 + $0x7a] sm:$0xff]
  %v4872 = vld [vmem:[%s3832 + $0x82] sm:$0xff]
  %v4873 = vld [vmem:[%s3832 + $0x92] sm:$0xff]
  %v4874 = vld [vmem:[%s3832 + $0x9a] sm:$0xff]
  %v4875 = vld [vmem:[%s3832 + $0xaa] sm:$0xff]
  %v4876 = vld [vmem:[%s3832 + $0xb2] sm:$0xff]
  %v4877 = vld [vmem:[%s3832 + $0xc2] sm:$0xff]
  %v4878 = vld [vmem:[%s3832 + $0xca] sm:$0xff]
  %v4879 = vld [vmem:[%s3832 + $0xda] sm:$0xff]
  %v4880 = vld [vmem:[%s3832 + $0xe2] sm:$0xff]
  %v4881 = vld [vmem:[%s3832 + $0xf2] sm:$0xff]
  %v4882 = vld [vmem:[%s3832 + $0xfa] sm:$0xff]
  %v4883 = vld [vmem:[%s3832 + $0x10a] sm:$0xff]
  %v4884 = vld [vmem:[%s3832 + $0x112] sm:$0xff]
  %v4885 = vld [vmem:[%s3832 + $0x122] sm:$0xff]
  %v4886 = vld [vmem:[%s3832 + $0x12a] sm:$0xff]
  %v4887 = vld [vmem:[%s3832 + $0x13a] sm:$0xff]
  %v4888 = vld [vmem:[%s3832 + $0x142] sm:$0xff]
  %v4889 = vld [vmem:[%s3832 + $0x152] sm:$0xff]
  %v4890 = vld [vmem:[%s3832 + $0x15a] sm:$0xff]
  %v4891 = vld [vmem:[%s3832 + $0x16a] sm:$0xff]
  %v4892 = vld [vmem:[%s3832 + $0x172] sm:$0xff]
  %v4893 = vld [vmem:[%s3832 + $0x1b2] sm:$0xff]
  %v4894 = vld [vmem:[%s3832 + $0x1ba] sm:$0xff]
  %v4895 = vld [vmem:[%s3832 + $0x1ca] sm:$0xff]
  %v4896 = vld [vmem:[%s3832 + $0x1d2] sm:$0xff]
  %v4897 = vld [vmem:[%s3832 + $0x1e2] sm:$0xff]
  %v4898 = vld [vmem:[%s3832 + $0x1ea] sm:$0xff]
  %v4899 = vld [vmem:[%s3832 + $0x1fa] sm:$0xff]
  %v4900 = vld [vmem:[%s3832 + $0x202] sm:$0xff]
  %v4901 = vld [vmem:[%s3832 + $0x212] sm:$0xff]
  %v4902 = vld [vmem:[%s3832 + $0x21a] sm:$0xff]
  %v4903 = vld [vmem:[%s3832 + $0x22a] sm:$0xff]
  %v4904 = vld [vmem:[%s3832 + $0x232] sm:$0xff]
  %v4905 = vld [vmem:[%s3832 + $0x242] sm:$0xff]
  %v4906 = vld [vmem:[%s3832 + $0x24a] sm:$0xff]
  %v4907 = vld [vmem:[%s3832 + $0x25a] sm:$0xff]
  %v4908 = vld [vmem:[%s3832 + $0x262] sm:$0xff]
  %v4909 = vld [vmem:[%s3832 + $0x272] sm:$0xff]
  %v4910 = vld [vmem:[%s3832 + $0x27a] sm:$0xff]
  %v4911 = vld [vmem:[%s3832 + $0x28a] sm:$0xff]
  %v4912 = vld [vmem:[%s3832 + $0x292] sm:$0xff]
  %v4913 = vld [vmem:[%s3832 + $0x2a2] sm:$0xff]
  %v4914 = vld [vmem:[%s3832 + $0x2aa] sm:$0xff]
  %v4915 = vld [vmem:[%s3832 + $0x2ba] sm:$0xff]
  %v4916 = vld [vmem:[%s3832 + $0x2c2] sm:$0xff]
  %v4917 = vld [vmem:[%s3832 + $0x2d2] sm:$0xff]
  %v4918 = vld [vmem:[%s3832 + $0x2da] sm:$0xff]
  %v4919 = vld [vmem:[%s3832 + $0x2ea] sm:$0xff]
  %v4920 = vld [vmem:[%s3832 + $0x2f2] sm:$0xff]
  %v4921 = vld [vmem:[%s3832 + $0x302] sm:$0xff]
  %v4922 = vld [vmem:[%s3832 + $0x30a] sm:$0xff]
  %v4923 = vld [vmem:[%s3832 + $0x31a] sm:$0xff]
  %v4924 = vld [vmem:[%s3832 + $0x322] sm:$0xff]
  %v4925 = vpack.c.bf16 %v4862, %v4861
  %v4926 = vpack.c.bf16 %v4864, %v4863
  %v4927 = vpack.c.bf16 %v4866, %v4865
  %v4928 = vpack.c.bf16 %v4868, %v4867
  %v4929 = vpack.c.bf16 %v4870, %v4869
  %v4930 = vpack.c.bf16 %v4872, %v4871
  %v4931 = vpack.c.bf16 %v4874, %v4873
  %v4932 = vpack.c.bf16 %v4876, %v4875
  %v4933 = vpack.c.bf16 %v4878, %v4877
  %v4934 = vpack.c.bf16 %v4880, %v4879
  %v4935 = vpack.c.bf16 %v4882, %v4881
  %v4936 = vpack.c.bf16 %v4884, %v4883
  %v4937 = vpack.c.bf16 %v4886, %v4885
  %v4938 = vpack.c.bf16 %v4888, %v4887
  %v4939 = vpack.c.bf16 %v4890, %v4889
  %v4940 = vpack.c.bf16 %v4892, %v4891
  %v4941 = vpack.c.bf16 %v4894, %v4893
  %v4942 = vpack.c.bf16 %v4896, %v4895
  %v4943 = vpack.c.bf16 %v4898, %v4897
  %v4944 = vpack.c.bf16 %v4900, %v4899
  %v4945 = vpack.c.bf16 %v4902, %v4901
  %v4946 = vpack.c.bf16 %v4904, %v4903
  %v4947 = vpack.c.bf16 %v4906, %v4905
  %v4948 = vpack.c.bf16 %v4908, %v4907
  %v4949 = vpack.c.bf16 %v4910, %v4909
  %v4950 = vpack.c.bf16 %v4912, %v4911
  %v4951 = vpack.c.bf16 %v4914, %v4913
  %v4952 = vpack.c.bf16 %v4916, %v4915
  %v4953 = vpack.c.bf16 %v4918, %v4917
  %v4954 = vpack.c.bf16 %v4920, %v4919
  %v4955 = vpack.c.bf16 %v4922, %v4921
  %v4956 = vpack.c.bf16 %v4924, %v4923
  %s4957 = scalar_lea.vmem %s3, 512
  %v4958 = vld [vmem:[%s4957] sm:$0xf]
  %v4959 = vld [vmem:[%s4957 + $0x4] sm:$0xf]
  %v4960 = vld [vmem:[%s4957 + $0x8] sm:$0xf]
  %v4961 = vld [vmem:[%s4957 + $0xc] sm:$0xf]
  %v4962 = vld [vmem:[%s4957 + $0x10] sm:$0xf]
  %v4963 = vld [vmem:[%s4957 + $0x14] sm:$0xf]
  %v4964 = vld [vmem:[%s4957 + $0x18] sm:$0xf]
  %v4965 = vld [vmem:[%s4957 + $0x1c] sm:$0xf]
  %v4966 = vld [vmem:[%s4957 + $0x20] sm:$0xf]
  %v4967 = vld [vmem:[%s4957 + $0x24] sm:$0xf]
  %v4968 = vld [vmem:[%s4957 + $0x28] sm:$0xf]
  %v4969 = vld [vmem:[%s4957 + $0x2c] sm:$0xf]
  %v4970 = vld [vmem:[%s4957 + $0x30] sm:$0xf]
  %v4971 = vld [vmem:[%s4957 + $0x34] sm:$0xf]
  %v4972 = vld [vmem:[%s4957 + $0x38] sm:$0xf]
  %v4973 = vld [vmem:[%s4957 + $0x3c] sm:$0xf]
  %v4990 = vunpack.c.l.b16 %v4958
  %v4991 = vunpack.c.l.b16 %v4959
  %v4992 = vunpack.c.l.b16 %v4960
  %v4993 = vunpack.c.l.b16 %v4961
  %v4994 = vunpack.c.l.b16 %v4962
  %v4995 = vunpack.c.l.b16 %v4963
  %v4996 = vunpack.c.l.b16 %v4964
  %v4997 = vunpack.c.l.b16 %v4965
  %v4998 = vunpack.c.l.b16 %v4966
  %v4999 = vunpack.c.l.b16 %v4967
  %v5000 = vunpack.c.l.b16 %v4968
  %v5001 = vunpack.c.l.b16 %v4969
  %v5002 = vunpack.c.l.b16 %v4970
  %v5003 = vunpack.c.l.b16 %v4971
  %v5004 = vunpack.c.l.b16 %v4972
  %v5005 = vunpack.c.l.b16 %v4973
  %v5006 = vpack.c.b16 %v4991, %v4990
  %v5007 = vpack.c.b16 %v4993, %v4992
  %v5008 = vpack.c.b16 %v4995, %v4994
  %v5009 = vpack.c.b16 %v4997, %v4996
  %v5010 = vpack.c.b16 %v4999, %v4998
  %v5011 = vpack.c.b16 %v5001, %v5000
  %v5012 = vpack.c.b16 %v5003, %v5002
  %v5013 = vpack.c.b16 %v5005, %v5004
  %5022 = vmatprep.subr.bf16.mxu0 0
  %5023 = vmatpush1.bf16.msra.mxu0 %v5006
  %5024 = vmatprep.subr.bf16.mxu0 0
  %5025 = vmatpush1.bf16.msra.mxu0 %v5007
  %5026 = vmatprep.subr.bf16.mxu0 0
  %5027 = vmatpush1.bf16.msra.mxu0 %v5008
  %5028 = vmatprep.subr.bf16.mxu0 0
  %5029 = vmatpush1.bf16.msra.mxu0 %v5009
  %5030 = vmatprep.subr.bf16.mxu0 0
  %5031 = vmatpush1.bf16.msra.mxu0 %v5010
  %5032 = vmatprep.subr.bf16.mxu0 0
  %5033 = vmatpush1.bf16.msra.mxu0 %v5011
  %5034 = vmatprep.subr.bf16.mxu0 0
  %5035 = vmatpush1.bf16.msra.mxu0 %v5012
  %5036 = vmatprep.subr.bf16.mxu0 0
  %5037 = vmatpush1.bf16.msra.mxu0 %v5013
  %5038 = vmatprep.subr.bf16.mxu0 0
  %5039 = vmatpush1.bf16.msra.mxu0 0
  %5040 = vmatprep.subr.bf16.mxu0 0
  %5041 = vmatpush1.bf16.msra.mxu0 0
  %5042 = vmatprep.subr.bf16.mxu0 0
  %5043 = vmatpush1.bf16.msra.mxu0 0
  %5044 = vmatprep.subr.bf16.mxu0 0
  %5045 = vmatpush1.bf16.msra.mxu0 0
  %5046 = vmatprep.subr.bf16.mxu0 0
  %5047 = vmatpush1.bf16.msra.mxu0 0
  %5048 = vmatprep.subr.bf16.mxu0 0
  %5049 = vmatpush1.bf16.msra.mxu0 0
  %5050 = vmatprep.subr.bf16.mxu0 0
  %5051 = vmatpush1.bf16.msra.mxu0 0
  %5052 = vmatprep.subr.bf16.mxu0 0
  %5053 = vmatpush1.bf16.msra.mxu0 0
  %5054 = vmatprep.mubr.bf16.mxu0 0
  %5055 = vmatmul.mubr.bf16.gmra.mrb[0].mxu0 %v4925
  %v5056 = vpop.f32.mrb[0].mxu0
  %v5057 = vadd.f32 0.0, %v5056
  %v5058 = vpop.f32.mrb[0].mxu0
  %v5059 = vpop.f32.mrb[0].mxu0
  %v5060 = vadd.f32 0.0, %v5059
  %v5061 = vpop.f32.mrb[0].mxu0
  %5062 = vmatprep.mubr.bf16.mxu0 0
  %5063 = vmatmul.mubr.bf16.gmra.mrb[0].mxu0 %v4926
  %v5064 = vpop.f32.mrb[0].mxu0
  %v5065 = vadd.f32 0.0, %v5064
  %v5066 = vpop.f32.mrb[0].mxu0
  %v5067 = vpop.f32.mrb[0].mxu0
  %v5068 = vadd.f32 0.0, %v5067
  %v5069 = vpop.f32.mrb[0].mxu0
  %5070 = vmatprep.mubr.bf16.mxu0 0
  %5071 = vmatmul.mubr.bf16.gmra.mrb[0].mxu0 %v4927
  %v5072 = vpop.f32.mrb[0].mxu0
  %v5073 = vadd.f32 0.0, %v5072
  %v5074 = vpop.f32.mrb[0].mxu0
  %v5075 = vpop.f32.mrb[0].mxu0
  %v5076 = vadd.f32 0.0, %v5075
  %v5077 = vpop.f32.mrb[0].mxu0
  %5078 = vmatprep.mubr.bf16.mxu0 0
  %5079 = vmatmul.mubr.bf16.gmra.mrb[0].mxu0 %v4928
  %v5080 = vpop.f32.mrb[0].mxu0
  %v5081 = vadd.f32 0.0, %v5080
  %v5082 = vpop.f32.mrb[0].mxu0
  %v5083 = vpop.f32.mrb[0].mxu0
  %v5084 = vadd.f32 0.0, %v5083
  %v5085 = vpop.f32.mrb[0].mxu0
  %5086 = vmatprep.mubr.bf16.mxu0 0
  %5087 = vmatmul.mubr.bf16.gmra.mrb[0].mxu0 %v4929
  %v5088 = vpop.f32.mrb[0].mxu0
  %v5089 = vadd.f32 0.0, %v5088
  %v5090 = vpop.f32.mrb[0].mxu0
  %v5091 = vpop.f32.mrb[0].mxu0
  %v5092 = vadd.f32 0.0, %v5091
  %v5093 = vpop.f32.mrb[0].mxu0
  %5094 = vmatprep.mubr.bf16.mxu0 0
  %5095 = vmatmul.mubr.bf16.gmra.mrb[0].mxu0 %v4930
  %v5096 = vpop.f32.mrb[0].mxu0
  %v5097 = vadd.f32 0.0, %v5096
  %v5098 = vpop.f32.mrb[0].mxu0
  %v5099 = vpop.f32.mrb[0].mxu0
  %v5100 = vadd.f32 0.0, %v5099
  %v5101 = vpop.f32.mrb[0].mxu0
  %5102 = vmatprep.mubr.bf16.mxu0 0
  %5103 = vmatmul.mubr.bf16.gmra.mrb[0].mxu0 %v4931
  %v5104 = vpop.f32.mrb[0].mxu0
  %v5105 = vadd.f32 0.0, %v5104
  %v5106 = vpop.f32.mrb[0].mxu0
  %v5107 = vpop.f32.mrb[0].mxu0
  %v5108 = vadd.f32 0.0, %v5107
  %v5109 = vpop.f32.mrb[0].mxu0
  %5110 = vmatprep.mubr.bf16.mxu0 0
  %5111 = vmatmul.mubr.bf16.gmra.mrb[0].mxu0 %v4932
  %v5112 = vpop.f32.mrb[0].mxu0
  %v5113 = vadd.f32 0.0, %v5112
  %v5114 = vpop.f32.mrb[0].mxu0
  %v5115 = vpop.f32.mrb[0].mxu0
  %v5116 = vadd.f32 0.0, %v5115
  %v5117 = vpop.f32.mrb[0].mxu0
  %5118 = vmatprep.mubr.bf16.mxu0 0
  %5119 = vmatmul.mubr.bf16.gmra.mrb[0].mxu0 %v4933
  %v5120 = vpop.f32.mrb[0].mxu0
  %v5121 = vadd.f32 0.0, %v5120
  %v5122 = vpop.f32.mrb[0].mxu0
  %v5123 = vpop.f32.mrb[0].mxu0
  %v5124 = vadd.f32 0.0, %v5123
  %v5125 = vpop.f32.mrb[0].mxu0
  %5126 = vmatprep.mubr.bf16.mxu0 0
  %5127 = vmatmul.mubr.bf16.gmra.mrb[0].mxu0 %v4934
  %v5128 = vpop.f32.mrb[0].mxu0
  %v5129 = vadd.f32 0.0, %v5128
  %v5130 = vpop.f32.mrb[0].mxu0
  %v5131 = vpop.f32.mrb[0].mxu0
  %v5132 = vadd.f32 0.0, %v5131
  %v5133 = vpop.f32.mrb[0].mxu0
  %5134 = vmatprep.mubr.bf16.mxu0 0
  %5135 = vmatmul.mubr.bf16.gmra.mrb[0].mxu0 %v4935
  %v5136 = vpop.f32.mrb[0].mxu0
  %v5137 = vadd.f32 0.0, %v5136
  %v5138 = vpop.f32.mrb[0].mxu0
  %v5139 = vpop.f32.mrb[0].mxu0
  %v5140 = vadd.f32 0.0, %v5139
  %v5141 = vpop.f32.mrb[0].mxu0
  %5142 = vmatprep.mubr.bf16.mxu0 0
  %5143 = vmatmul.mubr.bf16.gmra.mrb[0].mxu0 %v4936
  %v5144 = vpop.f32.mrb[0].mxu0
  %v5145 = vadd.f32 0.0, %v5144
  %v5146 = vpop.f32.mrb[0].mxu0
  %v5147 = vpop.f32.mrb[0].mxu0
  %v5148 = vadd.f32 0.0, %v5147
  %v5149 = vpop.f32.mrb[0].mxu0
  %5150 = vmatprep.mubr.bf16.mxu0 0
  %5151 = vmatmul.mubr.bf16.gmra.mrb[0].mxu0 %v4937
  %v5152 = vpop.f32.mrb[0].mxu0
  %v5153 = vadd.f32 0.0, %v5152
  %v5154 = vpop.f32.mrb[0].mxu0
  %v5155 = vpop.f32.mrb[0].mxu0
  %v5156 = vadd.f32 0.0, %v5155
  %v5157 = vpop.f32.mrb[0].mxu0
  %5158 = vmatprep.mubr.bf16.mxu0 0
  %5159 = vmatmul.mubr.bf16.gmra.mrb[0].mxu0 %v4938
  %v5160 = vpop.f32.mrb[0].mxu0
  %v5161 = vadd.f32 0.0, %v5160
  %v5162 = vpop.f32.mrb[0].mxu0
  %v5163 = vpop.f32.mrb[0].mxu0
  %v5164 = vadd.f32 0.0, %v5163
  %v5165 = vpop.f32.mrb[0].mxu0
  %5166 = vmatprep.mubr.bf16.mxu0 0
  %5167 = vmatmul.mubr.bf16.gmra.mrb[0].mxu0 %v4939
  %v5168 = vpop.f32.mrb[0].mxu0
  %v5169 = vadd.f32 0.0, %v5168
  %v5170 = vpop.f32.mrb[0].mxu0
  %v5171 = vpop.f32.mrb[0].mxu0
  %v5172 = vadd.f32 0.0, %v5171
  %v5173 = vpop.f32.mrb[0].mxu0
  %5174 = vmatprep.mubr.bf16.mxu0 0
  %5175 = vmatmul.mubr.bf16.gmra.mrb[0].mxu0 %v4940
  %v5176 = vpop.f32.mrb[0].mxu0
  %v5177 = vadd.f32 0.0, %v5176
  %v5178 = vpop.f32.mrb[0].mxu0
  %v5179 = vpop.f32.mrb[0].mxu0
  %v5180 = vadd.f32 0.0, %v5179
  %v5181 = vpop.f32.mrb[0].mxu0
  %5182 = vmatprep.mubr.bf16.mxu0 0
  %5183 = vmatmul.mubr.bf16.gmra.mrb[0].mxu0 %v4941
  %v5184 = vpop.f32.mrb[0].mxu0
  %v5185 = vadd.f32 0.0, %v5184
  %v5186 = vpop.f32.mrb[0].mxu0
  %v5187 = vpop.f32.mrb[0].mxu0
  %v5188 = vadd.f32 0.0, %v5187
  %v5189 = vpop.f32.mrb[0].mxu0
  %5190 = vmatprep.mubr.bf16.mxu0 0
  %5191 = vmatmul.mubr.bf16.gmra.mrb[0].mxu0 %v4942
  %v5192 = vpop.f32.mrb[0].mxu0
  %v5193 = vadd.f32 0.0, %v5192
  %v5194 = vpop.f32.mrb[0].mxu0
  %v5195 = vpop.f32.mrb[0].mxu0
  %v5196 = vadd.f32 0.0, %v5195
  %v5197 = vpop.f32.mrb[0].mxu0
  %5198 = vmatprep.mubr.bf16.mxu0 0
  %5199 = vmatmul.mubr.bf16.gmra.mrb[0].mxu0 %v4943
  %v5200 = vpop.f32.mrb[0].mxu0
  %v5201 = vadd.f32 0.0, %v5200
  %v5202 = vpop.f32.mrb[0].mxu0
  %v5203 = vpop.f32.mrb[0].mxu0
  %v5204 = vadd.f32 0.0, %v5203
  %v5205 = vpop.f32.mrb[0].mxu0
  %5206 = vmatprep.mubr.bf16.mxu0 0
  %5207 = vmatmul.mubr.bf16.gmra.mrb[0].mxu0 %v4944
  %v5208 = vpop.f32.mrb[0].mxu0
  %v5209 = vadd.f32 0.0, %v5208
  %v5210 = vpop.f32.mrb[0].mxu0
  %v5211 = vpop.f32.mrb[0].mxu0
  %v5212 = vadd.f32 0.0, %v5211
  %v5213 = vpop.f32.mrb[0].mxu0
  %5214 = vmatprep.mubr.bf16.mxu0 0
  %5215 = vmatmul.mubr.bf16.gmra.mrb[0].mxu0 %v4945
  %v5216 = vpop.f32.mrb[0].mxu0
  %v5217 = vadd.f32 0.0, %v5216
  %v5218 = vpop.f32.mrb[0].mxu0
  %v5219 = vpop.f32.mrb[0].mxu0
  %v5220 = vadd.f32 0.0, %v5219
  %v5221 = vpop.f32.mrb[0].mxu0
  %5222 = vmatprep.mubr.bf16.mxu0 0
  %5223 = vmatmul.mubr.bf16.gmra.mrb[0].mxu0 %v4946
  %v5224 = vpop.f32.mrb[0].mxu0
  %v5225 = vadd.f32 0.0, %v5224
  %v5226 = vpop.f32.mrb[0].mxu0
  %v5227 = vpop.f32.mrb[0].mxu0
  %v5228 = vadd.f32 0.0, %v5227
  %v5229 = vpop.f32.mrb[0].mxu0
  %5230 = vmatprep.mubr.bf16.mxu0 0
  %5231 = vmatmul.mubr.bf16.gmra.mrb[0].mxu0 %v4947
  %v5232 = vpop.f32.mrb[0].mxu0
  %v5233 = vadd.f32 0.0, %v5232
  %v5234 = vpop.f32.mrb[0].mxu0
  %v5235 = vpop.f32.mrb[0].mxu0
  %v5236 = vadd.f32 0.0, %v5235
  %v5237 = vpop.f32.mrb[0].mxu0
  %5238 = vmatprep.mubr.bf16.mxu0 0
  %5239 = vmatmul.mubr.bf16.gmra.mrb[0].mxu0 %v4948
  %v5240 = vpop.f32.mrb[0].mxu0
  %v5241 = vadd.f32 0.0, %v5240
  %v5242 = vpop.f32.mrb[0].mxu0
  %v5243 = vpop.f32.mrb[0].mxu0
  %v5244 = vadd.f32 0.0, %v5243
  %v5245 = vpop.f32.mrb[0].mxu0
  %5246 = vmatprep.mubr.bf16.mxu0 0
  %5247 = vmatmul.mubr.bf16.gmra.mrb[0].mxu0 %v4949
  %v5248 = vpop.f32.mrb[0].mxu0
  %v5249 = vadd.f32 0.0, %v5248
  %v5250 = vpop.f32.mrb[0].mxu0
  %v5251 = vpop.f32.mrb[0].mxu0
  %v5252 = vadd.f32 0.0, %v5251
  %v5253 = vpop.f32.mrb[0].mxu0
  %5254 = vmatprep.mubr.bf16.mxu0 0
  %5255 = vmatmul.mubr.bf16.gmra.mrb[0].mxu0 %v4950
  %v5256 = vpop.f32.mrb[0].mxu0
  %v5257 = vadd.f32 0.0, %v5256
  %v5258 = vpop.f32.mrb[0].mxu0
  %v5259 = vpop.f32.mrb[0].mxu0
  %v5260 = vadd.f32 0.0, %v5259
  %v5261 = vpop.f32.mrb[0].mxu0
  %5262 = vmatprep.mubr.bf16.mxu0 0
  %5263 = vmatmul.mubr.bf16.gmra.mrb[0].mxu0 %v4951
  %v5264 = vpop.f32.mrb[0].mxu0
  %v5265 = vadd.f32 0.0, %v5264
  %v5266 = vpop.f32.mrb[0].mxu0
  %v5267 = vpop.f32.mrb[0].mxu0
  %v5268 = vadd.f32 0.0, %v5267
  %v5269 = vpop.f32.mrb[0].mxu0
  %5270 = vmatprep.mubr.bf16.mxu0 0
  %5271 = vmatmul.mubr.bf16.gmra.mrb[0].mxu0 %v4952
  %v5272 = vpop.f32.mrb[0].mxu0
  %v5273 = vadd.f32 0.0, %v5272
  %v5274 = vpop.f32.mrb[0].mxu0
  %v5275 = vpop.f32.mrb[0].mxu0
  %v5276 = vadd.f32 0.0, %v5275
  %v5277 = vpop.f32.mrb[0].mxu0
  %5278 = vmatprep.mubr.bf16.mxu0 0
  %5279 = vmatmul.mubr.bf16.gmra.mrb[0].mxu0 %v4953
  %v5280 = vpop.f32.mrb[0].mxu0
  %v5281 = vadd.f32 0.0, %v5280
  %v5282 = vpop.f32.mrb[0].mxu0
  %v5283 = vpop.f32.mrb[0].mxu0
  %v5284 = vadd.f32 0.0, %v5283
  %v5285 = vpop.f32.mrb[0].mxu0
  %5286 = vmatprep.mubr.bf16.mxu0 0
  %5287 = vmatmul.mubr.bf16.gmra.mrb[0].mxu0 %v4954
  %v5288 = vpop.f32.mrb[0].mxu0
  %v5289 = vadd.f32 0.0, %v5288
  %v5290 = vpop.f32.mrb[0].mxu0
  %v5291 = vpop.f32.mrb[0].mxu0
  %v5292 = vadd.f32 0.0, %v5291
  %v5293 = vpop.f32.mrb[0].mxu0
  %5294 = vmatprep.mubr.bf16.mxu0 0
  %5295 = vmatmul.mubr.bf16.gmra.mrb[0].mxu0 %v4955
  %v5296 = vpop.f32.mrb[0].mxu0
  %v5297 = vadd.f32 0.0, %v5296
  %v5298 = vpop.f32.mrb[0].mxu0
  %v5299 = vpop.f32.mrb[0].mxu0
  %v5300 = vadd.f32 0.0, %v5299
  %v5301 = vpop.f32.mrb[0].mxu0
  %5302 = vmatprep.mubr.bf16.mxu0 0
  %5303 = vmatmul.mubr.bf16.gmra.mrb[0].mxu0 %v4956
  %v5304 = vpop.f32.mrb[0].mxu0
  %v5305 = vadd.f32 0.0, %v5304
  %v5306 = vpop.f32.mrb[0].mxu0
  %v5307 = vpop.f32.mrb[0].mxu0
  %v5308 = vadd.f32 0.0, %v5307
  %v5309 = vpop.f32.mrb[0].mxu0
  %5310 = vdwg.mxu0
  %v5311 = vadd.f32 %v4797, %v5057
  %v5312 = vadd.f32 %v4798, %v5060
  %v5313 = vadd.f32 %v4799, %v5065
  %v5314 = vadd.f32 %v4800, %v5068
  %v5315 = vadd.f32 %v4801, %v5073
  %v5316 = vadd.f32 %v4802, %v5076
  %v5317 = vadd.f32 %v4803, %v5081
  %v5318 = vadd.f32 %v4804, %v5084
  %v5319 = vadd.f32 %v4805, %v5089
  %v5320 = vadd.f32 %v4806, %v5092
  %v5321 = vadd.f32 %v4807, %v5097
  %v5322 = vadd.f32 %v4808, %v5100
  %v5323 = vadd.f32 %v4809, %v5105
  %v5324 = vadd.f32 %v4810, %v5108
  %v5325 = vadd.f32 %v4811, %v5113
  %v5326 = vadd.f32 %v4812, %v5116
  %v5327 = vadd.f32 %v4813, %v5121
  %v5328 = vadd.f32 %v4814, %v5124
  %v5329 = vadd.f32 %v4815, %v5129
  %v5330 = vadd.f32 %v4816, %v5132
  %v5331 = vadd.f32 %v4817, %v5137
  %v5332 = vadd.f32 %v4818, %v5140
  %v5333 = vadd.f32 %v4819, %v5145
  %v5334 = vadd.f32 %v4820, %v5148
  %v5335 = vadd.f32 %v4821, %v5153
  %v5336 = vadd.f32 %v4822, %v5156
  %v5337 = vadd.f32 %v4823, %v5161
  %v5338 = vadd.f32 %v4824, %v5164
  %v5339 = vadd.f32 %v4825, %v5169
  %v5340 = vadd.f32 %v4826, %v5172
  %v5341 = vadd.f32 %v4827, %v5177
  %v5342 = vadd.f32 %v4828, %v5180
  %v5343 = vadd.f32 %v4829, %v5185
  %v5344 = vadd.f32 %v4830, %v5188
  %v5345 = vadd.f32 %v4831, %v5193
  %v5346 = vadd.f32 %v4832, %v5196
  %v5347 = vadd.f32 %v4833, %v5201
  %v5348 = vadd.f32 %v4834, %v5204
  %v5349 = vadd.f32 %v4835, %v5209
  %v5350 = vadd.f32 %v4836, %v5212
  %v5351 = vadd.f32 %v4837, %v5217
  %v5352 = vadd.f32 %v4838, %v5220
  %v5353 = vadd.f32 %v4839, %v5225
  %v5354 = vadd.f32 %v4840, %v5228
  %v5355 = vadd.f32 %v4841, %v5233
  %v5356 = vadd.f32 %v4842, %v5236
  %v5357 = vadd.f32 %v4843, %v5241
  %v5358 = vadd.f32 %v4844, %v5244
  %v5359 = vadd.f32 %v4845, %v5249
  %v5360 = vadd.f32 %v4846, %v5252
  %v5361 = vadd.f32 %v4847, %v5257
  %v5362 = vadd.f32 %v4848, %v5260
  %v5363 = vadd.f32 %v4849, %v5265
  %v5364 = vadd.f32 %v4850, %v5268
  %v5365 = vadd.f32 %v4851, %v5273
  %v5366 = vadd.f32 %v4852, %v5276
  %v5367 = vadd.f32 %v4853, %v5281
  %v5368 = vadd.f32 %v4854, %v5284
  %v5369 = vadd.f32 %v4855, %v5289
  %v5370 = vadd.f32 %v4856, %v5292
  %v5371 = vadd.f32 %v4857, %v5297
  %v5372 = vadd.f32 %v4858, %v5300
  %v5373 = vadd.f32 %v4859, %v5305
  %v5374 = vadd.f32 %v4860, %v5308
  %v5375 = vadd.f32 %v5311, %v5312
  %v5376 = vadd.f32 %v5375, %v5313
  %v5377 = vadd.f32 %v5376, %v5314
  %v5378 = vadd.f32 %v5377, %v5315
  %v5379 = vadd.f32 %v5378, %v5316
  %v5380 = vadd.f32 %v5379, %v5317
  %v5381 = vadd.f32 %v5380, %v5318
  %v5382 = vadd.f32 %v5381, %v5319
  %v5383 = vadd.f32 %v5382, %v5320
  %v5384 = vadd.f32 %v5383, %v5321
  %v5385 = vadd.f32 %v5384, %v5322
  %v5386 = vadd.f32 %v5385, %v5323
  %v5387 = vadd.f32 %v5386, %v5324
  %v5388 = vadd.f32 %v5387, %v5325
  %v5389 = vadd.f32 %v5388, %v5326
  %v5390 = vadd.f32 %v5389, %v5327
  %v5391 = vadd.f32 %v5390, %v5328
  %v5392 = vadd.f32 %v5391, %v5329
  %v5393 = vadd.f32 %v5392, %v5330
  %v5394 = vadd.f32 %v5393, %v5331
  %v5395 = vadd.f32 %v5394, %v5332
  %v5396 = vadd.f32 %v5395, %v5333
  %v5397 = vadd.f32 %v5396, %v5334
  %v5398 = vadd.f32 %v5397, %v5335
  %v5399 = vadd.f32 %v5398, %v5336
  %v5400 = vadd.f32 %v5399, %v5337
  %v5401 = vadd.f32 %v5400, %v5338
  %v5402 = vadd.f32 %v5401, %v5339
  %v5403 = vadd.f32 %v5402, %v5340
  %v5404 = vadd.f32 %v5403, %v5341
  %v5405 = vadd.f32 %v5404, %v5342
  %v5406 = vadd.f32 %v5405, %v5343
  %v5407 = vadd.f32 %v5406, %v5344
  %v5408 = vadd.f32 %v5407, %v5345
  %v5409 = vadd.f32 %v5408, %v5346
  %v5410 = vadd.f32 %v5409, %v5347
  %v5411 = vadd.f32 %v5410, %v5348
  %v5412 = vadd.f32 %v5411, %v5349
  %v5413 = vadd.f32 %v5412, %v5350
  %v5414 = vadd.f32 %v5413, %v5351
  %v5415 = vadd.f32 %v5414, %v5352
  %v5416 = vadd.f32 %v5415, %v5353
  %v5417 = vadd.f32 %v5416, %v5354
  %v5418 = vadd.f32 %v5417, %v5355
  %v5419 = vadd.f32 %v5418, %v5356
  %v5420 = vadd.f32 %v5419, %v5357
  %v5421 = vadd.f32 %v5420, %v5358
  %v5422 = vadd.f32 %v5421, %v5359
  %v5423 = vadd.f32 %v5422, %v5360
  %v5424 = vadd.f32 %v5423, %v5361
  %v5425 = vadd.f32 %v5424, %v5362
  %v5426 = vadd.f32 %v5425, %v5363
  %v5427 = vadd.f32 %v5426, %v5364
  %v5428 = vadd.f32 %v5427, %v5365
  %v5429 = vadd.f32 %v5428, %v5366
  %v5430 = vadd.f32 %v5429, %v5367
  %v5431 = vadd.f32 %v5430, %v5368
  %v5432 = vadd.f32 %v5431, %v5369
  %v5433 = vadd.f32 %v5432, %v5370
  %v5434 = vadd.f32 %v5433, %v5371
  %v5435 = vadd.f32 %v5434, %v5372
  %v5436 = vadd.f32 %v5435, %v5373
  %v5437 = vadd.f32 %v5436, %v5374
  %v5438 = vrot.slane %v5437, 4
  %v5439 = vadd.f32 %v5437, %v5438
  %v5440 = vrot.slane %v5439, 2
  %v5441 = vadd.f32 %v5439, %v5440
  %v5442 = vrot.slane %v5441, 1
  %v5443 = vadd.f32 %v5441, %v5442
  %v5444 = vmul.f32 %v5443, 0.001953125
  %v5445 = vmul.f32 %v5311, %v5311
  %v5446 = vmul.f32 %v5312, %v5312
  %v5447 = vmul.f32 %v5313, %v5313
  %v5448 = vmul.f32 %v5314, %v5314
  %v5449 = vmul.f32 %v5315, %v5315
  %v5450 = vmul.f32 %v5316, %v5316
  %v5451 = vmul.f32 %v5317, %v5317
  %v5452 = vmul.f32 %v5318, %v5318
  %v5453 = vmul.f32 %v5319, %v5319
  %v5454 = vmul.f32 %v5320, %v5320
  %v5455 = vmul.f32 %v5321, %v5321
  %v5456 = vmul.f32 %v5322, %v5322
  %v5457 = vmul.f32 %v5323, %v5323
  %v5458 = vmul.f32 %v5324, %v5324
  %v5459 = vmul.f32 %v5325, %v5325
  %v5460 = vmul.f32 %v5326, %v5326
  %v5461 = vmul.f32 %v5327, %v5327
  %v5462 = vmul.f32 %v5328, %v5328
  %v5463 = vmul.f32 %v5329, %v5329
  %v5464 = vmul.f32 %v5330, %v5330
  %v5465 = vmul.f32 %v5331, %v5331
  %v5466 = vmul.f32 %v5332, %v5332
  %v5467 = vmul.f32 %v5333, %v5333
  %v5468 = vmul.f32 %v5334, %v5334
  %v5469 = vmul.f32 %v5335, %v5335
  %v5470 = vmul.f32 %v5336, %v5336
  %v5471 = vmul.f32 %v5337, %v5337
  %v5472 = vmul.f32 %v5338, %v5338
  %v5473 = vmul.f32 %v5339, %v5339
  %v5474 = vmul.f32 %v5340, %v5340
  %v5475 = vmul.f32 %v5341, %v5341
  %v5476 = vmul.f32 %v5342, %v5342
  %v5477 = vmul.f32 %v5343, %v5343
  %v5478 = vmul.f32 %v5344, %v5344
  %v5479 = vmul.f32 %v5345, %v5345
  %v5480 = vmul.f32 %v5346, %v5346
  %v5481 = vmul.f32 %v5347, %v5347
  %v5482 = vmul.f32 %v5348, %v5348
  %v5483 = vmul.f32 %v5349, %v5349
  %v5484 = vmul.f32 %v5350, %v5350
  %v5485 = vmul.f32 %v5351, %v5351
  %v5486 = vmul.f32 %v5352, %v5352
  %v5487 = vmul.f32 %v5353, %v5353
  %v5488 = vmul.f32 %v5354, %v5354
  %v5489 = vmul.f32 %v5355, %v5355
  %v5490 = vmul.f32 %v5356, %v5356
  %v5491 = vmul.f32 %v5357, %v5357
  %v5492 = vmul.f32 %v5358, %v5358
  %v5493 = vmul.f32 %v5359, %v5359
  %v5494 = vmul.f32 %v5360, %v5360
  %v5495 = vmul.f32 %v5361, %v5361
  %v5496 = vmul.f32 %v5362, %v5362
  %v5497 = vmul.f32 %v5363, %v5363
  %v5498 = vmul.f32 %v5364, %v5364
  %v5499 = vmul.f32 %v5365, %v5365
  %v5500 = vmul.f32 %v5366, %v5366
  %v5501 = vmul.f32 %v5367, %v5367
  %v5502 = vmul.f32 %v5368, %v5368
  %v5503 = vmul.f32 %v5369, %v5369
  %v5504 = vmul.f32 %v5370, %v5370
  %v5505 = vmul.f32 %v5371, %v5371
  %v5506 = vmul.f32 %v5372, %v5372
  %v5507 = vmul.f32 %v5373, %v5373
  %v5508 = vmul.f32 %v5374, %v5374
  %v5509 = vadd.f32 %v5445, %v5446
  %v5510 = vadd.f32 %v5509, %v5447
  %v5511 = vadd.f32 %v5510, %v5448
  %v5512 = vadd.f32 %v5511, %v5449
  %v5513 = vadd.f32 %v5512, %v5450
  %v5514 = vadd.f32 %v5513, %v5451
  %v5515 = vadd.f32 %v5514, %v5452
  %v5516 = vadd.f32 %v5515, %v5453
  %v5517 = vadd.f32 %v5516, %v5454
  %v5518 = vadd.f32 %v5517, %v5455
  %v5519 = vadd.f32 %v5518, %v5456
  %v5520 = vadd.f32 %v5519, %v5457
  %v5521 = vadd.f32 %v5520, %v5458
  %v5522 = vadd.f32 %v5521, %v5459
  %v5523 = vadd.f32 %v5522, %v5460
  %v5524 = vadd.f32 %v5523, %v5461
  %v5525 = vadd.f32 %v5524, %v5462
  %v5526 = vadd.f32 %v5525, %v5463
  %v5527 = vadd.f32 %v5526, %v5464
  %v5528 = vadd.f32 %v5527, %v5465
  %v5529 = vadd.f32 %v5528, %v5466
  %v5530 = vadd.f32 %v5529, %v5467
  %v5531 = vadd.f32 %v5530, %v5468
  %v5532 = vadd.f32 %v5531, %v5469
  %v5533 = vadd.f32 %v5532, %v5470
  %v5534 = vadd.f32 %v5533, %v5471
  %v5535 = vadd.f32 %v5534, %v5472
  %v5536 = vadd.f32 %v5535, %v5473
  %v5537 = vadd.f32 %v5536, %v5474
  %v5538 = vadd.f32 %v5537, %v5475
  %v5539 = vadd.f32 %v5538, %v5476
  %v5540 = vadd.f32 %v5539, %v5477
  %v5541 = vadd.f32 %v5540, %v5478
  %v5542 = vadd.f32 %v5541, %v5479
  %v5543 = vadd.f32 %v5542, %v5480
  %v5544 = vadd.f32 %v5543, %v5481
  %v5545 = vadd.f32 %v5544, %v5482
  %v5546 = vadd.f32 %v5545, %v5483
  %v5547 = vadd.f32 %v5546, %v5484
  %v5548 = vadd.f32 %v5547, %v5485
  %v5549 = vadd.f32 %v5548, %v5486
  %v5550 = vadd.f32 %v5549, %v5487
  %v5551 = vadd.f32 %v5550, %v5488
  %v5552 = vadd.f32 %v5551, %v5489
  %v5553 = vadd.f32 %v5552, %v5490
  %v5554 = vadd.f32 %v5553, %v5491
  %v5555 = vadd.f32 %v5554, %v5492
  %v5556 = vadd.f32 %v5555, %v5493
  %v5557 = vadd.f32 %v5556, %v5494
  %v5558 = vadd.f32 %v5557, %v5495
  %v5559 = vadd.f32 %v5558, %v5496
  %v5560 = vadd.f32 %v5559, %v5497
  %v5561 = vadd.f32 %v5560, %v5498
  %v5562 = vadd.f32 %v5561, %v5499
  %v5563 = vadd.f32 %v5562, %v5500
  %v5564 = vadd.f32 %v5563, %v5501
  %v5565 = vadd.f32 %v5564, %v5502
  %v5566 = vadd.f32 %v5565, %v5503
  %v5567 = vadd.f32 %v5566, %v5504
  %v5568 = vadd.f32 %v5567, %v5505
  %v5569 = vadd.f32 %v5568, %v5506
  %v5570 = vadd.f32 %v5569, %v5507
  %v5571 = vadd.f32 %v5570, %v5508
  %v5572 = vrot.slane %v5571, 4
  %v5573 = vadd.f32 %v5571, %v5572
  %v5574 = vrot.slane %v5573, 2
  %v5575 = vadd.f32 %v5573, %v5574
  %v5576 = vrot.slane %v5575, 1
  %v5577 = vadd.f32 %v5575, %v5576
  %v5578 = vmul.f32 %v5577, 0.001953125
  %v5579 = vmul.f32 %v5444, %v5444
  %v5580 = vsub.f32 %v5578, %v5579
  %v5581 = vmax.f32 %v5580, 0.0
  %v5582 = vadd.f32 %v5581, 0.0001
  %v5583 = vrsqrt.pop %v5582
  %v5584 = vld [vmem:[%s4] sm:$0x1]
  %v5585 = vmul.f32 %v5583, %v5584
  %v5586 = vsub.f32 %v5311, %v5444
  %v5587 = vsub.f32 %v5312, %v5444
  %v5588 = vsub.f32 %v5313, %v5444
  %v5589 = vsub.f32 %v5314, %v5444
  %v5590 = vsub.f32 %v5315, %v5444
  %v5591 = vsub.f32 %v5316, %v5444
  %v5592 = vsub.f32 %v5317, %v5444
  %v5593 = vsub.f32 %v5318, %v5444
  %v5594 = vsub.f32 %v5319, %v5444
  %v5595 = vsub.f32 %v5320, %v5444
  %v5596 = vsub.f32 %v5321, %v5444
  %v5597 = vsub.f32 %v5322, %v5444
  %v5598 = vsub.f32 %v5323, %v5444
  %v5599 = vsub.f32 %v5324, %v5444
  %v5600 = vsub.f32 %v5325, %v5444
  %v5601 = vsub.f32 %v5326, %v5444
  %v5602 = vsub.f32 %v5327, %v5444
  %v5603 = vsub.f32 %v5328, %v5444
  %v5604 = vsub.f32 %v5329, %v5444
  %v5605 = vsub.f32 %v5330, %v5444
  %v5606 = vsub.f32 %v5331, %v5444
  %v5607 = vsub.f32 %v5332, %v5444
  %v5608 = vsub.f32 %v5333, %v5444
  %v5609 = vsub.f32 %v5334, %v5444
  %v5610 = vsub.f32 %v5335, %v5444
  %v5611 = vsub.f32 %v5336, %v5444
  %v5612 = vsub.f32 %v5337, %v5444
  %v5613 = vsub.f32 %v5338, %v5444
  %v5614 = vsub.f32 %v5339, %v5444
  %v5615 = vsub.f32 %v5340, %v5444
  %v5616 = vsub.f32 %v5341, %v5444
  %v5617 = vsub.f32 %v5342, %v5444
  %v5618 = vsub.f32 %v5343, %v5444
  %v5619 = vsub.f32 %v5344, %v5444
  %v5620 = vsub.f32 %v5345, %v5444
  %v5621 = vsub.f32 %v5346, %v5444
  %v5622 = vsub.f32 %v5347, %v5444
  %v5623 = vsub.f32 %v5348, %v5444
  %v5624 = vsub.f32 %v5349, %v5444
  %v5625 = vsub.f32 %v5350, %v5444
  %v5626 = vsub.f32 %v5351, %v5444
  %v5627 = vsub.f32 %v5352, %v5444
  %v5628 = vsub.f32 %v5353, %v5444
  %v5629 = vsub.f32 %v5354, %v5444
  %v5630 = vsub.f32 %v5355, %v5444
  %v5631 = vsub.f32 %v5356, %v5444
  %v5632 = vsub.f32 %v5357, %v5444
  %v5633 = vsub.f32 %v5358, %v5444
  %v5634 = vsub.f32 %v5359, %v5444
  %v5635 = vsub.f32 %v5360, %v5444
  %v5636 = vsub.f32 %v5361, %v5444
  %v5637 = vsub.f32 %v5362, %v5444
  %v5638 = vsub.f32 %v5363, %v5444
  %v5639 = vsub.f32 %v5364, %v5444
  %v5640 = vsub.f32 %v5365, %v5444
  %v5641 = vsub.f32 %v5366, %v5444
  %v5642 = vsub.f32 %v5367, %v5444
  %v5643 = vsub.f32 %v5368, %v5444
  %v5644 = vsub.f32 %v5369, %v5444
  %v5645 = vsub.f32 %v5370, %v5444
  %v5646 = vsub.f32 %v5371, %v5444
  %v5647 = vsub.f32 %v5372, %v5444
  %v5648 = vsub.f32 %v5373, %v5444
  %v5649 = vsub.f32 %v5374, %v5444
  %v5650 = vlaneseq
  %v5651 = vshrl.u32 %v5650, 7
  %v5652 = vsub.s32 0, %v5651
  %v5653 = vrot.slane %v5585, %v5652
  %v5654 = vmul.f32 %v5586, %v5653
  %v5655 = vmul.f32 %v5587, %v5653
  %v5656 = vmul.f32 %v5588, %v5653
  %v5657 = vmul.f32 %v5589, %v5653
  %v5658 = vmul.f32 %v5590, %v5653
  %v5659 = vmul.f32 %v5591, %v5653
  %v5660 = vmul.f32 %v5592, %v5653
  %v5661 = vmul.f32 %v5593, %v5653
  %v5662 = vmul.f32 %v5594, %v5653
  %v5663 = vmul.f32 %v5595, %v5653
  %v5664 = vmul.f32 %v5596, %v5653
  %v5665 = vmul.f32 %v5597, %v5653
  %v5666 = vmul.f32 %v5598, %v5653
  %v5667 = vmul.f32 %v5599, %v5653
  %v5668 = vmul.f32 %v5600, %v5653
  %v5669 = vmul.f32 %v5601, %v5653
  %v5670 = vmul.f32 %v5602, %v5653
  %v5671 = vmul.f32 %v5603, %v5653
  %v5672 = vmul.f32 %v5604, %v5653
  %v5673 = vmul.f32 %v5605, %v5653
  %v5674 = vmul.f32 %v5606, %v5653
  %v5675 = vmul.f32 %v5607, %v5653
  %v5676 = vmul.f32 %v5608, %v5653
  %v5677 = vmul.f32 %v5609, %v5653
  %v5678 = vmul.f32 %v5610, %v5653
  %v5679 = vmul.f32 %v5611, %v5653
  %v5680 = vmul.f32 %v5612, %v5653
  %v5681 = vmul.f32 %v5613, %v5653
  %v5682 = vmul.f32 %v5614, %v5653
  %v5683 = vmul.f32 %v5615, %v5653
  %v5684 = vmul.f32 %v5616, %v5653
  %v5685 = vmul.f32 %v5617, %v5653
  %v5686 = vmul.f32 %v5618, %v5653
  %v5687 = vmul.f32 %v5619, %v5653
  %v5688 = vmul.f32 %v5620, %v5653
  %v5689 = vmul.f32 %v5621, %v5653
  %v5690 = vmul.f32 %v5622, %v5653
  %v5691 = vmul.f32 %v5623, %v5653
  %v5692 = vmul.f32 %v5624, %v5653
  %v5693 = vmul.f32 %v5625, %v5653
  %v5694 = vmul.f32 %v5626, %v5653
  %v5695 = vmul.f32 %v5627, %v5653
  %v5696 = vmul.f32 %v5628, %v5653
  %v5697 = vmul.f32 %v5629, %v5653
  %v5698 = vmul.f32 %v5630, %v5653
  %v5699 = vmul.f32 %v5631, %v5653
  %v5700 = vmul.f32 %v5632, %v5653
  %v5701 = vmul.f32 %v5633, %v5653
  %v5702 = vmul.f32 %v5634, %v5653
  %v5703 = vmul.f32 %v5635, %v5653
  %v5704 = vmul.f32 %v5636, %v5653
  %v5705 = vmul.f32 %v5637, %v5653
  %v5706 = vmul.f32 %v5638, %v5653
  %v5707 = vmul.f32 %v5639, %v5653
  %v5708 = vmul.f32 %v5640, %v5653
  %v5709 = vmul.f32 %v5641, %v5653
  %v5710 = vmul.f32 %v5642, %v5653
  %v5711 = vmul.f32 %v5643, %v5653
  %v5712 = vmul.f32 %v5644, %v5653
  %v5713 = vmul.f32 %v5645, %v5653
  %v5714 = vmul.f32 %v5646, %v5653
  %v5715 = vmul.f32 %v5647, %v5653
  %v5716 = vmul.f32 %v5648, %v5653
  %v5717 = vmul.f32 %v5649, %v5653
  %v5718 = vld [vmem:[%s5] sm:$0x1]
  %v5720 = vlaneseq
  %v5721 = vshrl.u32 %v5720, 7
  %v5722 = vsub.s32 0, %v5721
  %v5723 = vrot.slane %v5718, %v5722
  %v5725 = vadd.f32 %v5654, %v5723
  %v5726 = vadd.f32 %v5655, %v5723
  %v5727 = vadd.f32 %v5656, %v5723
  %v5728 = vadd.f32 %v5657, %v5723
  %v5729 = vadd.f32 %v5658, %v5723
  %v5730 = vadd.f32 %v5659, %v5723
  %v5731 = vadd.f32 %v5660, %v5723
  %v5732 = vadd.f32 %v5661, %v5723
  %v5733 = vadd.f32 %v5662, %v5723
  %v5734 = vadd.f32 %v5663, %v5723
  %v5735 = vadd.f32 %v5664, %v5723
  %v5736 = vadd.f32 %v5665, %v5723
  %v5737 = vadd.f32 %v5666, %v5723
  %v5738 = vadd.f32 %v5667, %v5723
  %v5739 = vadd.f32 %v5668, %v5723
  %v5740 = vadd.f32 %v5669, %v5723
  %v5741 = vadd.f32 %v5670, %v5723
  %v5742 = vadd.f32 %v5671, %v5723
  %v5743 = vadd.f32 %v5672, %v5723
  %v5744 = vadd.f32 %v5673, %v5723
  %v5745 = vadd.f32 %v5674, %v5723
  %v5746 = vadd.f32 %v5675, %v5723
  %v5747 = vadd.f32 %v5676, %v5723
  %v5748 = vadd.f32 %v5677, %v5723
  %v5749 = vadd.f32 %v5678, %v5723
  %v5750 = vadd.f32 %v5679, %v5723
  %v5751 = vadd.f32 %v5680, %v5723
  %v5752 = vadd.f32 %v5681, %v5723
  %v5753 = vadd.f32 %v5682, %v5723
  %v5754 = vadd.f32 %v5683, %v5723
  %v5755 = vadd.f32 %v5684, %v5723
  %v5756 = vadd.f32 %v5685, %v5723
  %v5757 = vadd.f32 %v5686, %v5723
  %v5758 = vadd.f32 %v5687, %v5723
  %v5759 = vadd.f32 %v5688, %v5723
  %v5760 = vadd.f32 %v5689, %v5723
  %v5761 = vadd.f32 %v5690, %v5723
  %v5762 = vadd.f32 %v5691, %v5723
  %v5763 = vadd.f32 %v5692, %v5723
  %v5764 = vadd.f32 %v5693, %v5723
  %v5765 = vadd.f32 %v5694, %v5723
  %v5766 = vadd.f32 %v5695, %v5723
  %v5767 = vadd.f32 %v5696, %v5723
  %v5768 = vadd.f32 %v5697, %v5723
  %v5769 = vadd.f32 %v5698, %v5723
  %v5770 = vadd.f32 %v5699, %v5723
  %v5771 = vadd.f32 %v5700, %v5723
  %v5772 = vadd.f32 %v5701, %v5723
  %v5773 = vadd.f32 %v5702, %v5723
  %v5774 = vadd.f32 %v5703, %v5723
  %v5775 = vadd.f32 %v5704, %v5723
  %v5776 = vadd.f32 %v5705, %v5723
  %v5777 = vadd.f32 %v5706, %v5723
  %v5778 = vadd.f32 %v5707, %v5723
  %v5779 = vadd.f32 %v5708, %v5723
  %v5780 = vadd.f32 %v5709, %v5723
  %v5781 = vadd.f32 %v5710, %v5723
  %v5782 = vadd.f32 %v5711, %v5723
  %v5783 = vadd.f32 %v5712, %v5723
  %v5784 = vadd.f32 %v5713, %v5723
  %v5785 = vadd.f32 %v5714, %v5723
  %v5786 = vadd.f32 %v5715, %v5723
  %v5787 = vadd.f32 %v5716, %v5723
  %v5788 = vadd.f32 %v5717, %v5723
  %v5789 = vmax.f32 %v5725, 0.0
  %v5790 = vmax.f32 %v5726, 0.0
  %v5791 = vmax.f32 %v5727, 0.0
  %v5792 = vmax.f32 %v5728, 0.0
  %v5793 = vmax.f32 %v5729, 0.0
  %v5794 = vmax.f32 %v5730, 0.0
  %v5795 = vmax.f32 %v5731, 0.0
  %v5796 = vmax.f32 %v5732, 0.0
  %v5797 = vmax.f32 %v5733, 0.0
  %v5798 = vmax.f32 %v5734, 0.0
  %v5799 = vmax.f32 %v5735, 0.0
  %v5800 = vmax.f32 %v5736, 0.0
  %v5801 = vmax.f32 %v5737, 0.0
  %v5802 = vmax.f32 %v5738, 0.0
  %v5803 = vmax.f32 %v5739, 0.0
  %v5804 = vmax.f32 %v5740, 0.0
  %v5805 = vmax.f32 %v5741, 0.0
  %v5806 = vmax.f32 %v5742, 0.0
  %v5807 = vmax.f32 %v5743, 0.0
  %v5808 = vmax.f32 %v5744, 0.0
  %v5809 = vmax.f32 %v5745, 0.0
  %v5810 = vmax.f32 %v5746, 0.0
  %v5811 = vmax.f32 %v5747, 0.0
  %v5812 = vmax.f32 %v5748, 0.0
  %v5813 = vmax.f32 %v5749, 0.0
  %v5814 = vmax.f32 %v5750, 0.0
  %v5815 = vmax.f32 %v5751, 0.0
  %v5816 = vmax.f32 %v5752, 0.0
  %v5817 = vmax.f32 %v5753, 0.0
  %v5818 = vmax.f32 %v5754, 0.0
  %v5819 = vmax.f32 %v5755, 0.0
  %v5820 = vmax.f32 %v5756, 0.0
  %v5821 = vmax.f32 %v5757, 0.0
  %v5822 = vmax.f32 %v5758, 0.0
  %v5823 = vmax.f32 %v5759, 0.0
  %v5824 = vmax.f32 %v5760, 0.0
  %v5825 = vmax.f32 %v5761, 0.0
  %v5826 = vmax.f32 %v5762, 0.0
  %v5827 = vmax.f32 %v5763, 0.0
  %v5828 = vmax.f32 %v5764, 0.0
  %v5829 = vmax.f32 %v5765, 0.0
  %v5830 = vmax.f32 %v5766, 0.0
  %v5831 = vmax.f32 %v5767, 0.0
  %v5832 = vmax.f32 %v5768, 0.0
  %v5833 = vmax.f32 %v5769, 0.0
  %v5834 = vmax.f32 %v5770, 0.0
  %v5835 = vmax.f32 %v5771, 0.0
  %v5836 = vmax.f32 %v5772, 0.0
  %v5837 = vmax.f32 %v5773, 0.0
  %v5838 = vmax.f32 %v5774, 0.0
  %v5839 = vmax.f32 %v5775, 0.0
  %v5840 = vmax.f32 %v5776, 0.0
  %v5841 = vmax.f32 %v5777, 0.0
  %v5842 = vmax.f32 %v5778, 0.0
  %v5843 = vmax.f32 %v5779, 0.0
  %v5844 = vmax.f32 %v5780, 0.0
  %v5845 = vmax.f32 %v5781, 0.0
  %v5846 = vmax.f32 %v5782, 0.0
  %v5847 = vmax.f32 %v5783, 0.0
  %v5848 = vmax.f32 %v5784, 0.0
  %v5849 = vmax.f32 %v5785, 0.0
  %v5850 = vmax.f32 %v5786, 0.0
  %v5851 = vmax.f32 %v5787, 0.0
  %v5852 = vmax.f32 %v5788, 0.0
  %5853 = vxpose.xlu0.b32.start [1/16] %v5789, 128
  %5854 = vxpose.xlu0.b32.cont [2/16] %v5790, 128
  %5855 = vxpose.xlu0.b32.cont [3/16] %v5791, 128
  %5856 = vxpose.xlu0.b32.cont [4/16] %v5792, 128
  %5857 = vxpose.xlu0.b32.cont [5/16] %v5793, 128
  %5858 = vxpose.xlu0.b32.cont [6/16] %v5794, 128
  %5859 = vxpose.xlu0.b32.cont [7/16] %v5795, 128
  %5860 = vxpose.xlu0.b32.cont [8/16] %v5796, 128
  %5861 = vxpose.xlu0.b32.cont [9/16] %v5797, 128
  %5862 = vxpose.xlu0.b32.cont [10/16] %v5798, 128
  %5863 = vxpose.xlu0.b32.cont [11/16] %v5799, 128
  %5864 = vxpose.xlu0.b32.cont [12/16] %v5800, 128
  %5865 = vxpose.xlu0.b32.cont [13/16] %v5801, 128
  %5866 = vxpose.xlu0.b32.cont [14/16] %v5802, 128
  %5867 = vxpose.xlu0.b32.cont [15/16] %v5803, 128
  %5868 = vxpose.xlu0.b32.end [16/16] %v5804, 128
  %v5869 = vpop.trf.xlu0
  %v5870 = vpop.trf.xlu0
  %v5871 = vpop.trf.xlu0
  %v5872 = vpop.trf.xlu0
  %v5873 = vpop.trf.xlu0
  %v5874 = vpop.trf.xlu0
  %v5875 = vpop.trf.xlu0
  %v5876 = vpop.trf.xlu0
  %v5877 = vpop.trf.xlu0
  %v5878 = vpop.trf.xlu0
  %v5879 = vpop.trf.xlu0
  %v5880 = vpop.trf.xlu0
  %v5881 = vpop.trf.xlu0
  %v5882 = vpop.trf.xlu0
  %v5883 = vpop.trf.xlu0
  %v5884 = vpop.trf.xlu0
  %5885 = vxpose.xlu0.b32.start [1/16] %v5805, 128
  %5886 = vxpose.xlu0.b32.cont [2/16] %v5806, 128
  %5887 = vxpose.xlu0.b32.cont [3/16] %v5807, 128
  %5888 = vxpose.xlu0.b32.cont [4/16] %v5808, 128
  %5889 = vxpose.xlu0.b32.cont [5/16] %v5809, 128
  %5890 = vxpose.xlu0.b32.cont [6/16] %v5810, 128
  %5891 = vxpose.xlu0.b32.cont [7/16] %v5811, 128
  %5892 = vxpose.xlu0.b32.cont [8/16] %v5812, 128
  %5893 = vxpose.xlu0.b32.cont [9/16] %v5813, 128
  %5894 = vxpose.xlu0.b32.cont [10/16] %v5814, 128
  %5895 = vxpose.xlu0.b32.cont [11/16] %v5815, 128
  %5896 = vxpose.xlu0.b32.cont [12/16] %v5816, 128
  %5897 = vxpose.xlu0.b32.cont [13/16] %v5817, 128
  %5898 = vxpose.xlu0.b32.cont [14/16] %v5818, 128
  %5899 = vxpose.xlu0.b32.cont [15/16] %v5819, 128
  %5900 = vxpose.xlu0.b32.end [16/16] %v5820, 128
  %v5901 = vpop.trf.xlu0
  %v5902 = vpop.trf.xlu0
  %v5903 = vpop.trf.xlu0
  %v5904 = vpop.trf.xlu0
  %v5905 = vpop.trf.xlu0
  %v5906 = vpop.trf.xlu0
  %v5907 = vpop.trf.xlu0
  %v5908 = vpop.trf.xlu0
  %v5909 = vpop.trf.xlu0
  %v5910 = vpop.trf.xlu0
  %v5911 = vpop.trf.xlu0
  %v5912 = vpop.trf.xlu0
  %v5913 = vpop.trf.xlu0
  %v5914 = vpop.trf.xlu0
  %v5915 = vpop.trf.xlu0
  %v5916 = vpop.trf.xlu0
  %5917 = vst [vmem:[%s6] sm:$0xff] %v5869
  %5918 = vst [vmem:[%s6 + $0x8] sm:$0xff] %v5901
  %5919 = vst [vmem:[%s6 + $0x10] sm:$0xff] %v5870
  %5920 = vst [vmem:[%s6 + $0x18] sm:$0xff] %v5902
  %5921 = vst [vmem:[%s6 + $0x20] sm:$0xff] %v5871
  %5922 = vst [vmem:[%s6 + $0x28] sm:$0xff] %v5903
  %5923 = vst [vmem:[%s6 + $0x30] sm:$0xff] %v5872
  %5924 = vst [vmem:[%s6 + $0x38] sm:$0xff] %v5904
  %5925 = vxpose.xlu0.b32.start [1/16] %v5821, 128
  %5926 = vxpose.xlu0.b32.cont [2/16] %v5822, 128
  %5927 = vxpose.xlu0.b32.cont [3/16] %v5823, 128
  %5928 = vxpose.xlu0.b32.cont [4/16] %v5824, 128
  %5929 = vxpose.xlu0.b32.cont [5/16] %v5825, 128
  %5930 = vxpose.xlu0.b32.cont [6/16] %v5826, 128
  %5931 = vxpose.xlu0.b32.cont [7/16] %v5827, 128
  %5932 = vxpose.xlu0.b32.cont [8/16] %v5828, 128
  %5933 = vxpose.xlu0.b32.cont [9/16] %v5829, 128
  %5934 = vxpose.xlu0.b32.cont [10/16] %v5830, 128
  %5935 = vxpose.xlu0.b32.cont [11/16] %v5831, 128
  %5936 = vxpose.xlu0.b32.cont [12/16] %v5832, 128
  %5937 = vxpose.xlu0.b32.cont [13/16] %v5833, 128
  %5938 = vxpose.xlu0.b32.cont [14/16] %v5834, 128
  %5939 = vxpose.xlu0.b32.cont [15/16] %v5835, 128
  %5940 = vxpose.xlu0.b32.end [16/16] %v5836, 128
  %v5941 = vpop.trf.xlu0
  %v5942 = vpop.trf.xlu0
  %v5943 = vpop.trf.xlu0
  %v5944 = vpop.trf.xlu0
  %v5945 = vpop.trf.xlu0
  %v5946 = vpop.trf.xlu0
  %v5947 = vpop.trf.xlu0
  %v5948 = vpop.trf.xlu0
  %v5949 = vpop.trf.xlu0
  %v5950 = vpop.trf.xlu0
  %v5951 = vpop.trf.xlu0
  %v5952 = vpop.trf.xlu0
  %v5953 = vpop.trf.xlu0
  %v5954 = vpop.trf.xlu0
  %v5955 = vpop.trf.xlu0
  %v5956 = vpop.trf.xlu0
  %5957 = vxpose.xlu0.b32.start [1/16] %v5837, 128
  %5958 = vxpose.xlu0.b32.cont [2/16] %v5838, 128
  %5959 = vxpose.xlu0.b32.cont [3/16] %v5839, 128
  %5960 = vxpose.xlu0.b32.cont [4/16] %v5840, 128
  %5961 = vxpose.xlu0.b32.cont [5/16] %v5841, 128
  %5962 = vxpose.xlu0.b32.cont [6/16] %v5842, 128
  %5963 = vxpose.xlu0.b32.cont [7/16] %v5843, 128
  %5964 = vxpose.xlu0.b32.cont [8/16] %v5844, 128
  %5965 = vxpose.xlu0.b32.cont [9/16] %v5845, 128
  %5966 = vxpose.xlu0.b32.cont [10/16] %v5846, 128
  %5967 = vxpose.xlu0.b32.cont [11/16] %v5847, 128
  %5968 = vxpose.xlu0.b32.cont [12/16] %v5848, 128
  %5969 = vxpose.xlu0.b32.cont [13/16] %v5849, 128
  %5970 = vxpose.xlu0.b32.cont [14/16] %v5850, 128
  %5971 = vxpose.xlu0.b32.cont [15/16] %v5851, 128
  %5972 = vxpose.xlu0.b32.end [16/16] %v5852, 128
  %v5973 = vpop.trf.xlu0
  %v5974 = vpop.trf.xlu0
  %v5975 = vpop.trf.xlu0
  %v5976 = vpop.trf.xlu0
  %v5977 = vpop.trf.xlu0
  %v5978 = vpop.trf.xlu0
  %v5979 = vpop.trf.xlu0
  %v5980 = vpop.trf.xlu0
  %v5981 = vpop.trf.xlu0
  %v5982 = vpop.trf.xlu0
  %v5983 = vpop.trf.xlu0
  %v5984 = vpop.trf.xlu0
  %v5985 = vpop.trf.xlu0
  %v5986 = vpop.trf.xlu0
  %v5987 = vpop.trf.xlu0
  %v5988 = vpop.trf.xlu0
  %s5989 = scalar_lea.vmem %s6, 64
  %5990 = vst [vmem:[%s5989] sm:$0xff] %v5941
  %5991 = vst [vmem:[%s5989 + $0x8] sm:$0xff] %v5973
  %5992 = vst [vmem:[%s5989 + $0x10] sm:$0xff] %v5942
  %5993 = vst [vmem:[%s5989 + $0x18] sm:$0xff] %v5974
  %5994 = vst [vmem:[%s5989 + $0x20] sm:$0xff] %v5943
  %5995 = vst [vmem:[%s5989 + $0x28] sm:$0xff] %v5975
  %5996 = vst [vmem:[%s5989 + $0x30] sm:$0xff] %v5944
  %5997 = vst [vmem:[%s5989 + $0x38] sm:$0xff] %v5976
  // Predicated region
  $region26: #{cnnblock0_forward.1} parent=0 // pred_check
    _
  $region27: #{cnnblock0_forward.1} parent=0 // pred_check_branch
    %5999 = sbr.rel (0) target = $region29
  $region28: #{cnnblock0_forward.1} parent=0 // pred_region
    _
  $region29: #{cnnblock0_forward.1} parent=0 // pred_fallthru
    _
  // Predicated region
  $region30: #{cnnblock0_forward.1} parent=0 // pred_check
    _
  $region31: #{cnnblock0_forward.1} parent=0 // pred_check_branch
    %6001 = sbr.rel (0) target = $region33
  $region32: #{cnnblock0_forward.1} parent=0 // pred_region
    _
  $region33: #{cnnblock0_forward.1} parent=0 // pred_fallthru
    _

</llo_original>
